<compile_context>
chip_gen: v6e
topology: v6e:2x2x1
jax: 0.10.0
libtpu: 0.0.40
codegen_flags: <defaults>
</compile_context>

<pallas_src>
import functools
import math

import jax
import jax.numpy as jnp
from jax.experimental import pallas as pl
from jax.experimental.pallas import tpu as pltpu

WINDOW_SIZE = 4      # VITS attentions.Encoder default
LN_EPS = 1e-5


def _round_up(x, m):
    return (x + m - 1) // m * m


def _pick_tile(M, candidates):
    """Largest tile from `candidates` dividing M, preferring >=2 grid steps."""
    for c in candidates:
        if M % c == 0 and M // c >= 2:
            return c
    for c in candidates:
        if M % c == 0:
            return c
    return M


def _vmem_limit(tile_bytes):
    # double-buffered tiles + headroom for compiler scratch; v7x-safe cap.
    return int(min(40 << 20, max(2 * tile_bytes + (4 << 20), 16 << 20)))


# ---------------------------------------------------------------------------
# Pallas kernel 1: fused matmul + bias + optional ReLU (M-tiled, full K/N)
# ---------------------------------------------------------------------------
def _mm_bias_act_kernel(a_ref, w_ref, b_ref, o_ref, *, act):
    acc = jnp.dot(a_ref[...], w_ref[...], preferred_element_type=jnp.float32)
    acc = acc + b_ref[...]                       # (TM, N) + (1, N)
    if act == "relu":
        acc = jnp.maximum(acc, 0.0)
    o_ref[...] = acc.astype(o_ref.dtype)


@functools.lru_cache(maxsize=None)
def _get_mm_call(M, K, N, TM, act):
    kernel = functools.partial(_mm_bias_act_kernel, act=act)
    tile_bytes = 4 * (TM * K + K * N + TM * N + N)
    return pl.pallas_call(
        kernel,
        out_shape=jax.ShapeDtypeStruct((M, N), jnp.float32),
        grid_spec=pltpu.PrefetchScalarGridSpec(
            num_scalar_prefetch=0,
            grid=(M // TM,),
            in_specs=[
                pl.BlockSpec((TM, K), lambda i: (i, 0)),
                pl.BlockSpec((K, N), lambda i: (0, 0)),
                pl.BlockSpec((1, N), lambda i: (0, 0)),
            ],
            out_specs=pl.BlockSpec((TM, N), lambda i: (i, 0)),
        ),
        compiler_params=pltpu.CompilerParams(
            dimension_semantics=("parallel",),
            vmem_limit_bytes=_vmem_limit(tile_bytes),
        ),
    )


def matmul_bias_act(A, W, b, act="none"):
    """A: (M, K), W: (K, N), b: (N,) -> (M, N) with optional ReLU.
    Assumes M is a multiple of 128 (padded sequence layout) -> no pads/slices."""
    M, K = A.shape
    _, N = W.shape
    TM = _pick_tile(M, (512, 256, 128))
    return _get_mm_call(M, K, N, TM, act)(A, W, b.reshape(1, N))


# ---------------------------------------------------------------------------
# Pallas kernel 2: fused residual add + LayerNorm (over the channel dim)
# ---------------------------------------------------------------------------
def _ln_res_kernel(x_ref, r_ref, g_ref, b_ref, o_ref, *, eps):
    v = x_ref[...] + r_ref[...]
    mu = jnp.mean(v, axis=-1, keepdims=True)
    c = v - mu
    var = jnp.mean(c * c, axis=-1, keepdims=True)
    o_ref[...] = (c * jax.lax.rsqrt(var + eps) * g_ref[...] + b_ref[...]).astype(o_ref.dtype)


@functools.lru_cache(maxsize=None)
def _get_ln_call(M, H, TM, eps):
    kernel = functools.partial(_ln_res_kernel, eps=eps)
    tile_bytes = 4 * (3 * TM * H + 2 * H)
    return pl.pallas_call(
        kernel,
        out_shape=jax.ShapeDtypeStruct((M, H), jnp.float32),
        grid_spec=pltpu.PrefetchScalarGridSpec(
            num_scalar_prefetch=0,
            grid=(M // TM,),
            in_specs=[
                pl.BlockSpec((TM, H), lambda i: (i, 0)),
                pl.BlockSpec((TM, H), lambda i: (i, 0)),
                pl.BlockSpec((1, H), lambda i: (0, 0)),
                pl.BlockSpec((1, H), lambda i: (0, 0)),
            ],
            out_specs=pl.BlockSpec((TM, H), lambda i: (i, 0)),
        ),
        compiler_params=pltpu.CompilerParams(
            dimension_semantics=("parallel",),
            vmem_limit_bytes=_vmem_limit(tile_bytes),
        ),
    )


def layernorm_residual(x, r, gamma, beta, eps=LN_EPS):
    """out = LayerNorm(x + r) over last dim; x, r: (M, H), M % 128 == 0."""
    M, H = x.shape
    TM = _pick_tile(M, (1024, 512, 256, 128))
    return _get_ln_call(M, H, TM, float(eps))(
        x, r, gamma.reshape(1, H), beta.reshape(1, H))


# ---------------------------------------------------------------------------
# Pallas kernel 3: fused relative-position self-attention, grid = (B,).
#   scores = (q/sqrt(d)) K^T + banded rel-key bias, masked_fill(-1e4), softmax,
#   out = P V + banded rel-value term. Heads merged -> lane-dense (T_pad, H).
# ---------------------------------------------------------------------------
def _attn_kernel(qkv_ref, relk_ref, relv_ref, mask_ref, o_ref,
                 *, n_heads, d, w, t, scale):
    H = n_heads * d
    key_ok = mask_ref[0] > 0.0                               # (1, t)
    row = jax.lax.broadcasted_iota(jnp.int32, (t, t), 0)
    col = jax.lax.broadcasted_iota(jnp.int32, (t, t), 1)
    rel = col - row
    band = [rel == (r - w) for r in range(2 * w + 1)]        # (t, t) bools
    relk = relk_ref[...]                                     # (2w+1, d)

    outs = []
    for h in range(n_heads):
        q = qkv_ref[0, :, h * d:(h + 1) * d] * scale                     # (t, d)
        k = qkv_ref[0, :, H + h * d:H + (h + 1) * d]
        v = qkv_ref[0, :, 2 * H + h * d:2 * H + (h + 1) * d]

        # content scores: q @ k^T  (NT matmul)
        s = jax.lax.dot_general(q, k, (((1,), (1,)), ((), ())),
                                preferred_element_type=jnp.float32)      # (t, t)
        # relative-key bias: qe[i, r] = q_i . E_k[r]; add along the band j-i=r-w
        qe = jax.lax.dot_general(q, relk, (((1,), (1,)), ((), ())),
                                 preferred_element_type=jnp.float32)     # (t, 2w+1)
        for r in range(2 * w + 1):
            s = s + jnp.where(band[r], qe[:, r:r + 1], 0.0)

        s = jnp.where(key_ok, s, -1e4)                        # masked_fill(mask==0)
        m = jnp.max(s, axis=-1, keepdims=True)
        e = jnp.exp(s - m)
        l = jnp.sum(e, axis=-1, keepdims=True)
        p = e / l

        o_h = jnp.dot(p, v, preferred_element_type=jnp.float32)          # (t, d)
        # relative-value term: out_i += sum_r p[i, i+r-w] * E_v[r]
        for r in range(2 * w + 1):
            coef = jnp.sum(jnp.where(band[r], p, 0.0), axis=-1, keepdims=True)
            o_h = o_h + coef * relv_ref[r:r + 1, :]
        outs.append(o_h)

    o_ref[0] = jnp.concatenate(outs, axis=-1).astype(o_ref.dtype)


@functools.lru_cache(maxsize=None)
def _get_attn_call(B, T, H, n_heads, d, w, scale):
    # TODO(synk): for very long sequences (T_pad >~ 1k) a query-tiled
    # flash-style variant would be needed to stay within v7x's 64 MiB VMEM.
    kernel = functools.partial(_attn_kernel, n_heads=n_heads, d=d, w=w,
                               t=T, scale=scale)
    nrel = 2 * w + 1
    tile_bytes = 4 * (T * 3 * H + T * H + 2 * nrel * d + T) + 4 * 4 * T * T
    return pl.pallas_call(
        kernel,
        out_shape=jax.ShapeDtypeStruct((B, T, H), jnp.float32),
        grid_spec=pltpu.PrefetchScalarGridSpec(
            num_scalar_prefetch=0,
            grid=(B,),
            in_specs=[
                pl.BlockSpec((1, T, 3 * H), lambda b: (b, 0, 0)),   # fused qkv
                pl.BlockSpec((nrel, d), lambda b: (0, 0)),          # emb_rel_k
                pl.BlockSpec((nrel, d), lambda b: (0, 0)),          # emb_rel_v
                pl.BlockSpec((1, 1, T), lambda b: (b, 0, 0)),       # seq mask
            ],
            out_specs=pl.BlockSpec((1, T, H), lambda b: (b, 0, 0)),
        ),
        compiler_params=pltpu.CompilerParams(
            dimension_semantics=("parallel",),
            vmem_limit_bytes=_vmem_limit(tile_bytes),
        ),
    )


# ---------------------------------------------------------------------------
# Pallas kernel 4: FFN conv1d ('same') as k shifted matmuls, fused
#   bias + optional ReLU + output sequence mask. Grid = (B,).
# ---------------------------------------------------------------------------
def _conv_mask_kernel(xp_ref, w_ref, b_ref, mask_ref, o_ref, *, k, t, act):
    c_out = o_ref.shape[-1]
    acc = jnp.zeros((t, c_out), jnp.float32)
    for j in range(k):
        acc = acc + jnp.dot(xp_ref[0, pl.ds(j, t), :], w_ref[j],
                            preferred_element_type=jnp.float32)
    acc = acc + b_ref[...]
    if act == "relu":
        acc = jnp.maximum(acc, 0.0)
    acc = acc * mask_ref[0]                                   # fused x_mask
    o_ref[0] = acc.astype(o_ref.dtype)


@functools.lru_cache(maxsize=None)
def _get_conv_call(B, T, R, C_in, C_out, k, act):
    kernel = functools.partial(_conv_mask_kernel, k=k, t=T, act=act)
    tile_bytes = 4 * (R * C_in + k * C_in * C_out + C_out + T + 2 * T * C_out)
    return pl.pallas_call(
        kernel,
        out_shape=jax.ShapeDtypeStruct((B, T, C_out), jnp.float32),
        grid_spec=pltpu.PrefetchScalarGridSpec(
            num_scalar_prefetch=0,
            grid=(B,),
            in_specs=[
                pl.BlockSpec((1, R, C_in), lambda b: (b, 0, 0)),     # padded input
                pl.BlockSpec((k, C_in, C_out), lambda b: (0, 0, 0)),  # (k, Cin, Cout)
                pl.BlockSpec((1, C_out), lambda b: (0, 0)),
                pl.BlockSpec((1, T, 1), lambda b: (b, 0, 0)),         # seq mask
            ],
            out_specs=pl.BlockSpec((1, T, C_out), lambda b: (b, 0, 0)),
        ),
        compiler_params=pltpu.CompilerParams(
            dimension_semantics=("parallel",),
            vmem_limit_bytes=_vmem_limit(tile_bytes),
        ),
    )


def conv1d_masked(x, w_k, b, mask3, k, act):
    """'same' Conv1d along T for x: (B, T_pad, C_in) (input already masked as
    required), weight (k, C_in, C_out). Output fused with bias/ReLU/mask."""
    B, T, C_in = x.shape
    C_out = w_k.shape[-1]
    pad_l = (k - 1) // 2
    R = _round_up(T + k - 1, 8)                     # keep the sublane dim 8-aligned
    xp = jnp.pad(x, ((0, 0), (pad_l, R - T - pad_l), (0, 0)))
    return _get_conv_call(B, T, R, C_in, C_out, k, act)(
        xp, w_k, b.reshape(1, C_out), mask3)


# ---------------------------------------------------------------------------
# Model pieces (thin JAX glue around the Pallas kernels)
# ---------------------------------------------------------------------------
def conv1d_weight_to_kmat(w):
    """PyTorch Conv1d weight (C_out, C_in, K) -> (K, C_in, C_out)."""
    return jnp.transpose(w, (2, 1, 0))


def _encoder_layer(x_flat, mask3, mask_b1t, lp, n_heads, kernel_size, B, T_pad, H):
    M = B * T_pad
    d = H // n_heads
    scale = 1.0 / math.sqrt(d)

    # --- self-attention block (fused QKV matmul + fused attention kernel) ---
    qkv = matmul_bias_act(x_flat, lp["w_qkv"], lp["b_qkv"], "none")      # (M, 3H)
    attn = _get_attn_call(B, T_pad, H, n_heads, d, WINDOW_SIZE, scale)(
        qkv.reshape(B, T_pad, 3 * H), lp["emb_rel_k"], lp["emb_rel_v"], mask_b1t)
    y = matmul_bias_act(attn.reshape(M, H), lp["w_o"], lp["b_o"], "none")
    x_flat = layernorm_residual(x_flat, y, lp["ln1_g"], lp["ln1_b"])

    # --- FFN block (masks fused into the pad / conv epilogues) ---
    x3 = x_flat.reshape(B, T_pad, H)
    h1 = conv1d_masked(x3 * mask3, lp["ffn_w1"], lp["ffn_b1"],
                       mask3, kernel_size, "relu")                       # (B,Tp,F)
    y2 = conv1d_masked(h1, lp["ffn_w2"], lp["ffn_b2"],
                       mask3, kernel_size, "none")                       # (B,Tp,H)
    x_flat = layernorm_residual(x_flat, y2.reshape(M, H), lp["ln2_g"], lp["ln2_b"])
    return x_flat


def vits_text_encoder_forward(params, input_ids, input_lengths, *, config):
    B, T = input_ids.shape
    H = config["hidden_channels"]
    O = config["inter_channels"]
    n_heads = config["n_heads"]
    k = config["kernel_size"]
    T_pad = _round_up(T, 128)         # lane-aligned seq length, kept end to end

    # TODO(synk): embedding lookup is a data-dependent row gather; kept as
    # jnp.take (XLA gather) rather than a manual Pallas DMA-gather kernel.
    h = jnp.take(params["emb"], input_ids, axis=0) * math.sqrt(H)        # (B, T, H)
    h = jnp.pad(h, ((0, 0), (0, T_pad - T), (0, 0)))

    mask = (jnp.arange(T_pad)[None, :] < input_lengths[:, None]).astype(h.dtype)
    mask3 = mask[..., None]                                              # (B, Tp, 1)
    mask_b1t = mask[:, None, :]                                          # (B, 1, Tp)

    x_flat = (h * mask3).reshape(B * T_pad, H)
    for lp in params["layers"]:
        x_flat = _encoder_layer(x_flat, mask3, mask_b1t, lp, n_heads, k, B, T_pad, H)

    x3 = x_flat.reshape(B, T_pad, H) * mask3                             # encoder end
    stats = matmul_bias_act(x3.reshape(B * T_pad, H),
                            params["proj_w"], params["proj_b"], "none")
    stats = stats.reshape(B, T_pad, 2 * O) * mask3

    x_out = jnp.transpose(x3[:, :T], (0, 2, 1))       # (B, H, T)  PyTorch layout
    stats = jnp.transpose(stats[:, :T], (0, 2, 1))    # (B, 2*O, T)
    m, logs = stats[:, :O], stats[:, O:]
    x_mask = mask[:, :T][:, None, :]                  # (B, 1, T)
    return x_out, m, logs, x_mask


# ---------------------------------------------------------------------------
# Deterministic synthetic parameter init (kernel-ready layouts)
# ---------------------------------------------------------------------------
def init_params(key, config):
    H = config["hidden_channels"]
    F = config["filter_channels"]
    nh = config["n_heads"]
    nl = config["n_layers"]
    k = config["kernel_size"]
    V = config["vocab_size"]
    O = config["inter_channels"]
    d = H // nh
    w = WINDOW_SIZE

    keys = jax.random.split(key, 2 + nl)
    params = {"emb": jax.random.normal(keys[0], (V, H), jnp.float32)}

    def lin(kk, fan_in, fan_out):
        lim = 1.0 / math.sqrt(fan_in)
        return jax.random.uniform(kk, (fan_in, fan_out), jnp.float32, -lim, lim)

    layers = []
    for li in range(nl):
        lk = jax.random.split(keys[1 + li], 11)
        wq, wk_, wv = lin(lk[0], H, H), lin(lk[1], H, H), lin(lk[2], H, H)
        layers.append(dict(
            w_qkv=jnp.concatenate([wq, wk_, wv], axis=1),            # (H, 3H)
            b_qkv=0.01 * jax.random.normal(lk[3], (3 * H,), jnp.float32),
            w_o=lin(lk[4], H, H),
            b_o=jnp.zeros((H,), jnp.float32),
            emb_rel_k=(d ** -0.5) * jax.random.normal(lk[5], (2 * w + 1, d), jnp.float32),
            emb_rel_v=(d ** -0.5) * jax.random.normal(lk[6], (2 * w + 1, d), jnp.float32),
            ln1_g=jnp.ones((H,), jnp.float32), ln1_b=jnp.zeros((H,), jnp.float32),
            ffn_w1=conv1d_weight_to_kmat(0.1 * jax.random.normal(lk[7], (F, H, k), jnp.float32)),
            ffn_b1=0.01 * jax.random.normal(lk[8], (F,), jnp.float32),
            ffn_w2=conv1d_weight_to_kmat(0.1 * jax.random.normal(lk[9], (H, F, k), jnp.float32)),
            ffn_b2=0.01 * jax.random.normal(lk[10], (H,), jnp.float32),
            ln2_g=jnp.ones((H,), jnp.float32), ln2_b=jnp.zeros((H,), jnp.float32),
        ))
    params["layers"] = layers

    pk = jax.random.split(keys[-1], 2)
    proj_conv = 0.1 * jax.random.normal(pk[0], (2 * O, H, 1), jnp.float32)
    params["proj_w"] = conv1d_weight_to_kmat(proj_conv)[0]               # (H, 2*O)
    params["proj_b"] = 0.01 * jax.random.normal(pk[1], (2 * O,), jnp.float32)
    return params


if __name__ == "__main__":
    config = dict(vocab_size=40, hidden_channels=64, filter_channels=128,
                  n_heads=2, n_layers=2, kernel_size=3, p_dropout=0.1,
                  inter_channels=32)

    key = jax.random.PRNGKey(0)
    kp, ki = jax.random.split(key)
    params = init_params(kp, config)

    B, T = 2, 16
    input_ids = jax.random.randint(ki, (B, T), 0, config["vocab_size"], dtype=jnp.int32)
    input_lengths = jnp.array([16, 11], dtype=jnp.int32)

    fwd = jax.jit(functools.partial(vits_text_encoder_forward, config=config))
    x, m, logs, x_mask = fwd(params, input_ids, input_lengths)
    jax.block_until_ready((x, m, logs, x_mask))

    assert x.shape == (B, config["hidden_channels"], T)
    assert m.shape == (B, config["inter_channels"], T)
    assert logs.shape == (B, config["inter_channels"], T)
    assert x_mask.shape == (B, 1, T)
    print("KERNEL_OK")
</pallas_src>

<mosaic_0001>
module attributes {stable_mosaic.version = 11 : i64} {
  func.func @_mm_bias_act_kernel(%arg0: i32, %arg1: memref<128x64xf32, #tpu.memory_space<vmem>>, %arg2: memref<64x192xf32, #tpu.memory_space<vmem>>, %arg3: memref<1x192xf32, #tpu.memory_space<vmem>>, %arg4: memref<128x192xf32, #tpu.memory_space<vmem>>) attributes {dimension_semantics = [#tpu.dimension_semantics<parallel>], iteration_bounds = array<i64: 2>, scalar_prefetch = 0 : i64, scratch_operands = 0 : i64, tpu.core_type = #tpu.core_type<tc>, window_params = [{transform_indices = @transform_0, window_bounds = array<i64: 128, 64>}, {pipeline_mode = #tpu.pipeline_mode<synchronous>, transform_indices = @transform_1, window_bounds = array<i64: 64, 192>}, {pipeline_mode = #tpu.pipeline_mode<synchronous>, transform_indices = @transform_2, window_bounds = array<i64: 1, 192>}, {transform_indices = @transform_3, window_bounds = array<i64: 128, 192>}]} {
    %c0 = arith.constant 0 : index
    %c0_0 = arith.constant 0 : index
    %0 = vector.load %arg1[%c0, %c0_0] : memref<128x64xf32, #tpu.memory_space<vmem>>, vector<128x64xf32>
    %c0_1 = arith.constant 0 : index
    %c0_2 = arith.constant 0 : index
    %1 = vector.load %arg2[%c0_1, %c0_2] : memref<64x192xf32, #tpu.memory_space<vmem>>, vector<64x192xf32>
    %cst = arith.constant dense<0.000000e+00> : vector<128x192xf32>
    %2 = tpu.matmul %0, %1, %cst {dimension_numbers = #tpu.dot_dimension_numbers<[1], [0], [0], [1], [0, 0, 1, 1], [], []>} : vector<128x64xf32>, vector<64x192xf32>, vector<128x192xf32> -> vector<128x192xf32>
    %c0_3 = arith.constant 0 : index
    %c0_4 = arith.constant 0 : index
    %3 = vector.load %arg3[%c0_3, %c0_4] : memref<1x192xf32, #tpu.memory_space<vmem>>, vector<1x192xf32>
    %4 = vector.broadcast %3 : vector<1x192xf32> to vector<128x192xf32>
    %5 = arith.addf %2, %4 : vector<128x192xf32>
    %c0_5 = arith.constant 0 : index
    %c0_6 = arith.constant 0 : index
    %6 = vector.load %arg4[%c0_5, %c0_6] : memref<128x192xf32, #tpu.memory_space<vmem>>, vector<128x192xf32>
    tpu.vector_store %arg4[%c0_5, %c0_6], %5 {strides = array<i32>} : memref<128x192xf32, #tpu.memory_space<vmem>>, vector<128x192xf32>,
    return
  }
  func.func @transform_0(%arg0: i32) -> (i32, i32) {
    %c0_i32 = arith.constant 0 : i32
    %c0_i32_0 = arith.constant 0 : i32
    return %arg0, %c0_i32 : i32, i32
  }
  func.func @transform_1(%arg0: i32) -> (i32, i32) {
    %c0_i32 = arith.constant 0 : i32
    %c0_i32_0 = arith.constant 0 : i32
    %c0_i32_1 = arith.constant 0 : i32
    return %c0_i32, %c0_i32_0 : i32, i32
  }
  func.func @transform_2(%arg0: i32) -> (i32, i32) {
    %c0_i32 = arith.constant 0 : i32
    %c0_i32_0 = arith.constant 0 : i32
    %c0_i32_1 = arith.constant 0 : i32
    return %c0_i32, %c0_i32_0 : i32, i32
  }
  func.func @transform_3(%arg0: i32) -> (i32, i32) {
    %c0_i32 = arith.constant 0 : i32
    %c0_i32_0 = arith.constant 0 : i32
    return %arg0, %c0_i32 : i32, i32
  }
}

module attributes {stable_mosaic.version = 11 : i64} {
  func.func @_mm_bias_act_kernel(%arg0: i32, %arg1: memref<128x64xf32, #tpu.memory_space<vmem>>, %arg2: memref<64x64xf32, #tpu.memory_space<vmem>>, %arg3: memref<1x64xf32, #tpu.memory_space<vmem>>, %arg4: memref<128x64xf32, #tpu.memory_space<vmem>>) attributes {dimension_semantics = [#tpu.dimension_semantics<parallel>], iteration_bounds = array<i64: 2>, scalar_prefetch = 0 : i64, scratch_operands = 0 : i64, tpu.core_type = #tpu.core_type<tc>, window_params = [{transform_indices = @transform_0, window_bounds = array<i64: 128, 64>}, {pipeline_mode = #tpu.pipeline_mode<synchronous>, transform_indices = @transform_1, window_bounds = array<i64: 64, 64>}, {pipeline_mode = #tpu.pipeline_mode<synchronous>, transform_indices = @transform_2, window_bounds = array<i64: 1, 64>}, {transform_indices = @transform_3, window_bounds = array<i64: 128, 64>}]} {
    %c0 = arith.constant 0 : index
    %c0_0 = arith.constant 0 : index
    %0 = vector.load %arg1[%c0, %c0_0] : memref<128x64xf32, #tpu.memory_space<vmem>>, vector<128x64xf32>
    %c0_1 = arith.constant 0 : index
    %c0_2 = arith.constant 0 : index
    %1 = vector.load %arg2[%c0_1, %c0_2] : memref<64x64xf32, #tpu.memory_space<vmem>>, vector<64x64xf32>
    %cst = arith.constant dense<0.000000e+00> : vector<128x64xf32>
    %2 = tpu.matmul %0, %1, %cst {dimension_numbers = #tpu.dot_dimension_numbers<[1], [0], [0], [1], [0, 0, 1, 1], [], []>} : vector<128x64xf32>, vector<64x64xf32>, vector<128x64xf32> -> vector<128x64xf32>
    %c0_3 = arith.constant 0 : index
    %c0_4 = arith.constant 0 : index
    %3 = vector.load %arg3[%c0_3, %c0_4] : memref<1x64xf32, #tpu.memory_space<vmem>>, vector<1x64xf32>
    %4 = vector.broadcast %3 : vector<1x64xf32> to vector<128x64xf32>
    %5 = arith.addf %2, %4 : vector<128x64xf32>
    %c0_5 = arith.constant 0 : index
    %c0_6 = arith.constant 0 : index
    %6 = vector.load %arg4[%c0_5, %c0_6] : memref<128x64xf32, #tpu.memory_space<vmem>>, vector<128x64xf32>
    tpu.vector_store %arg4[%c0_5, %c0_6], %5 {strides = array<i32>} : memref<128x64xf32, #tpu.memory_space<vmem>>, vector<128x64xf32>,
    return
  }
  func.func @transform_0(%arg0: i32) -> (i32, i32) {
    %c0_i32 = arith.constant 0 : i32
    %c0_i32_0 = arith.constant 0 : i32
    return %arg0, %c0_i32 : i32, i32
  }
  func.func @transform_1(%arg0: i32) -> (i32, i32) {
    %c0_i32 = arith.constant 0 : i32
    %c0_i32_0 = arith.constant 0 : i32
    %c0_i32_1 = arith.constant 0 : i32
    return %c0_i32, %c0_i32_0 : i32, i32
  }
  func.func @transform_2(%arg0: i32) -> (i32, i32) {
    %c0_i32 = arith.constant 0 : i32
    %c0_i32_0 = arith.constant 0 : i32
    %c0_i32_1 = arith.constant 0 : i32
    return %c0_i32, %c0_i32_0 : i32, i32
  }
  func.func @transform_3(%arg0: i32) -> (i32, i32) {
    %c0_i32 = arith.constant 0 : i32
    %c0_i32_0 = arith.constant 0 : i32
    return %arg0, %c0_i32 : i32, i32
  }
}

module attributes {stable_mosaic.version = 11 : i64} {
  func.func @_ln_res_kernel(%arg0: i32, %arg1: memref<128x64xf32, #tpu.memory_space<vmem>>, %arg2: memref<128x64xf32, #tpu.memory_space<vmem>>, %arg3: memref<1x64xf32, #tpu.memory_space<vmem>>, %arg4: memref<1x64xf32, #tpu.memory_space<vmem>>, %arg5: memref<128x64xf32, #tpu.memory_space<vmem>>) attributes {dimension_semantics = [#tpu.dimension_semantics<parallel>], iteration_bounds = array<i64: 2>, scalar_prefetch = 0 : i64, scratch_operands = 0 : i64, tpu.core_type = #tpu.core_type<tc>, window_params = [{transform_indices = @transform_0, window_bounds = array<i64: 128, 64>}, {transform_indices = @transform_1, window_bounds = array<i64: 128, 64>}, {pipeline_mode = #tpu.pipeline_mode<synchronous>, transform_indices = @transform_2, window_bounds = array<i64: 1, 64>}, {pipeline_mode = #tpu.pipeline_mode<synchronous>, transform_indices = @transform_3, window_bounds = array<i64: 1, 64>}, {transform_indices = @transform_4, window_bounds = array<i64: 128, 64>}]} {
    %c0 = arith.constant 0 : index
    %c0_0 = arith.constant 0 : index
    %0 = vector.load %arg1[%c0, %c0_0] : memref<128x64xf32, #tpu.memory_space<vmem>>, vector<128x64xf32>
    %c0_1 = arith.constant 0 : index
    %c0_2 = arith.constant 0 : index
    %1 = vector.load %arg2[%c0_1, %c0_2] : memref<128x64xf32, #tpu.memory_space<vmem>>, vector<128x64xf32>
    %2 = arith.addf %0, %1 : vector<128x64xf32>
    %cst = arith.constant dense<0.000000e+00> : vector<128xf32>
    %3 = vector.multi_reduction <add>, %2, %cst [1] : vector<128x64xf32> to vector<128xf32>
    %4 = vector.shape_cast %3 : vector<128xf32> to vector<128x1xf32>
    %cst_3 = arith.constant 6.400000e+01 : f32
    %5 = vector.broadcast %cst_3 : f32 to vector<128x1xf32>
    %6 = arith.divf %4, %5 : vector<128x1xf32>
    %7 = vector.broadcast %6 : vector<128x1xf32> to vector<128x64xf32>
    %8 = arith.subf %2, %7 : vector<128x64xf32>
    %9 = arith.mulf %8, %8 : vector<128x64xf32>
    %cst_4 = arith.constant dense<0.000000e+00> : vector<128xf32>
    %10 = vector.multi_reduction <add>, %9, %cst_4 [1] : vector<128x64xf32> to vector<128xf32>
    %11 = vector.shape_cast %10 : vector<128xf32> to vector<128x1xf32>
    %cst_5 = arith.constant 6.400000e+01 : f32
    %12 = vector.broadcast %cst_5 : f32 to vector<128x1xf32>
    %13 = arith.divf %11, %12 : vector<128x1xf32>
    %cst_6 = arith.constant 9.99999974E-6 : f32
    %14 = vector.broadcast %cst_6 : f32 to vector<128x1xf32>
    %15 = arith.addf %13, %14 : vector<128x1xf32>
    %16 = math.rsqrt %15 : vector<128x1xf32>
    %17 = vector.broadcast %16 : vector<128x1xf32> to vector<128x64xf32>
    %18 = arith.mulf %8, %17 : vector<128x64xf32>
    %c0_7 = arith.constant 0 : index
    %c0_8 = arith.constant 0 : index
    %19 = vector.load %arg3[%c0_7, %c0_8] : memref<1x64xf32, #tpu.memory_space<vmem>>, vector<1x64xf32>
    %20 = vector.broadcast %19 : vector<1x64xf32> to vector<128x64xf32>
    %21 = arith.mulf %18, %20 : vector<128x64xf32>
    %c0_9 = arith.constant 0 : index
    %c0_10 = arith.constant 0 : index
    %22 = vector.load %arg4[%c0_9, %c0_10] : memref<1x64xf32, #tpu.memory_space<vmem>>, vector<1x64xf32>
    %23 = vector.broadcast %22 : vector<1x64xf32> to vector<128x64xf32>
    %24 = arith.addf %21, %23 : vector<128x64xf32>
    %c0_11 = arith.constant 0 : index
    %c0_12 = arith.constant 0 : index
    %25 = vector.load %arg5[%c0_11, %c0_12] : memref<128x64xf32, #tpu.memory_space<vmem>>, vector<128x64xf32>
    tpu.vector_store %arg5[%c0_11, %c0_12], %24 {strides = array<i32>} : memref<128x64xf32, #tpu.memory_space<vmem>>, vector<128x64xf32>,
    return
  }
  func.func @transform_0(%arg0: i32) -> (i32, i32) {
    %c0_i32 = arith.constant 0 : i32
    %c0_i32_0 = arith.constant 0 : i32
    return %arg0, %c0_i32 : i32, i32
  }
  func.func @transform_1(%arg0: i32) -> (i32, i32) {
    %c0_i32 = arith.constant 0 : i32
    %c0_i32_0 = arith.constant 0 : i32
    return %arg0, %c0_i32 : i32, i32
  }
  func.func @transform_2(%arg0: i32) -> (i32, i32) {
    %c0_i32 = arith.constant 0 : i32
    %c0_i32_0 = arith.constant 0 : i32
    %c0_i32_1 = arith.constant 0 : i32
    return %c0_i32, %c0_i32_0 : i32, i32
  }
  func.func @transform_3(%arg0: i32) -> (i32, i32) {
    %c0_i32 = arith.constant 0 : i32
    %c0_i32_0 = arith.constant 0 : i32
    %c0_i32_1 = arith.constant 0 : i32
    return %c0_i32, %c0_i32_0 : i32, i32
  }
  func.func @transform_4(%arg0: i32) -> (i32, i32) {
    %c0_i32 = arith.constant 0 : i32
    %c0_i32_0 = arith.constant 0 : i32
    return %arg0, %c0_i32 : i32, i32
  }
}

module attributes {stable_mosaic.version = 11 : i64} {
  func.func @_attn_kernel(%arg0: i32, %arg1: memref<1x128x192xf32, #tpu.memory_space<vmem>>, %arg2: memref<9x32xf32, #tpu.memory_space<vmem>>, %arg3: memref<9x32xf32, #tpu.memory_space<vmem>>, %arg4: memref<1x1x128xf32, #tpu.memory_space<vmem>>, %arg5: memref<1x128x64xf32, #tpu.memory_space<vmem>>) attributes {dimension_semantics = [#tpu.dimension_semantics<parallel>], iteration_bounds = array<i64: 2>, scalar_prefetch = 0 : i64, scratch_operands = 0 : i64, tpu.core_type = #tpu.core_type<tc>, window_params = [{transform_indices = @transform_0, window_bounds = array<i64: 1, 128, 192>}, {pipeline_mode = #tpu.pipeline_mode<synchronous>, transform_indices = @transform_1, window_bounds = array<i64: 9, 32>}, {pipeline_mode = #tpu.pipeline_mode<synchronous>, transform_indices = @transform_2, window_bounds = array<i64: 9, 32>}, {transform_indices = @transform_3, window_bounds = array<i64: 1, 1, 128>}, {transform_indices = @transform_4, window_bounds = array<i64: 1, 128, 64>}]} {
    %c0 = arith.constant 0 : index
    %c0_0 = arith.constant 0 : index
    %c0_1 = arith.constant 0 : index
    %0 = vector.load %arg4[%c0, %c0_0, %c0_1] : memref<1x1x128xf32, #tpu.memory_space<vmem>>, vector<1x1x128xf32>
    %1 = vector.shape_cast %0 : vector<1x1x128xf32> to vector<1x128xf32>
    %cst = arith.constant 0.000000e+00 : f32
    %2 = vector.broadcast %cst : f32 to vector<1x128xf32>
    %3 = arith.cmpf ogt, %1, %2 : vector<1x128xf32>
    %4 = tpu.iota {dimensions = array<i32: 0>} : vector<128x128xi32>
    %5 = tpu.iota {dimensions = array<i32: 1>} : vector<128x128xi32>
    %6 = arith.subi %5, %4 : vector<128x128xi32>
    %c-4_i32 = arith.constant -4 : i32
    %7 = vector.broadcast %c-4_i32 : i32 to vector<128x128xi32>
    %8 = arith.cmpi eq, %6, %7 : vector<128x128xi32>
    %c-3_i32 = arith.constant -3 : i32
    %9 = vector.broadcast %c-3_i32 : i32 to vector<128x128xi32>
    %10 = arith.cmpi eq, %6, %9 : vector<128x128xi32>
    %c-2_i32 = arith.constant -2 : i32
    %11 = vector.broadcast %c-2_i32 : i32 to vector<128x128xi32>
    %12 = arith.cmpi eq, %6, %11 : vector<128x128xi32>
    %c-1_i32 = arith.constant -1 : i32
    %13 = vector.broadcast %c-1_i32 : i32 to vector<128x128xi32>
    %14 = arith.cmpi eq, %6, %13 : vector<128x128xi32>
    %c0_i32 = arith.constant 0 : i32
    %15 = vector.broadcast %c0_i32 : i32 to vector<128x128xi32>
    %16 = arith.cmpi eq, %6, %15 : vector<128x128xi32>
    %c1_i32 = arith.constant 1 : i32
    %17 = vector.broadcast %c1_i32 : i32 to vector<128x128xi32>
    %18 = arith.cmpi eq, %6, %17 : vector<128x128xi32>
    %c2_i32 = arith.constant 2 : i32
    %19 = vector.broadcast %c2_i32 : i32 to vector<128x128xi32>
    %20 = arith.cmpi eq, %6, %19 : vector<128x128xi32>
    %c3_i32 = arith.constant 3 : i32
    %21 = vector.broadcast %c3_i32 : i32 to vector<128x128xi32>
    %22 = arith.cmpi eq, %6, %21 : vector<128x128xi32>
    %c4_i32 = arith.constant 4 : i32
    %23 = vector.broadcast %c4_i32 : i32 to vector<128x128xi32>
    %24 = arith.cmpi eq, %6, %23 : vector<128x128xi32>
    %c0_2 = arith.constant 0 : index
    %c0_3 = arith.constant 0 : index
    %25 = vector.load %arg2[%c0_2, %c0_3] : memref<9x32xf32, #tpu.memory_space<vmem>>, vector<9x32xf32>
    %c0_4 = arith.constant 0 : index
    %c0_5 = arith.constant 0 : index
    %c0_6 = arith.constant 0 : index
    %26 = vector.load %arg1[%c0_4, %c0_5, %c0_6] : memref<1x128x192xf32, #tpu.memory_space<vmem>>, vector<1x128x32xf32>
    %27 = vector.shape_cast %26 : vector<1x128x32xf32> to vector<128x32xf32>
    %cst_7 = arith.constant 0.176776692 : f32
    %28 = vector.broadcast %cst_7 : f32 to vector<128x32xf32>
    %29 = arith.mulf %27, %28 : vector<128x32xf32>
    %c0_8 = arith.constant 0 : index
    %c0_9 = arith.constant 0 : index
    %c64 = arith.constant 64 : index
    %30 = vector.load %arg1[%c0_8, %c0_9, %c64] : memref<1x128x192xf32, #tpu.memory_space<vmem>>, vector<1x128x32xf32>
    %31 = vector.shape_cast %30 : vector<1x128x32xf32> to vector<128x32xf32>
    %c0_10 = arith.constant 0 : index
    %c0_11 = arith.constant 0 : index
    %c128 = arith.constant 128 : index
    %32 = vector.load %arg1[%c0_10, %c0_11, %c128] : memref<1x128x192xf32, #tpu.memory_space<vmem>>, vector<1x128x32xf32>
    %33 = vector.shape_cast %32 : vector<1x128x32xf32> to vector<128x32xf32>
    %cst_12 = arith.constant dense<0.000000e+00> : vector<128x128xf32>
    %34 = tpu.matmul %29, %31, %cst_12 {dimension_numbers = #tpu.dot_dimension_numbers<[1], [1], [0], [0], [0, 0, 1, 0], [], []>} : vector<128x32xf32>, vector<128x32xf32>, vector<128x128xf32> -> vector<128x128xf32>
    %cst_13 = arith.constant dense<0.000000e+00> : vector<128x9xf32>
    %35 = tpu.matmul %29, %25, %cst_13 {dimension_numbers = #tpu.dot_dimension_numbers<[1], [1], [0], [0], [0, 0, 1, 0], [], []>} : vector<128x32xf32>, vector<9x32xf32>, vector<128x9xf32> -> vector<128x9xf32>
    %36 = vector.extract_strided_slice %35 {offsets = [0, 0], sizes = [128, 1], strides = [1, 1]} : vector<128x9xf32> to vector<128x1xf32>
    %cst_14 = arith.constant 0.000000e+00 : f32
    %37 = vector.shape_cast %36 : vector<128x1xf32> to vector<128x1xf32>
    %38 = vector.broadcast %37 : vector<128x1xf32> to vector<128x128xf32>
    %39 = vector.broadcast %cst_14 : f32 to vector<128x128xf32>
    %40 = arith.select %8, %38, %39 : vector<128x128xi1>, vector<128x128xf32>
    %41 = arith.addf %34, %40 : vector<128x128xf32>
    %42 = vector.extract_strided_slice %35 {offsets = [0, 1], sizes = [128, 1], strides = [1, 1]} : vector<128x9xf32> to vector<128x1xf32>
    %cst_15 = arith.constant 0.000000e+00 : f32
    %43 = vector.shape_cast %42 : vector<128x1xf32> to vector<128x1xf32>
    %44 = vector.broadcast %43 : vector<128x1xf32> to vector<128x128xf32>
    %45 = vector.broadcast %cst_15 : f32 to vector<128x128xf32>
    %46 = arith.select %10, %44, %45 : vector<128x128xi1>, vector<128x128xf32>
    %47 = arith.addf %41, %46 : vector<128x128xf32>
    %48 = vector.extract_strided_slice %35 {offsets = [0, 2], sizes = [128, 1], strides = [1, 1]} : vector<128x9xf32> to vector<128x1xf32>
    %cst_16 = arith.constant 0.000000e+00 : f32
    %49 = vector.shape_cast %48 : vector<128x1xf32> to vector<128x1xf32>
    %50 = vector.broadcast %49 : vector<128x1xf32> to vector<128x128xf32>
    %51 = vector.broadcast %cst_16 : f32 to vector<128x128xf32>
    %52 = arith.select %12, %50, %51 : vector<128x128xi1>, vector<128x128xf32>
    %53 = arith.addf %47, %52 : vector<128x128xf32>
    %54 = vector.extract_strided_slice %35 {offsets = [0, 3], sizes = [128, 1], strides = [1, 1]} : vector<128x9xf32> to vector<128x1xf32>
    %cst_17 = arith.constant 0.000000e+00 : f32
    %55 = vector.shape_cast %54 : vector<128x1xf32> to vector<128x1xf32>
    %56 = vector.broadcast %55 : vector<128x1xf32> to vector<128x128xf32>
    %57 = vector.broadcast %cst_17 : f32 to vector<128x128xf32>
    %58 = arith.select %14, %56, %57 : vector<128x128xi1>, vector<128x128xf32>
    %59 = arith.addf %53, %58 : vector<128x128xf32>
    %60 = vector.extract_strided_slice %35 {offsets = [0, 4], sizes = [128, 1], strides = [1, 1]} : vector<128x9xf32> to vector<128x1xf32>
    %cst_18 = arith.constant 0.000000e+00 : f32
    %61 = vector.shape_cast %60 : vector<128x1xf32> to vector<128x1xf32>
    %62 = vector.broadcast %61 : vector<128x1xf32> to vector<128x128xf32>
    %63 = vector.broadcast %cst_18 : f32 to vector<128x128xf32>
    %64 = arith.select %16, %62, %63 : vector<128x128xi1>, vector<128x128xf32>
    %65 = arith.addf %59, %64 : vector<128x128xf32>
    %66 = vector.extract_strided_slice %35 {offsets = [0, 5], sizes = [128, 1], strides = [1, 1]} : vector<128x9xf32> to vector<128x1xf32>
    %cst_19 = arith.constant 0.000000e+00 : f32
    %67 = vector.shape_cast %66 : vector<128x1xf32> to vector<128x1xf32>
    %68 = vector.broadcast %67 : vector<128x1xf32> to vector<128x128xf32>
    %69 = vector.broadcast %cst_19 : f32 to vector<128x128xf32>
    %70 = arith.select %18, %68, %69 : vector<128x128xi1>, vector<128x128xf32>
    %71 = arith.addf %65, %70 : vector<128x128xf32>
    %72 = vector.extract_strided_slice %35 {offsets = [0, 6], sizes = [128, 1], strides = [1, 1]} : vector<128x9xf32> to vector<128x1xf32>
    %cst_20 = arith.constant 0.000000e+00 : f32
    %73 = vector.shape_cast %72 : vector<128x1xf32> to vector<128x1xf32>
    %74 = vector.broadcast %73 : vector<128x1xf32> to vector<128x128xf32>
    %75 = vector.broadcast %cst_20 : f32 to vector<128x128xf32>
    %76 = arith.select %20, %74, %75 : vector<128x128xi1>, vector<128x128xf32>
    %77 = arith.addf %71, %76 : vector<128x128xf32>
    %78 = vector.extract_strided_slice %35 {offsets = [0, 7], sizes = [128, 1], strides = [1, 1]} : vector<128x9xf32> to vector<128x1xf32>
    %cst_21 = arith.constant 0.000000e+00 : f32
    %79 = vector.shape_cast %78 : vector<128x1xf32> to vector<128x1xf32>
    %80 = vector.broadcast %79 : vector<128x1xf32> to vector<128x128xf32>
    %81 = vector.broadcast %cst_21 : f32 to vector<128x128xf32>
    %82 = arith.select %22, %80, %81 : vector<128x128xi1>, vector<128x128xf32>
    %83 = arith.addf %77, %82 : vector<128x128xf32>
    %84 = vector.extract_strided_slice %35 {offsets = [0, 8], sizes = [128, 1], strides = [1, 1]} : vector<128x9xf32> to vector<128x1xf32>
    %cst_22 = arith.constant 0.000000e+00 : f32
    %85 = vector.shape_cast %84 : vector<128x1xf32> to vector<128x1xf32>
    %86 = vector.broadcast %85 : vector<128x1xf32> to vector<128x128xf32>
    %87 = vector.broadcast %cst_22 : f32 to vector<128x128xf32>
    %88 = arith.select %24, %86, %87 : vector<128x128xi1>, vector<128x128xf32>
    %89 = arith.addf %83, %88 : vector<128x128xf32>
    %cst_23 = arith.constant -1.000000e+04 : f32
    %90 = vector.shape_cast %3 : vector<1x128xi1> to vector<1x128xi1>
    %91 = vector.broadcast %90 : vector<1x128xi1> to vector<128x128xi1>
    %92 = vector.broadcast %cst_23 : f32 to vector<128x128xf32>
    %93 = arith.select %91, %89, %92 : vector<128x128xi1>, vector<128x128xf32>
    %cst_24 = arith.constant dense<0xFF800000> : vector<128xf32>
    %94 = vector.multi_reduction <maximumf>, %93, %cst_24 [1] : vector<128x128xf32> to vector<128xf32>
    %95 = vector.shape_cast %94 : vector<128xf32> to vector<128x1xf32>
    %96 = vector.broadcast %95 : vector<128x1xf32> to vector<128x128xf32>
    %97 = arith.subf %93, %96 : vector<128x128xf32>
    %98 = math.exp %97 : vector<128x128xf32>
    %cst_25 = arith.constant dense<0.000000e+00> : vector<128xf32>
    %99 = vector.multi_reduction <add>, %98, %cst_25 [1] : vector<128x128xf32> to vector<128xf32>
    %100 = vector.shape_cast %99 : vector<128xf32> to vector<128x1xf32>
    %101 = vector.broadcast %100 : vector<128x1xf32> to vector<128x128xf32>
    %102 = arith.divf %98, %101 : vector<128x128xf32>
    %cst_26 = arith.constant dense<0.000000e+00> : vector<128x32xf32>
    %103 = tpu.matmul %102, %33, %cst_26 {dimension_numbers = #tpu.dot_dimension_numbers<[1], [0], [0], [1], [0, 0, 1, 1], [], []>} : vector<128x128xf32>, vector<128x32xf32>, vector<128x32xf32> -> vector<128x32xf32>
    %cst_27 = arith.constant 0.000000e+00 : f32
    %104 = vector.broadcast %cst_27 : f32 to vector<128x128xf32>
    %105 = arith.select %8, %102, %104 : vector<128x128xi1>, vector<128x128xf32>
    %cst_28 = arith.constant dense<0.000000e+00> : vector<128xf32>
    %106 = vector.multi_reduction <add>, %105, %cst_28 [1] : vector<128x128xf32> to vector<128xf32>
    %107 = vector.shape_cast %106 : vector<128xf32> to vector<128x1xf32>
    %c0_29 = arith.constant 0 : index
    %c0_30 = arith.constant 0 : index
    %108 = vector.load %arg3[%c0_29, %c0_30] : memref<9x32xf32, #tpu.memory_space<vmem>>, vector<1x32xf32>
    %109 = vector.broadcast %107 : vector<128x1xf32> to vector<128x32xf32>
    %110 = vector.broadcast %108 : vector<1x32xf32> to vector<128x32xf32>
    %111 = arith.mulf %109, %110 : vector<128x32xf32>
    %112 = arith.addf %103, %111 : vector<128x32xf32>
    %cst_31 = arith.constant 0.000000e+00 : f32
    %113 = vector.broadcast %cst_31 : f32 to vector<128x128xf32>
    %114 = arith.select %10, %102, %113 : vector<128x128xi1>, vector<128x128xf32>
    %cst_32 = arith.constant dense<0.000000e+00> : vector<128xf32>
    %115 = vector.multi_reduction <add>, %114, %cst_32 [1] : vector<128x128xf32> to vector<128xf32>
    %116 = vector.shape_cast %115 : vector<128xf32> to vector<128x1xf32>
    %c1 = arith.constant 1 : index
    %c0_33 = arith.constant 0 : index
    %117 = vector.load %arg3[%c1, %c0_33] : memref<9x32xf32, #tpu.memory_space<vmem>>, vector<1x32xf32>
    %118 = vector.broadcast %116 : vector<128x1xf32> to vector<128x32xf32>
    %119 = vector.broadcast %117 : vector<1x32xf32> to vector<128x32xf32>
    %120 = arith.mulf %118, %119 : vector<128x32xf32>
    %121 = arith.addf %112, %120 : vector<128x32xf32>
    %cst_34 = arith.constant 0.000000e+00 : f32
    %122 = vector.broadcast %cst_34 : f32 to vector<128x128xf32>
    %123 = arith.select %12, %102, %122 : vector<128x128xi1>, vector<128x128xf32>
    %cst_35 = arith.constant dense<0.000000e+00> : vector<128xf32>
    %124 = vector.multi_reduction <add>, %123, %cst_35 [1] : vector<128x128xf32> to vector<128xf32>
    %125 = vector.shape_cast %124 : vector<128xf32> to vector<128x1xf32>
    %c2 = arith.constant 2 : index
    %c0_36 = arith.constant 0 : index
    %126 = vector.load %arg3[%c2, %c0_36] : memref<9x32xf32, #tpu.memory_space<vmem>>, vector<1x32xf32>
    %127 = vector.broadcast %125 : vector<128x1xf32> to vector<128x32xf32>
    %128 = vector.broadcast %126 : vector<1x32xf32> to vector<128x32xf32>
    %129 = arith.mulf %127, %128 : vector<128x32xf32>
    %130 = arith.addf %121, %129 : vector<128x32xf32>
    %cst_37 = arith.constant 0.000000e+00 : f32
    %131 = vector.broadcast %cst_37 : f32 to vector<128x128xf32>
    %132 = arith.select %14, %102, %131 : vector<128x128xi1>, vector<128x128xf32>
    %cst_38 = arith.constant dense<0.000000e+00> : vector<128xf32>
    %133 = vector.multi_reduction <add>, %132, %cst_38 [1] : vector<128x128xf32> to vector<128xf32>
    %134 = vector.shape_cast %133 : vector<128xf32> to vector<128x1xf32>
    %c3 = arith.constant 3 : index
    %c0_39 = arith.constant 0 : index
    %135 = vector.load %arg3[%c3, %c0_39] : memref<9x32xf32, #tpu.memory_space<vmem>>, vector<1x32xf32>
    %136 = vector.broadcast %134 : vector<128x1xf32> to vector<128x32xf32>
    %137 = vector.broadcast %135 : vector<1x32xf32> to vector<128x32xf32>
    %138 = arith.mulf %136, %137 : vector<128x32xf32>
    %139 = arith.addf %130, %138 : vector<128x32xf32>
    %cst_40 = arith.constant 0.000000e+00 : f32
    %140 = vector.broadcast %cst_40 : f32 to vector<128x128xf32>
    %141 = arith.select %16, %102, %140 : vector<128x128xi1>, vector<128x128xf32>
    %cst_41 = arith.constant dense<0.000000e+00> : vector<128xf32>
    %142 = vector.multi_reduction <add>, %141, %cst_41 [1] : vector<128x128xf32> to vector<128xf32>
    %143 = vector.shape_cast %142 : vector<128xf32> to vector<128x1xf32>
    %c4 = arith.constant 4 : index
    %c0_42 = arith.constant 0 : index
    %144 = vector.load %arg3[%c4, %c0_42] : memref<9x32xf32, #tpu.memory_space<vmem>>, vector<1x32xf32>
    %145 = vector.broadcast %143 : vector<128x1xf32> to vector<128x32xf32>
    %146 = vector.broadcast %144 : vector<1x32xf32> to vector<128x32xf32>
    %147 = arith.mulf %145, %146 : vector<128x32xf32>
    %148 = arith.addf %139, %147 : vector<128x32xf32>
    %cst_43 = arith.constant 0.000000e+00 : f32
    %149 = vector.broadcast %cst_43 : f32 to vector<128x128xf32>
    %150 = arith.select %18, %102, %149 : vector<128x128xi1>, vector<128x128xf32>
    %cst_44 = arith.constant dense<0.000000e+00> : vector<128xf32>
    %151 = vector.multi_reduction <add>, %150, %cst_44 [1] : vector<128x128xf32> to vector<128xf32>
    %152 = vector.shape_cast %151 : vector<128xf32> to vector<128x1xf32>
    %c5 = arith.constant 5 : index
    %c0_45 = arith.constant 0 : index
    %153 = vector.load %arg3[%c5, %c0_45] : memref<9x32xf32, #tpu.memory_space<vmem>>, vector<1x32xf32>
    %154 = vector.broadcast %152 : vector<128x1xf32> to vector<128x32xf32>
    %155 = vector.broadcast %153 : vector<1x32xf32> to vector<128x32xf32>
    %156 = arith.mulf %154, %155 : vector<128x32xf32>
    %157 = arith.addf %148, %156 : vector<128x32xf32>
    %cst_46 = arith.constant 0.000000e+00 : f32
    %158 = vector.broadcast %cst_46 : f32 to vector<128x128xf32>
    %159 = arith.select %20, %102, %158 : vector<128x128xi1>, vector<128x128xf32>
    %cst_47 = arith.constant dense<0.000000e+00> : vector<128xf32>
    %160 = vector.multi_reduction <add>, %159, %cst_47 [1] : vector<128x128xf32> to vector<128xf32>
    %161 = vector.shape_cast %160 : vector<128xf32> to vector<128x1xf32>
    %c6 = arith.constant 6 : index
    %c0_48 = arith.constant 0 : index
    %162 = vector.load %arg3[%c6, %c0_48] : memref<9x32xf32, #tpu.memory_space<vmem>>, vector<1x32xf32>
    %163 = vector.broadcast %161 : vector<128x1xf32> to vector<128x32xf32>
    %164 = vector.broadcast %162 : vector<1x32xf32> to vector<128x32xf32>
    %165 = arith.mulf %163, %164 : vector<128x32xf32>
    %166 = arith.addf %157, %165 : vector<128x32xf32>
    %cst_49 = arith.constant 0.000000e+00 : f32
    %167 = vector.broadcast %cst_49 : f32 to vector<128x128xf32>
    %168 = arith.select %22, %102, %167 : vector<128x128xi1>, vector<128x128xf32>
    %cst_50 = arith.constant dense<0.000000e+00> : vector<128xf32>
    %169 = vector.multi_reduction <add>, %168, %cst_50 [1] : vector<128x128xf32> to vector<128xf32>
    %170 = vector.shape_cast %169 : vector<128xf32> to vector<128x1xf32>
    %c7 = arith.constant 7 : index
    %c0_51 = arith.constant 0 : index
    %171 = vector.load %arg3[%c7, %c0_51] : memref<9x32xf32, #tpu.memory_space<vmem>>, vector<1x32xf32>
    %172 = vector.broadcast %170 : vector<128x1xf32> to vector<128x32xf32>
    %173 = vector.broadcast %171 : vector<1x32xf32> to vector<128x32xf32>
    %174 = arith.mulf %172, %173 : vector<128x32xf32>
    %175 = arith.addf %166, %174 : vector<128x32xf32>
    %cst_52 = arith.constant 0.000000e+00 : f32
    %176 = vector.broadcast %cst_52 : f32 to vector<128x128xf32>
    %177 = arith.select %24, %102, %176 : vector<128x128xi1>, vector<128x128xf32>
    %cst_53 = arith.constant dense<0.000000e+00> : vector<128xf32>
    %178 = vector.multi_reduction <add>, %177, %cst_53 [1] : vector<128x128xf32> to vector<128xf32>
    %179 = vector.shape_cast %178 : vector<128xf32> to vector<128x1xf32>
    %c8 = arith.constant 8 : index
    %c0_54 = arith.constant 0 : index
    %180 = vector.load %arg3[%c8, %c0_54] : memref<9x32xf32, #tpu.memory_space<vmem>>, vector<1x32xf32>
    %181 = vector.broadcast %179 : vector<128x1xf32> to vector<128x32xf32>
    %182 = vector.broadcast %180 : vector<1x32xf32> to vector<128x32xf32>
    %183 = arith.mulf %181, %182 : vector<128x32xf32>
    %184 = arith.addf %175, %183 : vector<128x32xf32>
    %c0_55 = arith.constant 0 : index
    %c0_56 = arith.constant 0 : index
    %c32 = arith.constant 32 : index
    %185 = vector.load %arg1[%c0_55, %c0_56, %c32] : memref<1x128x192xf32, #tpu.memory_space<vmem>>, vector<1x128x32xf32>
    %186 = vector.shape_cast %185 : vector<1x128x32xf32> to vector<128x32xf32>
    %cst_57 = arith.constant 0.176776692 : f32
    %187 = vector.broadcast %cst_57 : f32 to vector<128x32xf32>
    %188 = arith.mulf %186, %187 : vector<128x32xf32>
    %c0_58 = arith.constant 0 : index
    %c0_59 = arith.constant 0 : index
    %c96 = arith.constant 96 : index
    %189 = vector.load %arg1[%c0_58, %c0_59, %c96] : memref<1x128x192xf32, #tpu.memory_space<vmem>>, vector<1x128x32xf32>
    %190 = vector.shape_cast %189 : vector<1x128x32xf32> to vector<128x32xf32>
    %c0_60 = arith.constant 0 : index
    %c0_61 = arith.constant 0 : index
    %c160 = arith.constant 160 : index
    %191 = vector.load %arg1[%c0_60, %c0_61, %c160] : memref<1x128x192xf32, #tpu.memory_space<vmem>>, vector<1x128x32xf32>
    %192 = vector.shape_cast %191 : vector<1x128x32xf32> to vector<128x32xf32>
    %cst_62 = arith.constant dense<0.000000e+00> : vector<128x128xf32>
    %193 = tpu.matmul %188, %190, %cst_62 {dimension_numbers = #tpu.dot_dimension_numbers<[1], [1], [0], [0], [0, 0, 1, 0], [], []>} : vector<128x32xf32>, vector<128x32xf32>, vector<128x128xf32> -> vector<128x128xf32>
    %cst_63 = arith.constant dense<0.000000e+00> : vector<128x9xf32>
    %194 = tpu.matmul %188, %25, %cst_63 {dimension_numbers = #tpu.dot_dimension_numbers<[1], [1], [0], [0], [0, 0, 1, 0], [], []>} : vector<128x32xf32>, vector<9x32xf32>, vector<128x9xf32> -> vector<128x9xf32>
    %195 = vector.extract_strided_slice %194 {offsets = [0, 0], sizes = [128, 1], strides = [1, 1]} : vector<128x9xf32> to vector<128x1xf32>
    %cst_64 = arith.constant 0.000000e+00 : f32
    %196 = vector.shape_cast %195 : vector<128x1xf32> to vector<128x1xf32>
    %197 = vector.broadcast %196 : vector<128x1xf32> to vector<128x128xf32>
    %198 = vector.broadcast %cst_64 : f32 to vector<128x128xf32>
    %199 = arith.select %8, %197, %198 : vector<128x128xi1>, vector<128x128xf32>
    %200 = arith.addf %193, %199 : vector<128x128xf32>
    %201 = vector.extract_strided_slice %194 {offsets = [0, 1], sizes = [128, 1], strides = [1, 1]} : vector<128x9xf32> to vector<128x1xf32>
    %cst_65 = arith.constant 0.000000e+00 : f32
    %202 = vector.shape_cast %201 : vector<128x1xf32> to vector<128x1xf32>
    %203 = vector.broadcast %202 : vector<128x1xf32> to vector<128x128xf32>
    %204 = vector.broadcast %cst_65 : f32 to vector<128x128xf32>
    %205 = arith.select %10, %203, %204 : vector<128x128xi1>, vector<128x128xf32>
    %206 = arith.addf %200, %205 : vector<128x128xf32>
    %207 = vector.extract_strided_slice %194 {offsets = [0, 2], sizes = [128, 1], strides = [1, 1]} : vector<128x9xf32> to vector<128x1xf32>
    %cst_66 = arith.constant 0.000000e+00 : f32
    %208 = vector.shape_cast %207 : vector<128x1xf32> to vector<128x1xf32>
    %209 = vector.broadcast %208 : vector<128x1xf32> to vector<128x128xf32>
    %210 = vector.broadcast %cst_66 : f32 to vector<128x128xf32>
    %211 = arith.select %12, %209, %210 : vector<128x128xi1>, vector<128x128xf32>
    %212 = arith.addf %206, %211 : vector<128x128xf32>
    %213 = vector.extract_strided_slice %194 {offsets = [0, 3], sizes = [128, 1], strides = [1, 1]} : vector<128x9xf32> to vector<128x1xf32>
    %cst_67 = arith.constant 0.000000e+00 : f32
    %214 = vector.shape_cast %213 : vector<128x1xf32> to vector<128x1xf32>
    %215 = vector.broadcast %214 : vector<128x1xf32> to vector<128x128xf32>
    %216 = vector.broadcast %cst_67 : f32 to vector<128x128xf32>
    %217 = arith.select %14, %215, %216 : vector<128x128xi1>, vector<128x128xf32>
    %218 = arith.addf %212, %217 : vector<128x128xf32>
    %219 = vector.extract_strided_slice %194 {offsets = [0, 4], sizes = [128, 1], strides = [1, 1]} : vector<128x9xf32> to vector<128x1xf32>
    %cst_68 = arith.constant 0.000000e+00 : f32
    %220 = vector.shape_cast %219 : vector<128x1xf32> to vector<128x1xf32>
    %221 = vector.broadcast %220 : vector<128x1xf32> to vector<128x128xf32>
    %222 = vector.broadcast %cst_68 : f32 to vector<128x128xf32>
    %223 = arith.select %16, %221, %222 : vector<128x128xi1>, vector<128x128xf32>
    %224 = arith.addf %218, %223 : vector<128x128xf32>
    %225 = vector.extract_strided_slice %194 {offsets = [0, 5], sizes = [128, 1], strides = [1, 1]} : vector<128x9xf32> to vector<128x1xf32>
    %cst_69 = arith.constant 0.000000e+00 : f32
    %226 = vector.shape_cast %225 : vector<128x1xf32> to vector<128x1xf32>
    %227 = vector.broadcast %226 : vector<128x1xf32> to vector<128x128xf32>
    %228 = vector.broadcast %cst_69 : f32 to vector<128x128xf32>
    %229 = arith.select %18, %227, %228 : vector<128x128xi1>, vector<128x128xf32>
    %230 = arith.addf %224, %229 : vector<128x128xf32>
    %231 = vector.extract_strided_slice %194 {offsets = [0, 6], sizes = [128, 1], strides = [1, 1]} : vector<128x9xf32> to vector<128x1xf32>
    %cst_70 = arith.constant 0.000000e+00 : f32
    %232 = vector.shape_cast %231 : vector<128x1xf32> to vector<128x1xf32>
    %233 = vector.broadcast %232 : vector<128x1xf32> to vector<128x128xf32>
    %234 = vector.broadcast %cst_70 : f32 to vector<128x128xf32>
    %235 = arith.select %20, %233, %234 : vector<128x128xi1>, vector<128x128xf32>
    %236 = arith.addf %230, %235 : vector<128x128xf32>
    %237 = vector.extract_strided_slice %194 {offsets = [0, 7], sizes = [128, 1], strides = [1, 1]} : vector<128x9xf32> to vector<128x1xf32>
    %cst_71 = arith.constant 0.000000e+00 : f32
    %238 = vector.shape_cast %237 : vector<128x1xf32> to vector<128x1xf32>
    %239 = vector.broadcast %238 : vector<128x1xf32> to vector<128x128xf32>
    %240 = vector.broadcast %cst_71 : f32 to vector<128x128xf32>
    %241 = arith.select %22, %239, %240 : vector<128x128xi1>, vector<128x128xf32>
    %242 = arith.addf %236, %241 : vector<128x128xf32>
    %243 = vector.extract_strided_slice %194 {offsets = [0, 8], sizes = [128, 1], strides = [1, 1]} : vector<128x9xf32> to vector<128x1xf32>
    %cst_72 = arith.constant 0.000000e+00 : f32
    %244 = vector.shape_cast %243 : vector<128x1xf32> to vector<128x1xf32>
    %245 = vector.broadcast %244 : vector<128x1xf32> to vector<128x128xf32>
    %246 = vector.broadcast %cst_72 : f32 to vector<128x128xf32>
    %247 = arith.select %24, %245, %246 : vector<128x128xi1>, vector<128x128xf32>
    %248 = arith.addf %242, %247 : vector<128x128xf32>
    %cst_73 = arith.constant -1.000000e+04 : f32
    %249 = vector.shape_cast %3 : vector<1x128xi1> to vector<1x128xi1>
    %250 = vector.broadcast %249 : vector<1x128xi1> to vector<128x128xi1>
    %251 = vector.broadcast %cst_73 : f32 to vector<128x128xf32>
    %252 = arith.select %250, %248, %251 : vector<128x128xi1>, vector<128x128xf32>
    %cst_74 = arith.constant dense<0xFF800000> : vector<128xf32>
    %253 = vector.multi_reduction <maximumf>, %252, %cst_74 [1] : vector<128x128xf32> to vector<128xf32>
    %254 = vector.shape_cast %253 : vector<128xf32> to vector<128x1xf32>
    %255 = vector.broadcast %254 : vector<128x1xf32> to vector<128x128xf32>
    %256 = arith.subf %252, %255 : vector<128x128xf32>
    %257 = math.exp %256 : vector<128x128xf32>
    %cst_75 = arith.constant dense<0.000000e+00> : vector<128xf32>
    %258 = vector.multi_reduction <add>, %257, %cst_75 [1] : vector<128x128xf32> to vector<128xf32>
    %259 = vector.shape_cast %258 : vector<128xf32> to vector<128x1xf32>
    %260 = vector.broadcast %259 : vector<128x1xf32> to vector<128x128xf32>
    %261 = arith.divf %257, %260 : vector<128x128xf32>
    %cst_76 = arith.constant dense<0.000000e+00> : vector<128x32xf32>
    %262 = tpu.matmul %261, %192, %cst_76 {dimension_numbers = #tpu.dot_dimension_numbers<[1], [0], [0], [1], [0, 0, 1, 1], [], []>} : vector<128x128xf32>, vector<128x32xf32>, vector<128x32xf32> -> vector<128x32xf32>
    %cst_77 = arith.constant 0.000000e+00 : f32
    %263 = vector.broadcast %cst_77 : f32 to vector<128x128xf32>
    %264 = arith.select %8, %261, %263 : vector<128x128xi1>, vector<128x128xf32>
    %cst_78 = arith.constant dense<0.000000e+00> : vector<128xf32>
    %265 = vector.multi_reduction <add>, %264, %cst_78 [1] : vector<128x128xf32> to vector<128xf32>
    %266 = vector.shape_cast %265 : vector<128xf32> to vector<128x1xf32>
    %c0_79 = arith.constant 0 : index
    %c0_80 = arith.constant 0 : index
    %267 = vector.load %arg3[%c0_79, %c0_80] : memref<9x32xf32, #tpu.memory_space<vmem>>, vector<1x32xf32>
    %268 = vector.broadcast %266 : vector<128x1xf32> to vector<128x32xf32>
    %269 = vector.broadcast %267 : vector<1x32xf32> to vector<128x32xf32>
    %270 = arith.mulf %268, %269 : vector<128x32xf32>
    %271 = arith.addf %262, %270 : vector<128x32xf32>
    %cst_81 = arith.constant 0.000000e+00 : f32
    %272 = vector.broadcast %cst_81 : f32 to vector<128x128xf32>
    %273 = arith.select %10, %261, %272 : vector<128x128xi1>, vector<128x128xf32>
    %cst_82 = arith.constant dense<0.000000e+00> : vector<128xf32>
    %274 = vector.multi_reduction <add>, %273, %cst_82 [1] : vector<128x128xf32> to vector<128xf32>
    %275 = vector.shape_cast %274 : vector<128xf32> to vector<128x1xf32>
    %c1_83 = arith.constant 1 : index
    %c0_84 = arith.constant 0 : index
    %276 = vector.load %arg3[%c1_83, %c0_84] : memref<9x32xf32, #tpu.memory_space<vmem>>, vector<1x32xf32>
    %277 = vector.broadcast %275 : vector<128x1xf32> to vector<128x32xf32>
    %278 = vector.broadcast %276 : vector<1x32xf32> to vector<128x32xf32>
    %279 = arith.mulf %277, %278 : vector<128x32xf32>
    %280 = arith.addf %271, %279 : vector<128x32xf32>
    %cst_85 = arith.constant 0.000000e+00 : f32
    %281 = vector.broadcast %cst_85 : f32 to vector<128x128xf32>
    %282 = arith.select %12, %261, %281 : vector<128x128xi1>, vector<128x128xf32>
    %cst_86 = arith.constant dense<0.000000e+00> : vector<128xf32>
    %283 = vector.multi_reduction <add>, %282, %cst_86 [1] : vector<128x128xf32> to vector<128xf32>
    %284 = vector.shape_cast %283 : vector<128xf32> to vector<128x1xf32>
    %c2_87 = arith.constant 2 : index
    %c0_88 = arith.constant 0 : index
    %285 = vector.load %arg3[%c2_87, %c0_88] : memref<9x32xf32, #tpu.memory_space<vmem>>, vector<1x32xf32>
    %286 = vector.broadcast %284 : vector<128x1xf32> to vector<128x32xf32>
    %287 = vector.broadcast %285 : vector<1x32xf32> to vector<128x32xf32>
    %288 = arith.mulf %286, %287 : vector<128x32xf32>
    %289 = arith.addf %280, %288 : vector<128x32xf32>
    %cst_89 = arith.constant 0.000000e+00 : f32
    %290 = vector.broadcast %cst_89 : f32 to vector<128x128xf32>
    %291 = arith.select %14, %261, %290 : vector<128x128xi1>, vector<128x128xf32>
    %cst_90 = arith.constant dense<0.000000e+00> : vector<128xf32>
    %292 = vector.multi_reduction <add>, %291, %cst_90 [1] : vector<128x128xf32> to vector<128xf32>
    %293 = vector.shape_cast %292 : vector<128xf32> to vector<128x1xf32>
    %c3_91 = arith.constant 3 : index
    %c0_92 = arith.constant 0 : index
    %294 = vector.load %arg3[%c3_91, %c0_92] : memref<9x32xf32, #tpu.memory_space<vmem>>, vector<1x32xf32>
    %295 = vector.broadcast %293 : vector<128x1xf32> to vector<128x32xf32>
    %296 = vector.broadcast %294 : vector<1x32xf32> to vector<128x32xf32>
    %297 = arith.mulf %295, %296 : vector<128x32xf32>
    %298 = arith.addf %289, %297 : vector<128x32xf32>
    %cst_93 = arith.constant 0.000000e+00 : f32
    %299 = vector.broadcast %cst_93 : f32 to vector<128x128xf32>
    %300 = arith.select %16, %261, %299 : vector<128x128xi1>, vector<128x128xf32>
    %cst_94 = arith.constant dense<0.000000e+00> : vector<128xf32>
    %301 = vector.multi_reduction <add>, %300, %cst_94 [1] : vector<128x128xf32> to vector<128xf32>
    %302 = vector.shape_cast %301 : vector<128xf32> to vector<128x1xf32>
    %c4_95 = arith.constant 4 : index
    %c0_96 = arith.constant 0 : index
    %303 = vector.load %arg3[%c4_95, %c0_96] : memref<9x32xf32, #tpu.memory_space<vmem>>, vector<1x32xf32>
    %304 = vector.broadcast %302 : vector<128x1xf32> to vector<128x32xf32>
    %305 = vector.broadcast %303 : vector<1x32xf32> to vector<128x32xf32>
    %306 = arith.mulf %304, %305 : vector<128x32xf32>
    %307 = arith.addf %298, %306 : vector<128x32xf32>
    %cst_97 = arith.constant 0.000000e+00 : f32
    %308 = vector.broadcast %cst_97 : f32 to vector<128x128xf32>
    %309 = arith.select %18, %261, %308 : vector<128x128xi1>, vector<128x128xf32>
    %cst_98 = arith.constant dense<0.000000e+00> : vector<128xf32>
    %310 = vector.multi_reduction <add>, %309, %cst_98 [1] : vector<128x128xf32> to vector<128xf32>
    %311 = vector.shape_cast %310 : vector<128xf32> to vector<128x1xf32>
    %c5_99 = arith.constant 5 : index
    %c0_100 = arith.constant 0 : index
    %312 = vector.load %arg3[%c5_99, %c0_100] : memref<9x32xf32, #tpu.memory_space<vmem>>, vector<1x32xf32>
    %313 = vector.broadcast %311 : vector<128x1xf32> to vector<128x32xf32>
    %314 = vector.broadcast %312 : vector<1x32xf32> to vector<128x32xf32>
    %315 = arith.mulf %313, %314 : vector<128x32xf32>
    %316 = arith.addf %307, %315 : vector<128x32xf32>
    %cst_101 = arith.constant 0.000000e+00 : f32
    %317 = vector.broadcast %cst_101 : f32 to vector<128x128xf32>
    %318 = arith.select %20, %261, %317 : vector<128x128xi1>, vector<128x128xf32>
    %cst_102 = arith.constant dense<0.000000e+00> : vector<128xf32>
    %319 = vector.multi_reduction <add>, %318, %cst_102 [1] : vector<128x128xf32> to vector<128xf32>
    %320 = vector.shape_cast %319 : vector<128xf32> to vector<128x1xf32>
    %c6_103 = arith.constant 6 : index
    %c0_104 = arith.constant 0 : index
    %321 = vector.load %arg3[%c6_103, %c0_104] : memref<9x32xf32, #tpu.memory_space<vmem>>, vector<1x32xf32>
    %322 = vector.broadcast %320 : vector<128x1xf32> to vector<128x32xf32>
    %323 = vector.broadcast %321 : vector<1x32xf32> to vector<128x32xf32>
    %324 = arith.mulf %322, %323 : vector<128x32xf32>
    %325 = arith.addf %316, %324 : vector<128x32xf32>
    %cst_105 = arith.constant 0.000000e+00 : f32
    %326 = vector.broadcast %cst_105 : f32 to vector<128x128xf32>
    %327 = arith.select %22, %261, %326 : vector<128x128xi1>, vector<128x128xf32>
    %cst_106 = arith.constant dense<0.000000e+00> : vector<128xf32>
    %328 = vector.multi_reduction <add>, %327, %cst_106 [1] : vector<128x128xf32> to vector<128xf32>
    %329 = vector.shape_cast %328 : vector<128xf32> to vector<128x1xf32>
    %c7_107 = arith.constant 7 : index
    %c0_108 = arith.constant 0 : index
    %330 = vector.load %arg3[%c7_107, %c0_108] : memref<9x32xf32, #tpu.memory_space<vmem>>, vector<1x32xf32>
    %331 = vector.broadcast %329 : vector<128x1xf32> to vector<128x32xf32>
    %332 = vector.broadcast %330 : vector<1x32xf32> to vector<128x32xf32>
    %333 = arith.mulf %331, %332 : vector<128x32xf32>
    %334 = arith.addf %325, %333 : vector<128x32xf32>
    %cst_109 = arith.constant 0.000000e+00 : f32
    %335 = vector.broadcast %cst_109 : f32 to vector<128x128xf32>
    %336 = arith.select %24, %261, %335 : vector<128x128xi1>, vector<128x128xf32>
    %cst_110 = arith.constant dense<0.000000e+00> : vector<128xf32>
    %337 = vector.multi_reduction <add>, %336, %cst_110 [1] : vector<128x128xf32> to vector<128xf32>
    %338 = vector.shape_cast %337 : vector<128xf32> to vector<128x1xf32>
    %c8_111 = arith.constant 8 : index
    %c0_112 = arith.constant 0 : index
    %339 = vector.load %arg3[%c8_111, %c0_112] : memref<9x32xf32, #tpu.memory_space<vmem>>, vector<1x32xf32>
    %340 = vector.broadcast %338 : vector<128x1xf32> to vector<128x32xf32>
    %341 = vector.broadcast %339 : vector<1x32xf32> to vector<128x32xf32>
    %342 = arith.mulf %340, %341 : vector<128x32xf32>
    %343 = arith.addf %334, %342 : vector<128x32xf32>
    %344 = tpu.concatenate %184, %343 in 1 : vector<128x32xf32>, vector<128x32xf32> -> vector<128x64xf32>
    %c0_113 = arith.constant 0 : index
    %c0_114 = arith.constant 0 : index
    %c0_115 = arith.constant 0 : index
    %345 = vector.load %arg5[%c0_113, %c0_114, %c0_115] : memref<1x128x64xf32, #tpu.memory_space<vmem>>, vector<1x128x64xf32>
    %346 = vector.shape_cast %345 : vector<1x128x64xf32> to vector<128x64xf32>
    %347 = vector.shape_cast %344 : vector<128x64xf32> to vector<1x128x64xf32>
    tpu.vector_store %arg5[%c0_113, %c0_114, %c0_115], %347 {strides = array<i32>} : memref<1x128x64xf32, #tpu.memory_space<vmem>>, vector<1x128x64xf32>,
    return
  }
  func.func @transform_0(%arg0: i32) -> (i32, i32, i32) {
    %c0_i32 = arith.constant 0 : i32
    %c0_i32_0 = arith.constant 0 : i32
    %c0_i32_1 = arith.constant 0 : i32
    return %arg0, %c0_i32, %c0_i32_0 : i32, i32, i32
  }
  func.func @transform_1(%arg0: i32) -> (i32, i32) {
    %c0_i32 = arith.constant 0 : i32
    %c0_i32_0 = arith.constant 0 : i32
    %c0_i32_1 = arith.constant 0 : i32
    return %c0_i32, %c0_i32_0 : i32, i32
  }
  func.func @transform_2(%arg0: i32) -> (i32, i32) {
    %c0_i32 = arith.constant 0 : i32
    %c0_i32_0 = arith.constant 0 : i32
    %c0_i32_1 = arith.constant 0 : i32
    return %c0_i32, %c0_i32_0 : i32, i32
  }
  func.func @transform_3(%arg0: i32) -> (i32, i32, i32) {
    %c0_i32 = arith.constant 0 : i32
    %c0_i32_0 = arith.constant 0 : i32
    %c0_i32_1 = arith.constant 0 : i32
    return %arg0, %c0_i32, %c0_i32_0 : i32, i32, i32
  }
  func.func @transform_4(%arg0: i32) -> (i32, i32, i32) {
    %c0_i32 = arith.constant 0 : i32
    %c0_i32_0 = arith.constant 0 : i32
    %c0_i32_1 = arith.constant 0 : i32
    return %arg0, %c0_i32, %c0_i32_0 : i32, i32, i32
  }
}

module attributes {stable_mosaic.version = 11 : i64} {
  func.func @_conv_mask_kernel(%arg0: i32, %arg1: memref<1x136x64xf32, #tpu.memory_space<vmem>>, %arg2: memref<3x64x128xf32, #tpu.memory_space<vmem>>, %arg3: memref<1x128xf32, #tpu.memory_space<vmem>>, %arg4: memref<1x128x1xf32, #tpu.memory_space<vmem>>, %arg5: memref<1x128x128xf32, #tpu.memory_space<vmem>>) attributes {dimension_semantics = [#tpu.dimension_semantics<parallel>], iteration_bounds = array<i64: 2>, scalar_prefetch = 0 : i64, scratch_operands = 0 : i64, tpu.core_type = #tpu.core_type<tc>, window_params = [{transform_indices = @transform_0, window_bounds = array<i64: 1, 136, 64>}, {pipeline_mode = #tpu.pipeline_mode<synchronous>, transform_indices = @transform_1, window_bounds = array<i64: 3, 64, 128>}, {pipeline_mode = #tpu.pipeline_mode<synchronous>, transform_indices = @transform_2, window_bounds = array<i64: 1, 128>}, {transform_indices = @transform_3, window_bounds = array<i64: 1, 128, 1>}, {transform_indices = @transform_4, window_bounds = array<i64: 1, 128, 128>}]} {
    %cst = arith.constant 0.000000e+00 : f32
    %0 = vector.broadcast %cst : f32 to vector<128x128xf32>
    %c0 = arith.constant 0 : index
    %c0_0 = arith.constant 0 : index
    %c0_1 = arith.constant 0 : index
    %1 = vector.load %arg1[%c0, %c0_0, %c0_1] : memref<1x136x64xf32, #tpu.memory_space<vmem>>, vector<1x128x64xf32>
    %2 = vector.shape_cast %1 : vector<1x128x64xf32> to vector<128x64xf32>
    %c0_2 = arith.constant 0 : index
    %c0_3 = arith.constant 0 : index
    %c0_4 = arith.constant 0 : index
    %3 = vector.load %arg2[%c0_2, %c0_3, %c0_4] : memref<3x64x128xf32, #tpu.memory_space<vmem>>, vector<1x64x128xf32>
    %4 = vector.shape_cast %3 : vector<1x64x128xf32> to vector<64x128xf32>
    %cst_5 = arith.constant dense<0.000000e+00> : vector<128x128xf32>
    %5 = tpu.matmul %2, %4, %cst_5 {dimension_numbers = #tpu.dot_dimension_numbers<[1], [0], [0], [1], [0, 0, 1, 1], [], []>} : vector<128x64xf32>, vector<64x128xf32>, vector<128x128xf32> -> vector<128x128xf32>
    %6 = arith.addf %0, %5 : vector<128x128xf32>
    %c0_6 = arith.constant 0 : index
    %c1 = arith.constant 1 : index
    %c0_7 = arith.constant 0 : index
    %7 = vector.load %arg1[%c0_6, %c1, %c0_7] : memref<1x136x64xf32, #tpu.memory_space<vmem>>, vector<1x128x64xf32>
    %8 = vector.shape_cast %7 : vector<1x128x64xf32> to vector<128x64xf32>
    %c1_8 = arith.constant 1 : index
    %c0_9 = arith.constant 0 : index
    %c0_10 = arith.constant 0 : index
    %9 = vector.load %arg2[%c1_8, %c0_9, %c0_10] : memref<3x64x128xf32, #tpu.memory_space<vmem>>, vector<1x64x128xf32>
    %10 = vector.shape_cast %9 : vector<1x64x128xf32> to vector<64x128xf32>
    %cst_11 = arith.constant dense<0.000000e+00> : vector<128x128xf32>
    %11 = tpu.matmul %8, %10, %cst_11 {dimension_numbers = #tpu.dot_dimension_numbers<[1], [0], [0], [1], [0, 0, 1, 1], [], []>} : vector<128x64xf32>, vector<64x128xf32>, vector<128x128xf32> -> vector<128x128xf32>
    %12 = arith.addf %6, %11 : vector<128x128xf32>
    %c0_12 = arith.constant 0 : index
    %c2 = arith.constant 2 : index
    %c0_13 = arith.constant 0 : index
    %13 = vector.load %arg1[%c0_12, %c2, %c0_13] : memref<1x136x64xf32, #tpu.memory_space<vmem>>, vector<1x128x64xf32>
    %14 = vector.shape_cast %13 : vector<1x128x64xf32> to vector<128x64xf32>
    %c2_14 = arith.constant 2 : index
    %c0_15 = arith.constant 0 : index
    %c0_16 = arith.constant 0 : index
    %15 = vector.load %arg2[%c2_14, %c0_15, %c0_16] : memref<3x64x128xf32, #tpu.memory_space<vmem>>, vector<1x64x128xf32>
    %16 = vector.shape_cast %15 : vector<1x64x128xf32> to vector<64x128xf32>
    %cst_17 = arith.constant dense<0.000000e+00> : vector<128x128xf32>
    %17 = tpu.matmul %14, %16, %cst_17 {dimension_numbers = #tpu.dot_dimension_numbers<[1], [0], [0], [1], [0, 0, 1, 1], [], []>} : vector<128x64xf32>, vector<64x128xf32>, vector<128x128xf32> -> vector<128x128xf32>
    %18 = arith.addf %12, %17 : vector<128x128xf32>
    %c0_18 = arith.constant 0 : index
    %c0_19 = arith.constant 0 : index
    %19 = vector.load %arg3[%c0_18, %c0_19] : memref<1x128xf32, #tpu.memory_space<vmem>>, vector<1x128xf32>
    %20 = vector.broadcast %19 : vector<1x128xf32> to vector<128x128xf32>
    %21 = arith.addf %18, %20 : vector<128x128xf32>
    %cst_20 = arith.constant 0.000000e+00 : f32
    %22 = vector.broadcast %cst_20 : f32 to vector<128x128xf32>
    %23 = arith.maximumf %21, %22 : vector<128x128xf32>
    %c0_21 = arith.constant 0 : index
    %c0_22 = arith.constant 0 : index
    %c0_23 = arith.constant 0 : index
    %24 = vector.load %arg4[%c0_21, %c0_22, %c0_23] : memref<1x128x1xf32, #tpu.memory_space<vmem>>, vector<1x128x1xf32>
    %25 = vector.shape_cast %24 : vector<1x128x1xf32> to vector<128x1xf32>
    %26 = vector.broadcast %25 : vector<128x1xf32> to vector<128x128xf32>
    %27 = arith.mulf %23, %26 : vector<128x128xf32>
    %c0_24 = arith.constant 0 : index
    %c0_25 = arith.constant 0 : index
    %c0_26 = arith.constant 0 : index
    %28 = vector.load %arg5[%c0_24, %c0_25, %c0_26] : memref<1x128x128xf32, #tpu.memory_space<vmem>>, vector<1x128x128xf32>
    %29 = vector.shape_cast %28 : vector<1x128x128xf32> to vector<128x128xf32>
    %30 = vector.shape_cast %27 : vector<128x128xf32> to vector<1x128x128xf32>
    tpu.vector_store %arg5[%c0_24, %c0_25, %c0_26], %30 {strides = array<i32>} : memref<1x128x128xf32, #tpu.memory_space<vmem>>, vector<1x128x128xf32>,
    return
  }
  func.func @transform_0(%arg0: i32) -> (i32, i32, i32) {
    %c0_i32 = arith.constant 0 : i32
    %c0_i32_0 = arith.constant 0 : i32
    %c0_i32_1 = arith.constant 0 : i32
    return %arg0, %c0_i32, %c0_i32_0 : i32, i32, i32
  }
  func.func @transform_1(%arg0: i32) -> (i32, i32, i32) {
    %c0_i32 = arith.constant 0 : i32
    %c0_i32_0 = arith.constant 0 : i32
    %c0_i32_1 = arith.constant 0 : i32
    %c0_i32_2 = arith.constant 0 : i32
    return %c0_i32, %c0_i32_0, %c0_i32_1 : i32, i32, i32
  }
  func.func @transform_2(%arg0: i32) -> (i32, i32) {
    %c0_i32 = arith.constant 0 : i32
    %c0_i32_0 = arith.constant 0 : i32
    %c0_i32_1 = arith.constant 0 : i32
    return %c0_i32, %c0_i32_0 : i32, i32
  }
  func.func @transform_3(%arg0: i32) -> (i32, i32, i32) {
    %c0_i32 = arith.constant 0 : i32
    %c0_i32_0 = arith.constant 0 : i32
    %c0_i32_1 = arith.constant 0 : i32
    return %arg0, %c0_i32, %c0_i32_0 : i32, i32, i32
  }
  func.func @transform_4(%arg0: i32) -> (i32, i32, i32) {
    %c0_i32 = arith.constant 0 : i32
    %c0_i32_0 = arith.constant 0 : i32
    %c0_i32_1 = arith.constant 0 : i32
    return %arg0, %c0_i32, %c0_i32_0 : i32, i32, i32
  }
}

module attributes {stable_mosaic.version = 11 : i64} {
  func.func @_conv_mask_kernel(%arg0: i32, %arg1: memref<1x136x128xf32, #tpu.memory_space<vmem>>, %arg2: memref<3x128x64xf32, #tpu.memory_space<vmem>>, %arg3: memref<1x64xf32, #tpu.memory_space<vmem>>, %arg4: memref<1x128x1xf32, #tpu.memory_space<vmem>>, %arg5: memref<1x128x64xf32, #tpu.memory_space<vmem>>) attributes {dimension_semantics = [#tpu.dimension_semantics<parallel>], iteration_bounds = array<i64: 2>, scalar_prefetch = 0 : i64, scratch_operands = 0 : i64, tpu.core_type = #tpu.core_type<tc>, window_params = [{transform_indices = @transform_0, window_bounds = array<i64: 1, 136, 128>}, {pipeline_mode = #tpu.pipeline_mode<synchronous>, transform_indices = @transform_1, window_bounds = array<i64: 3, 128, 64>}, {pipeline_mode = #tpu.pipeline_mode<synchronous>, transform_indices = @transform_2, window_bounds = array<i64: 1, 64>}, {transform_indices = @transform_3, window_bounds = array<i64: 1, 128, 1>}, {transform_indices = @transform_4, window_bounds = array<i64: 1, 128, 64>}]} {
    %cst = arith.constant 0.000000e+00 : f32
    %0 = vector.broadcast %cst : f32 to vector<128x64xf32>
    %c0 = arith.constant 0 : index
    %c0_0 = arith.constant 0 : index
    %c0_1 = arith.constant 0 : index
    %1 = vector.load %arg1[%c0, %c0_0, %c0_1] : memref<1x136x128xf32, #tpu.memory_space<vmem>>, vector<1x128x128xf32>
    %2 = vector.shape_cast %1 : vector<1x128x128xf32> to vector<128x128xf32>
    %c0_2 = arith.constant 0 : index
    %c0_3 = arith.constant 0 : index
    %c0_4 = arith.constant 0 : index
    %3 = vector.load %arg2[%c0_2, %c0_3, %c0_4] : memref<3x128x64xf32, #tpu.memory_space<vmem>>, vector<1x128x64xf32>
    %4 = vector.shape_cast %3 : vector<1x128x64xf32> to vector<128x64xf32>
    %cst_5 = arith.constant dense<0.000000e+00> : vector<128x64xf32>
    %5 = tpu.matmul %2, %4, %cst_5 {dimension_numbers = #tpu.dot_dimension_numbers<[1], [0], [0], [1], [0, 0, 1, 1], [], []>} : vector<128x128xf32>, vector<128x64xf32>, vector<128x64xf32> -> vector<128x64xf32>
    %6 = arith.addf %0, %5 : vector<128x64xf32>
    %c0_6 = arith.constant 0 : index
    %c1 = arith.constant 1 : index
    %c0_7 = arith.constant 0 : index
    %7 = vector.load %arg1[%c0_6, %c1, %c0_7] : memref<1x136x128xf32, #tpu.memory_space<vmem>>, vector<1x128x128xf32>
    %8 = vector.shape_cast %7 : vector<1x128x128xf32> to vector<128x128xf32>
    %c1_8 = arith.constant 1 : index
    %c0_9 = arith.constant 0 : index
    %c0_10 = arith.constant 0 : index
    %9 = vector.load %arg2[%c1_8, %c0_9, %c0_10] : memref<3x128x64xf32, #tpu.memory_space<vmem>>, vector<1x128x64xf32>
    %10 = vector.shape_cast %9 : vector<1x128x64xf32> to vector<128x64xf32>
    %cst_11 = arith.constant dense<0.000000e+00> : vector<128x64xf32>
    %11 = tpu.matmul %8, %10, %cst_11 {dimension_numbers = #tpu.dot_dimension_numbers<[1], [0], [0], [1], [0, 0, 1, 1], [], []>} : vector<128x128xf32>, vector<128x64xf32>, vector<128x64xf32> -> vector<128x64xf32>
    %12 = arith.addf %6, %11 : vector<128x64xf32>
    %c0_12 = arith.constant 0 : index
    %c2 = arith.constant 2 : index
    %c0_13 = arith.constant 0 : index
    %13 = vector.load %arg1[%c0_12, %c2, %c0_13] : memref<1x136x128xf32, #tpu.memory_space<vmem>>, vector<1x128x128xf32>
    %14 = vector.shape_cast %13 : vector<1x128x128xf32> to vector<128x128xf32>
    %c2_14 = arith.constant 2 : index
    %c0_15 = arith.constant 0 : index
    %c0_16 = arith.constant 0 : index
    %15 = vector.load %arg2[%c2_14, %c0_15, %c0_16] : memref<3x128x64xf32, #tpu.memory_space<vmem>>, vector<1x128x64xf32>
    %16 = vector.shape_cast %15 : vector<1x128x64xf32> to vector<128x64xf32>
    %cst_17 = arith.constant dense<0.000000e+00> : vector<128x64xf32>
    %17 = tpu.matmul %14, %16, %cst_17 {dimension_numbers = #tpu.dot_dimension_numbers<[1], [0], [0], [1], [0, 0, 1, 1], [], []>} : vector<128x128xf32>, vector<128x64xf32>, vector<128x64xf32> -> vector<128x64xf32>
    %18 = arith.addf %12, %17 : vector<128x64xf32>
    %c0_18 = arith.constant 0 : index
    %c0_19 = arith.constant 0 : index
    %19 = vector.load %arg3[%c0_18, %c0_19] : memref<1x64xf32, #tpu.memory_space<vmem>>, vector<1x64xf32>
    %20 = vector.broadcast %19 : vector<1x64xf32> to vector<128x64xf32>
    %21 = arith.addf %18, %20 : vector<128x64xf32>
    %c0_20 = arith.constant 0 : index
    %c0_21 = arith.constant 0 : index
    %c0_22 = arith.constant 0 : index
    %22 = vector.load %arg4[%c0_20, %c0_21, %c0_22] : memref<1x128x1xf32, #tpu.memory_space<vmem>>, vector<1x128x1xf32>
    %23 = vector.shape_cast %22 : vector<1x128x1xf32> to vector<128x1xf32>
    %24 = vector.broadcast %23 : vector<128x1xf32> to vector<128x64xf32>
    %25 = arith.mulf %21, %24 : vector<128x64xf32>
    %c0_23 = arith.constant 0 : index
    %c0_24 = arith.constant 0 : index
    %c0_25 = arith.constant 0 : index
    %26 = vector.load %arg5[%c0_23, %c0_24, %c0_25] : memref<1x128x64xf32, #tpu.memory_space<vmem>>, vector<1x128x64xf32>
    %27 = vector.shape_cast %26 : vector<1x128x64xf32> to vector<128x64xf32>
    %28 = vector.shape_cast %25 : vector<128x64xf32> to vector<1x128x64xf32>
    tpu.vector_store %arg5[%c0_23, %c0_24, %c0_25], %28 {strides = array<i32>} : memref<1x128x64xf32, #tpu.memory_space<vmem>>, vector<1x128x64xf32>,
    return
  }
  func.func @transform_0(%arg0: i32) -> (i32, i32, i32) {
    %c0_i32 = arith.constant 0 : i32
    %c0_i32_0 = arith.constant 0 : i32
    %c0_i32_1 = arith.constant 0 : i32
    return %arg0, %c0_i32, %c0_i32_0 : i32, i32, i32
  }
  func.func @transform_1(%arg0: i32) -> (i32, i32, i32) {
    %c0_i32 = arith.constant 0 : i32
    %c0_i32_0 = arith.constant 0 : i32
    %c0_i32_1 = arith.constant 0 : i32
    %c0_i32_2 = arith.constant 0 : i32
    return %c0_i32, %c0_i32_0, %c0_i32_1 : i32, i32, i32
  }
  func.func @transform_2(%arg0: i32) -> (i32, i32) {
    %c0_i32 = arith.constant 0 : i32
    %c0_i32_0 = arith.constant 0 : i32
    %c0_i32_1 = arith.constant 0 : i32
    return %c0_i32, %c0_i32_0 : i32, i32
  }
  func.func @transform_3(%arg0: i32) -> (i32, i32, i32) {
    %c0_i32 = arith.constant 0 : i32
    %c0_i32_0 = arith.constant 0 : i32
    %c0_i32_1 = arith.constant 0 : i32
    return %arg0, %c0_i32, %c0_i32_0 : i32, i32, i32
  }
  func.func @transform_4(%arg0: i32) -> (i32, i32, i32) {
    %c0_i32 = arith.constant 0 : i32
    %c0_i32_0 = arith.constant 0 : i32
    %c0_i32_1 = arith.constant 0 : i32
    return %arg0, %c0_i32, %c0_i32_0 : i32, i32, i32
  }
}

</mosaic_0001>

<llo_original>
// kernel: vits_text_encoder_forward.17
$region0: #{vits_text_encoder_forward.17}
  #allocation0 [shape = 'u32[]', space=smem, size = 0x4, offset = 0x4, fixed_abs, tag = 'smem constant byte address 0x4 - core index']
  #allocation1 [shape = 'u32[144,128]{1,0:T(1,128)}', space=vmem, size = 0x12000, scoped, tag = 'internal scratch']
  %s0 = inlined_call_operand.vmem [shape: f32[256,64], index: 0, kind: input, shape index: {}]
  %s1 = inlined_call_operand.vmem [shape: f32[64,64], index: 1, kind: input, shape index: {}]
  %s2 = inlined_call_operand.vmem [shape: f32[1,64], index: 2, kind: input, shape index: {}]
  %s3 = inlined_call_operand.vmem [shape: f32[256,64], index: 3, kind: output, shape index: {}]
  %s4 = sld [smem:[#allocation0]]
  $region45: #{vits_text_encoder_forward.17} parent=0
    _
  %s6 = ssub.s32 1, %s4
  %s7 = scalar_select 0, %s6, %s4
  loop: start=0, step=1, limit=4
  $region2: #{vits_text_encoder_forward.17} parent=0 // loop_pre_header
    _
  $region3: #{vits_text_encoder_forward.17} parent=0 // loop_header
    %s9 = sphi 0, %s13
    %p10 = scmp.ge.s32.totalorder %s9, 4
    %s19 = sphi 0, %s21
    %s22 = sphi 0, %s19
    %s23 = sphi 0, %s22
    %s39 = sphi 0, %s23
    %s43 = sphi 0, %s43
    %s45 = sphi 0, %s43
    %s46 = sphi 0, %s45
    %s60 = sphi 0, %s46
    %s64 = sphi 0, %s64
    %s66 = sphi 0, %s64
    %s67 = sphi 0, %s66
    %s81 = sphi 0, %s67
    %s87 = sphi 0, %s89
    %s90 = sphi 0, %s87
    %s91 = sphi 0, %s90
    %s107 = sphi 0, %s91
  $region4: #{vits_text_encoder_forward.17} parent=0 // loop_header_branch
    %12 = sbr.rel (%p10) target = $region8
  $region5: #{vits_text_encoder_forward.17} parent=0 // loop_body
    %s14 = ssub.s32 %s9, 1
    %s15 = ssub.s32 %s9, 2
    %s16 = sadd.s32 %s9, 1
    %s17 = ssub.s32 %s9, %s16
    %p18 = scmp.eq.s32.totalorder %s17, 0
    %s20 = sadd.s32 %s19, 1
    %s21 = scalar_select %p18, %s19, %s20
    %p24 = pneg %p18
    %p25 = scmp.eq.s32.totalorder %s9, 1
    %p26 = por %p24, %p25
    %p27 = scmp.ne.s32.totalorder %s19, %s22
    %p28 = scmp.eq.s32.totalorder %s9, 0
    %p29 = por %p27, %p28
    %p30 = scmp.ne.s32.totalorder %s19, %s22
    %p31 = scmp.eq.s32.totalorder %s14, 1
    %p32 = por %p30, %p31
    %p33 = scmp.ne.s32.totalorder %s22, %s23
    %p34 = scmp.eq.s32.totalorder %s14, 0
    %p35 = por %p33, %p34
    %p36 = scmp.ne.s32.totalorder %s22, %s23
    %p37 = scmp.eq.s32.totalorder %s15, 1
    %p38 = por %p36, %p37
    %p40 = scmp.ne.s32.totalorder %s23, %s39
    %p41 = scmp.eq.s32.totalorder %s15, 0
    %p42 = por %p40, %p41
    %s44 = sadd.s32 %s43, 1
    %p47 = scmp.eq.s32.totalorder %s9, 1
    %p48 = scmp.ne.s32.totalorder %s43, %s45
    %p49 = scmp.eq.s32.totalorder %s9, 0
    %p50 = por %p48, %p49
    %p51 = scmp.ne.s32.totalorder %s43, %s45
    %p52 = scmp.eq.s32.totalorder %s14, 1
    %p53 = por %p51, %p52
    %p54 = scmp.ne.s32.totalorder %s45, %s46
    %p55 = scmp.eq.s32.totalorder %s14, 0
    %p56 = por %p54, %p55
    %p57 = scmp.ne.s32.totalorder %s45, %s46
    %p58 = scmp.eq.s32.totalorder %s15, 1
    %p59 = por %p57, %p58
    %p61 = scmp.ne.s32.totalorder %s46, %s60
    %p62 = scmp.eq.s32.totalorder %s15, 0
    %p63 = por %p61, %p62
    %s65 = sadd.s32 %s64, 1
    %p68 = scmp.eq.s32.totalorder %s9, 1
    %p69 = scmp.ne.s32.totalorder %s64, %s66
    %p70 = scmp.eq.s32.totalorder %s9, 0
    %p71 = por %p69, %p70
    %p72 = scmp.ne.s32.totalorder %s64, %s66
    %p73 = scmp.eq.s32.totalorder %s14, 1
    %p74 = por %p72, %p73
    %p75 = scmp.ne.s32.totalorder %s66, %s67
    %p76 = scmp.eq.s32.totalorder %s14, 0
    %p77 = por %p75, %p76
    %p78 = scmp.ne.s32.totalorder %s66, %s67
    %p79 = scmp.eq.s32.totalorder %s15, 1
    %p80 = por %p78, %p79
    %p82 = scmp.ne.s32.totalorder %s67, %s81
    %p83 = scmp.eq.s32.totalorder %s15, 0
    %p84 = por %p82, %p83
    %s85 = ssub.s32 %s9, %s16
    %p86 = scmp.eq.s32.totalorder %s85, 0
    %s88 = sadd.s32 %s87, 1
    %s89 = scalar_select %p86, %s87, %s88
    %p92 = pneg %p86
    %p93 = scmp.eq.s32.totalorder %s9, 1
    %p94 = por %p92, %p93
    %p95 = scmp.ne.s32.totalorder %s87, %s90
    %p96 = scmp.eq.s32.totalorder %s9, 0
    %p97 = por %p95, %p96
    %p98 = scmp.ne.s32.totalorder %s87, %s90
    %p99 = scmp.eq.s32.totalorder %s14, 1
    %p100 = por %p98, %p99
    %p101 = scmp.ne.s32.totalorder %s90, %s91
    %p102 = scmp.eq.s32.totalorder %s14, 0
    %p103 = por %p101, %p102
    %p104 = scmp.ne.s32.totalorder %s90, %s91
    %p105 = scmp.eq.s32.totalorder %s15, 1
    %p106 = por %p104, %p105
    %p108 = scmp.ne.s32.totalorder %s91, %s107
    %p109 = scmp.eq.s32.totalorder %s15, 0
    %p110 = por %p108, %p109
    %p111 = scmp.le.s32.totalorder 1, %s9
    %p112 = scmp.lt.s32.totalorder %s9, 3
    %p113 = pnand %p111, %p112
    %p114 = pneg %p113
    // Predicated region
    $region9: #{vits_text_encoder_forward.17} parent=5 // pred_check
      _
    $region10: #{vits_text_encoder_forward.17} parent=5 // pred_check_branch
      %116 = sbr.rel (%p113) target = $region12
    $region11: #{vits_text_encoder_forward.17} parent=5 // pred_region
      %s117 = ssub.s32 %s9, 1
      // Predicated region
      $region13: #{vits_text_encoder_forward.17} parent=11 // pred_check
        %p118 = pneg %p56
      $region14: #{vits_text_encoder_forward.17} parent=11 // pred_check_branch
        %120 = sbr.rel (%p118) target = $region16
      $region15: #{vits_text_encoder_forward.17} parent=11 // pred_region
        _
      $region16: #{vits_text_encoder_forward.17} parent=11 // pred_fallthru
        _
      // Predicated region
      $region17: #{vits_text_encoder_forward.17} parent=11 // pred_check
        %p121 = pneg %p77
      $region18: #{vits_text_encoder_forward.17} parent=11 // pred_check_branch
        %123 = sbr.rel (%p121) target = $region20
      $region19: #{vits_text_encoder_forward.17} parent=11 // pred_region
        _
      $region20: #{vits_text_encoder_forward.17} parent=11 // pred_fallthru
        _
    $region12: #{vits_text_encoder_forward.17} parent=5 // pred_fallthru
      _
    %p124 = scmp.lt.s32.totalorder %s9, 2
    // Predicated region
    $region21: #{vits_text_encoder_forward.17} parent=5 // pred_check
      %p125 = pneg %p124
    $region22: #{vits_text_encoder_forward.17} parent=5 // pred_check_branch
      %127 = sbr.rel (%p125) target = $region24
    $region23: #{vits_text_encoder_forward.17} parent=5 // pred_region
      // Predicated region
      $region25: #{vits_text_encoder_forward.17} parent=23 // pred_check
        %p128 = pneg %p29
      $region26: #{vits_text_encoder_forward.17} parent=23 // pred_check_branch
        %130 = sbr.rel (%p128) target = $region28
      $region27: #{vits_text_encoder_forward.17} parent=23 // pred_region
        %s131 = smul.u32 16, %s9
        %p132 = scmp.lt.s32.totalorder %s131, 31
        %s133 = scalar_select %p132, %s131, 31
        %s134 = smul.addr %s133, 8
        %s135 = scalar_lea.vmem %s0, %s134
        %s136 = smul.u32 16, %s9
      $region28: #{vits_text_encoder_forward.17} parent=23 // pred_fallthru
        _
    $region24: #{vits_text_encoder_forward.17} parent=5 // pred_fallthru
      _
    %p137 = scmp.le.s32.totalorder 1, %s9
    %p138 = scmp.lt.s32.totalorder %s9, 3
    %p139 = pnand %p137, %p138
    %p140 = pneg %p139
    // Predicated region
    $region29: #{vits_text_encoder_forward.17} parent=5 // pred_check
      _
    $region30: #{vits_text_encoder_forward.17} parent=5 // pred_check_branch
      %142 = sbr.rel (%p139) target = $region32
    $region31: #{vits_text_encoder_forward.17} parent=5 // pred_region
      %s143 = ssub.s32 %s9, 1
      %s144 = smul.u32 16, %s14
      %p145 = scmp.lt.s32.totalorder %s144, 31
      %s146 = scalar_select %p145, %s144, 31
      %s147 = smul.addr %s146, 8
      %s148 = scalar_lea.vmem %s0, %s147
      %p149 = pneg %p35
      %p150 = pneg %p32
      %p151 = pneg %p56
      %p152 = pneg %p53
      %p153 = pneg %p77
      %p154 = pneg %p74
      %p155 = pneg %p103
      %p156 = pneg %p100
      %s157 = smul.u32 16, %s14
      %p158 = scmp.lt.s32.totalorder %s157, 31
      %s159 = scalar_select %p158, %s157, 31
      %s160 = smul.addr %s159, 8
      %s161 = scalar_lea.vmem %s3, %s160
      %s162 = smul.u32 16, %s14
      %p163 = scmp.lt.s32.totalorder %s162, 31
      %s164 = scalar_select %p163, %s162, 31
      %s165 = smul.addr %s164, 8
      %s166 = scalar_lea.vmem %s0, %s165
      %s167 = smul.u32 16, %s14
      %s168 = smul.u32 16, %s14
      %p169 = scmp.lt.s32.totalorder %s168, 31
      %s170 = scalar_select %p169, %s168, 31
      %s171 = smul.addr %s170, 8
      %s172 = scalar_lea.vmem %s3, %s171
      %s173 = smul.u32 16, %s14
      %v174 = vld [vmem:[%s166] sm:$0xff]
      %v175 = vld [vmem:[%s166 + $0x8] sm:$0xff]
      %v176 = vld [vmem:[%s166 + $0x10] sm:$0xff]
      %v177 = vld [vmem:[%s166 + $0x18] sm:$0xff]
      %v178 = vld [vmem:[%s166 + $0x20] sm:$0xff]
      %v179 = vld [vmem:[%s166 + $0x28] sm:$0xff]
      %v180 = vld [vmem:[%s166 + $0x30] sm:$0xff]
      %v181 = vld [vmem:[%s166 + $0x38] sm:$0xff]
      %v182 = vld [vmem:[%s166 + $0x40] sm:$0xff]
      %v183 = vld [vmem:[%s166 + $0x48] sm:$0xff]
      %v184 = vld [vmem:[%s166 + $0x50] sm:$0xff]
      %v185 = vld [vmem:[%s166 + $0x58] sm:$0xff]
      %v186 = vld [vmem:[%s166 + $0x60] sm:$0xff]
      %v187 = vld [vmem:[%s166 + $0x68] sm:$0xff]
      %v188 = vld [vmem:[%s166 + $0x70] sm:$0xff]
      %v189 = vld [vmem:[%s166 + $0x78] sm:$0xff]
      %v190 = vld [vmem:[%s1] sm:$0xff]
      %v191 = vld [vmem:[%s1 + $0x8] sm:$0xff]
      %v192 = vld [vmem:[%s1 + $0x10] sm:$0xff]
      %v193 = vld [vmem:[%s1 + $0x18] sm:$0xff]
      %v194 = vld [vmem:[%s1 + $0x20] sm:$0xff]
      %v195 = vld [vmem:[%s1 + $0x28] sm:$0xff]
      %v196 = vld [vmem:[%s1 + $0x30] sm:$0xff]
      %v197 = vld [vmem:[%s1 + $0x38] sm:$0xff]
      %v198 = vld [vmem:[%s2] sm:$0x1]
      %v200 = vlaneseq
      %v201 = vshrl.u32 %v200, 7
      %v202 = vsub.s32 0, %v201
      %v203 = vrot.slane %v198, %v202
      %vm205 = vcmask 523264
      %v207 = vsel %vm205, %v174, 0
      %v210 = vsel %vm205, %v175, 0
      %v213 = vsel %vm205, %v176, 0
      %v216 = vsel %vm205, %v177, 0
      %v219 = vsel %vm205, %v178, 0
      %v222 = vsel %vm205, %v179, 0
      %v225 = vsel %vm205, %v180, 0
      %v228 = vsel %vm205, %v181, 0
      %v231 = vsel %vm205, %v182, 0
      %v234 = vsel %vm205, %v183, 0
      %v237 = vsel %vm205, %v184, 0
      %v240 = vsel %vm205, %v185, 0
      %v243 = vsel %vm205, %v186, 0
      %v246 = vsel %vm205, %v187, 0
      %v249 = vsel %vm205, %v188, 0
      %v252 = vsel %vm205, %v189, 0
      %254 = vmatprep.subr.mxu0 0.0
      %255 = vmatpush1.msra.mxu0 0.0
      %256 = vmatprep.subr.mxu0 0.0
      %257 = vmatpush1.msra.mxu0 0.0
      %258 = vmatprep.subr.mxu0 0.0
      %259 = vmatpush1.msra.mxu0 0.0
      %260 = vmatprep.subr.mxu0 0.0
      %261 = vmatpush1.msra.mxu0 0.0
      %262 = vmatprep.subr.mxu0 0.0
      %263 = vmatpush1.msra.mxu0 0.0
      %264 = vmatprep.subr.mxu0 0.0
      %265 = vmatpush1.msra.mxu0 0.0
      %266 = vmatprep.subr.mxu0 0.0
      %267 = vmatpush1.msra.mxu0 0.0
      %268 = vmatprep.subr.mxu0 0.0
      %269 = vmatpush1.msra.mxu0 0.0
      %270 = vmatprep.subr.mxu0 0.0
      %271 = vmatpush1.msra.mxu0 %v197
      %272 = vmatprep.subr.mxu0 0.0
      %273 = vmatpush1.msra.mxu0 %v196
      %274 = vmatprep.subr.mxu0 0.0
      %275 = vmatpush1.msra.mxu0 %v195
      %276 = vmatprep.subr.mxu0 0.0
      %277 = vmatpush1.msra.mxu0 %v194
      %278 = vmatprep.subr.mxu0 0.0
      %279 = vmatpush1.msra.mxu0 %v193
      %280 = vmatprep.subr.mxu0 0.0
      %281 = vmatpush1.msra.mxu0 %v192
      %282 = vmatprep.subr.mxu0 0.0
      %283 = vmatpush1.msra.mxu0 %v191
      %284 = vmatprep.subr.mxu0 0.0
      %285 = vmatpush1.msra.mxu0 %v190
      %286 = vmatprep.subr.mxu0 0.0
      %287 = vmatpush2.msra.mxu0 0.0
      %288 = vmatprep.subr.mxu0 0.0
      %289 = vmatpush2.msra.mxu0 0.0
      %290 = vmatprep.subr.mxu0 0.0
      %291 = vmatpush2.msra.mxu0 0.0
      %292 = vmatprep.subr.mxu0 0.0
      %293 = vmatpush2.msra.mxu0 0.0
      %294 = vmatprep.subr.mxu0 0.0
      %295 = vmatpush2.msra.mxu0 0.0
      %296 = vmatprep.subr.mxu0 0.0
      %297 = vmatpush2.msra.mxu0 0.0
      %298 = vmatprep.subr.mxu0 0.0
      %299 = vmatpush2.msra.mxu0 0.0
      %300 = vmatprep.subr.mxu0 0.0
      %301 = vmatpush2.msra.mxu0 0.0
      %302 = vmatprep.subr.mxu0 0.0
      %303 = vmatpush2.msra.mxu0 0.0
      %304 = vmatprep.subr.mxu0 0.0
      %305 = vmatpush2.msra.mxu0 0.0
      %306 = vmatprep.subr.mxu0 0.0
      %307 = vmatpush2.msra.mxu0 0.0
      %308 = vmatprep.subr.mxu0 0.0
      %309 = vmatpush2.msra.mxu0 0.0
      %310 = vmatprep.subr.mxu0 0.0
      %311 = vmatpush2.msra.mxu0 0.0
      %312 = vmatprep.subr.mxu0 0.0
      %313 = vmatpush2.msra.mxu0 0.0
      %314 = vmatprep.subr.mxu0 0.0
      %315 = vmatpush2.msra.mxu0 0.0
      %316 = vmatprep.subr.mxu0 0.0
      %317 = vmatpush2.msra.mxu0 0.0
      %318 = vmatprep.mubr.f32.mxu0 0.0
      %319 = vmatmul.mubr.f32.gmra.mxu0 %v207
      %v320 = vpop.f32.mrf.mxu0
      %v321 = vadd.f32 %v203, %v320
      %v322 = vpop.f32.mrf.mxu0
      %323 = vmatprep.mubr.f32.mxu0 0.0
      %324 = vmatmul.mubr.f32.gmra.mxu0 %v210
      %v325 = vpop.f32.mrf.mxu0
      %v326 = vadd.f32 %v203, %v325
      %v327 = vpop.f32.mrf.mxu0
      %328 = vmatprep.mubr.f32.mxu0 0.0
      %329 = vmatmul.mubr.f32.gmra.mxu0 %v213
      %v330 = vpop.f32.mrf.mxu0
      %v331 = vadd.f32 %v203, %v330
      %v332 = vpop.f32.mrf.mxu0
      %333 = vmatprep.mubr.f32.mxu0 0.0
      %334 = vmatmul.mubr.f32.gmra.mxu0 %v216
      %v335 = vpop.f32.mrf.mxu0
      %v336 = vadd.f32 %v203, %v335
      %v337 = vpop.f32.mrf.mxu0
      %338 = vmatprep.mubr.f32.mxu0 0.0
      %339 = vmatmul.mubr.f32.gmra.mxu0 %v219
      %v340 = vpop.f32.mrf.mxu0
      %v341 = vadd.f32 %v203, %v340
      %v342 = vpop.f32.mrf.mxu0
      %343 = vmatprep.mubr.f32.mxu0 0.0
      %344 = vmatmul.mubr.f32.gmra.mxu0 %v222
      %v345 = vpop.f32.mrf.mxu0
      %v346 = vadd.f32 %v203, %v345
      %v347 = vpop.f32.mrf.mxu0
      %348 = vmatprep.mubr.f32.mxu0 0.0
      %349 = vmatmul.mubr.f32.gmra.mxu0 %v225
      %v350 = vpop.f32.mrf.mxu0
      %v351 = vadd.f32 %v203, %v350
      %v352 = vpop.f32.mrf.mxu0
      %353 = vmatprep.mubr.f32.mxu0 0.0
      %354 = vmatmul.mubr.f32.gmra.mxu0 %v228
      %v355 = vpop.f32.mrf.mxu0
      %v356 = vadd.f32 %v203, %v355
      %v357 = vpop.f32.mrf.mxu0
      %358 = vmatprep.mubr.f32.mxu0 0.0
      %359 = vmatmul.mubr.f32.gmra.mxu0 %v231
      %v360 = vpop.f32.mrf.mxu0
      %v361 = vadd.f32 %v203, %v360
      %v362 = vpop.f32.mrf.mxu0
      %363 = vmatprep.mubr.f32.mxu0 0.0
      %364 = vmatmul.mubr.f32.gmra.mxu0 %v234
      %v365 = vpop.f32.mrf.mxu0
      %v366 = vadd.f32 %v203, %v365
      %v367 = vpop.f32.mrf.mxu0
      %368 = vmatprep.mubr.f32.mxu0 0.0
      %369 = vmatmul.mubr.f32.gmra.mxu0 %v237
      %v370 = vpop.f32.mrf.mxu0
      %v371 = vadd.f32 %v203, %v370
      %v372 = vpop.f32.mrf.mxu0
      %373 = vmatprep.mubr.f32.mxu0 0.0
      %374 = vmatmul.mubr.f32.gmra.mxu0 %v240
      %v375 = vpop.f32.mrf.mxu0
      %v376 = vadd.f32 %v203, %v375
      %v377 = vpop.f32.mrf.mxu0
      %378 = vmatprep.mubr.f32.mxu0 0.0
      %379 = vmatmul.mubr.f32.gmra.mxu0 %v243
      %v380 = vpop.f32.mrf.mxu0
      %v381 = vadd.f32 %v203, %v380
      %v382 = vpop.f32.mrf.mxu0
      %383 = vmatprep.mubr.f32.mxu0 0.0
      %384 = vmatmul.mubr.f32.gmra.mxu0 %v246
      %v385 = vpop.f32.mrf.mxu0
      %v386 = vadd.f32 %v203, %v385
      %v387 = vpop.f32.mrf.mxu0
      %388 = vmatprep.mubr.f32.mxu0 0.0
      %389 = vmatmul.mubr.f32.gmra.mxu0 %v249
      %v390 = vpop.f32.mrf.mxu0
      %v391 = vadd.f32 %v203, %v390
      %v392 = vpop.f32.mrf.mxu0
      %393 = vmatprep.mubr.f32.mxu0 0.0
      %394 = vmatmul.mubr.f32.gmra.mxu0 %v252
      %v395 = vpop.f32.mrf.mxu0
      %v396 = vadd.f32 %v203, %v395
      %v397 = vpop.f32.mrf.mxu0
      %398 = vdwg.mxu0
      %399 = vst.msk [vmem:[%s172] sm:$0xff] %vm205, %v321
      %400 = vst.msk [vmem:[%s172 + $0x8] sm:$0xff] %vm205, %v326
      %401 = vst.msk [vmem:[%s172 + $0x10] sm:$0xff] %vm205, %v331
      %402 = vst.msk [vmem:[%s172 + $0x18] sm:$0xff] %vm205, %v336
      %403 = vst.msk [vmem:[%s172 + $0x20] sm:$0xff] %vm205, %v341
      %404 = vst.msk [vmem:[%s172 + $0x28] sm:$0xff] %vm205, %v346
      %405 = vst.msk [vmem:[%s172 + $0x30] sm:$0xff] %vm205, %v351
      %406 = vst.msk [vmem:[%s172 + $0x38] sm:$0xff] %vm205, %v356
      %407 = vst.msk [vmem:[%s172 + $0x40] sm:$0xff] %vm205, %v361
      %408 = vst.msk [vmem:[%s172 + $0x48] sm:$0xff] %vm205, %v366
      %409 = vst.msk [vmem:[%s172 + $0x50] sm:$0xff] %vm205, %v371
      %410 = vst.msk [vmem:[%s172 + $0x58] sm:$0xff] %vm205, %v376
      %411 = vst.msk [vmem:[%s172 + $0x60] sm:$0xff] %vm205, %v381
      %412 = vst.msk [vmem:[%s172 + $0x68] sm:$0xff] %vm205, %v386
      %413 = vst.msk [vmem:[%s172 + $0x70] sm:$0xff] %vm205, %v391
      %414 = vst.msk [vmem:[%s172 + $0x78] sm:$0xff] %vm205, %v396
      %s415 = smul.u32 16, %s14
      %p416 = scmp.lt.s32.totalorder %s415, 31
      %s417 = scalar_select %p416, %s415, 31
      %s418 = smul.addr %s417, 8
      %s419 = scalar_lea.vmem %s3, %s418
      // Predicated region
      $region33: #{vits_text_encoder_forward.17} parent=31 // pred_check
        %p420 = pneg %p100
      $region34: #{vits_text_encoder_forward.17} parent=31 // pred_check_branch
        %422 = sbr.rel (%p420) target = $region36
      $region35: #{vits_text_encoder_forward.17} parent=31 // pred_region
        %s423 = smul.u32 16, %s14
      $region36: #{vits_text_encoder_forward.17} parent=31 // pred_fallthru
        _
    $region32: #{vits_text_encoder_forward.17} parent=5 // pred_fallthru
      _
    %p424 = scmp.le.s32.totalorder 2, %s9
    // Predicated region
    $region37: #{vits_text_encoder_forward.17} parent=5 // pred_check
      %p425 = pneg %p424
    $region38: #{vits_text_encoder_forward.17} parent=5 // pred_check_branch
      %427 = sbr.rel (%p425) target = $region40
    $region39: #{vits_text_encoder_forward.17} parent=5 // pred_region
      %s428 = ssub.s32 %s9, 2
      // Predicated region
      $region41: #{vits_text_encoder_forward.17} parent=39 // pred_check
        %p429 = pneg %p106
      $region42: #{vits_text_encoder_forward.17} parent=39 // pred_check_branch
        %431 = sbr.rel (%p429) target = $region44
      $region43: #{vits_text_encoder_forward.17} parent=39 // pred_region
        %s432 = smul.u32 16, %s15
        %p433 = scmp.lt.s32.totalorder %s432, 31
        %s434 = scalar_select %p433, %s432, 31
        %s435 = smul.addr %s434, 8
        %s436 = scalar_lea.vmem %s3, %s435
      $region44: #{vits_text_encoder_forward.17} parent=39 // pred_fallthru
        _
    $region40: #{vits_text_encoder_forward.17} parent=5 // pred_fallthru
      _
  $region6: #{vits_text_encoder_forward.17} parent=0 // loop_footer
    %s13 = sadd.s32 1, %s9
  $region7: #{vits_text_encoder_forward.17} parent=0 // loop_footer_branch
    %8 = sbr.rel target = $region3
  $region8: #{vits_text_encoder_forward.17} parent=0 // loop_exit
    _

// kernel: vits_text_encoder_forward.18
$region0: #{vits_text_encoder_forward.18}
  #allocation0 [shape = 'u32[]', space=smem, size = 0x4, offset = 0x4, fixed_abs, tag = 'smem constant byte address 0x4 - core index']
  #allocation1 [shape = 'u32[144,128]{1,0:T(1,128)}', space=vmem, size = 0x12000, scoped, tag = 'internal scratch']
  %s0 = inlined_call_operand.vmem [shape: f32[256,64], index: 0, kind: input, shape index: {}]
  %s1 = inlined_call_operand.vmem [shape: f32[256,64], index: 1, kind: input, shape index: {}]
  %s2 = inlined_call_operand.vmem [shape: f32[1,64], index: 2, kind: input, shape index: {}]
  %s3 = inlined_call_operand.vmem [shape: f32[1,64], index: 3, kind: input, shape index: {}]
  %s4 = inlined_call_operand.vmem [shape: f32[256,64], index: 4, kind: output, shape index: {}]
  %s5 = sld [smem:[#allocation0]]
  $region49: #{vits_text_encoder_forward.18} parent=0
    _
  %s7 = ssub.s32 1, %s5
  %s8 = scalar_select 0, %s7, %s5
  loop: start=0, step=1, limit=4
  $region2: #{vits_text_encoder_forward.18} parent=0 // loop_pre_header
    _
  $region3: #{vits_text_encoder_forward.18} parent=0 // loop_header
    %s10 = sphi 0, %s14
    %p11 = scmp.ge.s32.totalorder %s10, 4
    %s20 = sphi 0, %s22
    %s23 = sphi 0, %s20
    %s24 = sphi 0, %s23
    %s40 = sphi 0, %s24
    %s46 = sphi 0, %s48
    %s49 = sphi 0, %s46
    %s50 = sphi 0, %s49
    %s66 = sphi 0, %s50
    %s70 = sphi 0, %s70
    %s72 = sphi 0, %s70
    %s73 = sphi 0, %s72
    %s87 = sphi 0, %s73
    %s91 = sphi 0, %s91
    %s93 = sphi 0, %s91
    %s94 = sphi 0, %s93
    %s108 = sphi 0, %s94
    %s114 = sphi 0, %s116
    %s117 = sphi 0, %s114
    %s118 = sphi 0, %s117
    %s134 = sphi 0, %s118
  $region4: #{vits_text_encoder_forward.18} parent=0 // loop_header_branch
    %13 = sbr.rel (%p11) target = $region8
  $region5: #{vits_text_encoder_forward.18} parent=0 // loop_body
    %s15 = ssub.s32 %s10, 1
    %s16 = ssub.s32 %s10, 2
    %s17 = sadd.s32 %s10, 1
    %s18 = ssub.s32 %s10, %s17
    %p19 = scmp.eq.s32.totalorder %s18, 0
    %s21 = sadd.s32 %s20, 1
    %s22 = scalar_select %p19, %s20, %s21
    %p25 = pneg %p19
    %p26 = scmp.eq.s32.totalorder %s10, 1
    %p27 = por %p25, %p26
    %p28 = scmp.ne.s32.totalorder %s20, %s23
    %p29 = scmp.eq.s32.totalorder %s10, 0
    %p30 = por %p28, %p29
    %p31 = scmp.ne.s32.totalorder %s20, %s23
    %p32 = scmp.eq.s32.totalorder %s15, 1
    %p33 = por %p31, %p32
    %p34 = scmp.ne.s32.totalorder %s23, %s24
    %p35 = scmp.eq.s32.totalorder %s15, 0
    %p36 = por %p34, %p35
    %p37 = scmp.ne.s32.totalorder %s23, %s24
    %p38 = scmp.eq.s32.totalorder %s16, 1
    %p39 = por %p37, %p38
    %p41 = scmp.ne.s32.totalorder %s24, %s40
    %p42 = scmp.eq.s32.totalorder %s16, 0
    %p43 = por %p41, %p42
    %s44 = ssub.s32 %s10, %s17
    %p45 = scmp.eq.s32.totalorder %s44, 0
    %s47 = sadd.s32 %s46, 1
    %s48 = scalar_select %p45, %s46, %s47
    %p51 = pneg %p45
    %p52 = scmp.eq.s32.totalorder %s10, 1
    %p53 = por %p51, %p52
    %p54 = scmp.ne.s32.totalorder %s46, %s49
    %p55 = scmp.eq.s32.totalorder %s10, 0
    %p56 = por %p54, %p55
    %p57 = scmp.ne.s32.totalorder %s46, %s49
    %p58 = scmp.eq.s32.totalorder %s15, 1
    %p59 = por %p57, %p58
    %p60 = scmp.ne.s32.totalorder %s49, %s50
    %p61 = scmp.eq.s32.totalorder %s15, 0
    %p62 = por %p60, %p61
    %p63 = scmp.ne.s32.totalorder %s49, %s50
    %p64 = scmp.eq.s32.totalorder %s16, 1
    %p65 = por %p63, %p64
    %p67 = scmp.ne.s32.totalorder %s50, %s66
    %p68 = scmp.eq.s32.totalorder %s16, 0
    %p69 = por %p67, %p68
    %s71 = sadd.s32 %s70, 1
    %p74 = scmp.eq.s32.totalorder %s10, 1
    %p75 = scmp.ne.s32.totalorder %s70, %s72
    %p76 = scmp.eq.s32.totalorder %s10, 0
    %p77 = por %p75, %p76
    %p78 = scmp.ne.s32.totalorder %s70, %s72
    %p79 = scmp.eq.s32.totalorder %s15, 1
    %p80 = por %p78, %p79
    %p81 = scmp.ne.s32.totalorder %s72, %s73
    %p82 = scmp.eq.s32.totalorder %s15, 0
    %p83 = por %p81, %p82
    %p84 = scmp.ne.s32.totalorder %s72, %s73
    %p85 = scmp.eq.s32.totalorder %s16, 1
    %p86 = por %p84, %p85
    %p88 = scmp.ne.s32.totalorder %s73, %s87
    %p89 = scmp.eq.s32.totalorder %s16, 0
    %p90 = por %p88, %p89
    %s92 = sadd.s32 %s91, 1
    %p95 = scmp.eq.s32.totalorder %s10, 1
    %p96 = scmp.ne.s32.totalorder %s91, %s93
    %p97 = scmp.eq.s32.totalorder %s10, 0
    %p98 = por %p96, %p97
    %p99 = scmp.ne.s32.totalorder %s91, %s93
    %p100 = scmp.eq.s32.totalorder %s15, 1
    %p101 = por %p99, %p100
    %p102 = scmp.ne.s32.totalorder %s93, %s94
    %p103 = scmp.eq.s32.totalorder %s15, 0
    %p104 = por %p102, %p103
    %p105 = scmp.ne.s32.totalorder %s93, %s94
    %p106 = scmp.eq.s32.totalorder %s16, 1
    %p107 = por %p105, %p106
    %p109 = scmp.ne.s32.totalorder %s94, %s108
    %p110 = scmp.eq.s32.totalorder %s16, 0
    %p111 = por %p109, %p110
    %s112 = ssub.s32 %s10, %s17
    %p113 = scmp.eq.s32.totalorder %s112, 0
    %s115 = sadd.s32 %s114, 1
    %s116 = scalar_select %p113, %s114, %s115
    %p119 = pneg %p113
    %p120 = scmp.eq.s32.totalorder %s10, 1
    %p121 = por %p119, %p120
    %p122 = scmp.ne.s32.totalorder %s114, %s117
    %p123 = scmp.eq.s32.totalorder %s10, 0
    %p124 = por %p122, %p123
    %p125 = scmp.ne.s32.totalorder %s114, %s117
    %p126 = scmp.eq.s32.totalorder %s15, 1
    %p127 = por %p125, %p126
    %p128 = scmp.ne.s32.totalorder %s117, %s118
    %p129 = scmp.eq.s32.totalorder %s15, 0
    %p130 = por %p128, %p129
    %p131 = scmp.ne.s32.totalorder %s117, %s118
    %p132 = scmp.eq.s32.totalorder %s16, 1
    %p133 = por %p131, %p132
    %p135 = scmp.ne.s32.totalorder %s118, %s134
    %p136 = scmp.eq.s32.totalorder %s16, 0
    %p137 = por %p135, %p136
    %p138 = scmp.le.s32.totalorder 1, %s10
    %p139 = scmp.lt.s32.totalorder %s10, 3
    %p140 = pnand %p138, %p139
    %p141 = pneg %p140
    // Predicated region
    $region9: #{vits_text_encoder_forward.18} parent=5 // pred_check
      _
    $region10: #{vits_text_encoder_forward.18} parent=5 // pred_check_branch
      %143 = sbr.rel (%p140) target = $region12
    $region11: #{vits_text_encoder_forward.18} parent=5 // pred_region
      %s144 = ssub.s32 %s10, 1
      // Predicated region
      $region13: #{vits_text_encoder_forward.18} parent=11 // pred_check
        %p145 = pneg %p83
      $region14: #{vits_text_encoder_forward.18} parent=11 // pred_check_branch
        %147 = sbr.rel (%p145) target = $region16
      $region15: #{vits_text_encoder_forward.18} parent=11 // pred_region
        _
      $region16: #{vits_text_encoder_forward.18} parent=11 // pred_fallthru
        _
      // Predicated region
      $region17: #{vits_text_encoder_forward.18} parent=11 // pred_check
        %p148 = pneg %p104
      $region18: #{vits_text_encoder_forward.18} parent=11 // pred_check_branch
        %150 = sbr.rel (%p148) target = $region20
      $region19: #{vits_text_encoder_forward.18} parent=11 // pred_region
        _
      $region20: #{vits_text_encoder_forward.18} parent=11 // pred_fallthru
        _
    $region12: #{vits_text_encoder_forward.18} parent=5 // pred_fallthru
      _
    %p151 = scmp.lt.s32.totalorder %s10, 2
    // Predicated region
    $region21: #{vits_text_encoder_forward.18} parent=5 // pred_check
      %p152 = pneg %p151
    $region22: #{vits_text_encoder_forward.18} parent=5 // pred_check_branch
      %154 = sbr.rel (%p152) target = $region24
    $region23: #{vits_text_encoder_forward.18} parent=5 // pred_region
      // Predicated region
      $region25: #{vits_text_encoder_forward.18} parent=23 // pred_check
        %p155 = pneg %p30
      $region26: #{vits_text_encoder_forward.18} parent=23 // pred_check_branch
        %157 = sbr.rel (%p155) target = $region28
      $region27: #{vits_text_encoder_forward.18} parent=23 // pred_region
        %s158 = smul.u32 16, %s10
        %p159 = scmp.lt.s32.totalorder %s158, 31
        %s160 = scalar_select %p159, %s158, 31
        %s161 = smul.addr %s160, 8
        %s162 = scalar_lea.vmem %s0, %s161
        %s163 = smul.u32 16, %s10
      $region28: #{vits_text_encoder_forward.18} parent=23 // pred_fallthru
        _
      // Predicated region
      $region29: #{vits_text_encoder_forward.18} parent=23 // pred_check
        %p164 = pneg %p56
      $region30: #{vits_text_encoder_forward.18} parent=23 // pred_check_branch
        %166 = sbr.rel (%p164) target = $region32
      $region31: #{vits_text_encoder_forward.18} parent=23 // pred_region
        %s167 = smul.u32 16, %s10
        %p168 = scmp.lt.s32.totalorder %s167, 31
        %s169 = scalar_select %p168, %s167, 31
        %s170 = smul.addr %s169, 8
        %s171 = scalar_lea.vmem %s1, %s170
        %s172 = smul.u32 16, %s10
      $region32: #{vits_text_encoder_forward.18} parent=23 // pred_fallthru
        _
    $region24: #{vits_text_encoder_forward.18} parent=5 // pred_fallthru
      _
    %p173 = scmp.le.s32.totalorder 1, %s10
    %p174 = scmp.lt.s32.totalorder %s10, 3
    %p175 = pnand %p173, %p174
    %p176 = pneg %p175
    // Predicated region
    $region33: #{vits_text_encoder_forward.18} parent=5 // pred_check
      _
    $region34: #{vits_text_encoder_forward.18} parent=5 // pred_check_branch
      %178 = sbr.rel (%p175) target = $region36
    $region35: #{vits_text_encoder_forward.18} parent=5 // pred_region
      %s179 = ssub.s32 %s10, 1
      %s180 = smul.u32 16, %s15
      %p181 = scmp.lt.s32.totalorder %s180, 31
      %s182 = scalar_select %p181, %s180, 31
      %s183 = smul.addr %s182, 8
      %s184 = scalar_lea.vmem %s0, %s183
      %p185 = pneg %p36
      %p186 = pneg %p33
      %s187 = smul.u32 16, %s15
      %p188 = scmp.lt.s32.totalorder %s187, 31
      %s189 = scalar_select %p188, %s187, 31
      %s190 = smul.addr %s189, 8
      %s191 = scalar_lea.vmem %s1, %s190
      %p192 = pneg %p62
      %p193 = pneg %p59
      %p194 = pneg %p83
      %p195 = pneg %p80
      %p196 = pneg %p104
      %p197 = pneg %p101
      %p198 = pneg %p130
      %p199 = pneg %p127
      %s200 = smul.u32 16, %s15
      %p201 = scmp.lt.s32.totalorder %s200, 31
      %s202 = scalar_select %p201, %s200, 31
      %s203 = smul.addr %s202, 8
      %s204 = scalar_lea.vmem %s4, %s203
      %s205 = smul.u32 16, %s15
      %p206 = scmp.lt.s32.totalorder %s205, 31
      %s207 = scalar_select %p206, %s205, 31
      %s208 = smul.addr %s207, 8
      %s209 = scalar_lea.vmem %s0, %s208
      %s210 = smul.u32 16, %s15
      %s211 = smul.u32 16, %s15
      %p212 = scmp.lt.s32.totalorder %s211, 31
      %s213 = scalar_select %p212, %s211, 31
      %s214 = smul.addr %s213, 8
      %s215 = scalar_lea.vmem %s1, %s214
      %s216 = smul.u32 16, %s15
      %s217 = smul.u32 16, %s15
      %p218 = scmp.lt.s32.totalorder %s217, 31
      %s219 = scalar_select %p218, %s217, 31
      %s220 = smul.addr %s219, 8
      %s221 = scalar_lea.vmem %s4, %s220
      %s222 = smul.u32 16, %s15
      %v223 = vld [vmem:[%s209] sm:$0xff]
      %v224 = vld [vmem:[%s209 + $0x8] sm:$0xff]
      %v225 = vld [vmem:[%s209 + $0x10] sm:$0xff]
      %v226 = vld [vmem:[%s209 + $0x18] sm:$0xff]
      %v227 = vld [vmem:[%s209 + $0x20] sm:$0xff]
      %v228 = vld [vmem:[%s209 + $0x28] sm:$0xff]
      %v229 = vld [vmem:[%s209 + $0x30] sm:$0xff]
      %v230 = vld [vmem:[%s209 + $0x38] sm:$0xff]
      %v231 = vld [vmem:[%s209 + $0x40] sm:$0xff]
      %v232 = vld [vmem:[%s209 + $0x48] sm:$0xff]
      %v233 = vld [vmem:[%s209 + $0x50] sm:$0xff]
      %v234 = vld [vmem:[%s209 + $0x58] sm:$0xff]
      %v235 = vld [vmem:[%s209 + $0x60] sm:$0xff]
      %v236 = vld [vmem:[%s209 + $0x68] sm:$0xff]
      %v237 = vld [vmem:[%s209 + $0x70] sm:$0xff]
      %v238 = vld [vmem:[%s209 + $0x78] sm:$0xff]
      %v239 = vld [vmem:[%s215] sm:$0xff]
      %v240 = vld [vmem:[%s215 + $0x8] sm:$0xff]
      %v241 = vld [vmem:[%s215 + $0x10] sm:$0xff]
      %v242 = vld [vmem:[%s215 + $0x18] sm:$0xff]
      %v243 = vld [vmem:[%s215 + $0x20] sm:$0xff]
      %v244 = vld [vmem:[%s215 + $0x28] sm:$0xff]
      %v245 = vld [vmem:[%s215 + $0x30] sm:$0xff]
      %v246 = vld [vmem:[%s215 + $0x38] sm:$0xff]
      %v247 = vld [vmem:[%s215 + $0x40] sm:$0xff]
      %v248 = vld [vmem:[%s215 + $0x48] sm:$0xff]
      %v249 = vld [vmem:[%s215 + $0x50] sm:$0xff]
      %v250 = vld [vmem:[%s215 + $0x58] sm:$0xff]
      %v251 = vld [vmem:[%s215 + $0x60] sm:$0xff]
      %v252 = vld [vmem:[%s215 + $0x68] sm:$0xff]
      %v253 = vld [vmem:[%s215 + $0x70] sm:$0xff]
      %v254 = vld [vmem:[%s215 + $0x78] sm:$0xff]
      %v255 = vadd.f32 %v223, %v239
      %v256 = vadd.f32 %v224, %v240
      %v257 = vadd.f32 %v225, %v241
      %v258 = vadd.f32 %v226, %v242
      %v259 = vadd.f32 %v227, %v243
      %v260 = vadd.f32 %v228, %v244
      %v261 = vadd.f32 %v229, %v245
      %v262 = vadd.f32 %v230, %v246
      %v263 = vadd.f32 %v231, %v247
      %v264 = vadd.f32 %v232, %v248
      %v265 = vadd.f32 %v233, %v249
      %v266 = vadd.f32 %v234, %v250
      %v267 = vadd.f32 %v235, %v251
      %v268 = vadd.f32 %v236, %v252
      %v269 = vadd.f32 %v237, %v253
      %v270 = vadd.f32 %v238, %v254
      %vm271 = vcmask 523264
      %v272 = vsel %vm271, %v255, 0.0
      %273 = vadd.xlane.f32.xlu0 %v272
      %v274 = vpop.xlane.xlu0 %273
      %v275 = vsel %vm271, %v256, 0.0
      %276 = vadd.xlane.f32.xlu0 %v275
      %v277 = vpop.xlane.xlu0 %276
      %v278 = vsel %vm271, %v257, 0.0
      %279 = vadd.xlane.f32.xlu0 %v278
      %v280 = vpop.xlane.xlu0 %279
      %v281 = vsel %vm271, %v258, 0.0
      %282 = vadd.xlane.f32.xlu0 %v281
      %v283 = vpop.xlane.xlu0 %282
      %v284 = vsel %vm271, %v259, 0.0
      %285 = vadd.xlane.f32.xlu0 %v284
      %v286 = vpop.xlane.xlu0 %285
      %v287 = vsel %vm271, %v260, 0.0
      %288 = vadd.xlane.f32.xlu0 %v287
      %v289 = vpop.xlane.xlu0 %288
      %v290 = vsel %vm271, %v261, 0.0
      %291 = vadd.xlane.f32.xlu0 %v290
      %v292 = vpop.xlane.xlu0 %291
      %v293 = vsel %vm271, %v262, 0.0
      %294 = vadd.xlane.f32.xlu0 %v293
      %v295 = vpop.xlane.xlu0 %294
      %v296 = vsel %vm271, %v263, 0.0
      %297 = vadd.xlane.f32.xlu0 %v296
      %v298 = vpop.xlane.xlu0 %297
      %v299 = vsel %vm271, %v264, 0.0
      %300 = vadd.xlane.f32.xlu0 %v299
      %v301 = vpop.xlane.xlu0 %300
      %v302 = vsel %vm271, %v265, 0.0
      %303 = vadd.xlane.f32.xlu0 %v302
      %v304 = vpop.xlane.xlu0 %303
      %v305 = vsel %vm271, %v266, 0.0
      %306 = vadd.xlane.f32.xlu0 %v305
      %v307 = vpop.xlane.xlu0 %306
      %v308 = vsel %vm271, %v267, 0.0
      %309 = vadd.xlane.f32.xlu0 %v308
      %v310 = vpop.xlane.xlu0 %309
      %v311 = vsel %vm271, %v268, 0.0
      %312 = vadd.xlane.f32.xlu0 %v311
      %v313 = vpop.xlane.xlu0 %312
      %v314 = vsel %vm271, %v269, 0.0
      %315 = vadd.xlane.f32.xlu0 %v314
      %v316 = vpop.xlane.xlu0 %315
      %v317 = vsel %vm271, %v270, 0.0
      %318 = vadd.xlane.f32.xlu0 %v317
      %v319 = vpop.xlane.xlu0 %318
      %v320 = vrcp.pop 64.0
      %v321 = vmul.f32 %v274, %v320
      %v322 = vmul.f32 %v277, %v320
      %v323 = vmul.f32 %v280, %v320
      %v324 = vmul.f32 %v283, %v320
      %v325 = vmul.f32 %v286, %v320
      %v326 = vmul.f32 %v289, %v320
      %v327 = vmul.f32 %v292, %v320
      %v328 = vmul.f32 %v295, %v320
      %v329 = vmul.f32 %v298, %v320
      %v330 = vmul.f32 %v301, %v320
      %v331 = vmul.f32 %v304, %v320
      %v332 = vmul.f32 %v307, %v320
      %v333 = vmul.f32 %v310, %v320
      %v334 = vmul.f32 %v313, %v320
      %v335 = vmul.f32 %v316, %v320
      %v336 = vmul.f32 %v319, %v320
      %v337 = vsub.f32 %v255, %v321
      %v338 = vsub.f32 %v256, %v322
      %v339 = vsub.f32 %v257, %v323
      %v340 = vsub.f32 %v258, %v324
      %v341 = vsub.f32 %v259, %v325
      %v342 = vsub.f32 %v260, %v326
      %v343 = vsub.f32 %v261, %v327
      %v344 = vsub.f32 %v262, %v328
      %v345 = vsub.f32 %v263, %v329
      %v346 = vsub.f32 %v264, %v330
      %v347 = vsub.f32 %v265, %v331
      %v348 = vsub.f32 %v266, %v332
      %v349 = vsub.f32 %v267, %v333
      %v350 = vsub.f32 %v268, %v334
      %v351 = vsub.f32 %v269, %v335
      %v352 = vsub.f32 %v270, %v336
      %v353 = vmul.f32 %v337, %v337
      %v354 = vmul.f32 %v338, %v338
      %v355 = vmul.f32 %v339, %v339
      %v356 = vmul.f32 %v340, %v340
      %v357 = vmul.f32 %v341, %v341
      %v358 = vmul.f32 %v342, %v342
      %v359 = vmul.f32 %v343, %v343
      %v360 = vmul.f32 %v344, %v344
      %v361 = vmul.f32 %v345, %v345
      %v362 = vmul.f32 %v346, %v346
      %v363 = vmul.f32 %v347, %v347
      %v364 = vmul.f32 %v348, %v348
      %v365 = vmul.f32 %v349, %v349
      %v366 = vmul.f32 %v350, %v350
      %v367 = vmul.f32 %v351, %v351
      %v368 = vmul.f32 %v352, %v352
      %v369 = vsel %vm271, %v353, 0.0
      %370 = vadd.xlane.f32.xlu0 %v369
      %v371 = vpop.xlane.xlu0 %370
      %v372 = vsel %vm271, %v354, 0.0
      %373 = vadd.xlane.f32.xlu0 %v372
      %v374 = vpop.xlane.xlu0 %373
      %v375 = vsel %vm271, %v355, 0.0
      %376 = vadd.xlane.f32.xlu0 %v375
      %v377 = vpop.xlane.xlu0 %376
      %v378 = vsel %vm271, %v356, 0.0
      %379 = vadd.xlane.f32.xlu0 %v378
      %v380 = vpop.xlane.xlu0 %379
      %v381 = vsel %vm271, %v357, 0.0
      %382 = vadd.xlane.f32.xlu0 %v381
      %v383 = vpop.xlane.xlu0 %382
      %v384 = vsel %vm271, %v358, 0.0
      %385 = vadd.xlane.f32.xlu0 %v384
      %v386 = vpop.xlane.xlu0 %385
      %v387 = vsel %vm271, %v359, 0.0
      %388 = vadd.xlane.f32.xlu0 %v387
      %v389 = vpop.xlane.xlu0 %388
      %v390 = vsel %vm271, %v360, 0.0
      %391 = vadd.xlane.f32.xlu0 %v390
      %v392 = vpop.xlane.xlu0 %391
      %v393 = vsel %vm271, %v361, 0.0
      %394 = vadd.xlane.f32.xlu0 %v393
      %v395 = vpop.xlane.xlu0 %394
      %v396 = vsel %vm271, %v362, 0.0
      %397 = vadd.xlane.f32.xlu0 %v396
      %v398 = vpop.xlane.xlu0 %397
      %v399 = vsel %vm271, %v363, 0.0
      %400 = vadd.xlane.f32.xlu0 %v399
      %v401 = vpop.xlane.xlu0 %400
      %v402 = vsel %vm271, %v364, 0.0
      %403 = vadd.xlane.f32.xlu0 %v402
      %v404 = vpop.xlane.xlu0 %403
      %v405 = vsel %vm271, %v365, 0.0
      %406 = vadd.xlane.f32.xlu0 %v405
      %v407 = vpop.xlane.xlu0 %406
      %v408 = vsel %vm271, %v366, 0.0
      %409 = vadd.xlane.f32.xlu0 %v408
      %v410 = vpop.xlane.xlu0 %409
      %v411 = vsel %vm271, %v367, 0.0
      %412 = vadd.xlane.f32.xlu0 %v411
      %v413 = vpop.xlane.xlu0 %412
      %v414 = vsel %vm271, %v368, 0.0
      %415 = vadd.xlane.f32.xlu0 %v414
      %v416 = vpop.xlane.xlu0 %415
      %v417 = vmul.f32 %v371, %v320
      %v418 = vmul.f32 %v374, %v320
      %v419 = vmul.f32 %v377, %v320
      %v420 = vmul.f32 %v380, %v320
      %v421 = vmul.f32 %v383, %v320
      %v422 = vmul.f32 %v386, %v320
      %v423 = vmul.f32 %v389, %v320
      %v424 = vmul.f32 %v392, %v320
      %v425 = vmul.f32 %v395, %v320
      %v426 = vmul.f32 %v398, %v320
      %v427 = vmul.f32 %v401, %v320
      %v428 = vmul.f32 %v404, %v320
      %v429 = vmul.f32 %v407, %v320
      %v430 = vmul.f32 %v410, %v320
      %v431 = vmul.f32 %v413, %v320
      %v432 = vmul.f32 %v416, %v320
      %v433 = vadd.f32 %v417, 1e-05
      %v434 = vadd.f32 %v418, 1e-05
      %v435 = vadd.f32 %v419, 1e-05
      %v436 = vadd.f32 %v420, 1e-05
      %v437 = vadd.f32 %v421, 1e-05
      %v438 = vadd.f32 %v422, 1e-05
      %v439 = vadd.f32 %v423, 1e-05
      %v440 = vadd.f32 %v424, 1e-05
      %v441 = vadd.f32 %v425, 1e-05
      %v442 = vadd.f32 %v426, 1e-05
      %v443 = vadd.f32 %v427, 1e-05
      %v444 = vadd.f32 %v428, 1e-05
      %v445 = vadd.f32 %v429, 1e-05
      %v446 = vadd.f32 %v430, 1e-05
      %v447 = vadd.f32 %v431, 1e-05
      %v448 = vadd.f32 %v432, 1e-05
      %v449 = vrsqrt.pop %v433
      %v450 = vrsqrt.pop %v434
      %v451 = vrsqrt.pop %v435
      %v452 = vrsqrt.pop %v436
      %v453 = vrsqrt.pop %v437
      %v454 = vrsqrt.pop %v438
      %v455 = vrsqrt.pop %v439
      %v456 = vrsqrt.pop %v440
      %v457 = vrsqrt.pop %v441
      %v458 = vrsqrt.pop %v442
      %v459 = vrsqrt.pop %v443
      %v460 = vrsqrt.pop %v444
      %v461 = vrsqrt.pop %v445
      %v462 = vrsqrt.pop %v446
      %v463 = vrsqrt.pop %v447
      %v464 = vrsqrt.pop %v448
      %v465 = vmul.f32 %v337, %v449
      %v466 = vmul.f32 %v338, %v450
      %v467 = vmul.f32 %v339, %v451
      %v468 = vmul.f32 %v340, %v452
      %v469 = vmul.f32 %v341, %v453
      %v470 = vmul.f32 %v342, %v454
      %v471 = vmul.f32 %v343, %v455
      %v472 = vmul.f32 %v344, %v456
      %v473 = vmul.f32 %v345, %v457
      %v474 = vmul.f32 %v346, %v458
      %v475 = vmul.f32 %v347, %v459
      %v476 = vmul.f32 %v348, %v460
      %v477 = vmul.f32 %v349, %v461
      %v478 = vmul.f32 %v350, %v462
      %v479 = vmul.f32 %v351, %v463
      %v480 = vmul.f32 %v352, %v464
      %v481 = vld [vmem:[%s2] sm:$0x1]
      %v483 = vlaneseq
      %v484 = vshrl.u32 %v483, 7
      %v485 = vsub.s32 0, %v484
      %v486 = vrot.slane %v481, %v485
      %v488 = vmul.f32 %v465, %v486
      %v489 = vmul.f32 %v466, %v486
      %v490 = vmul.f32 %v467, %v486
      %v491 = vmul.f32 %v468, %v486
      %v492 = vmul.f32 %v469, %v486
      %v493 = vmul.f32 %v470, %v486
      %v494 = vmul.f32 %v471, %v486
      %v495 = vmul.f32 %v472, %v486
      %v496 = vmul.f32 %v473, %v486
      %v497 = vmul.f32 %v474, %v486
      %v498 = vmul.f32 %v475, %v486
      %v499 = vmul.f32 %v476, %v486
      %v500 = vmul.f32 %v477, %v486
      %v501 = vmul.f32 %v478, %v486
      %v502 = vmul.f32 %v479, %v486
      %v503 = vmul.f32 %v480, %v486
      %v504 = vld [vmem:[%s3] sm:$0x1]
      %v506 = vlaneseq
      %v507 = vshrl.u32 %v506, 7
      %v508 = vsub.s32 0, %v507
      %v509 = vrot.slane %v504, %v508
      %v511 = vadd.f32 %v488, %v509
      %v512 = vadd.f32 %v489, %v509
      %v513 = vadd.f32 %v490, %v509
      %v514 = vadd.f32 %v491, %v509
      %v515 = vadd.f32 %v492, %v509
      %v516 = vadd.f32 %v493, %v509
      %v517 = vadd.f32 %v494, %v509
      %v518 = vadd.f32 %v495, %v509
      %v519 = vadd.f32 %v496, %v509
      %v520 = vadd.f32 %v497, %v509
      %v521 = vadd.f32 %v498, %v509
      %v522 = vadd.f32 %v499, %v509
      %v523 = vadd.f32 %v500, %v509
      %v524 = vadd.f32 %v501, %v509
      %v525 = vadd.f32 %v502, %v509
      %v526 = vadd.f32 %v503, %v509
      %527 = vst.msk [vmem:[%s221] sm:$0xff] %vm271, %v511
      %528 = vst.msk [vmem:[%s221 + $0x8] sm:$0xff] %vm271, %v512
      %529 = vst.msk [vmem:[%s221 + $0x10] sm:$0xff] %vm271, %v513
      %530 = vst.msk [vmem:[%s221 + $0x18] sm:$0xff] %vm271, %v514
      %531 = vst.msk [vmem:[%s221 + $0x20] sm:$0xff] %vm271, %v515
      %532 = vst.msk [vmem:[%s221 + $0x28] sm:$0xff] %vm271, %v516
      %533 = vst.msk [vmem:[%s221 + $0x30] sm:$0xff] %vm271, %v517
      %534 = vst.msk [vmem:[%s221 + $0x38] sm:$0xff] %vm271, %v518
      %535 = vst.msk [vmem:[%s221 + $0x40] sm:$0xff] %vm271, %v519
      %536 = vst.msk [vmem:[%s221 + $0x48] sm:$0xff] %vm271, %v520
      %537 = vst.msk [vmem:[%s221 + $0x50] sm:$0xff] %vm271, %v521
      %538 = vst.msk [vmem:[%s221 + $0x58] sm:$0xff] %vm271, %v522
      %539 = vst.msk [vmem:[%s221 + $0x60] sm:$0xff] %vm271, %v523
      %540 = vst.msk [vmem:[%s221 + $0x68] sm:$0xff] %vm271, %v524
      %541 = vst.msk [vmem:[%s221 + $0x70] sm:$0xff] %vm271, %v525
      %542 = vst.msk [vmem:[%s221 + $0x78] sm:$0xff] %vm271, %v526
      %s543 = smul.u32 16, %s15
      %p544 = scmp.lt.s32.totalorder %s543, 31
      %s545 = scalar_select %p544, %s543, 31
      %s546 = smul.addr %s545, 8
      %s547 = scalar_lea.vmem %s4, %s546
      // Predicated region
      $region37: #{vits_text_encoder_forward.18} parent=35 // pred_check
        %p548 = pneg %p127
      $region38: #{vits_text_encoder_forward.18} parent=35 // pred_check_branch
        %550 = sbr.rel (%p548) target = $region40
      $region39: #{vits_text_encoder_forward.18} parent=35 // pred_region
        %s551 = smul.u32 16, %s15
      $region40: #{vits_text_encoder_forward.18} parent=35 // pred_fallthru
        _
    $region36: #{vits_text_encoder_forward.18} parent=5 // pred_fallthru
      _
    %p552 = scmp.le.s32.totalorder 2, %s10
    // Predicated region
    $region41: #{vits_text_encoder_forward.18} parent=5 // pred_check
      %p553 = pneg %p552
    $region42: #{vits_text_encoder_forward.18} parent=5 // pred_check_branch
      %555 = sbr.rel (%p553) target = $region44
    $region43: #{vits_text_encoder_forward.18} parent=5 // pred_region
      %s556 = ssub.s32 %s10, 2
      // Predicated region
      $region45: #{vits_text_encoder_forward.18} parent=43 // pred_check
        %p557 = pneg %p133
      $region46: #{vits_text_encoder_forward.18} parent=43 // pred_check_branch
        %559 = sbr.rel (%p557) target = $region48
      $region47: #{vits_text_encoder_forward.18} parent=43 // pred_region
        %s560 = smul.u32 16, %s16
        %p561 = scmp.lt.s32.totalorder %s560, 31
        %s562 = scalar_select %p561, %s560, 31
        %s563 = smul.addr %s562, 8
        %s564 = scalar_lea.vmem %s4, %s563
      $region48: #{vits_text_encoder_forward.18} parent=43 // pred_fallthru
        _
    $region44: #{vits_text_encoder_forward.18} parent=5 // pred_fallthru
      _
  $region6: #{vits_text_encoder_forward.18} parent=0 // loop_footer
    %s14 = sadd.s32 1, %s10
  $region7: #{vits_text_encoder_forward.18} parent=0 // loop_footer_branch
    %9 = sbr.rel target = $region3
  $region8: #{vits_text_encoder_forward.18} parent=0 // loop_exit
    _

// kernel: vits_text_encoder_forward.15
$region0: #{vits_text_encoder_forward.15}
  #allocation0 [shape = 'u32[]', space=smem, size = 0x4, offset = 0x4, fixed_abs, tag = 'smem constant byte address 0x4 - core index']
  #allocation1 [shape = 'u32[144,128]{1,0:T(1,128)}', space=vmem, size = 0x12000, scoped, tag = 'internal scratch']
  %s0 = inlined_call_operand.vmem [shape: f32[256,64], index: 0, kind: input, shape index: {}]
  %s1 = inlined_call_operand.vmem [shape: f32[64,192], index: 1, kind: input, shape index: {}]
  %s2 = inlined_call_operand.vmem [shape: f32[1,192], index: 2, kind: input, shape index: {}]
  %s3 = inlined_call_operand.vmem [shape: f32[256,192], index: 3, kind: output, shape index: {}]
  %s4 = sld [smem:[#allocation0]]
  $region45: #{vits_text_encoder_forward.15} parent=0
    _
  %s6 = ssub.s32 1, %s4
  %s7 = scalar_select 0, %s6, %s4
  loop: start=0, step=1, limit=4
  $region2: #{vits_text_encoder_forward.15} parent=0 // loop_pre_header
    _
  $region3: #{vits_text_encoder_forward.15} parent=0 // loop_header
    %s9 = sphi 0, %s13
    %p10 = scmp.ge.s32.totalorder %s9, 4
    %s19 = sphi 0, %s21
    %s22 = sphi 0, %s19
    %s23 = sphi 0, %s22
    %s39 = sphi 0, %s23
    %s43 = sphi 0, %s43
    %s45 = sphi 0, %s43
    %s46 = sphi 0, %s45
    %s60 = sphi 0, %s46
    %s64 = sphi 0, %s64
    %s66 = sphi 0, %s64
    %s67 = sphi 0, %s66
    %s81 = sphi 0, %s67
    %s87 = sphi 0, %s89
    %s90 = sphi 0, %s87
    %s91 = sphi 0, %s90
    %s107 = sphi 0, %s91
  $region4: #{vits_text_encoder_forward.15} parent=0 // loop_header_branch
    %12 = sbr.rel (%p10) target = $region8
  $region5: #{vits_text_encoder_forward.15} parent=0 // loop_body
    %s14 = ssub.s32 %s9, 1
    %s15 = ssub.s32 %s9, 2
    %s16 = sadd.s32 %s9, 1
    %s17 = ssub.s32 %s9, %s16
    %p18 = scmp.eq.s32.totalorder %s17, 0
    %s20 = sadd.s32 %s19, 1
    %s21 = scalar_select %p18, %s19, %s20
    %p24 = pneg %p18
    %p25 = scmp.eq.s32.totalorder %s9, 1
    %p26 = por %p24, %p25
    %p27 = scmp.ne.s32.totalorder %s19, %s22
    %p28 = scmp.eq.s32.totalorder %s9, 0
    %p29 = por %p27, %p28
    %p30 = scmp.ne.s32.totalorder %s19, %s22
    %p31 = scmp.eq.s32.totalorder %s14, 1
    %p32 = por %p30, %p31
    %p33 = scmp.ne.s32.totalorder %s22, %s23
    %p34 = scmp.eq.s32.totalorder %s14, 0
    %p35 = por %p33, %p34
    %p36 = scmp.ne.s32.totalorder %s22, %s23
    %p37 = scmp.eq.s32.totalorder %s15, 1
    %p38 = por %p36, %p37
    %p40 = scmp.ne.s32.totalorder %s23, %s39
    %p41 = scmp.eq.s32.totalorder %s15, 0
    %p42 = por %p40, %p41
    %s44 = sadd.s32 %s43, 1
    %p47 = scmp.eq.s32.totalorder %s9, 1
    %p48 = scmp.ne.s32.totalorder %s43, %s45
    %p49 = scmp.eq.s32.totalorder %s9, 0
    %p50 = por %p48, %p49
    %p51 = scmp.ne.s32.totalorder %s43, %s45
    %p52 = scmp.eq.s32.totalorder %s14, 1
    %p53 = por %p51, %p52
    %p54 = scmp.ne.s32.totalorder %s45, %s46
    %p55 = scmp.eq.s32.totalorder %s14, 0
    %p56 = por %p54, %p55
    %p57 = scmp.ne.s32.totalorder %s45, %s46
    %p58 = scmp.eq.s32.totalorder %s15, 1
    %p59 = por %p57, %p58
    %p61 = scmp.ne.s32.totalorder %s46, %s60
    %p62 = scmp.eq.s32.totalorder %s15, 0
    %p63 = por %p61, %p62
    %s65 = sadd.s32 %s64, 1
    %p68 = scmp.eq.s32.totalorder %s9, 1
    %p69 = scmp.ne.s32.totalorder %s64, %s66
    %p70 = scmp.eq.s32.totalorder %s9, 0
    %p71 = por %p69, %p70
    %p72 = scmp.ne.s32.totalorder %s64, %s66
    %p73 = scmp.eq.s32.totalorder %s14, 1
    %p74 = por %p72, %p73
    %p75 = scmp.ne.s32.totalorder %s66, %s67
    %p76 = scmp.eq.s32.totalorder %s14, 0
    %p77 = por %p75, %p76
    %p78 = scmp.ne.s32.totalorder %s66, %s67
    %p79 = scmp.eq.s32.totalorder %s15, 1
    %p80 = por %p78, %p79
    %p82 = scmp.ne.s32.totalorder %s67, %s81
    %p83 = scmp.eq.s32.totalorder %s15, 0
    %p84 = por %p82, %p83
    %s85 = ssub.s32 %s9, %s16
    %p86 = scmp.eq.s32.totalorder %s85, 0
    %s88 = sadd.s32 %s87, 1
    %s89 = scalar_select %p86, %s87, %s88
    %p92 = pneg %p86
    %p93 = scmp.eq.s32.totalorder %s9, 1
    %p94 = por %p92, %p93
    %p95 = scmp.ne.s32.totalorder %s87, %s90
    %p96 = scmp.eq.s32.totalorder %s9, 0
    %p97 = por %p95, %p96
    %p98 = scmp.ne.s32.totalorder %s87, %s90
    %p99 = scmp.eq.s32.totalorder %s14, 1
    %p100 = por %p98, %p99
    %p101 = scmp.ne.s32.totalorder %s90, %s91
    %p102 = scmp.eq.s32.totalorder %s14, 0
    %p103 = por %p101, %p102
    %p104 = scmp.ne.s32.totalorder %s90, %s91
    %p105 = scmp.eq.s32.totalorder %s15, 1
    %p106 = por %p104, %p105
    %p108 = scmp.ne.s32.totalorder %s91, %s107
    %p109 = scmp.eq.s32.totalorder %s15, 0
    %p110 = por %p108, %p109
    %p111 = scmp.le.s32.totalorder 1, %s9
    %p112 = scmp.lt.s32.totalorder %s9, 3
    %p113 = pnand %p111, %p112
    %p114 = pneg %p113
    // Predicated region
    $region9: #{vits_text_encoder_forward.15} parent=5 // pred_check
      _
    $region10: #{vits_text_encoder_forward.15} parent=5 // pred_check_branch
      %116 = sbr.rel (%p113) target = $region12
    $region11: #{vits_text_encoder_forward.15} parent=5 // pred_region
      %s117 = ssub.s32 %s9, 1
      // Predicated region
      $region13: #{vits_text_encoder_forward.15} parent=11 // pred_check
        %p118 = pneg %p56
      $region14: #{vits_text_encoder_forward.15} parent=11 // pred_check_branch
        %120 = sbr.rel (%p118) target = $region16
      $region15: #{vits_text_encoder_forward.15} parent=11 // pred_region
        _
      $region16: #{vits_text_encoder_forward.15} parent=11 // pred_fallthru
        _
      // Predicated region
      $region17: #{vits_text_encoder_forward.15} parent=11 // pred_check
        %p121 = pneg %p77
      $region18: #{vits_text_encoder_forward.15} parent=11 // pred_check_branch
        %123 = sbr.rel (%p121) target = $region20
      $region19: #{vits_text_encoder_forward.15} parent=11 // pred_region
        _
      $region20: #{vits_text_encoder_forward.15} parent=11 // pred_fallthru
        _
    $region12: #{vits_text_encoder_forward.15} parent=5 // pred_fallthru
      _
    %p124 = scmp.lt.s32.totalorder %s9, 2
    // Predicated region
    $region21: #{vits_text_encoder_forward.15} parent=5 // pred_check
      %p125 = pneg %p124
    $region22: #{vits_text_encoder_forward.15} parent=5 // pred_check_branch
      %127 = sbr.rel (%p125) target = $region24
    $region23: #{vits_text_encoder_forward.15} parent=5 // pred_region
      // Predicated region
      $region25: #{vits_text_encoder_forward.15} parent=23 // pred_check
        %p128 = pneg %p29
      $region26: #{vits_text_encoder_forward.15} parent=23 // pred_check_branch
        %130 = sbr.rel (%p128) target = $region28
      $region27: #{vits_text_encoder_forward.15} parent=23 // pred_region
        %s131 = smul.u32 16, %s9
        %p132 = scmp.lt.s32.totalorder %s131, 31
        %s133 = scalar_select %p132, %s131, 31
        %s134 = smul.addr %s133, 8
        %s135 = scalar_lea.vmem %s0, %s134
        %s136 = smul.u32 16, %s9
      $region28: #{vits_text_encoder_forward.15} parent=23 // pred_fallthru
        _
    $region24: #{vits_text_encoder_forward.15} parent=5 // pred_fallthru
      _
    %p137 = scmp.le.s32.totalorder 1, %s9
    %p138 = scmp.lt.s32.totalorder %s9, 3
    %p139 = pnand %p137, %p138
    %p140 = pneg %p139
    // Predicated region
    $region29: #{vits_text_encoder_forward.15} parent=5 // pred_check
      _
    $region30: #{vits_text_encoder_forward.15} parent=5 // pred_check_branch
      %142 = sbr.rel (%p139) target = $region32
    $region31: #{vits_text_encoder_forward.15} parent=5 // pred_region
      %s143 = ssub.s32 %s9, 1
      %s144 = smul.u32 16, %s14
      %p145 = scmp.lt.s32.totalorder %s144, 31
      %s146 = scalar_select %p145, %s144, 31
      %s147 = smul.addr %s146, 8
      %s148 = scalar_lea.vmem %s0, %s147
      %p149 = pneg %p35
      %p150 = pneg %p32
      %p151 = pneg %p56
      %p152 = pneg %p53
      %p153 = pneg %p77
      %p154 = pneg %p74
      %p155 = pneg %p103
      %p156 = pneg %p100
      %s157 = smul.u32 16, %s14
      %p158 = scmp.lt.s32.totalorder %s157, 31
      %s159 = scalar_select %p158, %s157, 31
      %s160 = smul.addr %s159, 2
      %s161 = smul.addr %s160, 8
      %s162 = scalar_lea.vmem %s3, %s161
      %s163 = smul.u32 16, %s14
      %p164 = scmp.lt.s32.totalorder %s163, 31
      %s165 = scalar_select %p164, %s163, 31
      %s166 = smul.addr %s165, 8
      %s167 = scalar_lea.vmem %s0, %s166
      %s168 = smul.u32 16, %s14
      %s169 = smul.u32 16, %s14
      %p170 = scmp.lt.s32.totalorder %s169, 31
      %s171 = scalar_select %p170, %s169, 31
      %s172 = smul.addr %s171, 2
      %s173 = smul.addr %s172, 8
      %s174 = scalar_lea.vmem %s3, %s173
      %s175 = smul.u32 16, %s14
      %v176 = vld [vmem:[%s167] sm:$0xff]
      %v177 = vld [vmem:[%s167 + $0x8] sm:$0xff]
      %v178 = vld [vmem:[%s167 + $0x10] sm:$0xff]
      %v179 = vld [vmem:[%s167 + $0x18] sm:$0xff]
      %v180 = vld [vmem:[%s167 + $0x20] sm:$0xff]
      %v181 = vld [vmem:[%s167 + $0x28] sm:$0xff]
      %v182 = vld [vmem:[%s167 + $0x30] sm:$0xff]
      %v183 = vld [vmem:[%s167 + $0x38] sm:$0xff]
      %v184 = vld [vmem:[%s167 + $0x40] sm:$0xff]
      %v185 = vld [vmem:[%s167 + $0x48] sm:$0xff]
      %v186 = vld [vmem:[%s167 + $0x50] sm:$0xff]
      %v187 = vld [vmem:[%s167 + $0x58] sm:$0xff]
      %v188 = vld [vmem:[%s167 + $0x60] sm:$0xff]
      %v189 = vld [vmem:[%s167 + $0x68] sm:$0xff]
      %v190 = vld [vmem:[%s167 + $0x70] sm:$0xff]
      %v191 = vld [vmem:[%s167 + $0x78] sm:$0xff]
      %v192 = vld [vmem:[%s1] sm:$0xff]
      %v193 = vld [vmem:[%s1 + $0x8] sm:$0xff]
      %v194 = vld [vmem:[%s1 + $0x10] sm:$0xff]
      %v195 = vld [vmem:[%s1 + $0x18] sm:$0xff]
      %v196 = vld [vmem:[%s1 + $0x20] sm:$0xff]
      %v197 = vld [vmem:[%s1 + $0x28] sm:$0xff]
      %v198 = vld [vmem:[%s1 + $0x30] sm:$0xff]
      %v199 = vld [vmem:[%s1 + $0x38] sm:$0xff]
      %v200 = vld [vmem:[%s1 + $0x40] sm:$0xff]
      %v201 = vld [vmem:[%s1 + $0x48] sm:$0xff]
      %v202 = vld [vmem:[%s1 + $0x50] sm:$0xff]
      %v203 = vld [vmem:[%s1 + $0x58] sm:$0xff]
      %v204 = vld [vmem:[%s1 + $0x60] sm:$0xff]
      %v205 = vld [vmem:[%s1 + $0x68] sm:$0xff]
      %v206 = vld [vmem:[%s1 + $0x70] sm:$0xff]
      %v207 = vld [vmem:[%s1 + $0x78] sm:$0xff]
      %v208 = vld [vmem:[%s2] sm:$0x3]
      %v210 = vlaneseq
      %v211 = vshrl.u32 %v210, 7
      %v212 = vsub.s32 0, %v211
      %v213 = vrot.slane %v208, %v212
      %v214 = vlaneseq
      %v215 = vshrl.u32 %v214, 7
      %v216 = vsub.s32 1, %v215
      %v217 = vrot.slane %v208, %v216
      %vm220 = vcmask 523264
      %v222 = vsel %vm220, %v176, 0
      %v225 = vsel %vm220, %v177, 0
      %v228 = vsel %vm220, %v178, 0
      %v231 = vsel %vm220, %v179, 0
      %v234 = vsel %vm220, %v180, 0
      %v237 = vsel %vm220, %v181, 0
      %v240 = vsel %vm220, %v182, 0
      %v243 = vsel %vm220, %v183, 0
      %v246 = vsel %vm220, %v184, 0
      %v249 = vsel %vm220, %v185, 0
      %v252 = vsel %vm220, %v186, 0
      %v255 = vsel %vm220, %v187, 0
      %v258 = vsel %vm220, %v188, 0
      %v261 = vsel %vm220, %v189, 0
      %v264 = vsel %vm220, %v190, 0
      %v267 = vsel %vm220, %v191, 0
      %269 = vmatprep.subr.mxu0 0.0
      %270 = vmatpush1.msra.mxu0 0.0
      %271 = vmatprep.subr.mxu0 0.0
      %272 = vmatpush1.msra.mxu0 0.0
      %273 = vmatprep.subr.mxu0 0.0
      %274 = vmatpush1.msra.mxu0 0.0
      %275 = vmatprep.subr.mxu0 0.0
      %276 = vmatpush1.msra.mxu0 0.0
      %277 = vmatprep.subr.mxu0 0.0
      %278 = vmatpush1.msra.mxu0 0.0
      %279 = vmatprep.subr.mxu0 0.0
      %280 = vmatpush1.msra.mxu0 0.0
      %281 = vmatprep.subr.mxu0 0.0
      %282 = vmatpush1.msra.mxu0 0.0
      %283 = vmatprep.subr.mxu0 0.0
      %284 = vmatpush1.msra.mxu0 0.0
      %285 = vmatprep.subr.mxu0 %v207
      %286 = vmatpush1.msra.mxu0 %v206
      %287 = vmatprep.subr.mxu0 %v205
      %288 = vmatpush1.msra.mxu0 %v204
      %289 = vmatprep.subr.mxu0 %v203
      %290 = vmatpush1.msra.mxu0 %v202
      %291 = vmatprep.subr.mxu0 %v201
      %292 = vmatpush1.msra.mxu0 %v200
      %293 = vmatprep.subr.mxu0 %v199
      %294 = vmatpush1.msra.mxu0 %v198
      %295 = vmatprep.subr.mxu0 %v197
      %296 = vmatpush1.msra.mxu0 %v196
      %297 = vmatprep.subr.mxu0 %v195
      %298 = vmatpush1.msra.mxu0 %v194
      %299 = vmatprep.subr.mxu0 %v193
      %300 = vmatpush1.msra.mxu0 %v192
      %301 = vmatprep.subr.mxu0 0.0
      %302 = vmatpush2.msra.mxu0 0.0
      %303 = vmatprep.subr.mxu0 0.0
      %304 = vmatpush2.msra.mxu0 0.0
      %305 = vmatprep.subr.mxu0 0.0
      %306 = vmatpush2.msra.mxu0 0.0
      %307 = vmatprep.subr.mxu0 0.0
      %308 = vmatpush2.msra.mxu0 0.0
      %309 = vmatprep.subr.mxu0 0.0
      %310 = vmatpush2.msra.mxu0 0.0
      %311 = vmatprep.subr.mxu0 0.0
      %312 = vmatpush2.msra.mxu0 0.0
      %313 = vmatprep.subr.mxu0 0.0
      %314 = vmatpush2.msra.mxu0 0.0
      %315 = vmatprep.subr.mxu0 0.0
      %316 = vmatpush2.msra.mxu0 0.0
      %317 = vmatprep.subr.mxu0 0.0
      %318 = vmatpush2.msra.mxu0 0.0
      %319 = vmatprep.subr.mxu0 0.0
      %320 = vmatpush2.msra.mxu0 0.0
      %321 = vmatprep.subr.mxu0 0.0
      %322 = vmatpush2.msra.mxu0 0.0
      %323 = vmatprep.subr.mxu0 0.0
      %324 = vmatpush2.msra.mxu0 0.0
      %325 = vmatprep.subr.mxu0 0.0
      %326 = vmatpush2.msra.mxu0 0.0
      %327 = vmatprep.subr.mxu0 0.0
      %328 = vmatpush2.msra.mxu0 0.0
      %329 = vmatprep.subr.mxu0 0.0
      %330 = vmatpush2.msra.mxu0 0.0
      %331 = vmatprep.subr.mxu0 0.0
      %332 = vmatpush2.msra.mxu0 0.0
      %333 = vmatprep.mubr.f32.mxu0 0.0
      %334 = vmatmul.mubr.f32.gmra.mxu0 %v222
      %v335 = vpop.f32.mrf.mxu0
      %v336 = vadd.f32 %v213, %v335
      %v337 = vpop.f32.mrf.mxu0
      %v338 = vadd.f32 %v217, %v337
      %339 = vmatprep.mubr.f32.mxu0 0.0
      %340 = vmatmul.mubr.f32.gmra.mxu0 %v225
      %v341 = vpop.f32.mrf.mxu0
      %v342 = vadd.f32 %v213, %v341
      %v343 = vpop.f32.mrf.mxu0
      %v344 = vadd.f32 %v217, %v343
      %345 = vmatprep.mubr.f32.mxu0 0.0
      %346 = vmatmul.mubr.f32.gmra.mxu0 %v228
      %v347 = vpop.f32.mrf.mxu0
      %v348 = vadd.f32 %v213, %v347
      %v349 = vpop.f32.mrf.mxu0
      %v350 = vadd.f32 %v217, %v349
      %351 = vmatprep.mubr.f32.mxu0 0.0
      %352 = vmatmul.mubr.f32.gmra.mxu0 %v231
      %v353 = vpop.f32.mrf.mxu0
      %v354 = vadd.f32 %v213, %v353
      %v355 = vpop.f32.mrf.mxu0
      %v356 = vadd.f32 %v217, %v355
      %357 = vmatprep.mubr.f32.mxu0 0.0
      %358 = vmatmul.mubr.f32.gmra.mxu0 %v234
      %v359 = vpop.f32.mrf.mxu0
      %v360 = vadd.f32 %v213, %v359
      %v361 = vpop.f32.mrf.mxu0
      %v362 = vadd.f32 %v217, %v361
      %363 = vmatprep.mubr.f32.mxu0 0.0
      %364 = vmatmul.mubr.f32.gmra.mxu0 %v237
      %v365 = vpop.f32.mrf.mxu0
      %v366 = vadd.f32 %v213, %v365
      %v367 = vpop.f32.mrf.mxu0
      %v368 = vadd.f32 %v217, %v367
      %369 = vmatprep.mubr.f32.mxu0 0.0
      %370 = vmatmul.mubr.f32.gmra.mxu0 %v240
      %v371 = vpop.f32.mrf.mxu0
      %v372 = vadd.f32 %v213, %v371
      %v373 = vpop.f32.mrf.mxu0
      %v374 = vadd.f32 %v217, %v373
      %375 = vmatprep.mubr.f32.mxu0 0.0
      %376 = vmatmul.mubr.f32.gmra.mxu0 %v243
      %v377 = vpop.f32.mrf.mxu0
      %v378 = vadd.f32 %v213, %v377
      %v379 = vpop.f32.mrf.mxu0
      %v380 = vadd.f32 %v217, %v379
      %381 = vmatprep.mubr.f32.mxu0 0.0
      %382 = vmatmul.mubr.f32.gmra.mxu0 %v246
      %v383 = vpop.f32.mrf.mxu0
      %v384 = vadd.f32 %v213, %v383
      %v385 = vpop.f32.mrf.mxu0
      %v386 = vadd.f32 %v217, %v385
      %387 = vmatprep.mubr.f32.mxu0 0.0
      %388 = vmatmul.mubr.f32.gmra.mxu0 %v249
      %v389 = vpop.f32.mrf.mxu0
      %v390 = vadd.f32 %v213, %v389
      %v391 = vpop.f32.mrf.mxu0
      %v392 = vadd.f32 %v217, %v391
      %393 = vmatprep.mubr.f32.mxu0 0.0
      %394 = vmatmul.mubr.f32.gmra.mxu0 %v252
      %v395 = vpop.f32.mrf.mxu0
      %v396 = vadd.f32 %v213, %v395
      %v397 = vpop.f32.mrf.mxu0
      %v398 = vadd.f32 %v217, %v397
      %399 = vmatprep.mubr.f32.mxu0 0.0
      %400 = vmatmul.mubr.f32.gmra.mxu0 %v255
      %v401 = vpop.f32.mrf.mxu0
      %v402 = vadd.f32 %v213, %v401
      %v403 = vpop.f32.mrf.mxu0
      %v404 = vadd.f32 %v217, %v403
      %405 = vmatprep.mubr.f32.mxu0 0.0
      %406 = vmatmul.mubr.f32.gmra.mxu0 %v258
      %v407 = vpop.f32.mrf.mxu0
      %v408 = vadd.f32 %v213, %v407
      %v409 = vpop.f32.mrf.mxu0
      %v410 = vadd.f32 %v217, %v409
      %411 = vmatprep.mubr.f32.mxu0 0.0
      %412 = vmatmul.mubr.f32.gmra.mxu0 %v261
      %v413 = vpop.f32.mrf.mxu0
      %v414 = vadd.f32 %v213, %v413
      %v415 = vpop.f32.mrf.mxu0
      %v416 = vadd.f32 %v217, %v415
      %417 = vmatprep.mubr.f32.mxu0 0.0
      %418 = vmatmul.mubr.f32.gmra.mxu0 %v264
      %v419 = vpop.f32.mrf.mxu0
      %v420 = vadd.f32 %v213, %v419
      %v421 = vpop.f32.mrf.mxu0
      %v422 = vadd.f32 %v217, %v421
      %423 = vmatprep.mubr.f32.mxu0 0.0
      %424 = vmatmul.mubr.f32.gmra.mxu0 %v267
      %v425 = vpop.f32.mrf.mxu0
      %v426 = vadd.f32 %v213, %v425
      %v427 = vpop.f32.mrf.mxu0
      %v428 = vadd.f32 %v217, %v427
      %429 = vdwg.mxu0
      %430 = vst [vmem:[%s174] sm:$0xff] %v336
      %431 = vst.msk [vmem:[%s174 + $0x8] sm:$0xff] %vm220, %v338
      %432 = vst [vmem:[%s174 + $0x10] sm:$0xff] %v342
      %433 = vst.msk [vmem:[%s174 + $0x18] sm:$0xff] %vm220, %v344
      %434 = vst [vmem:[%s174 + $0x20] sm:$0xff] %v348
      %435 = vst.msk [vmem:[%s174 + $0x28] sm:$0xff] %vm220, %v350
      %436 = vst [vmem:[%s174 + $0x30] sm:$0xff] %v354
      %437 = vst.msk [vmem:[%s174 + $0x38] sm:$0xff] %vm220, %v356
      %438 = vst [vmem:[%s174 + $0x40] sm:$0xff] %v360
      %439 = vst.msk [vmem:[%s174 + $0x48] sm:$0xff] %vm220, %v362
      %440 = vst [vmem:[%s174 + $0x50] sm:$0xff] %v366
      %441 = vst.msk [vmem:[%s174 + $0x58] sm:$0xff] %vm220, %v368
      %442 = vst [vmem:[%s174 + $0x60] sm:$0xff] %v372
      %443 = vst.msk [vmem:[%s174 + $0x68] sm:$0xff] %vm220, %v374
      %444 = vst [vmem:[%s174 + $0x70] sm:$0xff] %v378
      %445 = vst.msk [vmem:[%s174 + $0x78] sm:$0xff] %vm220, %v380
      %446 = vst [vmem:[%s174 + $0x80] sm:$0xff] %v384
      %447 = vst.msk [vmem:[%s174 + $0x88] sm:$0xff] %vm220, %v386
      %448 = vst [vmem:[%s174 + $0x90] sm:$0xff] %v390
      %449 = vst.msk [vmem:[%s174 + $0x98] sm:$0xff] %vm220, %v392
      %450 = vst [vmem:[%s174 + $0xa0] sm:$0xff] %v396
      %451 = vst.msk [vmem:[%s174 + $0xa8] sm:$0xff] %vm220, %v398
      %452 = vst [vmem:[%s174 + $0xb0] sm:$0xff] %v402
      %453 = vst.msk [vmem:[%s174 + $0xb8] sm:$0xff] %vm220, %v404
      %454 = vst [vmem:[%s174 + $0xc0] sm:$0xff] %v408
      %455 = vst.msk [vmem:[%s174 + $0xc8] sm:$0xff] %vm220, %v410
      %456 = vst [vmem:[%s174 + $0xd0] sm:$0xff] %v414
      %457 = vst.msk [vmem:[%s174 + $0xd8] sm:$0xff] %vm220, %v416
      %458 = vst [vmem:[%s174 + $0xe0] sm:$0xff] %v420
      %459 = vst.msk [vmem:[%s174 + $0xe8] sm:$0xff] %vm220, %v422
      %460 = vst [vmem:[%s174 + $0xf0] sm:$0xff] %v426
      %461 = vst.msk [vmem:[%s174 + $0xf8] sm:$0xff] %vm220, %v428
      %s462 = smul.u32 16, %s14
      %p463 = scmp.lt.s32.totalorder %s462, 31
      %s464 = scalar_select %p463, %s462, 31
      %s465 = smul.addr %s464, 2
      %s466 = smul.addr %s465, 8
      %s467 = scalar_lea.vmem %s3, %s466
      // Predicated region
      $region33: #{vits_text_encoder_forward.15} parent=31 // pred_check
        %p468 = pneg %p100
      $region34: #{vits_text_encoder_forward.15} parent=31 // pred_check_branch
        %470 = sbr.rel (%p468) target = $region36
      $region35: #{vits_text_encoder_forward.15} parent=31 // pred_region
        %s471 = smul.u32 16, %s14
      $region36: #{vits_text_encoder_forward.15} parent=31 // pred_fallthru
        _
    $region32: #{vits_text_encoder_forward.15} parent=5 // pred_fallthru
      _
    %p472 = scmp.le.s32.totalorder 2, %s9
    // Predicated region
    $region37: #{vits_text_encoder_forward.15} parent=5 // pred_check
      %p473 = pneg %p472
    $region38: #{vits_text_encoder_forward.15} parent=5 // pred_check_branch
      %475 = sbr.rel (%p473) target = $region40
    $region39: #{vits_text_encoder_forward.15} parent=5 // pred_region
      %s476 = ssub.s32 %s9, 2
      // Predicated region
      $region41: #{vits_text_encoder_forward.15} parent=39 // pred_check
        %p477 = pneg %p106
      $region42: #{vits_text_encoder_forward.15} parent=39 // pred_check_branch
        %479 = sbr.rel (%p477) target = $region44
      $region43: #{vits_text_encoder_forward.15} parent=39 // pred_region
        %s480 = smul.u32 16, %s15
        %p481 = scmp.lt.s32.totalorder %s480, 31
        %s482 = scalar_select %p481, %s480, 31
        %s483 = smul.addr %s482, 2
        %s484 = smul.addr %s483, 8
        %s485 = scalar_lea.vmem %s3, %s484
      $region44: #{vits_text_encoder_forward.15} parent=39 // pred_fallthru
        _
    $region40: #{vits_text_encoder_forward.15} parent=5 // pred_fallthru
      _
  $region6: #{vits_text_encoder_forward.15} parent=0 // loop_footer
    %s13 = sadd.s32 1, %s9
  $region7: #{vits_text_encoder_forward.15} parent=0 // loop_footer_branch
    %8 = sbr.rel target = $region3
  $region8: #{vits_text_encoder_forward.15} parent=0 // loop_exit
    _

// kernel: vits_text_encoder_forward.19
$region0: #{vits_text_encoder_forward.19}
  #allocation0 [shape = 'u32[]', space=smem, size = 0x4, offset = 0x4, fixed_abs, tag = 'smem constant byte address 0x4 - core index']
  #allocation1 [shape = 'u32[144,128]{1,0:T(1,128)}', space=vmem, size = 0x12000, scoped, tag = 'internal scratch']
  %s0 = inlined_call_operand.vmem [shape: f32[2,136,64], index: 0, kind: input, shape index: {}]
  %s1 = inlined_call_operand.vmem [shape: f32[3,64,128], index: 1, kind: input, shape index: {}]
  %s2 = inlined_call_operand.vmem [shape: f32[1,128], index: 2, kind: input, shape index: {}]
  %s3 = inlined_call_operand.vmem [shape: f32[2,128,1], index: 3, kind: input, shape index: {}]
  %s4 = inlined_call_operand.vmem [shape: f32[2,128,128], index: 4, kind: output, shape index: {}]
  %s5 = sld [smem:[#allocation0]]
  $region49: #{vits_text_encoder_forward.19} parent=0
    _
  %s7 = ssub.s32 1, %s5
  %s8 = scalar_select 0, %s7, %s5
  loop: start=0, step=1, limit=4
  $region2: #{vits_text_encoder_forward.19} parent=0 // loop_pre_header
    _
  $region3: #{vits_text_encoder_forward.19} parent=0 // loop_header
    %s10 = sphi 0, %s14
    %p11 = scmp.ge.s32.totalorder %s10, 4
    %s20 = sphi 0, %s22
    %s23 = sphi 0, %s20
    %s24 = sphi 0, %s23
    %s40 = sphi 0, %s24
    %s44 = sphi 0, %s44
    %s46 = sphi 0, %s44
    %s47 = sphi 0, %s46
    %s61 = sphi 0, %s47
    %s65 = sphi 0, %s65
    %s67 = sphi 0, %s65
    %s68 = sphi 0, %s67
    %s82 = sphi 0, %s68
    %s88 = sphi 0, %s90
    %s91 = sphi 0, %s88
    %s92 = sphi 0, %s91
    %s108 = sphi 0, %s92
    %s114 = sphi 0, %s116
    %s117 = sphi 0, %s114
    %s118 = sphi 0, %s117
    %s134 = sphi 0, %s118
  $region4: #{vits_text_encoder_forward.19} parent=0 // loop_header_branch
    %13 = sbr.rel (%p11) target = $region8
  $region5: #{vits_text_encoder_forward.19} parent=0 // loop_body
    %s15 = ssub.s32 %s10, 1
    %s16 = ssub.s32 %s10, 2
    %s17 = sadd.s32 %s10, 1
    %s18 = ssub.s32 %s10, %s17
    %p19 = scmp.eq.s32.totalorder %s18, 0
    %s21 = sadd.s32 %s20, 1
    %s22 = scalar_select %p19, %s20, %s21
    %p25 = pneg %p19
    %p26 = scmp.eq.s32.totalorder %s10, 1
    %p27 = por %p25, %p26
    %p28 = scmp.ne.s32.totalorder %s20, %s23
    %p29 = scmp.eq.s32.totalorder %s10, 0
    %p30 = por %p28, %p29
    %p31 = scmp.ne.s32.totalorder %s20, %s23
    %p32 = scmp.eq.s32.totalorder %s15, 1
    %p33 = por %p31, %p32
    %p34 = scmp.ne.s32.totalorder %s23, %s24
    %p35 = scmp.eq.s32.totalorder %s15, 0
    %p36 = por %p34, %p35
    %p37 = scmp.ne.s32.totalorder %s23, %s24
    %p38 = scmp.eq.s32.totalorder %s16, 1
    %p39 = por %p37, %p38
    %p41 = scmp.ne.s32.totalorder %s24, %s40
    %p42 = scmp.eq.s32.totalorder %s16, 0
    %p43 = por %p41, %p42
    %s45 = sadd.s32 %s44, 1
    %p48 = scmp.eq.s32.totalorder %s10, 1
    %p49 = scmp.ne.s32.totalorder %s44, %s46
    %p50 = scmp.eq.s32.totalorder %s10, 0
    %p51 = por %p49, %p50
    %p52 = scmp.ne.s32.totalorder %s44, %s46
    %p53 = scmp.eq.s32.totalorder %s15, 1
    %p54 = por %p52, %p53
    %p55 = scmp.ne.s32.totalorder %s46, %s47
    %p56 = scmp.eq.s32.totalorder %s15, 0
    %p57 = por %p55, %p56
    %p58 = scmp.ne.s32.totalorder %s46, %s47
    %p59 = scmp.eq.s32.totalorder %s16, 1
    %p60 = por %p58, %p59
    %p62 = scmp.ne.s32.totalorder %s47, %s61
    %p63 = scmp.eq.s32.totalorder %s16, 0
    %p64 = por %p62, %p63
    %s66 = sadd.s32 %s65, 1
    %p69 = scmp.eq.s32.totalorder %s10, 1
    %p70 = scmp.ne.s32.totalorder %s65, %s67
    %p71 = scmp.eq.s32.totalorder %s10, 0
    %p72 = por %p70, %p71
    %p73 = scmp.ne.s32.totalorder %s65, %s67
    %p74 = scmp.eq.s32.totalorder %s15, 1
    %p75 = por %p73, %p74
    %p76 = scmp.ne.s32.totalorder %s67, %s68
    %p77 = scmp.eq.s32.totalorder %s15, 0
    %p78 = por %p76, %p77
    %p79 = scmp.ne.s32.totalorder %s67, %s68
    %p80 = scmp.eq.s32.totalorder %s16, 1
    %p81 = por %p79, %p80
    %p83 = scmp.ne.s32.totalorder %s68, %s82
    %p84 = scmp.eq.s32.totalorder %s16, 0
    %p85 = por %p83, %p84
    %s86 = ssub.s32 %s10, %s17
    %p87 = scmp.eq.s32.totalorder %s86, 0
    %s89 = sadd.s32 %s88, 1
    %s90 = scalar_select %p87, %s88, %s89
    %p93 = pneg %p87
    %p94 = scmp.eq.s32.totalorder %s10, 1
    %p95 = por %p93, %p94
    %p96 = scmp.ne.s32.totalorder %s88, %s91
    %p97 = scmp.eq.s32.totalorder %s10, 0
    %p98 = por %p96, %p97
    %p99 = scmp.ne.s32.totalorder %s88, %s91
    %p100 = scmp.eq.s32.totalorder %s15, 1
    %p101 = por %p99, %p100
    %p102 = scmp.ne.s32.totalorder %s91, %s92
    %p103 = scmp.eq.s32.totalorder %s15, 0
    %p104 = por %p102, %p103
    %p105 = scmp.ne.s32.totalorder %s91, %s92
    %p106 = scmp.eq.s32.totalorder %s16, 1
    %p107 = por %p105, %p106
    %p109 = scmp.ne.s32.totalorder %s92, %s108
    %p110 = scmp.eq.s32.totalorder %s16, 0
    %p111 = por %p109, %p110
    %s112 = ssub.s32 %s10, %s17
    %p113 = scmp.eq.s32.totalorder %s112, 0
    %s115 = sadd.s32 %s114, 1
    %s116 = scalar_select %p113, %s114, %s115
    %p119 = pneg %p113
    %p120 = scmp.eq.s32.totalorder %s10, 1
    %p121 = por %p119, %p120
    %p122 = scmp.ne.s32.totalorder %s114, %s117
    %p123 = scmp.eq.s32.totalorder %s10, 0
    %p124 = por %p122, %p123
    %p125 = scmp.ne.s32.totalorder %s114, %s117
    %p126 = scmp.eq.s32.totalorder %s15, 1
    %p127 = por %p125, %p126
    %p128 = scmp.ne.s32.totalorder %s117, %s118
    %p129 = scmp.eq.s32.totalorder %s15, 0
    %p130 = por %p128, %p129
    %p131 = scmp.ne.s32.totalorder %s117, %s118
    %p132 = scmp.eq.s32.totalorder %s16, 1
    %p133 = por %p131, %p132
    %p135 = scmp.ne.s32.totalorder %s118, %s134
    %p136 = scmp.eq.s32.totalorder %s16, 0
    %p137 = por %p135, %p136
    %p138 = scmp.le.s32.totalorder 1, %s10
    %p139 = scmp.lt.s32.totalorder %s10, 3
    %p140 = pnand %p138, %p139
    %p141 = pneg %p140
    // Predicated region
    $region9: #{vits_text_encoder_forward.19} parent=5 // pred_check
      _
    $region10: #{vits_text_encoder_forward.19} parent=5 // pred_check_branch
      %143 = sbr.rel (%p140) target = $region12
    $region11: #{vits_text_encoder_forward.19} parent=5 // pred_region
      %s144 = ssub.s32 %s10, 1
      // Predicated region
      $region13: #{vits_text_encoder_forward.19} parent=11 // pred_check
        %p145 = pneg %p57
      $region14: #{vits_text_encoder_forward.19} parent=11 // pred_check_branch
        %147 = sbr.rel (%p145) target = $region16
      $region15: #{vits_text_encoder_forward.19} parent=11 // pred_region
        _
      $region16: #{vits_text_encoder_forward.19} parent=11 // pred_fallthru
        _
      // Predicated region
      $region17: #{vits_text_encoder_forward.19} parent=11 // pred_check
        %p148 = pneg %p78
      $region18: #{vits_text_encoder_forward.19} parent=11 // pred_check_branch
        %150 = sbr.rel (%p148) target = $region20
      $region19: #{vits_text_encoder_forward.19} parent=11 // pred_region
        _
      $region20: #{vits_text_encoder_forward.19} parent=11 // pred_fallthru
        _
    $region12: #{vits_text_encoder_forward.19} parent=5 // pred_fallthru
      _
    %p151 = scmp.lt.s32.totalorder %s10, 2
    // Predicated region
    $region21: #{vits_text_encoder_forward.19} parent=5 // pred_check
      %p152 = pneg %p151
    $region22: #{vits_text_encoder_forward.19} parent=5 // pred_check_branch
      %154 = sbr.rel (%p152) target = $region24
    $region23: #{vits_text_encoder_forward.19} parent=5 // pred_region
      // Predicated region
      $region25: #{vits_text_encoder_forward.19} parent=23 // pred_check
        %p155 = pneg %p30
      $region26: #{vits_text_encoder_forward.19} parent=23 // pred_check_branch
        %157 = sbr.rel (%p155) target = $region28
      $region27: #{vits_text_encoder_forward.19} parent=23 // pred_region
        %p158 = scmp.lt.s32.totalorder %s10, 1
        %s159 = scalar_select %p158, %s10, 1
        %s160 = smul.addr %s159, 17
        %s161 = smul.addr %s160, 8
        %s162 = scalar_lea.vmem %s0, %s161
      $region28: #{vits_text_encoder_forward.19} parent=23 // pred_fallthru
        _
      // Predicated region
      $region29: #{vits_text_encoder_forward.19} parent=23 // pred_check
        %p163 = pneg %p98
      $region30: #{vits_text_encoder_forward.19} parent=23 // pred_check_branch
        %165 = sbr.rel (%p163) target = $region32
      $region31: #{vits_text_encoder_forward.19} parent=23 // pred_region
        %p166 = scmp.lt.s32.totalorder %s10, 1
        %s167 = scalar_select %p166, %s10, 1
        %s168 = smul.addr %s167, 16
        %s169 = smul.addr %s168, 8
        %s170 = scalar_lea.vmem %s3, %s169
      $region32: #{vits_text_encoder_forward.19} parent=23 // pred_fallthru
        _
    $region24: #{vits_text_encoder_forward.19} parent=5 // pred_fallthru
      _
    %p171 = scmp.le.s32.totalorder 1, %s10
    %p172 = scmp.lt.s32.totalorder %s10, 3
    %p173 = pnand %p171, %p172
    %p174 = pneg %p173
    // Predicated region
    $region33: #{vits_text_encoder_forward.19} parent=5 // pred_check
      _
    $region34: #{vits_text_encoder_forward.19} parent=5 // pred_check_branch
      %176 = sbr.rel (%p173) target = $region36
    $region35: #{vits_text_encoder_forward.19} parent=5 // pred_region
      %s177 = ssub.s32 %s10, 1
      %p178 = scmp.lt.s32.totalorder %s15, 1
      %s179 = scalar_select %p178, %s15, 1
      %s180 = smul.addr %s179, 17
      %s181 = smul.addr %s180, 8
      %s182 = scalar_lea.vmem %s0, %s181
      %p183 = pneg %p36
      %p184 = pneg %p33
      %p185 = pneg %p57
      %p186 = pneg %p54
      %p187 = pneg %p78
      %p188 = pneg %p75
      %p189 = scmp.lt.s32.totalorder %s15, 1
      %s190 = scalar_select %p189, %s15, 1
      %s191 = smul.addr %s190, 16
      %s192 = smul.addr %s191, 8
      %s193 = scalar_lea.vmem %s3, %s192
      %p194 = pneg %p104
      %p195 = pneg %p101
      %p196 = pneg %p130
      %p197 = pneg %p127
      %p198 = scmp.lt.s32.totalorder %s15, 1
      %s199 = scalar_select %p198, %s15, 1
      %s200 = smul.addr %s199, 16
      %s201 = smul.addr %s200, 8
      %s202 = scalar_lea.vmem %s4, %s201
      %p203 = scmp.lt.s32.totalorder %s15, 1
      %s204 = scalar_select %p203, %s15, 1
      %s205 = smul.addr %s204, 17
      %s206 = smul.addr %s205, 8
      %s207 = scalar_lea.vmem %s0, %s206
      %p208 = scmp.lt.s32.totalorder %s15, 1
      %s209 = scalar_select %p208, %s15, 1
      %s210 = smul.addr %s209, 16
      %s211 = smul.addr %s210, 8
      %s212 = scalar_lea.vmem %s3, %s211
      %p213 = scmp.lt.s32.totalorder %s15, 1
      %s214 = scalar_select %p213, %s15, 1
      %s215 = smul.addr %s214, 16
      %s216 = smul.addr %s215, 8
      %s217 = scalar_lea.vmem %s4, %s216
      %v218 = vld [vmem:[%s207] sm:$0xff]
      %v219 = vld [vmem:[%s207 + $0x8] sm:$0xff]
      %v220 = vld [vmem:[%s207 + $0x10] sm:$0xff]
      %v221 = vld [vmem:[%s207 + $0x18] sm:$0xff]
      %v222 = vld [vmem:[%s207 + $0x20] sm:$0xff]
      %v223 = vld [vmem:[%s207 + $0x28] sm:$0xff]
      %v224 = vld [vmem:[%s207 + $0x30] sm:$0xff]
      %v225 = vld [vmem:[%s207 + $0x38] sm:$0xff]
      %v226 = vld [vmem:[%s207 + $0x40] sm:$0xff]
      %v227 = vld [vmem:[%s207 + $0x48] sm:$0xff]
      %v228 = vld [vmem:[%s207 + $0x50] sm:$0xff]
      %v229 = vld [vmem:[%s207 + $0x58] sm:$0xff]
      %v230 = vld [vmem:[%s207 + $0x60] sm:$0xff]
      %v231 = vld [vmem:[%s207 + $0x68] sm:$0xff]
      %v232 = vld [vmem:[%s207 + $0x70] sm:$0xff]
      %v233 = vld [vmem:[%s207 + $0x78] sm:$0xff]
      %v234 = vld [vmem:[%s1] sm:$0xff]
      %v235 = vld [vmem:[%s1 + $0x8] sm:$0xff]
      %v236 = vld [vmem:[%s1 + $0x10] sm:$0xff]
      %v237 = vld [vmem:[%s1 + $0x18] sm:$0xff]
      %v238 = vld [vmem:[%s1 + $0x20] sm:$0xff]
      %v239 = vld [vmem:[%s1 + $0x28] sm:$0xff]
      %v240 = vld [vmem:[%s1 + $0x30] sm:$0xff]
      %v241 = vld [vmem:[%s1 + $0x38] sm:$0xff]
      %v242 = vld [vmem:[%s207 + $0x1] sm:$0xff]
      %v243 = vld [vmem:[%s207 + $0x9] sm:$0xff]
      %v244 = vld [vmem:[%s207 + $0x11] sm:$0xff]
      %v245 = vld [vmem:[%s207 + $0x19] sm:$0xff]
      %v246 = vld [vmem:[%s207 + $0x21] sm:$0xff]
      %v247 = vld [vmem:[%s207 + $0x29] sm:$0xff]
      %v248 = vld [vmem:[%s207 + $0x31] sm:$0xff]
      %v249 = vld [vmem:[%s207 + $0x39] sm:$0xff]
      %v250 = vld [vmem:[%s207 + $0x41] sm:$0xff]
      %v251 = vld [vmem:[%s207 + $0x49] sm:$0xff]
      %v252 = vld [vmem:[%s207 + $0x51] sm:$0xff]
      %v253 = vld [vmem:[%s207 + $0x59] sm:$0xff]
      %v254 = vld [vmem:[%s207 + $0x61] sm:$0xff]
      %v255 = vld [vmem:[%s207 + $0x69] sm:$0xff]
      %v256 = vld [vmem:[%s207 + $0x71] sm:$0xff]
      %v257 = vld [vmem:[%s207 + $0x79] sm:$0xff]
      %s258 = scalar_lea.vmem %s1, 64
      %v259 = vld [vmem:[%s258] sm:$0xff]
      %v260 = vld [vmem:[%s258 + $0x8] sm:$0xff]
      %v261 = vld [vmem:[%s258 + $0x10] sm:$0xff]
      %v262 = vld [vmem:[%s258 + $0x18] sm:$0xff]
      %v263 = vld [vmem:[%s258 + $0x20] sm:$0xff]
      %v264 = vld [vmem:[%s258 + $0x28] sm:$0xff]
      %v265 = vld [vmem:[%s258 + $0x30] sm:$0xff]
      %v266 = vld [vmem:[%s258 + $0x38] sm:$0xff]
      %vm267 = vcmask 523264
      %v269 = vsel %vm267, %v242, 0
      %v272 = vsel %vm267, %v243, 0
      %v275 = vsel %vm267, %v244, 0
      %v278 = vsel %vm267, %v245, 0
      %v281 = vsel %vm267, %v246, 0
      %v284 = vsel %vm267, %v247, 0
      %v287 = vsel %vm267, %v248, 0
      %v290 = vsel %vm267, %v249, 0
      %v293 = vsel %vm267, %v250, 0
      %v296 = vsel %vm267, %v251, 0
      %v299 = vsel %vm267, %v252, 0
      %v302 = vsel %vm267, %v253, 0
      %v305 = vsel %vm267, %v254, 0
      %v308 = vsel %vm267, %v255, 0
      %v311 = vsel %vm267, %v256, 0
      %v314 = vsel %vm267, %v257, 0
      %316 = vmatprep.subr.mxu0 0.0
      %317 = vmatpush1.msra.mxu0 0.0
      %318 = vmatprep.subr.mxu0 0.0
      %319 = vmatpush1.msra.mxu0 0.0
      %320 = vmatprep.subr.mxu0 0.0
      %321 = vmatpush1.msra.mxu0 0.0
      %322 = vmatprep.subr.mxu0 0.0
      %323 = vmatpush1.msra.mxu0 0.0
      %324 = vmatprep.subr.mxu0 0.0
      %325 = vmatpush1.msra.mxu0 0.0
      %326 = vmatprep.subr.mxu0 0.0
      %327 = vmatpush1.msra.mxu0 0.0
      %328 = vmatprep.subr.mxu0 0.0
      %329 = vmatpush1.msra.mxu0 0.0
      %330 = vmatprep.subr.mxu0 0.0
      %331 = vmatpush1.msra.mxu0 0.0
      %332 = vmatprep.subr.mxu0 0.0
      %333 = vmatpush1.msra.mxu0 %v266
      %334 = vmatprep.subr.mxu0 0.0
      %335 = vmatpush1.msra.mxu0 %v265
      %336 = vmatprep.subr.mxu0 0.0
      %337 = vmatpush1.msra.mxu0 %v264
      %338 = vmatprep.subr.mxu0 0.0
      %339 = vmatpush1.msra.mxu0 %v263
      %340 = vmatprep.subr.mxu0 0.0
      %341 = vmatpush1.msra.mxu0 %v262
      %342 = vmatprep.subr.mxu0 0.0
      %343 = vmatpush1.msra.mxu0 %v261
      %344 = vmatprep.subr.mxu0 0.0
      %345 = vmatpush1.msra.mxu0 %v260
      %346 = vmatprep.subr.mxu0 0.0
      %347 = vmatpush1.msra.mxu0 %v259
      %348 = vmatprep.subr.mxu0 0.0
      %349 = vmatpush2.msra.mxu0 0.0
      %350 = vmatprep.subr.mxu0 0.0
      %351 = vmatpush2.msra.mxu0 0.0
      %352 = vmatprep.subr.mxu0 0.0
      %353 = vmatpush2.msra.mxu0 0.0
      %354 = vmatprep.subr.mxu0 0.0
      %355 = vmatpush2.msra.mxu0 0.0
      %356 = vmatprep.subr.mxu0 0.0
      %357 = vmatpush2.msra.mxu0 0.0
      %358 = vmatprep.subr.mxu0 0.0
      %359 = vmatpush2.msra.mxu0 0.0
      %360 = vmatprep.subr.mxu0 0.0
      %361 = vmatpush2.msra.mxu0 0.0
      %362 = vmatprep.subr.mxu0 0.0
      %363 = vmatpush2.msra.mxu0 0.0
      %364 = vmatprep.subr.mxu0 0.0
      %365 = vmatpush2.msra.mxu0 0.0
      %366 = vmatprep.subr.mxu0 0.0
      %367 = vmatpush2.msra.mxu0 0.0
      %368 = vmatprep.subr.mxu0 0.0
      %369 = vmatpush2.msra.mxu0 0.0
      %370 = vmatprep.subr.mxu0 0.0
      %371 = vmatpush2.msra.mxu0 0.0
      %372 = vmatprep.subr.mxu0 0.0
      %373 = vmatpush2.msra.mxu0 0.0
      %374 = vmatprep.subr.mxu0 0.0
      %375 = vmatpush2.msra.mxu0 0.0
      %376 = vmatprep.subr.mxu0 0.0
      %377 = vmatpush2.msra.mxu0 0.0
      %378 = vmatprep.subr.mxu0 0.0
      %379 = vmatpush2.msra.mxu0 0.0
      %380 = vmatprep.mubr.f32.mxu0 0.0
      %381 = vmatmul.mubr.f32.gmra.mxu0 %v269
      %v382 = vpop.f32.mrf.mxu0
      %v383 = vadd.f32 0.0, %v382
      %v384 = vpop.f32.mrf.mxu0
      %385 = vmatprep.mubr.f32.mxu0 0.0
      %386 = vmatmul.mubr.f32.gmra.mxu0 %v272
      %v387 = vpop.f32.mrf.mxu0
      %v388 = vadd.f32 0.0, %v387
      %v389 = vpop.f32.mrf.mxu0
      %390 = vmatprep.mubr.f32.mxu0 0.0
      %391 = vmatmul.mubr.f32.gmra.mxu0 %v275
      %v392 = vpop.f32.mrf.mxu0
      %v393 = vadd.f32 0.0, %v392
      %v394 = vpop.f32.mrf.mxu0
      %395 = vmatprep.mubr.f32.mxu0 0.0
      %396 = vmatmul.mubr.f32.gmra.mxu0 %v278
      %v397 = vpop.f32.mrf.mxu0
      %v398 = vadd.f32 0.0, %v397
      %v399 = vpop.f32.mrf.mxu0
      %400 = vmatprep.mubr.f32.mxu0 0.0
      %401 = vmatmul.mubr.f32.gmra.mxu0 %v281
      %v402 = vpop.f32.mrf.mxu0
      %v403 = vadd.f32 0.0, %v402
      %v404 = vpop.f32.mrf.mxu0
      %405 = vmatprep.mubr.f32.mxu0 0.0
      %406 = vmatmul.mubr.f32.gmra.mxu0 %v284
      %v407 = vpop.f32.mrf.mxu0
      %v408 = vadd.f32 0.0, %v407
      %v409 = vpop.f32.mrf.mxu0
      %410 = vmatprep.mubr.f32.mxu0 0.0
      %411 = vmatmul.mubr.f32.gmra.mxu0 %v287
      %v412 = vpop.f32.mrf.mxu0
      %v413 = vadd.f32 0.0, %v412
      %v414 = vpop.f32.mrf.mxu0
      %415 = vmatprep.mubr.f32.mxu0 0.0
      %416 = vmatmul.mubr.f32.gmra.mxu0 %v290
      %v417 = vpop.f32.mrf.mxu0
      %v418 = vadd.f32 0.0, %v417
      %v419 = vpop.f32.mrf.mxu0
      %420 = vmatprep.mubr.f32.mxu0 0.0
      %421 = vmatmul.mubr.f32.gmra.mxu0 %v293
      %v422 = vpop.f32.mrf.mxu0
      %v423 = vadd.f32 0.0, %v422
      %v424 = vpop.f32.mrf.mxu0
      %425 = vmatprep.mubr.f32.mxu0 0.0
      %426 = vmatmul.mubr.f32.gmra.mxu0 %v296
      %v427 = vpop.f32.mrf.mxu0
      %v428 = vadd.f32 0.0, %v427
      %v429 = vpop.f32.mrf.mxu0
      %430 = vmatprep.mubr.f32.mxu0 0.0
      %431 = vmatmul.mubr.f32.gmra.mxu0 %v299
      %v432 = vpop.f32.mrf.mxu0
      %v433 = vadd.f32 0.0, %v432
      %v434 = vpop.f32.mrf.mxu0
      %435 = vmatprep.mubr.f32.mxu0 0.0
      %436 = vmatmul.mubr.f32.gmra.mxu0 %v302
      %v437 = vpop.f32.mrf.mxu0
      %v438 = vadd.f32 0.0, %v437
      %v439 = vpop.f32.mrf.mxu0
      %440 = vmatprep.mubr.f32.mxu0 0.0
      %441 = vmatmul.mubr.f32.gmra.mxu0 %v305
      %v442 = vpop.f32.mrf.mxu0
      %v443 = vadd.f32 0.0, %v442
      %v444 = vpop.f32.mrf.mxu0
      %445 = vmatprep.mubr.f32.mxu0 0.0
      %446 = vmatmul.mubr.f32.gmra.mxu0 %v308
      %v447 = vpop.f32.mrf.mxu0
      %v448 = vadd.f32 0.0, %v447
      %v449 = vpop.f32.mrf.mxu0
      %450 = vmatprep.mubr.f32.mxu0 0.0
      %451 = vmatmul.mubr.f32.gmra.mxu0 %v311
      %v452 = vpop.f32.mrf.mxu0
      %v453 = vadd.f32 0.0, %v452
      %v454 = vpop.f32.mrf.mxu0
      %455 = vmatprep.mubr.f32.mxu0 0.0
      %456 = vmatmul.mubr.f32.gmra.mxu0 %v314
      %v457 = vpop.f32.mrf.mxu0
      %v458 = vadd.f32 0.0, %v457
      %v459 = vpop.f32.mrf.mxu0
      %460 = vdwg.mxu0
      %v462 = vsel %vm267, %v218, 0
      %v465 = vsel %vm267, %v219, 0
      %v468 = vsel %vm267, %v220, 0
      %v471 = vsel %vm267, %v221, 0
      %v474 = vsel %vm267, %v222, 0
      %v477 = vsel %vm267, %v223, 0
      %v480 = vsel %vm267, %v224, 0
      %v483 = vsel %vm267, %v225, 0
      %v486 = vsel %vm267, %v226, 0
      %v489 = vsel %vm267, %v227, 0
      %v492 = vsel %vm267, %v228, 0
      %v495 = vsel %vm267, %v229, 0
      %v498 = vsel %vm267, %v230, 0
      %v501 = vsel %vm267, %v231, 0
      %v504 = vsel %vm267, %v232, 0
      %v507 = vsel %vm267, %v233, 0
      %509 = vmatprep.subr.mxu0 0.0
      %510 = vmatpush1.msra.mxu0 0.0
      %511 = vmatprep.subr.mxu0 0.0
      %512 = vmatpush1.msra.mxu0 0.0
      %513 = vmatprep.subr.mxu0 0.0
      %514 = vmatpush1.msra.mxu0 0.0
      %515 = vmatprep.subr.mxu0 0.0
      %516 = vmatpush1.msra.mxu0 0.0
      %517 = vmatprep.subr.mxu0 0.0
      %518 = vmatpush1.msra.mxu0 0.0
      %519 = vmatprep.subr.mxu0 0.0
      %520 = vmatpush1.msra.mxu0 0.0
      %521 = vmatprep.subr.mxu0 0.0
      %522 = vmatpush1.msra.mxu0 0.0
      %523 = vmatprep.subr.mxu0 0.0
      %524 = vmatpush1.msra.mxu0 0.0
      %525 = vmatprep.subr.mxu0 0.0
      %526 = vmatpush1.msra.mxu0 %v241
      %527 = vmatprep.subr.mxu0 0.0
      %528 = vmatpush1.msra.mxu0 %v240
      %529 = vmatprep.subr.mxu0 0.0
      %530 = vmatpush1.msra.mxu0 %v239
      %531 = vmatprep.subr.mxu0 0.0
      %532 = vmatpush1.msra.mxu0 %v238
      %533 = vmatprep.subr.mxu0 0.0
      %534 = vmatpush1.msra.mxu0 %v237
      %535 = vmatprep.subr.mxu0 0.0
      %536 = vmatpush1.msra.mxu0 %v236
      %537 = vmatprep.subr.mxu0 0.0
      %538 = vmatpush1.msra.mxu0 %v235
      %539 = vmatprep.subr.mxu0 0.0
      %540 = vmatpush1.msra.mxu0 %v234
      %541 = vmatprep.subr.mxu0 0.0
      %542 = vmatpush2.msra.mxu0 0.0
      %543 = vmatprep.subr.mxu0 0.0
      %544 = vmatpush2.msra.mxu0 0.0
      %545 = vmatprep.subr.mxu0 0.0
      %546 = vmatpush2.msra.mxu0 0.0
      %547 = vmatprep.subr.mxu0 0.0
      %548 = vmatpush2.msra.mxu0 0.0
      %549 = vmatprep.subr.mxu0 0.0
      %550 = vmatpush2.msra.mxu0 0.0
      %551 = vmatprep.subr.mxu0 0.0
      %552 = vmatpush2.msra.mxu0 0.0
      %553 = vmatprep.subr.mxu0 0.0
      %554 = vmatpush2.msra.mxu0 0.0
      %555 = vmatprep.subr.mxu0 0.0
      %556 = vmatpush2.msra.mxu0 0.0
      %557 = vmatprep.subr.mxu0 0.0
      %558 = vmatpush2.msra.mxu0 0.0
      %559 = vmatprep.subr.mxu0 0.0
      %560 = vmatpush2.msra.mxu0 0.0
      %561 = vmatprep.subr.mxu0 0.0
      %562 = vmatpush2.msra.mxu0 0.0
      %563 = vmatprep.subr.mxu0 0.0
      %564 = vmatpush2.msra.mxu0 0.0
      %565 = vmatprep.subr.mxu0 0.0
      %566 = vmatpush2.msra.mxu0 0.0
      %567 = vmatprep.subr.mxu0 0.0
      %568 = vmatpush2.msra.mxu0 0.0
      %569 = vmatprep.subr.mxu0 0.0
      %570 = vmatpush2.msra.mxu0 0.0
      %571 = vmatprep.subr.mxu0 0.0
      %572 = vmatpush2.msra.mxu0 0.0
      %573 = vmatprep.mubr.f32.mxu0 0.0
      %574 = vmatmul.mubr.f32.gmra.mxu0 %v462
      %v575 = vpop.f32.mrf.mxu0
      %v576 = vadd.f32 %v383, %v575
      %v577 = vpop.f32.mrf.mxu0
      %578 = vmatprep.mubr.f32.mxu0 0.0
      %579 = vmatmul.mubr.f32.gmra.mxu0 %v465
      %v580 = vpop.f32.mrf.mxu0
      %v581 = vadd.f32 %v388, %v580
      %v582 = vpop.f32.mrf.mxu0
      %583 = vmatprep.mubr.f32.mxu0 0.0
      %584 = vmatmul.mubr.f32.gmra.mxu0 %v468
      %v585 = vpop.f32.mrf.mxu0
      %v586 = vadd.f32 %v393, %v585
      %v587 = vpop.f32.mrf.mxu0
      %588 = vmatprep.mubr.f32.mxu0 0.0
      %589 = vmatmul.mubr.f32.gmra.mxu0 %v471
      %v590 = vpop.f32.mrf.mxu0
      %v591 = vadd.f32 %v398, %v590
      %v592 = vpop.f32.mrf.mxu0
      %593 = vmatprep.mubr.f32.mxu0 0.0
      %594 = vmatmul.mubr.f32.gmra.mxu0 %v474
      %v595 = vpop.f32.mrf.mxu0
      %v596 = vadd.f32 %v403, %v595
      %v597 = vpop.f32.mrf.mxu0
      %598 = vmatprep.mubr.f32.mxu0 0.0
      %599 = vmatmul.mubr.f32.gmra.mxu0 %v477
      %v600 = vpop.f32.mrf.mxu0
      %v601 = vadd.f32 %v408, %v600
      %v602 = vpop.f32.mrf.mxu0
      %603 = vmatprep.mubr.f32.mxu0 0.0
      %604 = vmatmul.mubr.f32.gmra.mxu0 %v480
      %v605 = vpop.f32.mrf.mxu0
      %v606 = vadd.f32 %v413, %v605
      %v607 = vpop.f32.mrf.mxu0
      %608 = vmatprep.mubr.f32.mxu0 0.0
      %609 = vmatmul.mubr.f32.gmra.mxu0 %v483
      %v610 = vpop.f32.mrf.mxu0
      %v611 = vadd.f32 %v418, %v610
      %v612 = vpop.f32.mrf.mxu0
      %613 = vmatprep.mubr.f32.mxu0 0.0
      %614 = vmatmul.mubr.f32.gmra.mxu0 %v486
      %v615 = vpop.f32.mrf.mxu0
      %v616 = vadd.f32 %v423, %v615
      %v617 = vpop.f32.mrf.mxu0
      %618 = vmatprep.mubr.f32.mxu0 0.0
      %619 = vmatmul.mubr.f32.gmra.mxu0 %v489
      %v620 = vpop.f32.mrf.mxu0
      %v621 = vadd.f32 %v428, %v620
      %v622 = vpop.f32.mrf.mxu0
      %623 = vmatprep.mubr.f32.mxu0 0.0
      %624 = vmatmul.mubr.f32.gmra.mxu0 %v492
      %v625 = vpop.f32.mrf.mxu0
      %v626 = vadd.f32 %v433, %v625
      %v627 = vpop.f32.mrf.mxu0
      %628 = vmatprep.mubr.f32.mxu0 0.0
      %629 = vmatmul.mubr.f32.gmra.mxu0 %v495
      %v630 = vpop.f32.mrf.mxu0
      %v631 = vadd.f32 %v438, %v630
      %v632 = vpop.f32.mrf.mxu0
      %633 = vmatprep.mubr.f32.mxu0 0.0
      %634 = vmatmul.mubr.f32.gmra.mxu0 %v498
      %v635 = vpop.f32.mrf.mxu0
      %v636 = vadd.f32 %v443, %v635
      %v637 = vpop.f32.mrf.mxu0
      %638 = vmatprep.mubr.f32.mxu0 0.0
      %639 = vmatmul.mubr.f32.gmra.mxu0 %v501
      %v640 = vpop.f32.mrf.mxu0
      %v641 = vadd.f32 %v448, %v640
      %v642 = vpop.f32.mrf.mxu0
      %643 = vmatprep.mubr.f32.mxu0 0.0
      %644 = vmatmul.mubr.f32.gmra.mxu0 %v504
      %v645 = vpop.f32.mrf.mxu0
      %v646 = vadd.f32 %v453, %v645
      %v647 = vpop.f32.mrf.mxu0
      %648 = vmatprep.mubr.f32.mxu0 0.0
      %649 = vmatmul.mubr.f32.gmra.mxu0 %v507
      %v650 = vpop.f32.mrf.mxu0
      %v651 = vadd.f32 %v458, %v650
      %v652 = vpop.f32.mrf.mxu0
      %653 = vdwg.mxu0
      %v654 = vld [vmem:[%s207 + $0x2] sm:$0xff]
      %v655 = vld [vmem:[%s207 + $0xa] sm:$0xff]
      %v656 = vld [vmem:[%s207 + $0x12] sm:$0xff]
      %v657 = vld [vmem:[%s207 + $0x1a] sm:$0xff]
      %v658 = vld [vmem:[%s207 + $0x22] sm:$0xff]
      %v659 = vld [vmem:[%s207 + $0x2a] sm:$0xff]
      %v660 = vld [vmem:[%s207 + $0x32] sm:$0xff]
      %v661 = vld [vmem:[%s207 + $0x3a] sm:$0xff]
      %v662 = vld [vmem:[%s207 + $0x42] sm:$0xff]
      %v663 = vld [vmem:[%s207 + $0x4a] sm:$0xff]
      %v664 = vld [vmem:[%s207 + $0x52] sm:$0xff]
      %v665 = vld [vmem:[%s207 + $0x5a] sm:$0xff]
      %v666 = vld [vmem:[%s207 + $0x62] sm:$0xff]
      %v667 = vld [vmem:[%s207 + $0x6a] sm:$0xff]
      %v668 = vld [vmem:[%s207 + $0x72] sm:$0xff]
      %v669 = vld [vmem:[%s207 + $0x7a] sm:$0xff]
      %s670 = scalar_lea.vmem %s1, 128
      %v671 = vld [vmem:[%s670] sm:$0xff]
      %v672 = vld [vmem:[%s670 + $0x8] sm:$0xff]
      %v673 = vld [vmem:[%s670 + $0x10] sm:$0xff]
      %v674 = vld [vmem:[%s670 + $0x18] sm:$0xff]
      %v675 = vld [vmem:[%s670 + $0x20] sm:$0xff]
      %v676 = vld [vmem:[%s670 + $0x28] sm:$0xff]
      %v677 = vld [vmem:[%s670 + $0x30] sm:$0xff]
      %v678 = vld [vmem:[%s670 + $0x38] sm:$0xff]
      %v680 = vsel %vm267, %v654, 0
      %v683 = vsel %vm267, %v655, 0
      %v686 = vsel %vm267, %v656, 0
      %v689 = vsel %vm267, %v657, 0
      %v692 = vsel %vm267, %v658, 0
      %v695 = vsel %vm267, %v659, 0
      %v698 = vsel %vm267, %v660, 0
      %v701 = vsel %vm267, %v661, 0
      %v704 = vsel %vm267, %v662, 0
      %v707 = vsel %vm267, %v663, 0
      %v710 = vsel %vm267, %v664, 0
      %v713 = vsel %vm267, %v665, 0
      %v716 = vsel %vm267, %v666, 0
      %v719 = vsel %vm267, %v667, 0
      %v722 = vsel %vm267, %v668, 0
      %v725 = vsel %vm267, %v669, 0
      %727 = vmatprep.subr.mxu0 0.0
      %728 = vmatpush1.msra.mxu0 0.0
      %729 = vmatprep.subr.mxu0 0.0
      %730 = vmatpush1.msra.mxu0 0.0
      %731 = vmatprep.subr.mxu0 0.0
      %732 = vmatpush1.msra.mxu0 0.0
      %733 = vmatprep.subr.mxu0 0.0
      %734 = vmatpush1.msra.mxu0 0.0
      %735 = vmatprep.subr.mxu0 0.0
      %736 = vmatpush1.msra.mxu0 0.0
      %737 = vmatprep.subr.mxu0 0.0
      %738 = vmatpush1.msra.mxu0 0.0
      %739 = vmatprep.subr.mxu0 0.0
      %740 = vmatpush1.msra.mxu0 0.0
      %741 = vmatprep.subr.mxu0 0.0
      %742 = vmatpush1.msra.mxu0 0.0
      %743 = vmatprep.subr.mxu0 0.0
      %744 = vmatpush1.msra.mxu0 %v678
      %745 = vmatprep.subr.mxu0 0.0
      %746 = vmatpush1.msra.mxu0 %v677
      %747 = vmatprep.subr.mxu0 0.0
      %748 = vmatpush1.msra.mxu0 %v676
      %749 = vmatprep.subr.mxu0 0.0
      %750 = vmatpush1.msra.mxu0 %v675
      %751 = vmatprep.subr.mxu0 0.0
      %752 = vmatpush1.msra.mxu0 %v674
      %753 = vmatprep.subr.mxu0 0.0
      %754 = vmatpush1.msra.mxu0 %v673
      %755 = vmatprep.subr.mxu0 0.0
      %756 = vmatpush1.msra.mxu0 %v672
      %757 = vmatprep.subr.mxu0 0.0
      %758 = vmatpush1.msra.mxu0 %v671
      %759 = vmatprep.subr.mxu0 0.0
      %760 = vmatpush2.msra.mxu0 0.0
      %761 = vmatprep.subr.mxu0 0.0
      %762 = vmatpush2.msra.mxu0 0.0
      %763 = vmatprep.subr.mxu0 0.0
      %764 = vmatpush2.msra.mxu0 0.0
      %765 = vmatprep.subr.mxu0 0.0
      %766 = vmatpush2.msra.mxu0 0.0
      %767 = vmatprep.subr.mxu0 0.0
      %768 = vmatpush2.msra.mxu0 0.0
      %769 = vmatprep.subr.mxu0 0.0
      %770 = vmatpush2.msra.mxu0 0.0
      %771 = vmatprep.subr.mxu0 0.0
      %772 = vmatpush2.msra.mxu0 0.0
      %773 = vmatprep.subr.mxu0 0.0
      %774 = vmatpush2.msra.mxu0 0.0
      %775 = vmatprep.subr.mxu0 0.0
      %776 = vmatpush2.msra.mxu0 0.0
      %777 = vmatprep.subr.mxu0 0.0
      %778 = vmatpush2.msra.mxu0 0.0
      %779 = vmatprep.subr.mxu0 0.0
      %780 = vmatpush2.msra.mxu0 0.0
      %781 = vmatprep.subr.mxu0 0.0
      %782 = vmatpush2.msra.mxu0 0.0
      %783 = vmatprep.subr.mxu0 0.0
      %784 = vmatpush2.msra.mxu0 0.0
      %785 = vmatprep.subr.mxu0 0.0
      %786 = vmatpush2.msra.mxu0 0.0
      %787 = vmatprep.subr.mxu0 0.0
      %788 = vmatpush2.msra.mxu0 0.0
      %789 = vmatprep.subr.mxu0 0.0
      %790 = vmatpush2.msra.mxu0 0.0
      %791 = vmatprep.mubr.f32.mxu0 0.0
      %792 = vmatmul.mubr.f32.gmra.mxu0 %v680
      %v793 = vpop.f32.mrf.mxu0
      %v794 = vadd.f32 0.0, %v793
      %v795 = vpop.f32.mrf.mxu0
      %796 = vmatprep.mubr.f32.mxu0 0.0
      %797 = vmatmul.mubr.f32.gmra.mxu0 %v683
      %v798 = vpop.f32.mrf.mxu0
      %v799 = vadd.f32 0.0, %v798
      %v800 = vpop.f32.mrf.mxu0
      %801 = vmatprep.mubr.f32.mxu0 0.0
      %802 = vmatmul.mubr.f32.gmra.mxu0 %v686
      %v803 = vpop.f32.mrf.mxu0
      %v804 = vadd.f32 0.0, %v803
      %v805 = vpop.f32.mrf.mxu0
      %806 = vmatprep.mubr.f32.mxu0 0.0
      %807 = vmatmul.mubr.f32.gmra.mxu0 %v689
      %v808 = vpop.f32.mrf.mxu0
      %v809 = vadd.f32 0.0, %v808
      %v810 = vpop.f32.mrf.mxu0
      %811 = vmatprep.mubr.f32.mxu0 0.0
      %812 = vmatmul.mubr.f32.gmra.mxu0 %v692
      %v813 = vpop.f32.mrf.mxu0
      %v814 = vadd.f32 0.0, %v813
      %v815 = vpop.f32.mrf.mxu0
      %816 = vmatprep.mubr.f32.mxu0 0.0
      %817 = vmatmul.mubr.f32.gmra.mxu0 %v695
      %v818 = vpop.f32.mrf.mxu0
      %v819 = vadd.f32 0.0, %v818
      %v820 = vpop.f32.mrf.mxu0
      %821 = vmatprep.mubr.f32.mxu0 0.0
      %822 = vmatmul.mubr.f32.gmra.mxu0 %v698
      %v823 = vpop.f32.mrf.mxu0
      %v824 = vadd.f32 0.0, %v823
      %v825 = vpop.f32.mrf.mxu0
      %826 = vmatprep.mubr.f32.mxu0 0.0
      %827 = vmatmul.mubr.f32.gmra.mxu0 %v701
      %v828 = vpop.f32.mrf.mxu0
      %v829 = vadd.f32 0.0, %v828
      %v830 = vpop.f32.mrf.mxu0
      %831 = vmatprep.mubr.f32.mxu0 0.0
      %832 = vmatmul.mubr.f32.gmra.mxu0 %v704
      %v833 = vpop.f32.mrf.mxu0
      %v834 = vadd.f32 0.0, %v833
      %v835 = vpop.f32.mrf.mxu0
      %836 = vmatprep.mubr.f32.mxu0 0.0
      %837 = vmatmul.mubr.f32.gmra.mxu0 %v707
      %v838 = vpop.f32.mrf.mxu0
      %v839 = vadd.f32 0.0, %v838
      %v840 = vpop.f32.mrf.mxu0
      %841 = vmatprep.mubr.f32.mxu0 0.0
      %842 = vmatmul.mubr.f32.gmra.mxu0 %v710
      %v843 = vpop.f32.mrf.mxu0
      %v844 = vadd.f32 0.0, %v843
      %v845 = vpop.f32.mrf.mxu0
      %846 = vmatprep.mubr.f32.mxu0 0.0
      %847 = vmatmul.mubr.f32.gmra.mxu0 %v713
      %v848 = vpop.f32.mrf.mxu0
      %v849 = vadd.f32 0.0, %v848
      %v850 = vpop.f32.mrf.mxu0
      %851 = vmatprep.mubr.f32.mxu0 0.0
      %852 = vmatmul.mubr.f32.gmra.mxu0 %v716
      %v853 = vpop.f32.mrf.mxu0
      %v854 = vadd.f32 0.0, %v853
      %v855 = vpop.f32.mrf.mxu0
      %856 = vmatprep.mubr.f32.mxu0 0.0
      %857 = vmatmul.mubr.f32.gmra.mxu0 %v719
      %v858 = vpop.f32.mrf.mxu0
      %v859 = vadd.f32 0.0, %v858
      %v860 = vpop.f32.mrf.mxu0
      %861 = vmatprep.mubr.f32.mxu0 0.0
      %862 = vmatmul.mubr.f32.gmra.mxu0 %v722
      %v863 = vpop.f32.mrf.mxu0
      %v864 = vadd.f32 0.0, %v863
      %v865 = vpop.f32.mrf.mxu0
      %866 = vmatprep.mubr.f32.mxu0 0.0
      %867 = vmatmul.mubr.f32.gmra.mxu0 %v725
      %v868 = vpop.f32.mrf.mxu0
      %v869 = vadd.f32 0.0, %v868
      %v870 = vpop.f32.mrf.mxu0
      %871 = vdwg.mxu0
      %v872 = vadd.f32 %v576, %v794
      %v873 = vadd.f32 %v581, %v799
      %v874 = vadd.f32 %v586, %v804
      %v875 = vadd.f32 %v591, %v809
      %v876 = vadd.f32 %v596, %v814
      %v877 = vadd.f32 %v601, %v819
      %v878 = vadd.f32 %v606, %v824
      %v879 = vadd.f32 %v611, %v829
      %v880 = vadd.f32 %v616, %v834
      %v881 = vadd.f32 %v621, %v839
      %v882 = vadd.f32 %v626, %v844
      %v883 = vadd.f32 %v631, %v849
      %v884 = vadd.f32 %v636, %v854
      %v885 = vadd.f32 %v641, %v859
      %v886 = vadd.f32 %v646, %v864
      %v887 = vadd.f32 %v651, %v869
      %v888 = vld [vmem:[%s2] sm:$0x1]
      %v890 = vlaneseq
      %v891 = vshrl.u32 %v890, 7
      %v892 = vsub.s32 0, %v891
      %v893 = vrot.slane %v888, %v892
      %v895 = vadd.f32 %v872, %v893
      %v896 = vadd.f32 %v873, %v893
      %v897 = vadd.f32 %v874, %v893
      %v898 = vadd.f32 %v875, %v893
      %v899 = vadd.f32 %v876, %v893
      %v900 = vadd.f32 %v877, %v893
      %v901 = vadd.f32 %v878, %v893
      %v902 = vadd.f32 %v879, %v893
      %v903 = vadd.f32 %v880, %v893
      %v904 = vadd.f32 %v881, %v893
      %v905 = vadd.f32 %v882, %v893
      %v906 = vadd.f32 %v883, %v893
      %v907 = vadd.f32 %v884, %v893
      %v908 = vadd.f32 %v885, %v893
      %v909 = vadd.f32 %v886, %v893
      %v910 = vadd.f32 %v887, %v893
      %v911 = vmax.f32 %v895, 0.0
      %v912 = vmax.f32 %v896, 0.0
      %v913 = vmax.f32 %v897, 0.0
      %v914 = vmax.f32 %v898, 0.0
      %v915 = vmax.f32 %v899, 0.0
      %v916 = vmax.f32 %v900, 0.0
      %v917 = vmax.f32 %v901, 0.0
      %v918 = vmax.f32 %v902, 0.0
      %v919 = vmax.f32 %v903, 0.0
      %v920 = vmax.f32 %v904, 0.0
      %v921 = vmax.f32 %v905, 0.0
      %v922 = vmax.f32 %v906, 0.0
      %v923 = vmax.f32 %v907, 0.0
      %v924 = vmax.f32 %v908, 0.0
      %v925 = vmax.f32 %v909, 0.0
      %v926 = vmax.f32 %v910, 0.0
      %v927 = vld [vmem:[%s212] sm:$0xff]
      %v928 = vld [vmem:[%s212 + $0x8] sm:$0xff]
      %v929 = vld [vmem:[%s212 + $0x10] sm:$0xff]
      %v930 = vld [vmem:[%s212 + $0x18] sm:$0xff]
      %v931 = vld [vmem:[%s212 + $0x20] sm:$0xff]
      %v932 = vld [vmem:[%s212 + $0x28] sm:$0xff]
      %v933 = vld [vmem:[%s212 + $0x30] sm:$0xff]
      %v934 = vld [vmem:[%s212 + $0x38] sm:$0xff]
      %v935 = vld [vmem:[%s212 + $0x40] sm:$0xff]
      %v936 = vld [vmem:[%s212 + $0x48] sm:$0xff]
      %v937 = vld [vmem:[%s212 + $0x50] sm:$0xff]
      %v938 = vld [vmem:[%s212 + $0x58] sm:$0xff]
      %v939 = vld [vmem:[%s212 + $0x60] sm:$0xff]
      %v940 = vld [vmem:[%s212 + $0x68] sm:$0xff]
      %v941 = vld [vmem:[%s212 + $0x70] sm:$0xff]
      %v942 = vld [vmem:[%s212 + $0x78] sm:$0xff]
      %944 = vset.pattern.permute.xlu0 0
      %945 = vperm.xlu0 %944, %v927
      %v946 = vpop.permute.xlu0 %945
      %949 = vset.pattern.permute.xlu0 0
      %950 = vperm.xlu0 %949, %v928
      %v951 = vpop.permute.xlu0 %950
      %954 = vset.pattern.permute.xlu0 0
      %955 = vperm.xlu0 %954, %v929
      %v956 = vpop.permute.xlu0 %955
      %959 = vset.pattern.permute.xlu0 0
      %960 = vperm.xlu0 %959, %v930
      %v961 = vpop.permute.xlu0 %960
      %964 = vset.pattern.permute.xlu0 0
      %965 = vperm.xlu0 %964, %v931
      %v966 = vpop.permute.xlu0 %965
      %969 = vset.pattern.permute.xlu0 0
      %970 = vperm.xlu0 %969, %v932
      %v971 = vpop.permute.xlu0 %970
      %974 = vset.pattern.permute.xlu0 0
      %975 = vperm.xlu0 %974, %v933
      %v976 = vpop.permute.xlu0 %975
      %979 = vset.pattern.permute.xlu0 0
      %980 = vperm.xlu0 %979, %v934
      %v981 = vpop.permute.xlu0 %980
      %984 = vset.pattern.permute.xlu0 0
      %985 = vperm.xlu0 %984, %v935
      %v986 = vpop.permute.xlu0 %985
      %989 = vset.pattern.permute.xlu0 0
      %990 = vperm.xlu0 %989, %v936
      %v991 = vpop.permute.xlu0 %990
      %994 = vset.pattern.permute.xlu0 0
      %995 = vperm.xlu0 %994, %v937
      %v996 = vpop.permute.xlu0 %995
      %999 = vset.pattern.permute.xlu0 0
      %1000 = vperm.xlu0 %999, %v938
      %v1001 = vpop.permute.xlu0 %1000
      %1004 = vset.pattern.permute.xlu0 0
      %1005 = vperm.xlu0 %1004, %v939
      %v1006 = vpop.permute.xlu0 %1005
      %1009 = vset.pattern.permute.xlu0 0
      %1010 = vperm.xlu0 %1009, %v940
      %v1011 = vpop.permute.xlu0 %1010
      %1014 = vset.pattern.permute.xlu0 0
      %1015 = vperm.xlu0 %1014, %v941
      %v1016 = vpop.permute.xlu0 %1015
      %1019 = vset.pattern.permute.xlu0 0
      %1020 = vperm.xlu0 %1019, %v942
      %v1021 = vpop.permute.xlu0 %1020
      %v1023 = vmul.f32 %v911, %v946
      %v1024 = vmul.f32 %v912, %v951
      %v1025 = vmul.f32 %v913, %v956
      %v1026 = vmul.f32 %v914, %v961
      %v1027 = vmul.f32 %v915, %v966
      %v1028 = vmul.f32 %v916, %v971
      %v1029 = vmul.f32 %v917, %v976
      %v1030 = vmul.f32 %v918, %v981
      %v1031 = vmul.f32 %v919, %v986
      %v1032 = vmul.f32 %v920, %v991
      %v1033 = vmul.f32 %v921, %v996
      %v1034 = vmul.f32 %v922, %v1001
      %v1035 = vmul.f32 %v923, %v1006
      %v1036 = vmul.f32 %v924, %v1011
      %v1037 = vmul.f32 %v925, %v1016
      %v1038 = vmul.f32 %v926, %v1021
      %1039 = vst [vmem:[%s217] sm:$0xff] %v1023
      %1040 = vst [vmem:[%s217 + $0x8] sm:$0xff] %v1024
      %1041 = vst [vmem:[%s217 + $0x10] sm:$0xff] %v1025
      %1042 = vst [vmem:[%s217 + $0x18] sm:$0xff] %v1026
      %1043 = vst [vmem:[%s217 + $0x20] sm:$0xff] %v1027
      %1044 = vst [vmem:[%s217 + $0x28] sm:$0xff] %v1028
      %1045 = vst [vmem:[%s217 + $0x30] sm:$0xff] %v1029
      %1046 = vst [vmem:[%s217 + $0x38] sm:$0xff] %v1030
      %1047 = vst [vmem:[%s217 + $0x40] sm:$0xff] %v1031
      %1048 = vst [vmem:[%s217 + $0x48] sm:$0xff] %v1032
      %1049 = vst [vmem:[%s217 + $0x50] sm:$0xff] %v1033
      %1050 = vst [vmem:[%s217 + $0x58] sm:$0xff] %v1034
      %1051 = vst [vmem:[%s217 + $0x60] sm:$0xff] %v1035
      %1052 = vst [vmem:[%s217 + $0x68] sm:$0xff] %v1036
      %1053 = vst [vmem:[%s217 + $0x70] sm:$0xff] %v1037
      %1054 = vst [vmem:[%s217 + $0x78] sm:$0xff] %v1038
      %p1055 = scmp.lt.s32.totalorder %s15, 1
      %s1056 = scalar_select %p1055, %s15, 1
      %s1057 = smul.addr %s1056, 16
      %s1058 = smul.addr %s1057, 8
      %s1059 = scalar_lea.vmem %s4, %s1058
      // Predicated region
      $region37: #{vits_text_encoder_forward.19} parent=35 // pred_check
        %p1060 = pneg %p127
      $region38: #{vits_text_encoder_forward.19} parent=35 // pred_check_branch
        %1062 = sbr.rel (%p1060) target = $region40
      $region39: #{vits_text_encoder_forward.19} parent=35 // pred_region
        _
      $region40: #{vits_text_encoder_forward.19} parent=35 // pred_fallthru
        _
    $region36: #{vits_text_encoder_forward.19} parent=5 // pred_fallthru
      _
    %p1063 = scmp.le.s32.totalorder 2, %s10
    // Predicated region
    $region41: #{vits_text_encoder_forward.19} parent=5 // pred_check
      %p1064 = pneg %p1063
    $region42: #{vits_text_encoder_forward.19} parent=5 // pred_check_branch
      %1066 = sbr.rel (%p1064) target = $region44
    $region43: #{vits_text_encoder_forward.19} parent=5 // pred_region
      %s1067 = ssub.s32 %s10, 2
      // Predicated region
      $region45: #{vits_text_encoder_forward.19} parent=43 // pred_check
        %p1068 = pneg %p133
      $region46: #{vits_text_encoder_forward.19} parent=43 // pred_check_branch
        %1070 = sbr.rel (%p1068) target = $region48
      $region47: #{vits_text_encoder_forward.19} parent=43 // pred_region
        %p1071 = scmp.lt.s32.totalorder %s16, 1
        %s1072 = scalar_select %p1071, %s16, 1
        %s1073 = smul.addr %s1072, 16
        %s1074 = smul.addr %s1073, 8
        %s1075 = scalar_lea.vmem %s4, %s1074
      $region48: #{vits_text_encoder_forward.19} parent=43 // pred_fallthru
        _
    $region44: #{vits_text_encoder_forward.19} parent=5 // pred_fallthru
      _
  $region6: #{vits_text_encoder_forward.19} parent=0 // loop_footer
    %s14 = sadd.s32 1, %s10
  $region7: #{vits_text_encoder_forward.19} parent=0 // loop_footer_branch
    %9 = sbr.rel target = $region3
  $region8: #{vits_text_encoder_forward.19} parent=0 // loop_exit
    _

// kernel: vits_text_encoder_forward.20
$region0: #{vits_text_encoder_forward.20}
  #allocation0 [shape = 'u32[]', space=smem, size = 0x4, offset = 0x4, fixed_abs, tag = 'smem constant byte address 0x4 - core index']
  #allocation1 [shape = 'u32[144,128]{1,0:T(1,128)}', space=vmem, size = 0x12000, scoped, tag = 'internal scratch']
  %s0 = inlined_call_operand.vmem [shape: f32[2,136,128], index: 0, kind: input, shape index: {}]
  %s1 = inlined_call_operand.vmem [shape: f32[3,128,64], index: 1, kind: input, shape index: {}]
  %s2 = inlined_call_operand.vmem [shape: f32[1,64], index: 2, kind: input, shape index: {}]
  %s3 = inlined_call_operand.vmem [shape: f32[2,128,1], index: 3, kind: input, shape index: {}]
  %s4 = inlined_call_operand.vmem [shape: f32[2,128,64], index: 4, kind: output, shape index: {}]
  %s5 = sld [smem:[#allocation0]]
  $region49: #{vits_text_encoder_forward.20} parent=0
    _
  %s7 = ssub.s32 1, %s5
  %s8 = scalar_select 0, %s7, %s5
  loop: start=0, step=1, limit=4
  $region2: #{vits_text_encoder_forward.20} parent=0 // loop_pre_header
    _
  $region3: #{vits_text_encoder_forward.20} parent=0 // loop_header
    %s10 = sphi 0, %s14
    %p11 = scmp.ge.s32.totalorder %s10, 4
    %s20 = sphi 0, %s22
    %s23 = sphi 0, %s20
    %s24 = sphi 0, %s23
    %s40 = sphi 0, %s24
    %s44 = sphi 0, %s44
    %s46 = sphi 0, %s44
    %s47 = sphi 0, %s46
    %s61 = sphi 0, %s47
    %s65 = sphi 0, %s65
    %s67 = sphi 0, %s65
    %s68 = sphi 0, %s67
    %s82 = sphi 0, %s68
    %s88 = sphi 0, %s90
    %s91 = sphi 0, %s88
    %s92 = sphi 0, %s91
    %s108 = sphi 0, %s92
    %s114 = sphi 0, %s116
    %s117 = sphi 0, %s114
    %s118 = sphi 0, %s117
    %s134 = sphi 0, %s118
  $region4: #{vits_text_encoder_forward.20} parent=0 // loop_header_branch
    %13 = sbr.rel (%p11) target = $region8
  $region5: #{vits_text_encoder_forward.20} parent=0 // loop_body
    %s15 = ssub.s32 %s10, 1
    %s16 = ssub.s32 %s10, 2
    %s17 = sadd.s32 %s10, 1
    %s18 = ssub.s32 %s10, %s17
    %p19 = scmp.eq.s32.totalorder %s18, 0
    %s21 = sadd.s32 %s20, 1
    %s22 = scalar_select %p19, %s20, %s21
    %p25 = pneg %p19
    %p26 = scmp.eq.s32.totalorder %s10, 1
    %p27 = por %p25, %p26
    %p28 = scmp.ne.s32.totalorder %s20, %s23
    %p29 = scmp.eq.s32.totalorder %s10, 0
    %p30 = por %p28, %p29
    %p31 = scmp.ne.s32.totalorder %s20, %s23
    %p32 = scmp.eq.s32.totalorder %s15, 1
    %p33 = por %p31, %p32
    %p34 = scmp.ne.s32.totalorder %s23, %s24
    %p35 = scmp.eq.s32.totalorder %s15, 0
    %p36 = por %p34, %p35
    %p37 = scmp.ne.s32.totalorder %s23, %s24
    %p38 = scmp.eq.s32.totalorder %s16, 1
    %p39 = por %p37, %p38
    %p41 = scmp.ne.s32.totalorder %s24, %s40
    %p42 = scmp.eq.s32.totalorder %s16, 0
    %p43 = por %p41, %p42
    %s45 = sadd.s32 %s44, 1
    %p48 = scmp.eq.s32.totalorder %s10, 1
    %p49 = scmp.ne.s32.totalorder %s44, %s46
    %p50 = scmp.eq.s32.totalorder %s10, 0
    %p51 = por %p49, %p50
    %p52 = scmp.ne.s32.totalorder %s44, %s46
    %p53 = scmp.eq.s32.totalorder %s15, 1
    %p54 = por %p52, %p53
    %p55 = scmp.ne.s32.totalorder %s46, %s47
    %p56 = scmp.eq.s32.totalorder %s15, 0
    %p57 = por %p55, %p56
    %p58 = scmp.ne.s32.totalorder %s46, %s47
    %p59 = scmp.eq.s32.totalorder %s16, 1
    %p60 = por %p58, %p59
    %p62 = scmp.ne.s32.totalorder %s47, %s61
    %p63 = scmp.eq.s32.totalorder %s16, 0
    %p64 = por %p62, %p63
    %s66 = sadd.s32 %s65, 1
    %p69 = scmp.eq.s32.totalorder %s10, 1
    %p70 = scmp.ne.s32.totalorder %s65, %s67
    %p71 = scmp.eq.s32.totalorder %s10, 0
    %p72 = por %p70, %p71
    %p73 = scmp.ne.s32.totalorder %s65, %s67
    %p74 = scmp.eq.s32.totalorder %s15, 1
    %p75 = por %p73, %p74
    %p76 = scmp.ne.s32.totalorder %s67, %s68
    %p77 = scmp.eq.s32.totalorder %s15, 0
    %p78 = por %p76, %p77
    %p79 = scmp.ne.s32.totalorder %s67, %s68
    %p80 = scmp.eq.s32.totalorder %s16, 1
    %p81 = por %p79, %p80
    %p83 = scmp.ne.s32.totalorder %s68, %s82
    %p84 = scmp.eq.s32.totalorder %s16, 0
    %p85 = por %p83, %p84
    %s86 = ssub.s32 %s10, %s17
    %p87 = scmp.eq.s32.totalorder %s86, 0
    %s89 = sadd.s32 %s88, 1
    %s90 = scalar_select %p87, %s88, %s89
    %p93 = pneg %p87
    %p94 = scmp.eq.s32.totalorder %s10, 1
    %p95 = por %p93, %p94
    %p96 = scmp.ne.s32.totalorder %s88, %s91
    %p97 = scmp.eq.s32.totalorder %s10, 0
    %p98 = por %p96, %p97
    %p99 = scmp.ne.s32.totalorder %s88, %s91
    %p100 = scmp.eq.s32.totalorder %s15, 1
    %p101 = por %p99, %p100
    %p102 = scmp.ne.s32.totalorder %s91, %s92
    %p103 = scmp.eq.s32.totalorder %s15, 0
    %p104 = por %p102, %p103
    %p105 = scmp.ne.s32.totalorder %s91, %s92
    %p106 = scmp.eq.s32.totalorder %s16, 1
    %p107 = por %p105, %p106
    %p109 = scmp.ne.s32.totalorder %s92, %s108
    %p110 = scmp.eq.s32.totalorder %s16, 0
    %p111 = por %p109, %p110
    %s112 = ssub.s32 %s10, %s17
    %p113 = scmp.eq.s32.totalorder %s112, 0
    %s115 = sadd.s32 %s114, 1
    %s116 = scalar_select %p113, %s114, %s115
    %p119 = pneg %p113
    %p120 = scmp.eq.s32.totalorder %s10, 1
    %p121 = por %p119, %p120
    %p122 = scmp.ne.s32.totalorder %s114, %s117
    %p123 = scmp.eq.s32.totalorder %s10, 0
    %p124 = por %p122, %p123
    %p125 = scmp.ne.s32.totalorder %s114, %s117
    %p126 = scmp.eq.s32.totalorder %s15, 1
    %p127 = por %p125, %p126
    %p128 = scmp.ne.s32.totalorder %s117, %s118
    %p129 = scmp.eq.s32.totalorder %s15, 0
    %p130 = por %p128, %p129
    %p131 = scmp.ne.s32.totalorder %s117, %s118
    %p132 = scmp.eq.s32.totalorder %s16, 1
    %p133 = por %p131, %p132
    %p135 = scmp.ne.s32.totalorder %s118, %s134
    %p136 = scmp.eq.s32.totalorder %s16, 0
    %p137 = por %p135, %p136
    %p138 = scmp.le.s32.totalorder 1, %s10
    %p139 = scmp.lt.s32.totalorder %s10, 3
    %p140 = pnand %p138, %p139
    %p141 = pneg %p140
    // Predicated region
    $region9: #{vits_text_encoder_forward.20} parent=5 // pred_check
      _
    $region10: #{vits_text_encoder_forward.20} parent=5 // pred_check_branch
      %143 = sbr.rel (%p140) target = $region12
    $region11: #{vits_text_encoder_forward.20} parent=5 // pred_region
      %s144 = ssub.s32 %s10, 1
      // Predicated region
      $region13: #{vits_text_encoder_forward.20} parent=11 // pred_check
        %p145 = pneg %p57
      $region14: #{vits_text_encoder_forward.20} parent=11 // pred_check_branch
        %147 = sbr.rel (%p145) target = $region16
      $region15: #{vits_text_encoder_forward.20} parent=11 // pred_region
        _
      $region16: #{vits_text_encoder_forward.20} parent=11 // pred_fallthru
        _
      // Predicated region
      $region17: #{vits_text_encoder_forward.20} parent=11 // pred_check
        %p148 = pneg %p78
      $region18: #{vits_text_encoder_forward.20} parent=11 // pred_check_branch
        %150 = sbr.rel (%p148) target = $region20
      $region19: #{vits_text_encoder_forward.20} parent=11 // pred_region
        _
      $region20: #{vits_text_encoder_forward.20} parent=11 // pred_fallthru
        _
    $region12: #{vits_text_encoder_forward.20} parent=5 // pred_fallthru
      _
    %p151 = scmp.lt.s32.totalorder %s10, 2
    // Predicated region
    $region21: #{vits_text_encoder_forward.20} parent=5 // pred_check
      %p152 = pneg %p151
    $region22: #{vits_text_encoder_forward.20} parent=5 // pred_check_branch
      %154 = sbr.rel (%p152) target = $region24
    $region23: #{vits_text_encoder_forward.20} parent=5 // pred_region
      // Predicated region
      $region25: #{vits_text_encoder_forward.20} parent=23 // pred_check
        %p155 = pneg %p30
      $region26: #{vits_text_encoder_forward.20} parent=23 // pred_check_branch
        %157 = sbr.rel (%p155) target = $region28
      $region27: #{vits_text_encoder_forward.20} parent=23 // pred_region
        %p158 = scmp.lt.s32.totalorder %s10, 1
        %s159 = scalar_select %p158, %s10, 1
        %s160 = smul.addr %s159, 17
        %s161 = smul.addr %s160, 8
        %s162 = scalar_lea.vmem %s0, %s161
      $region28: #{vits_text_encoder_forward.20} parent=23 // pred_fallthru
        _
      // Predicated region
      $region29: #{vits_text_encoder_forward.20} parent=23 // pred_check
        %p163 = pneg %p98
      $region30: #{vits_text_encoder_forward.20} parent=23 // pred_check_branch
        %165 = sbr.rel (%p163) target = $region32
      $region31: #{vits_text_encoder_forward.20} parent=23 // pred_region
        %p166 = scmp.lt.s32.totalorder %s10, 1
        %s167 = scalar_select %p166, %s10, 1
        %s168 = smul.addr %s167, 16
        %s169 = smul.addr %s168, 8
        %s170 = scalar_lea.vmem %s3, %s169
      $region32: #{vits_text_encoder_forward.20} parent=23 // pred_fallthru
        _
    $region24: #{vits_text_encoder_forward.20} parent=5 // pred_fallthru
      _
    %p171 = scmp.le.s32.totalorder 1, %s10
    %p172 = scmp.lt.s32.totalorder %s10, 3
    %p173 = pnand %p171, %p172
    %p174 = pneg %p173
    // Predicated region
    $region33: #{vits_text_encoder_forward.20} parent=5 // pred_check
      _
    $region34: #{vits_text_encoder_forward.20} parent=5 // pred_check_branch
      %176 = sbr.rel (%p173) target = $region36
    $region35: #{vits_text_encoder_forward.20} parent=5 // pred_region
      %s177 = ssub.s32 %s10, 1
      %p178 = scmp.lt.s32.totalorder %s15, 1
      %s179 = scalar_select %p178, %s15, 1
      %s180 = smul.addr %s179, 17
      %s181 = smul.addr %s180, 8
      %s182 = scalar_lea.vmem %s0, %s181
      %p183 = pneg %p36
      %p184 = pneg %p33
      %p185 = pneg %p57
      %p186 = pneg %p54
      %p187 = pneg %p78
      %p188 = pneg %p75
      %p189 = scmp.lt.s32.totalorder %s15, 1
      %s190 = scalar_select %p189, %s15, 1
      %s191 = smul.addr %s190, 16
      %s192 = smul.addr %s191, 8
      %s193 = scalar_lea.vmem %s3, %s192
      %p194 = pneg %p104
      %p195 = pneg %p101
      %p196 = pneg %p130
      %p197 = pneg %p127
      %p198 = scmp.lt.s32.totalorder %s15, 1
      %s199 = scalar_select %p198, %s15, 1
      %s200 = smul.addr %s199, 16
      %s201 = smul.addr %s200, 8
      %s202 = scalar_lea.vmem %s4, %s201
      %p203 = scmp.lt.s32.totalorder %s15, 1
      %s204 = scalar_select %p203, %s15, 1
      %s205 = smul.addr %s204, 17
      %s206 = smul.addr %s205, 8
      %s207 = scalar_lea.vmem %s0, %s206
      %p208 = scmp.lt.s32.totalorder %s15, 1
      %s209 = scalar_select %p208, %s15, 1
      %s210 = smul.addr %s209, 16
      %s211 = smul.addr %s210, 8
      %s212 = scalar_lea.vmem %s3, %s211
      %p213 = scmp.lt.s32.totalorder %s15, 1
      %s214 = scalar_select %p213, %s15, 1
      %s215 = smul.addr %s214, 16
      %s216 = smul.addr %s215, 8
      %s217 = scalar_lea.vmem %s4, %s216
      %v218 = vld [vmem:[%s207] sm:$0xff]
      %v219 = vld [vmem:[%s207 + $0x8] sm:$0xff]
      %v220 = vld [vmem:[%s207 + $0x10] sm:$0xff]
      %v221 = vld [vmem:[%s207 + $0x18] sm:$0xff]
      %v222 = vld [vmem:[%s207 + $0x20] sm:$0xff]
      %v223 = vld [vmem:[%s207 + $0x28] sm:$0xff]
      %v224 = vld [vmem:[%s207 + $0x30] sm:$0xff]
      %v225 = vld [vmem:[%s207 + $0x38] sm:$0xff]
      %v226 = vld [vmem:[%s207 + $0x40] sm:$0xff]
      %v227 = vld [vmem:[%s207 + $0x48] sm:$0xff]
      %v228 = vld [vmem:[%s207 + $0x50] sm:$0xff]
      %v229 = vld [vmem:[%s207 + $0x58] sm:$0xff]
      %v230 = vld [vmem:[%s207 + $0x60] sm:$0xff]
      %v231 = vld [vmem:[%s207 + $0x68] sm:$0xff]
      %v232 = vld [vmem:[%s207 + $0x70] sm:$0xff]
      %v233 = vld [vmem:[%s207 + $0x78] sm:$0xff]
      %v234 = vld [vmem:[%s1] sm:$0xff]
      %v235 = vld [vmem:[%s1 + $0x8] sm:$0xff]
      %v236 = vld [vmem:[%s1 + $0x10] sm:$0xff]
      %v237 = vld [vmem:[%s1 + $0x18] sm:$0xff]
      %v238 = vld [vmem:[%s1 + $0x20] sm:$0xff]
      %v239 = vld [vmem:[%s1 + $0x28] sm:$0xff]
      %v240 = vld [vmem:[%s1 + $0x30] sm:$0xff]
      %v241 = vld [vmem:[%s1 + $0x38] sm:$0xff]
      %v242 = vld [vmem:[%s1 + $0x40] sm:$0xff]
      %v243 = vld [vmem:[%s1 + $0x48] sm:$0xff]
      %v244 = vld [vmem:[%s1 + $0x50] sm:$0xff]
      %v245 = vld [vmem:[%s1 + $0x58] sm:$0xff]
      %v246 = vld [vmem:[%s1 + $0x60] sm:$0xff]
      %v247 = vld [vmem:[%s1 + $0x68] sm:$0xff]
      %v248 = vld [vmem:[%s1 + $0x70] sm:$0xff]
      %v249 = vld [vmem:[%s1 + $0x78] sm:$0xff]
      %v250 = vld [vmem:[%s207 + $0x1] sm:$0xff]
      %v251 = vld [vmem:[%s207 + $0x9] sm:$0xff]
      %v252 = vld [vmem:[%s207 + $0x11] sm:$0xff]
      %v253 = vld [vmem:[%s207 + $0x19] sm:$0xff]
      %v254 = vld [vmem:[%s207 + $0x21] sm:$0xff]
      %v255 = vld [vmem:[%s207 + $0x29] sm:$0xff]
      %v256 = vld [vmem:[%s207 + $0x31] sm:$0xff]
      %v257 = vld [vmem:[%s207 + $0x39] sm:$0xff]
      %v258 = vld [vmem:[%s207 + $0x41] sm:$0xff]
      %v259 = vld [vmem:[%s207 + $0x49] sm:$0xff]
      %v260 = vld [vmem:[%s207 + $0x51] sm:$0xff]
      %v261 = vld [vmem:[%s207 + $0x59] sm:$0xff]
      %v262 = vld [vmem:[%s207 + $0x61] sm:$0xff]
      %v263 = vld [vmem:[%s207 + $0x69] sm:$0xff]
      %v264 = vld [vmem:[%s207 + $0x71] sm:$0xff]
      %v265 = vld [vmem:[%s207 + $0x79] sm:$0xff]
      %s266 = scalar_lea.vmem %s1, 128
      %v267 = vld [vmem:[%s266] sm:$0xff]
      %v268 = vld [vmem:[%s266 + $0x8] sm:$0xff]
      %v269 = vld [vmem:[%s266 + $0x10] sm:$0xff]
      %v270 = vld [vmem:[%s266 + $0x18] sm:$0xff]
      %v271 = vld [vmem:[%s266 + $0x20] sm:$0xff]
      %v272 = vld [vmem:[%s266 + $0x28] sm:$0xff]
      %v273 = vld [vmem:[%s266 + $0x30] sm:$0xff]
      %v274 = vld [vmem:[%s266 + $0x38] sm:$0xff]
      %v275 = vld [vmem:[%s266 + $0x40] sm:$0xff]
      %v276 = vld [vmem:[%s266 + $0x48] sm:$0xff]
      %v277 = vld [vmem:[%s266 + $0x50] sm:$0xff]
      %v278 = vld [vmem:[%s266 + $0x58] sm:$0xff]
      %v279 = vld [vmem:[%s266 + $0x60] sm:$0xff]
      %v280 = vld [vmem:[%s266 + $0x68] sm:$0xff]
      %v281 = vld [vmem:[%s266 + $0x70] sm:$0xff]
      %v282 = vld [vmem:[%s266 + $0x78] sm:$0xff]
      %283 = vmatprep.subr.mxu0 0.0
      %284 = vmatpush1.msra.mxu0 %v282
      %285 = vmatprep.subr.mxu0 0.0
      %286 = vmatpush1.msra.mxu0 %v281
      %287 = vmatprep.subr.mxu0 0.0
      %288 = vmatpush1.msra.mxu0 %v280
      %289 = vmatprep.subr.mxu0 0.0
      %290 = vmatpush1.msra.mxu0 %v279
      %291 = vmatprep.subr.mxu0 0.0
      %292 = vmatpush1.msra.mxu0 %v278
      %293 = vmatprep.subr.mxu0 0.0
      %294 = vmatpush1.msra.mxu0 %v277
      %295 = vmatprep.subr.mxu0 0.0
      %296 = vmatpush1.msra.mxu0 %v276
      %297 = vmatprep.subr.mxu0 0.0
      %298 = vmatpush1.msra.mxu0 %v275
      %299 = vmatprep.subr.mxu0 0.0
      %300 = vmatpush1.msra.mxu0 %v274
      %301 = vmatprep.subr.mxu0 0.0
      %302 = vmatpush1.msra.mxu0 %v273
      %303 = vmatprep.subr.mxu0 0.0
      %304 = vmatpush1.msra.mxu0 %v272
      %305 = vmatprep.subr.mxu0 0.0
      %306 = vmatpush1.msra.mxu0 %v271
      %307 = vmatprep.subr.mxu0 0.0
      %308 = vmatpush1.msra.mxu0 %v270
      %309 = vmatprep.subr.mxu0 0.0
      %310 = vmatpush1.msra.mxu0 %v269
      %311 = vmatprep.subr.mxu0 0.0
      %312 = vmatpush1.msra.mxu0 %v268
      %313 = vmatprep.subr.mxu0 0.0
      %314 = vmatpush1.msra.mxu0 %v267
      %315 = vmatprep.subr.mxu0 0.0
      %316 = vmatpush2.msra.mxu0 0.0
      %317 = vmatprep.subr.mxu0 0.0
      %318 = vmatpush2.msra.mxu0 0.0
      %319 = vmatprep.subr.mxu0 0.0
      %320 = vmatpush2.msra.mxu0 0.0
      %321 = vmatprep.subr.mxu0 0.0
      %322 = vmatpush2.msra.mxu0 0.0
      %323 = vmatprep.subr.mxu0 0.0
      %324 = vmatpush2.msra.mxu0 0.0
      %325 = vmatprep.subr.mxu0 0.0
      %326 = vmatpush2.msra.mxu0 0.0
      %327 = vmatprep.subr.mxu0 0.0
      %328 = vmatpush2.msra.mxu0 0.0
      %329 = vmatprep.subr.mxu0 0.0
      %330 = vmatpush2.msra.mxu0 0.0
      %331 = vmatprep.subr.mxu0 0.0
      %332 = vmatpush2.msra.mxu0 0.0
      %333 = vmatprep.subr.mxu0 0.0
      %334 = vmatpush2.msra.mxu0 0.0
      %335 = vmatprep.subr.mxu0 0.0
      %336 = vmatpush2.msra.mxu0 0.0
      %337 = vmatprep.subr.mxu0 0.0
      %338 = vmatpush2.msra.mxu0 0.0
      %339 = vmatprep.subr.mxu0 0.0
      %340 = vmatpush2.msra.mxu0 0.0
      %341 = vmatprep.subr.mxu0 0.0
      %342 = vmatpush2.msra.mxu0 0.0
      %343 = vmatprep.subr.mxu0 0.0
      %344 = vmatpush2.msra.mxu0 0.0
      %345 = vmatprep.subr.mxu0 0.0
      %346 = vmatpush2.msra.mxu0 0.0
      %347 = vmatprep.mubr.f32.mxu0 0.0
      %348 = vmatmul.mubr.f32.gmra.mxu0 %v250
      %v349 = vpop.f32.mrf.mxu0
      %v350 = vadd.f32 0.0, %v349
      %v351 = vpop.f32.mrf.mxu0
      %352 = vmatprep.mubr.f32.mxu0 0.0
      %353 = vmatmul.mubr.f32.gmra.mxu0 %v251
      %v354 = vpop.f32.mrf.mxu0
      %v355 = vadd.f32 0.0, %v354
      %v356 = vpop.f32.mrf.mxu0
      %357 = vmatprep.mubr.f32.mxu0 0.0
      %358 = vmatmul.mubr.f32.gmra.mxu0 %v252
      %v359 = vpop.f32.mrf.mxu0
      %v360 = vadd.f32 0.0, %v359
      %v361 = vpop.f32.mrf.mxu0
      %362 = vmatprep.mubr.f32.mxu0 0.0
      %363 = vmatmul.mubr.f32.gmra.mxu0 %v253
      %v364 = vpop.f32.mrf.mxu0
      %v365 = vadd.f32 0.0, %v364
      %v366 = vpop.f32.mrf.mxu0
      %367 = vmatprep.mubr.f32.mxu0 0.0
      %368 = vmatmul.mubr.f32.gmra.mxu0 %v254
      %v369 = vpop.f32.mrf.mxu0
      %v370 = vadd.f32 0.0, %v369
      %v371 = vpop.f32.mrf.mxu0
      %372 = vmatprep.mubr.f32.mxu0 0.0
      %373 = vmatmul.mubr.f32.gmra.mxu0 %v255
      %v374 = vpop.f32.mrf.mxu0
      %v375 = vadd.f32 0.0, %v374
      %v376 = vpop.f32.mrf.mxu0
      %377 = vmatprep.mubr.f32.mxu0 0.0
      %378 = vmatmul.mubr.f32.gmra.mxu0 %v256
      %v379 = vpop.f32.mrf.mxu0
      %v380 = vadd.f32 0.0, %v379
      %v381 = vpop.f32.mrf.mxu0
      %382 = vmatprep.mubr.f32.mxu0 0.0
      %383 = vmatmul.mubr.f32.gmra.mxu0 %v257
      %v384 = vpop.f32.mrf.mxu0
      %v385 = vadd.f32 0.0, %v384
      %v386 = vpop.f32.mrf.mxu0
      %387 = vmatprep.mubr.f32.mxu0 0.0
      %388 = vmatmul.mubr.f32.gmra.mxu0 %v258
      %v389 = vpop.f32.mrf.mxu0
      %v390 = vadd.f32 0.0, %v389
      %v391 = vpop.f32.mrf.mxu0
      %392 = vmatprep.mubr.f32.mxu0 0.0
      %393 = vmatmul.mubr.f32.gmra.mxu0 %v259
      %v394 = vpop.f32.mrf.mxu0
      %v395 = vadd.f32 0.0, %v394
      %v396 = vpop.f32.mrf.mxu0
      %397 = vmatprep.mubr.f32.mxu0 0.0
      %398 = vmatmul.mubr.f32.gmra.mxu0 %v260
      %v399 = vpop.f32.mrf.mxu0
      %v400 = vadd.f32 0.0, %v399
      %v401 = vpop.f32.mrf.mxu0
      %402 = vmatprep.mubr.f32.mxu0 0.0
      %403 = vmatmul.mubr.f32.gmra.mxu0 %v261
      %v404 = vpop.f32.mrf.mxu0
      %v405 = vadd.f32 0.0, %v404
      %v406 = vpop.f32.mrf.mxu0
      %407 = vmatprep.mubr.f32.mxu0 0.0
      %408 = vmatmul.mubr.f32.gmra.mxu0 %v262
      %v409 = vpop.f32.mrf.mxu0
      %v410 = vadd.f32 0.0, %v409
      %v411 = vpop.f32.mrf.mxu0
      %412 = vmatprep.mubr.f32.mxu0 0.0
      %413 = vmatmul.mubr.f32.gmra.mxu0 %v263
      %v414 = vpop.f32.mrf.mxu0
      %v415 = vadd.f32 0.0, %v414
      %v416 = vpop.f32.mrf.mxu0
      %417 = vmatprep.mubr.f32.mxu0 0.0
      %418 = vmatmul.mubr.f32.gmra.mxu0 %v264
      %v419 = vpop.f32.mrf.mxu0
      %v420 = vadd.f32 0.0, %v419
      %v421 = vpop.f32.mrf.mxu0
      %422 = vmatprep.mubr.f32.mxu0 0.0
      %423 = vmatmul.mubr.f32.gmra.mxu0 %v265
      %v424 = vpop.f32.mrf.mxu0
      %v425 = vadd.f32 0.0, %v424
      %v426 = vpop.f32.mrf.mxu0
      %427 = vdwg.mxu0
      %428 = vmatprep.subr.mxu0 0.0
      %429 = vmatpush1.msra.mxu0 %v249
      %430 = vmatprep.subr.mxu0 0.0
      %431 = vmatpush1.msra.mxu0 %v248
      %432 = vmatprep.subr.mxu0 0.0
      %433 = vmatpush1.msra.mxu0 %v247
      %434 = vmatprep.subr.mxu0 0.0
      %435 = vmatpush1.msra.mxu0 %v246
      %436 = vmatprep.subr.mxu0 0.0
      %437 = vmatpush1.msra.mxu0 %v245
      %438 = vmatprep.subr.mxu0 0.0
      %439 = vmatpush1.msra.mxu0 %v244
      %440 = vmatprep.subr.mxu0 0.0
      %441 = vmatpush1.msra.mxu0 %v243
      %442 = vmatprep.subr.mxu0 0.0
      %443 = vmatpush1.msra.mxu0 %v242
      %444 = vmatprep.subr.mxu0 0.0
      %445 = vmatpush1.msra.mxu0 %v241
      %446 = vmatprep.subr.mxu0 0.0
      %447 = vmatpush1.msra.mxu0 %v240
      %448 = vmatprep.subr.mxu0 0.0
      %449 = vmatpush1.msra.mxu0 %v239
      %450 = vmatprep.subr.mxu0 0.0
      %451 = vmatpush1.msra.mxu0 %v238
      %452 = vmatprep.subr.mxu0 0.0
      %453 = vmatpush1.msra.mxu0 %v237
      %454 = vmatprep.subr.mxu0 0.0
      %455 = vmatpush1.msra.mxu0 %v236
      %456 = vmatprep.subr.mxu0 0.0
      %457 = vmatpush1.msra.mxu0 %v235
      %458 = vmatprep.subr.mxu0 0.0
      %459 = vmatpush1.msra.mxu0 %v234
      %460 = vmatprep.subr.mxu0 0.0
      %461 = vmatpush2.msra.mxu0 0.0
      %462 = vmatprep.subr.mxu0 0.0
      %463 = vmatpush2.msra.mxu0 0.0
      %464 = vmatprep.subr.mxu0 0.0
      %465 = vmatpush2.msra.mxu0 0.0
      %466 = vmatprep.subr.mxu0 0.0
      %467 = vmatpush2.msra.mxu0 0.0
      %468 = vmatprep.subr.mxu0 0.0
      %469 = vmatpush2.msra.mxu0 0.0
      %470 = vmatprep.subr.mxu0 0.0
      %471 = vmatpush2.msra.mxu0 0.0
      %472 = vmatprep.subr.mxu0 0.0
      %473 = vmatpush2.msra.mxu0 0.0
      %474 = vmatprep.subr.mxu0 0.0
      %475 = vmatpush2.msra.mxu0 0.0
      %476 = vmatprep.subr.mxu0 0.0
      %477 = vmatpush2.msra.mxu0 0.0
      %478 = vmatprep.subr.mxu0 0.0
      %479 = vmatpush2.msra.mxu0 0.0
      %480 = vmatprep.subr.mxu0 0.0
      %481 = vmatpush2.msra.mxu0 0.0
      %482 = vmatprep.subr.mxu0 0.0
      %483 = vmatpush2.msra.mxu0 0.0
      %484 = vmatprep.subr.mxu0 0.0
      %485 = vmatpush2.msra.mxu0 0.0
      %486 = vmatprep.subr.mxu0 0.0
      %487 = vmatpush2.msra.mxu0 0.0
      %488 = vmatprep.subr.mxu0 0.0
      %489 = vmatpush2.msra.mxu0 0.0
      %490 = vmatprep.subr.mxu0 0.0
      %491 = vmatpush2.msra.mxu0 0.0
      %492 = vmatprep.mubr.f32.mxu0 0.0
      %493 = vmatmul.mubr.f32.gmra.mxu0 %v218
      %v494 = vpop.f32.mrf.mxu0
      %v495 = vadd.f32 %v350, %v494
      %v496 = vpop.f32.mrf.mxu0
      %497 = vmatprep.mubr.f32.mxu0 0.0
      %498 = vmatmul.mubr.f32.gmra.mxu0 %v219
      %v499 = vpop.f32.mrf.mxu0
      %v500 = vadd.f32 %v355, %v499
      %v501 = vpop.f32.mrf.mxu0
      %502 = vmatprep.mubr.f32.mxu0 0.0
      %503 = vmatmul.mubr.f32.gmra.mxu0 %v220
      %v504 = vpop.f32.mrf.mxu0
      %v505 = vadd.f32 %v360, %v504
      %v506 = vpop.f32.mrf.mxu0
      %507 = vmatprep.mubr.f32.mxu0 0.0
      %508 = vmatmul.mubr.f32.gmra.mxu0 %v221
      %v509 = vpop.f32.mrf.mxu0
      %v510 = vadd.f32 %v365, %v509
      %v511 = vpop.f32.mrf.mxu0
      %512 = vmatprep.mubr.f32.mxu0 0.0
      %513 = vmatmul.mubr.f32.gmra.mxu0 %v222
      %v514 = vpop.f32.mrf.mxu0
      %v515 = vadd.f32 %v370, %v514
      %v516 = vpop.f32.mrf.mxu0
      %517 = vmatprep.mubr.f32.mxu0 0.0
      %518 = vmatmul.mubr.f32.gmra.mxu0 %v223
      %v519 = vpop.f32.mrf.mxu0
      %v520 = vadd.f32 %v375, %v519
      %v521 = vpop.f32.mrf.mxu0
      %522 = vmatprep.mubr.f32.mxu0 0.0
      %523 = vmatmul.mubr.f32.gmra.mxu0 %v224
      %v524 = vpop.f32.mrf.mxu0
      %v525 = vadd.f32 %v380, %v524
      %v526 = vpop.f32.mrf.mxu0
      %527 = vmatprep.mubr.f32.mxu0 0.0
      %528 = vmatmul.mubr.f32.gmra.mxu0 %v225
      %v529 = vpop.f32.mrf.mxu0
      %v530 = vadd.f32 %v385, %v529
      %v531 = vpop.f32.mrf.mxu0
      %532 = vmatprep.mubr.f32.mxu0 0.0
      %533 = vmatmul.mubr.f32.gmra.mxu0 %v226
      %v534 = vpop.f32.mrf.mxu0
      %v535 = vadd.f32 %v390, %v534
      %v536 = vpop.f32.mrf.mxu0
      %537 = vmatprep.mubr.f32.mxu0 0.0
      %538 = vmatmul.mubr.f32.gmra.mxu0 %v227
      %v539 = vpop.f32.mrf.mxu0
      %v540 = vadd.f32 %v395, %v539
      %v541 = vpop.f32.mrf.mxu0
      %542 = vmatprep.mubr.f32.mxu0 0.0
      %543 = vmatmul.mubr.f32.gmra.mxu0 %v228
      %v544 = vpop.f32.mrf.mxu0
      %v545 = vadd.f32 %v400, %v544
      %v546 = vpop.f32.mrf.mxu0
      %547 = vmatprep.mubr.f32.mxu0 0.0
      %548 = vmatmul.mubr.f32.gmra.mxu0 %v229
      %v549 = vpop.f32.mrf.mxu0
      %v550 = vadd.f32 %v405, %v549
      %v551 = vpop.f32.mrf.mxu0
      %552 = vmatprep.mubr.f32.mxu0 0.0
      %553 = vmatmul.mubr.f32.gmra.mxu0 %v230
      %v554 = vpop.f32.mrf.mxu0
      %v555 = vadd.f32 %v410, %v554
      %v556 = vpop.f32.mrf.mxu0
      %557 = vmatprep.mubr.f32.mxu0 0.0
      %558 = vmatmul.mubr.f32.gmra.mxu0 %v231
      %v559 = vpop.f32.mrf.mxu0
      %v560 = vadd.f32 %v415, %v559
      %v561 = vpop.f32.mrf.mxu0
      %562 = vmatprep.mubr.f32.mxu0 0.0
      %563 = vmatmul.mubr.f32.gmra.mxu0 %v232
      %v564 = vpop.f32.mrf.mxu0
      %v565 = vadd.f32 %v420, %v564
      %v566 = vpop.f32.mrf.mxu0
      %567 = vmatprep.mubr.f32.mxu0 0.0
      %568 = vmatmul.mubr.f32.gmra.mxu0 %v233
      %v569 = vpop.f32.mrf.mxu0
      %v570 = vadd.f32 %v425, %v569
      %v571 = vpop.f32.mrf.mxu0
      %572 = vdwg.mxu0
      %v573 = vld [vmem:[%s207 + $0x2] sm:$0xff]
      %v574 = vld [vmem:[%s207 + $0xa] sm:$0xff]
      %v575 = vld [vmem:[%s207 + $0x12] sm:$0xff]
      %v576 = vld [vmem:[%s207 + $0x1a] sm:$0xff]
      %v577 = vld [vmem:[%s207 + $0x22] sm:$0xff]
      %v578 = vld [vmem:[%s207 + $0x2a] sm:$0xff]
      %v579 = vld [vmem:[%s207 + $0x32] sm:$0xff]
      %v580 = vld [vmem:[%s207 + $0x3a] sm:$0xff]
      %v581 = vld [vmem:[%s207 + $0x42] sm:$0xff]
      %v582 = vld [vmem:[%s207 + $0x4a] sm:$0xff]
      %v583 = vld [vmem:[%s207 + $0x52] sm:$0xff]
      %v584 = vld [vmem:[%s207 + $0x5a] sm:$0xff]
      %v585 = vld [vmem:[%s207 + $0x62] sm:$0xff]
      %v586 = vld [vmem:[%s207 + $0x6a] sm:$0xff]
      %v587 = vld [vmem:[%s207 + $0x72] sm:$0xff]
      %v588 = vld [vmem:[%s207 + $0x7a] sm:$0xff]
      %s589 = scalar_lea.vmem %s1, 256
      %v590 = vld [vmem:[%s589] sm:$0xff]
      %v591 = vld [vmem:[%s589 + $0x8] sm:$0xff]
      %v592 = vld [vmem:[%s589 + $0x10] sm:$0xff]
      %v593 = vld [vmem:[%s589 + $0x18] sm:$0xff]
      %v594 = vld [vmem:[%s589 + $0x20] sm:$0xff]
      %v595 = vld [vmem:[%s589 + $0x28] sm:$0xff]
      %v596 = vld [vmem:[%s589 + $0x30] sm:$0xff]
      %v597 = vld [vmem:[%s589 + $0x38] sm:$0xff]
      %v598 = vld [vmem:[%s589 + $0x40] sm:$0xff]
      %v599 = vld [vmem:[%s589 + $0x48] sm:$0xff]
      %v600 = vld [vmem:[%s589 + $0x50] sm:$0xff]
      %v601 = vld [vmem:[%s589 + $0x58] sm:$0xff]
      %v602 = vld [vmem:[%s589 + $0x60] sm:$0xff]
      %v603 = vld [vmem:[%s589 + $0x68] sm:$0xff]
      %v604 = vld [vmem:[%s589 + $0x70] sm:$0xff]
      %v605 = vld [vmem:[%s589 + $0x78] sm:$0xff]
      %606 = vmatprep.subr.mxu0 0.0
      %607 = vmatpush1.msra.mxu0 %v605
      %608 = vmatprep.subr.mxu0 0.0
      %609 = vmatpush1.msra.mxu0 %v604
      %610 = vmatprep.subr.mxu0 0.0
      %611 = vmatpush1.msra.mxu0 %v603
      %612 = vmatprep.subr.mxu0 0.0
      %613 = vmatpush1.msra.mxu0 %v602
      %614 = vmatprep.subr.mxu0 0.0
      %615 = vmatpush1.msra.mxu0 %v601
      %616 = vmatprep.subr.mxu0 0.0
      %617 = vmatpush1.msra.mxu0 %v600
      %618 = vmatprep.subr.mxu0 0.0
      %619 = vmatpush1.msra.mxu0 %v599
      %620 = vmatprep.subr.mxu0 0.0
      %621 = vmatpush1.msra.mxu0 %v598
      %622 = vmatprep.subr.mxu0 0.0
      %623 = vmatpush1.msra.mxu0 %v597
      %624 = vmatprep.subr.mxu0 0.0
      %625 = vmatpush1.msra.mxu0 %v596
      %626 = vmatprep.subr.mxu0 0.0
      %627 = vmatpush1.msra.mxu0 %v595
      %628 = vmatprep.subr.mxu0 0.0
      %629 = vmatpush1.msra.mxu0 %v594
      %630 = vmatprep.subr.mxu0 0.0
      %631 = vmatpush1.msra.mxu0 %v593
      %632 = vmatprep.subr.mxu0 0.0
      %633 = vmatpush1.msra.mxu0 %v592
      %634 = vmatprep.subr.mxu0 0.0
      %635 = vmatpush1.msra.mxu0 %v591
      %636 = vmatprep.subr.mxu0 0.0
      %637 = vmatpush1.msra.mxu0 %v590
      %638 = vmatprep.subr.mxu0 0.0
      %639 = vmatpush2.msra.mxu0 0.0
      %640 = vmatprep.subr.mxu0 0.0
      %641 = vmatpush2.msra.mxu0 0.0
      %642 = vmatprep.subr.mxu0 0.0
      %643 = vmatpush2.msra.mxu0 0.0
      %644 = vmatprep.subr.mxu0 0.0
      %645 = vmatpush2.msra.mxu0 0.0
      %646 = vmatprep.subr.mxu0 0.0
      %647 = vmatpush2.msra.mxu0 0.0
      %648 = vmatprep.subr.mxu0 0.0
      %649 = vmatpush2.msra.mxu0 0.0
      %650 = vmatprep.subr.mxu0 0.0
      %651 = vmatpush2.msra.mxu0 0.0
      %652 = vmatprep.subr.mxu0 0.0
      %653 = vmatpush2.msra.mxu0 0.0
      %654 = vmatprep.subr.mxu0 0.0
      %655 = vmatpush2.msra.mxu0 0.0
      %656 = vmatprep.subr.mxu0 0.0
      %657 = vmatpush2.msra.mxu0 0.0
      %658 = vmatprep.subr.mxu0 0.0
      %659 = vmatpush2.msra.mxu0 0.0
      %660 = vmatprep.subr.mxu0 0.0
      %661 = vmatpush2.msra.mxu0 0.0
      %662 = vmatprep.subr.mxu0 0.0
      %663 = vmatpush2.msra.mxu0 0.0
      %664 = vmatprep.subr.mxu0 0.0
      %665 = vmatpush2.msra.mxu0 0.0
      %666 = vmatprep.subr.mxu0 0.0
      %667 = vmatpush2.msra.mxu0 0.0
      %668 = vmatprep.subr.mxu0 0.0
      %669 = vmatpush2.msra.mxu0 0.0
      %670 = vmatprep.mubr.f32.mxu0 0.0
      %671 = vmatmul.mubr.f32.gmra.mxu0 %v573
      %v672 = vpop.f32.mrf.mxu0
      %v673 = vadd.f32 0.0, %v672
      %v674 = vpop.f32.mrf.mxu0
      %675 = vmatprep.mubr.f32.mxu0 0.0
      %676 = vmatmul.mubr.f32.gmra.mxu0 %v574
      %v677 = vpop.f32.mrf.mxu0
      %v678 = vadd.f32 0.0, %v677
      %v679 = vpop.f32.mrf.mxu0
      %680 = vmatprep.mubr.f32.mxu0 0.0
      %681 = vmatmul.mubr.f32.gmra.mxu0 %v575
      %v682 = vpop.f32.mrf.mxu0
      %v683 = vadd.f32 0.0, %v682
      %v684 = vpop.f32.mrf.mxu0
      %685 = vmatprep.mubr.f32.mxu0 0.0
      %686 = vmatmul.mubr.f32.gmra.mxu0 %v576
      %v687 = vpop.f32.mrf.mxu0
      %v688 = vadd.f32 0.0, %v687
      %v689 = vpop.f32.mrf.mxu0
      %690 = vmatprep.mubr.f32.mxu0 0.0
      %691 = vmatmul.mubr.f32.gmra.mxu0 %v577
      %v692 = vpop.f32.mrf.mxu0
      %v693 = vadd.f32 0.0, %v692
      %v694 = vpop.f32.mrf.mxu0
      %695 = vmatprep.mubr.f32.mxu0 0.0
      %696 = vmatmul.mubr.f32.gmra.mxu0 %v578
      %v697 = vpop.f32.mrf.mxu0
      %v698 = vadd.f32 0.0, %v697
      %v699 = vpop.f32.mrf.mxu0
      %700 = vmatprep.mubr.f32.mxu0 0.0
      %701 = vmatmul.mubr.f32.gmra.mxu0 %v579
      %v702 = vpop.f32.mrf.mxu0
      %v703 = vadd.f32 0.0, %v702
      %v704 = vpop.f32.mrf.mxu0
      %705 = vmatprep.mubr.f32.mxu0 0.0
      %706 = vmatmul.mubr.f32.gmra.mxu0 %v580
      %v707 = vpop.f32.mrf.mxu0
      %v708 = vadd.f32 0.0, %v707
      %v709 = vpop.f32.mrf.mxu0
      %710 = vmatprep.mubr.f32.mxu0 0.0
      %711 = vmatmul.mubr.f32.gmra.mxu0 %v581
      %v712 = vpop.f32.mrf.mxu0
      %v713 = vadd.f32 0.0, %v712
      %v714 = vpop.f32.mrf.mxu0
      %715 = vmatprep.mubr.f32.mxu0 0.0
      %716 = vmatmul.mubr.f32.gmra.mxu0 %v582
      %v717 = vpop.f32.mrf.mxu0
      %v718 = vadd.f32 0.0, %v717
      %v719 = vpop.f32.mrf.mxu0
      %720 = vmatprep.mubr.f32.mxu0 0.0
      %721 = vmatmul.mubr.f32.gmra.mxu0 %v583
      %v722 = vpop.f32.mrf.mxu0
      %v723 = vadd.f32 0.0, %v722
      %v724 = vpop.f32.mrf.mxu0
      %725 = vmatprep.mubr.f32.mxu0 0.0
      %726 = vmatmul.mubr.f32.gmra.mxu0 %v584
      %v727 = vpop.f32.mrf.mxu0
      %v728 = vadd.f32 0.0, %v727
      %v729 = vpop.f32.mrf.mxu0
      %730 = vmatprep.mubr.f32.mxu0 0.0
      %731 = vmatmul.mubr.f32.gmra.mxu0 %v585
      %v732 = vpop.f32.mrf.mxu0
      %v733 = vadd.f32 0.0, %v732
      %v734 = vpop.f32.mrf.mxu0
      %735 = vmatprep.mubr.f32.mxu0 0.0
      %736 = vmatmul.mubr.f32.gmra.mxu0 %v586
      %v737 = vpop.f32.mrf.mxu0
      %v738 = vadd.f32 0.0, %v737
      %v739 = vpop.f32.mrf.mxu0
      %740 = vmatprep.mubr.f32.mxu0 0.0
      %741 = vmatmul.mubr.f32.gmra.mxu0 %v587
      %v742 = vpop.f32.mrf.mxu0
      %v743 = vadd.f32 0.0, %v742
      %v744 = vpop.f32.mrf.mxu0
      %745 = vmatprep.mubr.f32.mxu0 0.0
      %746 = vmatmul.mubr.f32.gmra.mxu0 %v588
      %v747 = vpop.f32.mrf.mxu0
      %v748 = vadd.f32 0.0, %v747
      %v749 = vpop.f32.mrf.mxu0
      %750 = vdwg.mxu0
      %v751 = vadd.f32 %v495, %v673
      %v752 = vadd.f32 %v500, %v678
      %v753 = vadd.f32 %v505, %v683
      %v754 = vadd.f32 %v510, %v688
      %v755 = vadd.f32 %v515, %v693
      %v756 = vadd.f32 %v520, %v698
      %v757 = vadd.f32 %v525, %v703
      %v758 = vadd.f32 %v530, %v708
      %v759 = vadd.f32 %v535, %v713
      %v760 = vadd.f32 %v540, %v718
      %v761 = vadd.f32 %v545, %v723
      %v762 = vadd.f32 %v550, %v728
      %v763 = vadd.f32 %v555, %v733
      %v764 = vadd.f32 %v560, %v738
      %v765 = vadd.f32 %v565, %v743
      %v766 = vadd.f32 %v570, %v748
      %v767 = vld [vmem:[%s2] sm:$0x1]
      %v769 = vlaneseq
      %v770 = vshrl.u32 %v769, 7
      %v771 = vsub.s32 0, %v770
      %v772 = vrot.slane %v767, %v771
      %v774 = vadd.f32 %v751, %v772
      %v775 = vadd.f32 %v752, %v772
      %v776 = vadd.f32 %v753, %v772
      %v777 = vadd.f32 %v754, %v772
      %v778 = vadd.f32 %v755, %v772
      %v779 = vadd.f32 %v756, %v772
      %v780 = vadd.f32 %v757, %v772
      %v781 = vadd.f32 %v758, %v772
      %v782 = vadd.f32 %v759, %v772
      %v783 = vadd.f32 %v760, %v772
      %v784 = vadd.f32 %v761, %v772
      %v785 = vadd.f32 %v762, %v772
      %v786 = vadd.f32 %v763, %v772
      %v787 = vadd.f32 %v764, %v772
      %v788 = vadd.f32 %v765, %v772
      %v789 = vadd.f32 %v766, %v772
      %v790 = vld [vmem:[%s212] sm:$0xff]
      %v791 = vld [vmem:[%s212 + $0x8] sm:$0xff]
      %v792 = vld [vmem:[%s212 + $0x10] sm:$0xff]
      %v793 = vld [vmem:[%s212 + $0x18] sm:$0xff]
      %v794 = vld [vmem:[%s212 + $0x20] sm:$0xff]
      %v795 = vld [vmem:[%s212 + $0x28] sm:$0xff]
      %v796 = vld [vmem:[%s212 + $0x30] sm:$0xff]
      %v797 = vld [vmem:[%s212 + $0x38] sm:$0xff]
      %v798 = vld [vmem:[%s212 + $0x40] sm:$0xff]
      %v799 = vld [vmem:[%s212 + $0x48] sm:$0xff]
      %v800 = vld [vmem:[%s212 + $0x50] sm:$0xff]
      %v801 = vld [vmem:[%s212 + $0x58] sm:$0xff]
      %v802 = vld [vmem:[%s212 + $0x60] sm:$0xff]
      %v803 = vld [vmem:[%s212 + $0x68] sm:$0xff]
      %v804 = vld [vmem:[%s212 + $0x70] sm:$0xff]
      %v805 = vld [vmem:[%s212 + $0x78] sm:$0xff]
      %807 = vset.pattern.permute.xlu0 0
      %808 = vperm.xlu0 %807, %v790
      %v809 = vpop.permute.xlu0 %808
      %812 = vset.pattern.permute.xlu0 0
      %813 = vperm.xlu0 %812, %v791
      %v814 = vpop.permute.xlu0 %813
      %817 = vset.pattern.permute.xlu0 0
      %818 = vperm.xlu0 %817, %v792
      %v819 = vpop.permute.xlu0 %818
      %822 = vset.pattern.permute.xlu0 0
      %823 = vperm.xlu0 %822, %v793
      %v824 = vpop.permute.xlu0 %823
      %827 = vset.pattern.permute.xlu0 0
      %828 = vperm.xlu0 %827, %v794
      %v829 = vpop.permute.xlu0 %828
      %832 = vset.pattern.permute.xlu0 0
      %833 = vperm.xlu0 %832, %v795
      %v834 = vpop.permute.xlu0 %833
      %837 = vset.pattern.permute.xlu0 0
      %838 = vperm.xlu0 %837, %v796
      %v839 = vpop.permute.xlu0 %838
      %842 = vset.pattern.permute.xlu0 0
      %843 = vperm.xlu0 %842, %v797
      %v844 = vpop.permute.xlu0 %843
      %847 = vset.pattern.permute.xlu0 0
      %848 = vperm.xlu0 %847, %v798
      %v849 = vpop.permute.xlu0 %848
      %852 = vset.pattern.permute.xlu0 0
      %853 = vperm.xlu0 %852, %v799
      %v854 = vpop.permute.xlu0 %853
      %857 = vset.pattern.permute.xlu0 0
      %858 = vperm.xlu0 %857, %v800
      %v859 = vpop.permute.xlu0 %858
      %862 = vset.pattern.permute.xlu0 0
      %863 = vperm.xlu0 %862, %v801
      %v864 = vpop.permute.xlu0 %863
      %867 = vset.pattern.permute.xlu0 0
      %868 = vperm.xlu0 %867, %v802
      %v869 = vpop.permute.xlu0 %868
      %872 = vset.pattern.permute.xlu0 0
      %873 = vperm.xlu0 %872, %v803
      %v874 = vpop.permute.xlu0 %873
      %877 = vset.pattern.permute.xlu0 0
      %878 = vperm.xlu0 %877, %v804
      %v879 = vpop.permute.xlu0 %878
      %882 = vset.pattern.permute.xlu0 0
      %883 = vperm.xlu0 %882, %v805
      %v884 = vpop.permute.xlu0 %883
      %v886 = vmul.f32 %v774, %v809
      %v887 = vmul.f32 %v775, %v814
      %v888 = vmul.f32 %v776, %v819
      %v889 = vmul.f32 %v777, %v824
      %v890 = vmul.f32 %v778, %v829
      %v891 = vmul.f32 %v779, %v834
      %v892 = vmul.f32 %v780, %v839
      %v893 = vmul.f32 %v781, %v844
      %v894 = vmul.f32 %v782, %v849
      %v895 = vmul.f32 %v783, %v854
      %v896 = vmul.f32 %v784, %v859
      %v897 = vmul.f32 %v785, %v864
      %v898 = vmul.f32 %v786, %v869
      %v899 = vmul.f32 %v787, %v874
      %v900 = vmul.f32 %v788, %v879
      %v901 = vmul.f32 %v789, %v884
      %vm902 = vcmask 523264
      %903 = vst.msk [vmem:[%s217] sm:$0xff] %vm902, %v886
      %904 = vst.msk [vmem:[%s217 + $0x8] sm:$0xff] %vm902, %v887
      %905 = vst.msk [vmem:[%s217 + $0x10] sm:$0xff] %vm902, %v888
      %906 = vst.msk [vmem:[%s217 + $0x18] sm:$0xff] %vm902, %v889
      %907 = vst.msk [vmem:[%s217 + $0x20] sm:$0xff] %vm902, %v890
      %908 = vst.msk [vmem:[%s217 + $0x28] sm:$0xff] %vm902, %v891
      %909 = vst.msk [vmem:[%s217 + $0x30] sm:$0xff] %vm902, %v892
      %910 = vst.msk [vmem:[%s217 + $0x38] sm:$0xff] %vm902, %v893
      %911 = vst.msk [vmem:[%s217 + $0x40] sm:$0xff] %vm902, %v894
      %912 = vst.msk [vmem:[%s217 + $0x48] sm:$0xff] %vm902, %v895
      %913 = vst.msk [vmem:[%s217 + $0x50] sm:$0xff] %vm902, %v896
      %914 = vst.msk [vmem:[%s217 + $0x58] sm:$0xff] %vm902, %v897
      %915 = vst.msk [vmem:[%s217 + $0x60] sm:$0xff] %vm902, %v898
      %916 = vst.msk [vmem:[%s217 + $0x68] sm:$0xff] %vm902, %v899
      %917 = vst.msk [vmem:[%s217 + $0x70] sm:$0xff] %vm902, %v900
      %918 = vst.msk [vmem:[%s217 + $0x78] sm:$0xff] %vm902, %v901
      %p919 = scmp.lt.s32.totalorder %s15, 1
      %s920 = scalar_select %p919, %s15, 1
      %s921 = smul.addr %s920, 16
      %s922 = smul.addr %s921, 8
      %s923 = scalar_lea.vmem %s4, %s922
      // Predicated region
      $region37: #{vits_text_encoder_forward.20} parent=35 // pred_check
        %p924 = pneg %p127
      $region38: #{vits_text_encoder_forward.20} parent=35 // pred_check_branch
        %926 = sbr.rel (%p924) target = $region40
      $region39: #{vits_text_encoder_forward.20} parent=35 // pred_region
        _
      $region40: #{vits_text_encoder_forward.20} parent=35 // pred_fallthru
        _
    $region36: #{vits_text_encoder_forward.20} parent=5 // pred_fallthru
      _
    %p927 = scmp.le.s32.totalorder 2, %s10
    // Predicated region
    $region41: #{vits_text_encoder_forward.20} parent=5 // pred_check
      %p928 = pneg %p927
    $region42: #{vits_text_encoder_forward.20} parent=5 // pred_check_branch
      %930 = sbr.rel (%p928) target = $region44
    $region43: #{vits_text_encoder_forward.20} parent=5 // pred_region
      %s931 = ssub.s32 %s10, 2
      // Predicated region
      $region45: #{vits_text_encoder_forward.20} parent=43 // pred_check
        %p932 = pneg %p133
      $region46: #{vits_text_encoder_forward.20} parent=43 // pred_check_branch
        %934 = sbr.rel (%p932) target = $region48
      $region47: #{vits_text_encoder_forward.20} parent=43 // pred_region
        %p935 = scmp.lt.s32.totalorder %s16, 1
        %s936 = scalar_select %p935, %s16, 1
        %s937 = smul.addr %s936, 16
        %s938 = smul.addr %s937, 8
        %s939 = scalar_lea.vmem %s4, %s938
      $region48: #{vits_text_encoder_forward.20} parent=43 // pred_fallthru
        _
    $region44: #{vits_text_encoder_forward.20} parent=5 // pred_fallthru
      _
  $region6: #{vits_text_encoder_forward.20} parent=0 // loop_footer
    %s14 = sadd.s32 1, %s10
  $region7: #{vits_text_encoder_forward.20} parent=0 // loop_footer_branch
    %9 = sbr.rel target = $region3
  $region8: #{vits_text_encoder_forward.20} parent=0 // loop_exit
    _

// kernel: vits_text_encoder_forward.16
$region0: #{vits_text_encoder_forward.16}
  #allocation0 [shape = 'u32[]', space=smem, size = 0x4, offset = 0x4, fixed_abs, tag = 'smem constant byte address 0x4 - core index']
  #allocation1 [shape = 'u32[144,128]{1,0:T(1,128)}', space=vmem, size = 0x12000, scoped, tag = 'internal scratch']
  %s0 = inlined_call_operand.vmem [shape: f32[2,128,192], index: 0, kind: input, shape index: {}]
  %s1 = inlined_call_operand.vmem [shape: f32[9,32], index: 1, kind: input, shape index: {}]
  %s2 = inlined_call_operand.vmem [shape: f32[9,32], index: 2, kind: input, shape index: {}]
  %s3 = inlined_call_operand.vmem [shape: f32[2,1,128], index: 3, kind: input, shape index: {}]
  %s4 = inlined_call_operand.vmem [shape: f32[2,128,64], index: 4, kind: output, shape index: {}]
  %s5 = sld [smem:[#allocation0]]
  $region49: #{vits_text_encoder_forward.16} parent=0
    _
  %s7 = ssub.s32 1, %s5
  %s8 = scalar_select 0, %s7, %s5
  loop: start=0, step=1, limit=4
  $region2: #{vits_text_encoder_forward.16} parent=0 // loop_pre_header
    _
  $region3: #{vits_text_encoder_forward.16} parent=0 // loop_header
    %s10 = sphi 0, %s14
    %p11 = scmp.ge.s32.totalorder %s10, 4
    %s20 = sphi 0, %s22
    %s23 = sphi 0, %s20
    %s24 = sphi 0, %s23
    %s40 = sphi 0, %s24
    %s44 = sphi 0, %s44
    %s46 = sphi 0, %s44
    %s47 = sphi 0, %s46
    %s61 = sphi 0, %s47
    %s65 = sphi 0, %s65
    %s67 = sphi 0, %s65
    %s68 = sphi 0, %s67
    %s82 = sphi 0, %s68
    %s88 = sphi 0, %s90
    %s91 = sphi 0, %s88
    %s92 = sphi 0, %s91
    %s108 = sphi 0, %s92
    %s114 = sphi 0, %s116
    %s117 = sphi 0, %s114
    %s118 = sphi 0, %s117
    %s134 = sphi 0, %s118
  $region4: #{vits_text_encoder_forward.16} parent=0 // loop_header_branch
    %13 = sbr.rel (%p11) target = $region8
  $region5: #{vits_text_encoder_forward.16} parent=0 // loop_body
    %s15 = ssub.s32 %s10, 1
    %s16 = ssub.s32 %s10, 2
    %s17 = sadd.s32 %s10, 1
    %s18 = ssub.s32 %s10, %s17
    %p19 = scmp.eq.s32.totalorder %s18, 0
    %s21 = sadd.s32 %s20, 1
    %s22 = scalar_select %p19, %s20, %s21
    %p25 = pneg %p19
    %p26 = scmp.eq.s32.totalorder %s10, 1
    %p27 = por %p25, %p26
    %p28 = scmp.ne.s32.totalorder %s20, %s23
    %p29 = scmp.eq.s32.totalorder %s10, 0
    %p30 = por %p28, %p29
    %p31 = scmp.ne.s32.totalorder %s20, %s23
    %p32 = scmp.eq.s32.totalorder %s15, 1
    %p33 = por %p31, %p32
    %p34 = scmp.ne.s32.totalorder %s23, %s24
    %p35 = scmp.eq.s32.totalorder %s15, 0
    %p36 = por %p34, %p35
    %p37 = scmp.ne.s32.totalorder %s23, %s24
    %p38 = scmp.eq.s32.totalorder %s16, 1
    %p39 = por %p37, %p38
    %p41 = scmp.ne.s32.totalorder %s24, %s40
    %p42 = scmp.eq.s32.totalorder %s16, 0
    %p43 = por %p41, %p42
    %s45 = sadd.s32 %s44, 1
    %p48 = scmp.eq.s32.totalorder %s10, 1
    %p49 = scmp.ne.s32.totalorder %s44, %s46
    %p50 = scmp.eq.s32.totalorder %s10, 0
    %p51 = por %p49, %p50
    %p52 = scmp.ne.s32.totalorder %s44, %s46
    %p53 = scmp.eq.s32.totalorder %s15, 1
    %p54 = por %p52, %p53
    %p55 = scmp.ne.s32.totalorder %s46, %s47
    %p56 = scmp.eq.s32.totalorder %s15, 0
    %p57 = por %p55, %p56
    %p58 = scmp.ne.s32.totalorder %s46, %s47
    %p59 = scmp.eq.s32.totalorder %s16, 1
    %p60 = por %p58, %p59
    %p62 = scmp.ne.s32.totalorder %s47, %s61
    %p63 = scmp.eq.s32.totalorder %s16, 0
    %p64 = por %p62, %p63
    %s66 = sadd.s32 %s65, 1
    %p69 = scmp.eq.s32.totalorder %s10, 1
    %p70 = scmp.ne.s32.totalorder %s65, %s67
    %p71 = scmp.eq.s32.totalorder %s10, 0
    %p72 = por %p70, %p71
    %p73 = scmp.ne.s32.totalorder %s65, %s67
    %p74 = scmp.eq.s32.totalorder %s15, 1
    %p75 = por %p73, %p74
    %p76 = scmp.ne.s32.totalorder %s67, %s68
    %p77 = scmp.eq.s32.totalorder %s15, 0
    %p78 = por %p76, %p77
    %p79 = scmp.ne.s32.totalorder %s67, %s68
    %p80 = scmp.eq.s32.totalorder %s16, 1
    %p81 = por %p79, %p80
    %p83 = scmp.ne.s32.totalorder %s68, %s82
    %p84 = scmp.eq.s32.totalorder %s16, 0
    %p85 = por %p83, %p84
    %s86 = ssub.s32 %s10, %s17
    %p87 = scmp.eq.s32.totalorder %s86, 0
    %s89 = sadd.s32 %s88, 1
    %s90 = scalar_select %p87, %s88, %s89
    %p93 = pneg %p87
    %p94 = scmp.eq.s32.totalorder %s10, 1
    %p95 = por %p93, %p94
    %p96 = scmp.ne.s32.totalorder %s88, %s91
    %p97 = scmp.eq.s32.totalorder %s10, 0
    %p98 = por %p96, %p97
    %p99 = scmp.ne.s32.totalorder %s88, %s91
    %p100 = scmp.eq.s32.totalorder %s15, 1
    %p101 = por %p99, %p100
    %p102 = scmp.ne.s32.totalorder %s91, %s92
    %p103 = scmp.eq.s32.totalorder %s15, 0
    %p104 = por %p102, %p103
    %p105 = scmp.ne.s32.totalorder %s91, %s92
    %p106 = scmp.eq.s32.totalorder %s16, 1
    %p107 = por %p105, %p106
    %p109 = scmp.ne.s32.totalorder %s92, %s108
    %p110 = scmp.eq.s32.totalorder %s16, 0
    %p111 = por %p109, %p110
    %s112 = ssub.s32 %s10, %s17
    %p113 = scmp.eq.s32.totalorder %s112, 0
    %s115 = sadd.s32 %s114, 1
    %s116 = scalar_select %p113, %s114, %s115
    %p119 = pneg %p113
    %p120 = scmp.eq.s32.totalorder %s10, 1
    %p121 = por %p119, %p120
    %p122 = scmp.ne.s32.totalorder %s114, %s117
    %p123 = scmp.eq.s32.totalorder %s10, 0
    %p124 = por %p122, %p123
    %p125 = scmp.ne.s32.totalorder %s114, %s117
    %p126 = scmp.eq.s32.totalorder %s15, 1
    %p127 = por %p125, %p126
    %p128 = scmp.ne.s32.totalorder %s117, %s118
    %p129 = scmp.eq.s32.totalorder %s15, 0
    %p130 = por %p128, %p129
    %p131 = scmp.ne.s32.totalorder %s117, %s118
    %p132 = scmp.eq.s32.totalorder %s16, 1
    %p133 = por %p131, %p132
    %p135 = scmp.ne.s32.totalorder %s118, %s134
    %p136 = scmp.eq.s32.totalorder %s16, 0
    %p137 = por %p135, %p136
    %p138 = scmp.le.s32.totalorder 1, %s10
    %p139 = scmp.lt.s32.totalorder %s10, 3
    %p140 = pnand %p138, %p139
    %p141 = pneg %p140
    // Predicated region
    $region9: #{vits_text_encoder_forward.16} parent=5 // pred_check
      _
    $region10: #{vits_text_encoder_forward.16} parent=5 // pred_check_branch
      %143 = sbr.rel (%p140) target = $region12
    $region11: #{vits_text_encoder_forward.16} parent=5 // pred_region
      %s144 = ssub.s32 %s10, 1
      // Predicated region
      $region13: #{vits_text_encoder_forward.16} parent=11 // pred_check
        %p145 = pneg %p57
      $region14: #{vits_text_encoder_forward.16} parent=11 // pred_check_branch
        %147 = sbr.rel (%p145) target = $region16
      $region15: #{vits_text_encoder_forward.16} parent=11 // pred_region
        _
      $region16: #{vits_text_encoder_forward.16} parent=11 // pred_fallthru
        _
      // Predicated region
      $region17: #{vits_text_encoder_forward.16} parent=11 // pred_check
        %p148 = pneg %p78
      $region18: #{vits_text_encoder_forward.16} parent=11 // pred_check_branch
        %150 = sbr.rel (%p148) target = $region20
      $region19: #{vits_text_encoder_forward.16} parent=11 // pred_region
        _
      $region20: #{vits_text_encoder_forward.16} parent=11 // pred_fallthru
        _
    $region12: #{vits_text_encoder_forward.16} parent=5 // pred_fallthru
      _
    %p151 = scmp.lt.s32.totalorder %s10, 2
    // Predicated region
    $region21: #{vits_text_encoder_forward.16} parent=5 // pred_check
      %p152 = pneg %p151
    $region22: #{vits_text_encoder_forward.16} parent=5 // pred_check_branch
      %154 = sbr.rel (%p152) target = $region24
    $region23: #{vits_text_encoder_forward.16} parent=5 // pred_region
      // Predicated region
      $region25: #{vits_text_encoder_forward.16} parent=23 // pred_check
        %p155 = pneg %p30
      $region26: #{vits_text_encoder_forward.16} parent=23 // pred_check_branch
        %157 = sbr.rel (%p155) target = $region28
      $region27: #{vits_text_encoder_forward.16} parent=23 // pred_region
        %p158 = scmp.lt.s32.totalorder %s10, 1
        %s159 = scalar_select %p158, %s10, 1
        %s160 = smul.addr %s159, 32
        %s161 = smul.addr %s160, 8
        %s162 = scalar_lea.vmem %s0, %s161
      $region28: #{vits_text_encoder_forward.16} parent=23 // pred_fallthru
        _
      // Predicated region
      $region29: #{vits_text_encoder_forward.16} parent=23 // pred_check
        %p163 = pneg %p98
      $region30: #{vits_text_encoder_forward.16} parent=23 // pred_check_branch
        %165 = sbr.rel (%p163) target = $region32
      $region31: #{vits_text_encoder_forward.16} parent=23 // pred_region
        %p166 = scmp.lt.s32.totalorder %s10, 1
        %s167 = scalar_select %p166, %s10, 1
        %s168 = scalar_lea.vmem %s3, %s167
      $region32: #{vits_text_encoder_forward.16} parent=23 // pred_fallthru
        _
    $region24: #{vits_text_encoder_forward.16} parent=5 // pred_fallthru
      _
    %p169 = scmp.le.s32.totalorder 1, %s10
    %p170 = scmp.lt.s32.totalorder %s10, 3
    %p171 = pnand %p169, %p170
    %p172 = pneg %p171
    // Predicated region
    $region33: #{vits_text_encoder_forward.16} parent=5 // pred_check
      _
    $region34: #{vits_text_encoder_forward.16} parent=5 // pred_check_branch
      %174 = sbr.rel (%p171) target = $region36
    $region35: #{vits_text_encoder_forward.16} parent=5 // pred_region
      %s175 = ssub.s32 %s10, 1
      %p176 = scmp.lt.s32.totalorder %s15, 1
      %s177 = scalar_select %p176, %s15, 1
      %s178 = smul.addr %s177, 32
      %s179 = smul.addr %s178, 8
      %s180 = scalar_lea.vmem %s0, %s179
      %p181 = pneg %p36
      %p182 = pneg %p33
      %p183 = pneg %p57
      %p184 = pneg %p54
      %p185 = pneg %p78
      %p186 = pneg %p75
      %p187 = scmp.lt.s32.totalorder %s15, 1
      %s188 = scalar_select %p187, %s15, 1
      %s189 = scalar_lea.vmem %s3, %s188
      %p190 = pneg %p104
      %p191 = pneg %p101
      %p192 = pneg %p130
      %p193 = pneg %p127
      %p194 = scmp.lt.s32.totalorder %s15, 1
      %s195 = scalar_select %p194, %s15, 1
      %s196 = smul.addr %s195, 16
      %s197 = smul.addr %s196, 8
      %s198 = scalar_lea.vmem %s4, %s197
      %p199 = scmp.lt.s32.totalorder %s15, 1
      %s200 = scalar_select %p199, %s15, 1
      %s201 = smul.addr %s200, 32
      %s202 = smul.addr %s201, 8
      %s203 = scalar_lea.vmem %s0, %s202
      %p204 = scmp.lt.s32.totalorder %s15, 1
      %s205 = scalar_select %p204, %s15, 1
      %s206 = scalar_lea.vmem %s3, %s205
      %p207 = scmp.lt.s32.totalorder %s15, 1
      %s208 = scalar_select %p207, %s15, 1
      %s209 = smul.addr %s208, 16
      %s210 = smul.addr %s209, 8
      %s211 = scalar_lea.vmem %s4, %s210
      %v212 = vld [vmem:[%s206] sm:$0x1]
      %vm213 = vcmp.gt.f32.partialorder %v212, 0.0
      %v214 = vlaneseq
      %v215 = vshrl.u32 %v214, 7
      %v216 = vadd.s32 %v215, 8
      %v217 = vadd.s32 %v215, 16
      %v218 = vadd.s32 %v215, 24
      %v219 = vadd.s32 %v215, 32
      %v220 = vadd.s32 %v215, 40
      %v221 = vadd.s32 %v215, 48
      %v222 = vadd.s32 %v215, 56
      %v223 = vadd.s32 %v215, 64
      %v224 = vadd.s32 %v215, 72
      %v225 = vadd.s32 %v215, 80
      %v226 = vadd.s32 %v215, 88
      %v227 = vadd.s32 %v215, 96
      %v228 = vadd.s32 %v215, 104
      %v229 = vadd.s32 %v215, 112
      %v230 = vadd.s32 %v215, 120
      %v231 = vlaneseq
      %v232 = vand.u32 %v231, 127
      %v233 = vsub.s32 %v232, %v215
      %v234 = vsub.s32 %v232, %v216
      %v235 = vsub.s32 %v232, %v217
      %v236 = vsub.s32 %v232, %v218
      %v237 = vsub.s32 %v232, %v219
      %v238 = vsub.s32 %v232, %v220
      %v239 = vsub.s32 %v232, %v221
      %v240 = vsub.s32 %v232, %v222
      %v241 = vsub.s32 %v232, %v223
      %v242 = vsub.s32 %v232, %v224
      %v243 = vsub.s32 %v232, %v225
      %v244 = vsub.s32 %v232, %v226
      %v245 = vsub.s32 %v232, %v227
      %v246 = vsub.s32 %v232, %v228
      %v247 = vsub.s32 %v232, %v229
      %v248 = vsub.s32 %v232, %v230
      %vm249 = vcmp.eq.s32.totalorder %v233, 4294967292
      %vm250 = vcmp.eq.s32.totalorder %v234, 4294967292
      %vm251 = vcmp.eq.s32.totalorder %v235, 4294967292
      %vm252 = vcmp.eq.s32.totalorder %v236, 4294967292
      %vm253 = vcmp.eq.s32.totalorder %v237, 4294967292
      %vm254 = vcmp.eq.s32.totalorder %v238, 4294967292
      %vm255 = vcmp.eq.s32.totalorder %v239, 4294967292
      %vm256 = vcmp.eq.s32.totalorder %v240, 4294967292
      %vm257 = vcmp.eq.s32.totalorder %v241, 4294967292
      %vm258 = vcmp.eq.s32.totalorder %v242, 4294967292
      %vm259 = vcmp.eq.s32.totalorder %v243, 4294967292
      %vm260 = vcmp.eq.s32.totalorder %v244, 4294967292
      %vm261 = vcmp.eq.s32.totalorder %v245, 4294967292
      %vm262 = vcmp.eq.s32.totalorder %v246, 4294967292
      %vm263 = vcmp.eq.s32.totalorder %v247, 4294967292
      %vm264 = vcmp.eq.s32.totalorder %v248, 4294967292
      %vm265 = vcmp.eq.s32.totalorder %v233, 4294967293
      %vm266 = vcmp.eq.s32.totalorder %v234, 4294967293
      %vm267 = vcmp.eq.s32.totalorder %v235, 4294967293
      %vm268 = vcmp.eq.s32.totalorder %v236, 4294967293
      %vm269 = vcmp.eq.s32.totalorder %v237, 4294967293
      %vm270 = vcmp.eq.s32.totalorder %v238, 4294967293
      %vm271 = vcmp.eq.s32.totalorder %v239, 4294967293
      %vm272 = vcmp.eq.s32.totalorder %v240, 4294967293
      %vm273 = vcmp.eq.s32.totalorder %v241, 4294967293
      %vm274 = vcmp.eq.s32.totalorder %v242, 4294967293
      %vm275 = vcmp.eq.s32.totalorder %v243, 4294967293
      %vm276 = vcmp.eq.s32.totalorder %v244, 4294967293
      %vm277 = vcmp.eq.s32.totalorder %v245, 4294967293
      %vm278 = vcmp.eq.s32.totalorder %v246, 4294967293
      %vm279 = vcmp.eq.s32.totalorder %v247, 4294967293
      %vm280 = vcmp.eq.s32.totalorder %v248, 4294967293
      %vm281 = vcmp.eq.s32.totalorder %v233, 4294967294
      %vm282 = vcmp.eq.s32.totalorder %v234, 4294967294
      %vm283 = vcmp.eq.s32.totalorder %v235, 4294967294
      %vm284 = vcmp.eq.s32.totalorder %v236, 4294967294
      %vm285 = vcmp.eq.s32.totalorder %v237, 4294967294
      %vm286 = vcmp.eq.s32.totalorder %v238, 4294967294
      %vm287 = vcmp.eq.s32.totalorder %v239, 4294967294
      %vm288 = vcmp.eq.s32.totalorder %v240, 4294967294
      %vm289 = vcmp.eq.s32.totalorder %v241, 4294967294
      %vm290 = vcmp.eq.s32.totalorder %v242, 4294967294
      %vm291 = vcmp.eq.s32.totalorder %v243, 4294967294
      %vm292 = vcmp.eq.s32.totalorder %v244, 4294967294
      %vm293 = vcmp.eq.s32.totalorder %v245, 4294967294
      %vm294 = vcmp.eq.s32.totalorder %v246, 4294967294
      %vm295 = vcmp.eq.s32.totalorder %v247, 4294967294
      %vm296 = vcmp.eq.s32.totalorder %v248, 4294967294
      %vm297 = vcmp.eq.s32.totalorder %v233, 4294967295
      %vm298 = vcmp.eq.s32.totalorder %v234, 4294967295
      %vm299 = vcmp.eq.s32.totalorder %v235, 4294967295
      %vm300 = vcmp.eq.s32.totalorder %v236, 4294967295
      %vm301 = vcmp.eq.s32.totalorder %v237, 4294967295
      %vm302 = vcmp.eq.s32.totalorder %v238, 4294967295
      %vm303 = vcmp.eq.s32.totalorder %v239, 4294967295
      %vm304 = vcmp.eq.s32.totalorder %v240, 4294967295
      %vm305 = vcmp.eq.s32.totalorder %v241, 4294967295
      %vm306 = vcmp.eq.s32.totalorder %v242, 4294967295
      %vm307 = vcmp.eq.s32.totalorder %v243, 4294967295
      %vm308 = vcmp.eq.s32.totalorder %v244, 4294967295
      %vm309 = vcmp.eq.s32.totalorder %v245, 4294967295
      %vm310 = vcmp.eq.s32.totalorder %v246, 4294967295
      %vm311 = vcmp.eq.s32.totalorder %v247, 4294967295
      %vm312 = vcmp.eq.s32.totalorder %v248, 4294967295
      %vm313 = vcmp.eq.s32.totalorder %v233, 0
      %vm314 = vcmp.eq.s32.totalorder %v234, 0
      %vm315 = vcmp.eq.s32.totalorder %v235, 0
      %vm316 = vcmp.eq.s32.totalorder %v236, 0
      %vm317 = vcmp.eq.s32.totalorder %v237, 0
      %vm318 = vcmp.eq.s32.totalorder %v238, 0
      %vm319 = vcmp.eq.s32.totalorder %v239, 0
      %vm320 = vcmp.eq.s32.totalorder %v240, 0
      %vm321 = vcmp.eq.s32.totalorder %v241, 0
      %vm322 = vcmp.eq.s32.totalorder %v242, 0
      %vm323 = vcmp.eq.s32.totalorder %v243, 0
      %vm324 = vcmp.eq.s32.totalorder %v244, 0
      %vm325 = vcmp.eq.s32.totalorder %v245, 0
      %vm326 = vcmp.eq.s32.totalorder %v246, 0
      %vm327 = vcmp.eq.s32.totalorder %v247, 0
      %vm328 = vcmp.eq.s32.totalorder %v248, 0
      %vm329 = vcmp.eq.s32.totalorder %v233, 1
      %vm330 = vcmp.eq.s32.totalorder %v234, 1
      %vm331 = vcmp.eq.s32.totalorder %v235, 1
      %vm332 = vcmp.eq.s32.totalorder %v236, 1
      %vm333 = vcmp.eq.s32.totalorder %v237, 1
      %vm334 = vcmp.eq.s32.totalorder %v238, 1
      %vm335 = vcmp.eq.s32.totalorder %v239, 1
      %vm336 = vcmp.eq.s32.totalorder %v240, 1
      %vm337 = vcmp.eq.s32.totalorder %v241, 1
      %vm338 = vcmp.eq.s32.totalorder %v242, 1
      %vm339 = vcmp.eq.s32.totalorder %v243, 1
      %vm340 = vcmp.eq.s32.totalorder %v244, 1
      %vm341 = vcmp.eq.s32.totalorder %v245, 1
      %vm342 = vcmp.eq.s32.totalorder %v246, 1
      %vm343 = vcmp.eq.s32.totalorder %v247, 1
      %vm344 = vcmp.eq.s32.totalorder %v248, 1
      %vm345 = vcmp.eq.s32.totalorder %v233, 2
      %vm346 = vcmp.eq.s32.totalorder %v234, 2
      %vm347 = vcmp.eq.s32.totalorder %v235, 2
      %vm348 = vcmp.eq.s32.totalorder %v236, 2
      %vm349 = vcmp.eq.s32.totalorder %v237, 2
      %vm350 = vcmp.eq.s32.totalorder %v238, 2
      %vm351 = vcmp.eq.s32.totalorder %v239, 2
      %vm352 = vcmp.eq.s32.totalorder %v240, 2
      %vm353 = vcmp.eq.s32.totalorder %v241, 2
      %vm354 = vcmp.eq.s32.totalorder %v242, 2
      %vm355 = vcmp.eq.s32.totalorder %v243, 2
      %vm356 = vcmp.eq.s32.totalorder %v244, 2
      %vm357 = vcmp.eq.s32.totalorder %v245, 2
      %vm358 = vcmp.eq.s32.totalorder %v246, 2
      %vm359 = vcmp.eq.s32.totalorder %v247, 2
      %vm360 = vcmp.eq.s32.totalorder %v248, 2
      %vm361 = vcmp.eq.s32.totalorder %v233, 3
      %vm362 = vcmp.eq.s32.totalorder %v234, 3
      %vm363 = vcmp.eq.s32.totalorder %v235, 3
      %vm364 = vcmp.eq.s32.totalorder %v236, 3
      %vm365 = vcmp.eq.s32.totalorder %v237, 3
      %vm366 = vcmp.eq.s32.totalorder %v238, 3
      %vm367 = vcmp.eq.s32.totalorder %v239, 3
      %vm368 = vcmp.eq.s32.totalorder %v240, 3
      %vm369 = vcmp.eq.s32.totalorder %v241, 3
      %vm370 = vcmp.eq.s32.totalorder %v242, 3
      %vm371 = vcmp.eq.s32.totalorder %v243, 3
      %vm372 = vcmp.eq.s32.totalorder %v244, 3
      %vm373 = vcmp.eq.s32.totalorder %v245, 3
      %vm374 = vcmp.eq.s32.totalorder %v246, 3
      %vm375 = vcmp.eq.s32.totalorder %v247, 3
      %vm376 = vcmp.eq.s32.totalorder %v248, 3
      %vm377 = vcmp.eq.s32.totalorder %v233, 4
      %vm378 = vcmp.eq.s32.totalorder %v234, 4
      %vm379 = vcmp.eq.s32.totalorder %v235, 4
      %vm380 = vcmp.eq.s32.totalorder %v236, 4
      %vm381 = vcmp.eq.s32.totalorder %v237, 4
      %vm382 = vcmp.eq.s32.totalorder %v238, 4
      %vm383 = vcmp.eq.s32.totalorder %v239, 4
      %vm384 = vcmp.eq.s32.totalorder %v240, 4
      %vm385 = vcmp.eq.s32.totalorder %v241, 4
      %vm386 = vcmp.eq.s32.totalorder %v242, 4
      %vm387 = vcmp.eq.s32.totalorder %v243, 4
      %vm388 = vcmp.eq.s32.totalorder %v244, 4
      %vm389 = vcmp.eq.s32.totalorder %v245, 4
      %vm390 = vcmp.eq.s32.totalorder %v246, 4
      %vm391 = vcmp.eq.s32.totalorder %v247, 4
      %vm392 = vcmp.eq.s32.totalorder %v248, 4
      %v393 = vld [vmem:[%s1] sm:$0xff]
      %v394 = vld [vmem:[%s1 + $0x8] sm:$0x1]
      %v395 = vld [vmem:[%s203] sm:$0xff]
      %v396 = vld [vmem:[%s203 + $0x10] sm:$0xff]
      %v397 = vld [vmem:[%s203 + $0x20] sm:$0xff]
      %v398 = vld [vmem:[%s203 + $0x30] sm:$0xff]
      %v399 = vld [vmem:[%s203 + $0x40] sm:$0xff]
      %v400 = vld [vmem:[%s203 + $0x50] sm:$0xff]
      %v401 = vld [vmem:[%s203 + $0x60] sm:$0xff]
      %v402 = vld [vmem:[%s203 + $0x70] sm:$0xff]
      %v403 = vld [vmem:[%s203 + $0x80] sm:$0xff]
      %v404 = vld [vmem:[%s203 + $0x90] sm:$0xff]
      %v405 = vld [vmem:[%s203 + $0xa0] sm:$0xff]
      %v406 = vld [vmem:[%s203 + $0xb0] sm:$0xff]
      %v407 = vld [vmem:[%s203 + $0xc0] sm:$0xff]
      %v408 = vld [vmem:[%s203 + $0xd0] sm:$0xff]
      %v409 = vld [vmem:[%s203 + $0xe0] sm:$0xff]
      %v410 = vld [vmem:[%s203 + $0xf0] sm:$0xff]
      %v411 = vmul.f32 %v395, 0.17677669
      %v412 = vmul.f32 %v396, 0.17677669
      %v413 = vmul.f32 %v397, 0.17677669
      %v414 = vmul.f32 %v398, 0.17677669
      %v415 = vmul.f32 %v399, 0.17677669
      %v416 = vmul.f32 %v400, 0.17677669
      %v417 = vmul.f32 %v401, 0.17677669
      %v418 = vmul.f32 %v402, 0.17677669
      %v419 = vmul.f32 %v403, 0.17677669
      %v420 = vmul.f32 %v404, 0.17677669
      %v421 = vmul.f32 %v405, 0.17677669
      %v422 = vmul.f32 %v406, 0.17677669
      %v423 = vmul.f32 %v407, 0.17677669
      %v424 = vmul.f32 %v408, 0.17677669
      %v425 = vmul.f32 %v409, 0.17677669
      %v426 = vmul.f32 %v410, 0.17677669
      %v427 = vld [vmem:[%s203 + $0x8] sm:$0xff]
      %v428 = vld [vmem:[%s203 + $0x18] sm:$0xff]
      %v429 = vld [vmem:[%s203 + $0x28] sm:$0xff]
      %v430 = vld [vmem:[%s203 + $0x38] sm:$0xff]
      %v431 = vld [vmem:[%s203 + $0x48] sm:$0xff]
      %v432 = vld [vmem:[%s203 + $0x58] sm:$0xff]
      %v433 = vld [vmem:[%s203 + $0x68] sm:$0xff]
      %v434 = vld [vmem:[%s203 + $0x78] sm:$0xff]
      %v435 = vld [vmem:[%s203 + $0x88] sm:$0xff]
      %v436 = vld [vmem:[%s203 + $0x98] sm:$0xff]
      %v437 = vld [vmem:[%s203 + $0xa8] sm:$0xff]
      %v438 = vld [vmem:[%s203 + $0xb8] sm:$0xff]
      %v439 = vld [vmem:[%s203 + $0xc8] sm:$0xff]
      %v440 = vld [vmem:[%s203 + $0xd8] sm:$0xff]
      %v441 = vld [vmem:[%s203 + $0xe8] sm:$0xff]
      %v442 = vld [vmem:[%s203 + $0xf8] sm:$0xff]
      %vm443 = vcmask 261120
      %v445 = vsel %vm443, %v411, 0
      %v448 = vsel %vm443, %v412, 0
      %v451 = vsel %vm443, %v413, 0
      %v454 = vsel %vm443, %v414, 0
      %v457 = vsel %vm443, %v415, 0
      %v460 = vsel %vm443, %v416, 0
      %v463 = vsel %vm443, %v417, 0
      %v466 = vsel %vm443, %v418, 0
      %v469 = vsel %vm443, %v419, 0
      %v472 = vsel %vm443, %v420, 0
      %v475 = vsel %vm443, %v421, 0
      %v478 = vsel %vm443, %v422, 0
      %v481 = vsel %vm443, %v423, 0
      %v484 = vsel %vm443, %v424, 0
      %v487 = vsel %vm443, %v425, 0
      %v490 = vsel %vm443, %v426, 0
      %v493 = vsel %vm443, %v393, 0
      %v496 = vsel %vm443, %v394, 0
      %498 = vmatprep.subr.mxu0 0.0
      %499 = vmatpush1.xpose.msra.mxu0 0.0
      %500 = vmatprep.subr.mxu0 0.0
      %501 = vmatpush1.xpose.msra.mxu0 0.0
      %502 = vmatprep.subr.mxu0 0.0
      %503 = vmatpush1.xpose.msra.mxu0 0.0
      %504 = vmatprep.subr.mxu0 0.0
      %505 = vmatpush1.xpose.msra.mxu0 0.0
      %506 = vmatprep.subr.mxu0 0.0
      %507 = vmatpush1.xpose.msra.mxu0 0.0
      %508 = vmatprep.subr.mxu0 0.0
      %509 = vmatpush1.xpose.msra.mxu0 0.0
      %510 = vmatprep.subr.mxu0 0.0
      %511 = vmatpush1.xpose.msra.mxu0 0.0
      %512 = vmatprep.subr.mxu0 0.0
      %513 = vmatpush1.xpose.msra.mxu0 0.0
      %514 = vmatprep.subr.mxu0 0.0
      %515 = vmatpush1.xpose.msra.mxu0 0.0
      %516 = vmatprep.subr.mxu0 0.0
      %517 = vmatpush1.xpose.msra.mxu0 0.0
      %518 = vmatprep.subr.mxu0 0.0
      %519 = vmatpush1.xpose.msra.mxu0 0.0
      %520 = vmatprep.subr.mxu0 0.0
      %521 = vmatpush1.xpose.msra.mxu0 0.0
      %522 = vmatprep.subr.mxu0 0.0
      %523 = vmatpush1.xpose.msra.mxu0 0.0
      %524 = vmatprep.subr.mxu0 0.0
      %525 = vmatpush1.xpose.msra.mxu0 0.0
      %526 = vmatprep.subr.mxu0 0.0
      %527 = vmatpush1.xpose.msra.mxu0 %v496
      %528 = vmatprep.subr.mxu0 0.0
      %529 = vmatpush1.xpose.msra.mxu0 %v493
      %530 = vmatprep.subr.mxu0 0.0
      %531 = vmatpush2.xpose.msra.mxu0 0.0
      %532 = vmatprep.subr.mxu0 0.0
      %533 = vmatpush2.xpose.msra.mxu0 0.0
      %534 = vmatprep.subr.mxu0 0.0
      %535 = vmatpush2.xpose.msra.mxu0 0.0
      %536 = vmatprep.subr.mxu0 0.0
      %537 = vmatpush2.xpose.msra.mxu0 0.0
      %538 = vmatprep.subr.mxu0 0.0
      %539 = vmatpush2.xpose.msra.mxu0 0.0
      %540 = vmatprep.subr.mxu0 0.0
      %541 = vmatpush2.xpose.msra.mxu0 0.0
      %542 = vmatprep.subr.mxu0 0.0
      %543 = vmatpush2.xpose.msra.mxu0 0.0
      %544 = vmatprep.subr.mxu0 0.0
      %545 = vmatpush2.xpose.msra.mxu0 0.0
      %546 = vmatprep.subr.mxu0 0.0
      %547 = vmatpush2.xpose.msra.mxu0 0.0
      %548 = vmatprep.subr.mxu0 0.0
      %549 = vmatpush2.xpose.msra.mxu0 0.0
      %550 = vmatprep.subr.mxu0 0.0
      %551 = vmatpush2.xpose.msra.mxu0 0.0
      %552 = vmatprep.subr.mxu0 0.0
      %553 = vmatpush2.xpose.msra.mxu0 0.0
      %554 = vmatprep.subr.mxu0 0.0
      %555 = vmatpush2.xpose.msra.mxu0 0.0
      %556 = vmatprep.subr.mxu0 0.0
      %557 = vmatpush2.xpose.msra.mxu0 0.0
      %558 = vmatprep.subr.mxu0 0.0
      %559 = vmatpush2.xpose.msra.mxu0 0.0
      %560 = vmatprep.subr.mxu0 0.0
      %561 = vmatpush2.xpose.msra.mxu0 0.0
      %562 = vmatprep.mubr.f32.mxu0 0.0
      %563 = vmatmul.mubr.f32.gmra.mxu0 %v445
      %v564 = vpop.f32.mrf.mxu0
      %v565 = vadd.f32 0.0, %v564
      %v566 = vpop.f32.mrf.mxu0
      %567 = vmatprep.mubr.f32.mxu0 0.0
      %568 = vmatmul.mubr.f32.gmra.mxu0 %v448
      %v569 = vpop.f32.mrf.mxu0
      %v570 = vadd.f32 0.0, %v569
      %v571 = vpop.f32.mrf.mxu0
      %572 = vmatprep.mubr.f32.mxu0 0.0
      %573 = vmatmul.mubr.f32.gmra.mxu0 %v451
      %v574 = vpop.f32.mrf.mxu0
      %v575 = vadd.f32 0.0, %v574
      %v576 = vpop.f32.mrf.mxu0
      %577 = vmatprep.mubr.f32.mxu0 0.0
      %578 = vmatmul.mubr.f32.gmra.mxu0 %v454
      %v579 = vpop.f32.mrf.mxu0
      %v580 = vadd.f32 0.0, %v579
      %v581 = vpop.f32.mrf.mxu0
      %582 = vmatprep.mubr.f32.mxu0 0.0
      %583 = vmatmul.mubr.f32.gmra.mxu0 %v457
      %v584 = vpop.f32.mrf.mxu0
      %v585 = vadd.f32 0.0, %v584
      %v586 = vpop.f32.mrf.mxu0
      %587 = vmatprep.mubr.f32.mxu0 0.0
      %588 = vmatmul.mubr.f32.gmra.mxu0 %v460
      %v589 = vpop.f32.mrf.mxu0
      %v590 = vadd.f32 0.0, %v589
      %v591 = vpop.f32.mrf.mxu0
      %592 = vmatprep.mubr.f32.mxu0 0.0
      %593 = vmatmul.mubr.f32.gmra.mxu0 %v463
      %v594 = vpop.f32.mrf.mxu0
      %v595 = vadd.f32 0.0, %v594
      %v596 = vpop.f32.mrf.mxu0
      %597 = vmatprep.mubr.f32.mxu0 0.0
      %598 = vmatmul.mubr.f32.gmra.mxu0 %v466
      %v599 = vpop.f32.mrf.mxu0
      %v600 = vadd.f32 0.0, %v599
      %v601 = vpop.f32.mrf.mxu0
      %602 = vmatprep.mubr.f32.mxu0 0.0
      %603 = vmatmul.mubr.f32.gmra.mxu0 %v469
      %v604 = vpop.f32.mrf.mxu0
      %v605 = vadd.f32 0.0, %v604
      %v606 = vpop.f32.mrf.mxu0
      %607 = vmatprep.mubr.f32.mxu0 0.0
      %608 = vmatmul.mubr.f32.gmra.mxu0 %v472
      %v609 = vpop.f32.mrf.mxu0
      %v610 = vadd.f32 0.0, %v609
      %v611 = vpop.f32.mrf.mxu0
      %612 = vmatprep.mubr.f32.mxu0 0.0
      %613 = vmatmul.mubr.f32.gmra.mxu0 %v475
      %v614 = vpop.f32.mrf.mxu0
      %v615 = vadd.f32 0.0, %v614
      %v616 = vpop.f32.mrf.mxu0
      %617 = vmatprep.mubr.f32.mxu0 0.0
      %618 = vmatmul.mubr.f32.gmra.mxu0 %v478
      %v619 = vpop.f32.mrf.mxu0
      %v620 = vadd.f32 0.0, %v619
      %v621 = vpop.f32.mrf.mxu0
      %622 = vmatprep.mubr.f32.mxu0 0.0
      %623 = vmatmul.mubr.f32.gmra.mxu0 %v481
      %v624 = vpop.f32.mrf.mxu0
      %v625 = vadd.f32 0.0, %v624
      %v626 = vpop.f32.mrf.mxu0
      %627 = vmatprep.mubr.f32.mxu0 0.0
      %628 = vmatmul.mubr.f32.gmra.mxu0 %v484
      %v629 = vpop.f32.mrf.mxu0
      %v630 = vadd.f32 0.0, %v629
      %v631 = vpop.f32.mrf.mxu0
      %632 = vmatprep.mubr.f32.mxu0 0.0
      %633 = vmatmul.mubr.f32.gmra.mxu0 %v487
      %v634 = vpop.f32.mrf.mxu0
      %v635 = vadd.f32 0.0, %v634
      %v636 = vpop.f32.mrf.mxu0
      %637 = vmatprep.mubr.f32.mxu0 0.0
      %638 = vmatmul.mubr.f32.gmra.mxu0 %v490
      %v639 = vpop.f32.mrf.mxu0
      %v640 = vadd.f32 0.0, %v639
      %v641 = vpop.f32.mrf.mxu0
      %642 = vdwg.mxu0
      %644 = vset.pattern.permute.xlu0 0
      %645 = vperm.xlu0 %644, %v565
      %v646 = vpop.permute.xlu0 %645
      %649 = vset.pattern.permute.xlu0 0
      %650 = vperm.xlu0 %649, %v570
      %v651 = vpop.permute.xlu0 %650
      %654 = vset.pattern.permute.xlu0 0
      %655 = vperm.xlu0 %654, %v575
      %v656 = vpop.permute.xlu0 %655
      %659 = vset.pattern.permute.xlu0 0
      %660 = vperm.xlu0 %659, %v580
      %v661 = vpop.permute.xlu0 %660
      %664 = vset.pattern.permute.xlu0 0
      %665 = vperm.xlu0 %664, %v585
      %v666 = vpop.permute.xlu0 %665
      %669 = vset.pattern.permute.xlu0 0
      %670 = vperm.xlu0 %669, %v590
      %v671 = vpop.permute.xlu0 %670
      %674 = vset.pattern.permute.xlu0 0
      %675 = vperm.xlu0 %674, %v595
      %v676 = vpop.permute.xlu0 %675
      %679 = vset.pattern.permute.xlu0 0
      %680 = vperm.xlu0 %679, %v600
      %v681 = vpop.permute.xlu0 %680
      %684 = vset.pattern.permute.xlu0 0
      %685 = vperm.xlu0 %684, %v605
      %v686 = vpop.permute.xlu0 %685
      %689 = vset.pattern.permute.xlu0 0
      %690 = vperm.xlu0 %689, %v610
      %v691 = vpop.permute.xlu0 %690
      %694 = vset.pattern.permute.xlu0 0
      %695 = vperm.xlu0 %694, %v615
      %v696 = vpop.permute.xlu0 %695
      %699 = vset.pattern.permute.xlu0 0
      %700 = vperm.xlu0 %699, %v620
      %v701 = vpop.permute.xlu0 %700
      %704 = vset.pattern.permute.xlu0 0
      %705 = vperm.xlu0 %704, %v625
      %v706 = vpop.permute.xlu0 %705
      %709 = vset.pattern.permute.xlu0 0
      %710 = vperm.xlu0 %709, %v630
      %v711 = vpop.permute.xlu0 %710
      %714 = vset.pattern.permute.xlu0 0
      %715 = vperm.xlu0 %714, %v635
      %v716 = vpop.permute.xlu0 %715
      %719 = vset.pattern.permute.xlu0 0
      %720 = vperm.xlu0 %719, %v640
      %v721 = vpop.permute.xlu0 %720
      %v723 = vsel %vm249, %v646, 0.0
      %v724 = vsel %vm250, %v651, 0.0
      %v725 = vsel %vm251, %v656, 0.0
      %v726 = vsel %vm252, %v661, 0.0
      %v727 = vsel %vm253, %v666, 0.0
      %v728 = vsel %vm254, %v671, 0.0
      %v729 = vsel %vm255, %v676, 0.0
      %v730 = vsel %vm256, %v681, 0.0
      %v731 = vsel %vm257, %v686, 0.0
      %v732 = vsel %vm258, %v691, 0.0
      %v733 = vsel %vm259, %v696, 0.0
      %v734 = vsel %vm260, %v701, 0.0
      %v735 = vsel %vm261, %v706, 0.0
      %v736 = vsel %vm262, %v711, 0.0
      %v737 = vsel %vm263, %v716, 0.0
      %v738 = vsel %vm264, %v721, 0.0
      %755 = vrot.lane.b32.xlu0 %v395, 64
      %v756 = vpop.permute.xlu0 %755
      %757 = vrot.lane.b32.xlu0 %v396, 64
      %v758 = vpop.permute.xlu0 %757
      %759 = vrot.lane.b32.xlu0 %v397, 64
      %v760 = vpop.permute.xlu0 %759
      %761 = vrot.lane.b32.xlu0 %v398, 64
      %v762 = vpop.permute.xlu0 %761
      %763 = vrot.lane.b32.xlu0 %v399, 64
      %v764 = vpop.permute.xlu0 %763
      %765 = vrot.lane.b32.xlu0 %v400, 64
      %v766 = vpop.permute.xlu0 %765
      %767 = vrot.lane.b32.xlu0 %v401, 64
      %v768 = vpop.permute.xlu0 %767
      %769 = vrot.lane.b32.xlu0 %v402, 64
      %v770 = vpop.permute.xlu0 %769
      %771 = vrot.lane.b32.xlu0 %v403, 64
      %v772 = vpop.permute.xlu0 %771
      %773 = vrot.lane.b32.xlu0 %v404, 64
      %v774 = vpop.permute.xlu0 %773
      %775 = vrot.lane.b32.xlu0 %v405, 64
      %v776 = vpop.permute.xlu0 %775
      %777 = vrot.lane.b32.xlu0 %v406, 64
      %v778 = vpop.permute.xlu0 %777
      %779 = vrot.lane.b32.xlu0 %v407, 64
      %v780 = vpop.permute.xlu0 %779
      %781 = vrot.lane.b32.xlu0 %v408, 64
      %v782 = vpop.permute.xlu0 %781
      %783 = vrot.lane.b32.xlu0 %v409, 64
      %v784 = vpop.permute.xlu0 %783
      %785 = vrot.lane.b32.xlu0 %v410, 64
      %v786 = vpop.permute.xlu0 %785
      %v787 = vsel %vm443, %v756, 0
      %v789 = vsel %vm443, %v758, 0
      %v791 = vsel %vm443, %v760, 0
      %v793 = vsel %vm443, %v762, 0
      %v795 = vsel %vm443, %v764, 0
      %v797 = vsel %vm443, %v766, 0
      %v799 = vsel %vm443, %v768, 0
      %v801 = vsel %vm443, %v770, 0
      %v803 = vsel %vm443, %v772, 0
      %v805 = vsel %vm443, %v774, 0
      %v807 = vsel %vm443, %v776, 0
      %v809 = vsel %vm443, %v778, 0
      %v811 = vsel %vm443, %v780, 0
      %v813 = vsel %vm443, %v782, 0
      %v815 = vsel %vm443, %v784, 0
      %v817 = vsel %vm443, %v786, 0
      %819 = vmatprep.subr.mxu0 0.0
      %820 = vmatpush1.xpose.msra.mxu0 %v817
      %821 = vmatprep.subr.mxu0 0.0
      %822 = vmatpush1.xpose.msra.mxu0 %v815
      %823 = vmatprep.subr.mxu0 0.0
      %824 = vmatpush1.xpose.msra.mxu0 %v813
      %825 = vmatprep.subr.mxu0 0.0
      %826 = vmatpush1.xpose.msra.mxu0 %v811
      %827 = vmatprep.subr.mxu0 0.0
      %828 = vmatpush1.xpose.msra.mxu0 %v809
      %829 = vmatprep.subr.mxu0 0.0
      %830 = vmatpush1.xpose.msra.mxu0 %v807
      %831 = vmatprep.subr.mxu0 0.0
      %832 = vmatpush1.xpose.msra.mxu0 %v805
      %833 = vmatprep.subr.mxu0 0.0
      %834 = vmatpush1.xpose.msra.mxu0 %v803
      %835 = vmatprep.subr.mxu0 0.0
      %836 = vmatpush1.xpose.msra.mxu0 %v801
      %837 = vmatprep.subr.mxu0 0.0
      %838 = vmatpush1.xpose.msra.mxu0 %v799
      %839 = vmatprep.subr.mxu0 0.0
      %840 = vmatpush1.xpose.msra.mxu0 %v797
      %841 = vmatprep.subr.mxu0 0.0
      %842 = vmatpush1.xpose.msra.mxu0 %v795
      %843 = vmatprep.subr.mxu0 0.0
      %844 = vmatpush1.xpose.msra.mxu0 %v793
      %845 = vmatprep.subr.mxu0 0.0
      %846 = vmatpush1.xpose.msra.mxu0 %v791
      %847 = vmatprep.subr.mxu0 0.0
      %848 = vmatpush1.xpose.msra.mxu0 %v789
      %849 = vmatprep.subr.mxu0 0.0
      %850 = vmatpush1.xpose.msra.mxu0 %v787
      %851 = vmatprep.subr.mxu0 0.0
      %852 = vmatpush2.xpose.msra.mxu0 0.0
      %853 = vmatprep.subr.mxu0 0.0
      %854 = vmatpush2.xpose.msra.mxu0 0.0
      %855 = vmatprep.subr.mxu0 0.0
      %856 = vmatpush2.xpose.msra.mxu0 0.0
      %857 = vmatprep.subr.mxu0 0.0
      %858 = vmatpush2.xpose.msra.mxu0 0.0
      %859 = vmatprep.subr.mxu0 0.0
      %860 = vmatpush2.xpose.msra.mxu0 0.0
      %861 = vmatprep.subr.mxu0 0.0
      %862 = vmatpush2.xpose.msra.mxu0 0.0
      %863 = vmatprep.subr.mxu0 0.0
      %864 = vmatpush2.xpose.msra.mxu0 0.0
      %865 = vmatprep.subr.mxu0 0.0
      %866 = vmatpush2.xpose.msra.mxu0 0.0
      %867 = vmatprep.subr.mxu0 0.0
      %868 = vmatpush2.xpose.msra.mxu0 0.0
      %869 = vmatprep.subr.mxu0 0.0
      %870 = vmatpush2.xpose.msra.mxu0 0.0
      %871 = vmatprep.subr.mxu0 0.0
      %872 = vmatpush2.xpose.msra.mxu0 0.0
      %873 = vmatprep.subr.mxu0 0.0
      %874 = vmatpush2.xpose.msra.mxu0 0.0
      %875 = vmatprep.subr.mxu0 0.0
      %876 = vmatpush2.xpose.msra.mxu0 0.0
      %877 = vmatprep.subr.mxu0 0.0
      %878 = vmatpush2.xpose.msra.mxu0 0.0
      %879 = vmatprep.subr.mxu0 0.0
      %880 = vmatpush2.xpose.msra.mxu0 0.0
      %881 = vmatprep.subr.mxu0 0.0
      %882 = vmatpush2.xpose.msra.mxu0 0.0
      %883 = vmatprep.mubr.f32.mxu0 0.0
      %884 = vmatmul.mubr.f32.gmra.mxu0 %v445
      %v885 = vpop.f32.mrf.mxu0
      %v886 = vadd.f32 %v723, %v885
      %v887 = vpop.f32.mrf.mxu0
      %888 = vmatprep.mubr.f32.mxu0 0.0
      %889 = vmatmul.mubr.f32.gmra.mxu0 %v448
      %v890 = vpop.f32.mrf.mxu0
      %v891 = vadd.f32 %v724, %v890
      %v892 = vpop.f32.mrf.mxu0
      %893 = vmatprep.mubr.f32.mxu0 0.0
      %894 = vmatmul.mubr.f32.gmra.mxu0 %v451
      %v895 = vpop.f32.mrf.mxu0
      %v896 = vadd.f32 %v725, %v895
      %v897 = vpop.f32.mrf.mxu0
      %898 = vmatprep.mubr.f32.mxu0 0.0
      %899 = vmatmul.mubr.f32.gmra.mxu0 %v454
      %v900 = vpop.f32.mrf.mxu0
      %v901 = vadd.f32 %v726, %v900
      %v902 = vpop.f32.mrf.mxu0
      %903 = vmatprep.mubr.f32.mxu0 0.0
      %904 = vmatmul.mubr.f32.gmra.mxu0 %v457
      %v905 = vpop.f32.mrf.mxu0
      %v906 = vadd.f32 %v727, %v905
      %v907 = vpop.f32.mrf.mxu0
      %908 = vmatprep.mubr.f32.mxu0 0.0
      %909 = vmatmul.mubr.f32.gmra.mxu0 %v460
      %v910 = vpop.f32.mrf.mxu0
      %v911 = vadd.f32 %v728, %v910
      %v912 = vpop.f32.mrf.mxu0
      %913 = vmatprep.mubr.f32.mxu0 0.0
      %914 = vmatmul.mubr.f32.gmra.mxu0 %v463
      %v915 = vpop.f32.mrf.mxu0
      %v916 = vadd.f32 %v729, %v915
      %v917 = vpop.f32.mrf.mxu0
      %918 = vmatprep.mubr.f32.mxu0 0.0
      %919 = vmatmul.mubr.f32.gmra.mxu0 %v466
      %v920 = vpop.f32.mrf.mxu0
      %v921 = vadd.f32 %v730, %v920
      %v922 = vpop.f32.mrf.mxu0
      %923 = vmatprep.mubr.f32.mxu0 0.0
      %924 = vmatmul.mubr.f32.gmra.mxu0 %v469
      %v925 = vpop.f32.mrf.mxu0
      %v926 = vadd.f32 %v731, %v925
      %v927 = vpop.f32.mrf.mxu0
      %928 = vmatprep.mubr.f32.mxu0 0.0
      %929 = vmatmul.mubr.f32.gmra.mxu0 %v472
      %v930 = vpop.f32.mrf.mxu0
      %v931 = vadd.f32 %v732, %v930
      %v932 = vpop.f32.mrf.mxu0
      %933 = vmatprep.mubr.f32.mxu0 0.0
      %934 = vmatmul.mubr.f32.gmra.mxu0 %v475
      %v935 = vpop.f32.mrf.mxu0
      %v936 = vadd.f32 %v733, %v935
      %v937 = vpop.f32.mrf.mxu0
      %938 = vmatprep.mubr.f32.mxu0 0.0
      %939 = vmatmul.mubr.f32.gmra.mxu0 %v478
      %v940 = vpop.f32.mrf.mxu0
      %v941 = vadd.f32 %v734, %v940
      %v942 = vpop.f32.mrf.mxu0
      %943 = vmatprep.mubr.f32.mxu0 0.0
      %944 = vmatmul.mubr.f32.gmra.mxu0 %v481
      %v945 = vpop.f32.mrf.mxu0
      %v946 = vadd.f32 %v735, %v945
      %v947 = vpop.f32.mrf.mxu0
      %948 = vmatprep.mubr.f32.mxu0 0.0
      %949 = vmatmul.mubr.f32.gmra.mxu0 %v484
      %v950 = vpop.f32.mrf.mxu0
      %v951 = vadd.f32 %v736, %v950
      %v952 = vpop.f32.mrf.mxu0
      %953 = vmatprep.mubr.f32.mxu0 0.0
      %954 = vmatmul.mubr.f32.gmra.mxu0 %v487
      %v955 = vpop.f32.mrf.mxu0
      %v956 = vadd.f32 %v737, %v955
      %v957 = vpop.f32.mrf.mxu0
      %958 = vmatprep.mubr.f32.mxu0 0.0
      %959 = vmatmul.mubr.f32.gmra.mxu0 %v490
      %v960 = vpop.f32.mrf.mxu0
      %v961 = vadd.f32 %v738, %v960
      %v962 = vpop.f32.mrf.mxu0
      %963 = vdwg.mxu0
      %964 = vset.pattern.permute.xlu0 1
      %965 = vperm.xlu0 %964, %v565
      %v966 = vpop.permute.xlu0 %965
      %968 = vset.pattern.permute.xlu0 1
      %969 = vperm.xlu0 %968, %v570
      %v970 = vpop.permute.xlu0 %969
      %972 = vset.pattern.permute.xlu0 1
      %973 = vperm.xlu0 %972, %v575
      %v974 = vpop.permute.xlu0 %973
      %976 = vset.pattern.permute.xlu0 1
      %977 = vperm.xlu0 %976, %v580
      %v978 = vpop.permute.xlu0 %977
      %980 = vset.pattern.permute.xlu0 1
      %981 = vperm.xlu0 %980, %v585
      %v982 = vpop.permute.xlu0 %981
      %984 = vset.pattern.permute.xlu0 1
      %985 = vperm.xlu0 %984, %v590
      %v986 = vpop.permute.xlu0 %985
      %988 = vset.pattern.permute.xlu0 1
      %989 = vperm.xlu0 %988, %v595
      %v990 = vpop.permute.xlu0 %989
      %992 = vset.pattern.permute.xlu0 1
      %993 = vperm.xlu0 %992, %v600
      %v994 = vpop.permute.xlu0 %993
      %996 = vset.pattern.permute.xlu0 1
      %997 = vperm.xlu0 %996, %v605
      %v998 = vpop.permute.xlu0 %997
      %1000 = vset.pattern.permute.xlu0 1
      %1001 = vperm.xlu0 %1000, %v610
      %v1002 = vpop.permute.xlu0 %1001
      %1004 = vset.pattern.permute.xlu0 1
      %1005 = vperm.xlu0 %1004, %v615
      %v1006 = vpop.permute.xlu0 %1005
      %1008 = vset.pattern.permute.xlu0 1
      %1009 = vperm.xlu0 %1008, %v620
      %v1010 = vpop.permute.xlu0 %1009
      %1012 = vset.pattern.permute.xlu0 1
      %1013 = vperm.xlu0 %1012, %v625
      %v1014 = vpop.permute.xlu0 %1013
      %1016 = vset.pattern.permute.xlu0 1
      %1017 = vperm.xlu0 %1016, %v630
      %v1018 = vpop.permute.xlu0 %1017
      %1020 = vset.pattern.permute.xlu0 1
      %1021 = vperm.xlu0 %1020, %v635
      %v1022 = vpop.permute.xlu0 %1021
      %1024 = vset.pattern.permute.xlu0 1
      %1025 = vperm.xlu0 %1024, %v640
      %v1026 = vpop.permute.xlu0 %1025
      %v1028 = vsel %vm265, %v966, 0.0
      %v1029 = vsel %vm266, %v970, 0.0
      %v1030 = vsel %vm267, %v974, 0.0
      %v1031 = vsel %vm268, %v978, 0.0
      %v1032 = vsel %vm269, %v982, 0.0
      %v1033 = vsel %vm270, %v986, 0.0
      %v1034 = vsel %vm271, %v990, 0.0
      %v1035 = vsel %vm272, %v994, 0.0
      %v1036 = vsel %vm273, %v998, 0.0
      %v1037 = vsel %vm274, %v1002, 0.0
      %v1038 = vsel %vm275, %v1006, 0.0
      %v1039 = vsel %vm276, %v1010, 0.0
      %v1040 = vsel %vm277, %v1014, 0.0
      %v1041 = vsel %vm278, %v1018, 0.0
      %v1042 = vsel %vm279, %v1022, 0.0
      %v1043 = vsel %vm280, %v1026, 0.0
      %v1044 = vadd.f32 %v886, %v1028
      %v1045 = vadd.f32 %v891, %v1029
      %v1046 = vadd.f32 %v896, %v1030
      %v1047 = vadd.f32 %v901, %v1031
      %v1048 = vadd.f32 %v906, %v1032
      %v1049 = vadd.f32 %v911, %v1033
      %v1050 = vadd.f32 %v916, %v1034
      %v1051 = vadd.f32 %v921, %v1035
      %v1052 = vadd.f32 %v926, %v1036
      %v1053 = vadd.f32 %v931, %v1037
      %v1054 = vadd.f32 %v936, %v1038
      %v1055 = vadd.f32 %v941, %v1039
      %v1056 = vadd.f32 %v946, %v1040
      %v1057 = vadd.f32 %v951, %v1041
      %v1058 = vadd.f32 %v956, %v1042
      %v1059 = vadd.f32 %v961, %v1043
      %1060 = vset.pattern.permute.xlu0 2
      %1061 = vperm.xlu0 %1060, %v565
      %v1062 = vpop.permute.xlu0 %1061
      %1064 = vset.pattern.permute.xlu0 2
      %1065 = vperm.xlu0 %1064, %v570
      %v1066 = vpop.permute.xlu0 %1065
      %1068 = vset.pattern.permute.xlu0 2
      %1069 = vperm.xlu0 %1068, %v575
      %v1070 = vpop.permute.xlu0 %1069
      %1072 = vset.pattern.permute.xlu0 2
      %1073 = vperm.xlu0 %1072, %v580
      %v1074 = vpop.permute.xlu0 %1073
      %1076 = vset.pattern.permute.xlu0 2
      %1077 = vperm.xlu0 %1076, %v585
      %v1078 = vpop.permute.xlu0 %1077
      %1080 = vset.pattern.permute.xlu0 2
      %1081 = vperm.xlu0 %1080, %v590
      %v1082 = vpop.permute.xlu0 %1081
      %1084 = vset.pattern.permute.xlu0 2
      %1085 = vperm.xlu0 %1084, %v595
      %v1086 = vpop.permute.xlu0 %1085
      %1088 = vset.pattern.permute.xlu0 2
      %1089 = vperm.xlu0 %1088, %v600
      %v1090 = vpop.permute.xlu0 %1089
      %1092 = vset.pattern.permute.xlu0 2
      %1093 = vperm.xlu0 %1092, %v605
      %v1094 = vpop.permute.xlu0 %1093
      %1096 = vset.pattern.permute.xlu0 2
      %1097 = vperm.xlu0 %1096, %v610
      %v1098 = vpop.permute.xlu0 %1097
      %1100 = vset.pattern.permute.xlu0 2
      %1101 = vperm.xlu0 %1100, %v615
      %v1102 = vpop.permute.xlu0 %1101
      %1104 = vset.pattern.permute.xlu0 2
      %1105 = vperm.xlu0 %1104, %v620
      %v1106 = vpop.permute.xlu0 %1105
      %1108 = vset.pattern.permute.xlu0 2
      %1109 = vperm.xlu0 %1108, %v625
      %v1110 = vpop.permute.xlu0 %1109
      %1112 = vset.pattern.permute.xlu0 2
      %1113 = vperm.xlu0 %1112, %v630
      %v1114 = vpop.permute.xlu0 %1113
      %1116 = vset.pattern.permute.xlu0 2
      %1117 = vperm.xlu0 %1116, %v635
      %v1118 = vpop.permute.xlu0 %1117
      %1120 = vset.pattern.permute.xlu0 2
      %1121 = vperm.xlu0 %1120, %v640
      %v1122 = vpop.permute.xlu0 %1121
      %v1124 = vsel %vm281, %v1062, 0.0
      %v1125 = vsel %vm282, %v1066, 0.0
      %v1126 = vsel %vm283, %v1070, 0.0
      %v1127 = vsel %vm284, %v1074, 0.0
      %v1128 = vsel %vm285, %v1078, 0.0
      %v1129 = vsel %vm286, %v1082, 0.0
      %v1130 = vsel %vm287, %v1086, 0.0
      %v1131 = vsel %vm288, %v1090, 0.0
      %v1132 = vsel %vm289, %v1094, 0.0
      %v1133 = vsel %vm290, %v1098, 0.0
      %v1134 = vsel %vm291, %v1102, 0.0
      %v1135 = vsel %vm292, %v1106, 0.0
      %v1136 = vsel %vm293, %v1110, 0.0
      %v1137 = vsel %vm294, %v1114, 0.0
      %v1138 = vsel %vm295, %v1118, 0.0
      %v1139 = vsel %vm296, %v1122, 0.0
      %v1140 = vadd.f32 %v1044, %v1124
      %v1141 = vadd.f32 %v1045, %v1125
      %v1142 = vadd.f32 %v1046, %v1126
      %v1143 = vadd.f32 %v1047, %v1127
      %v1144 = vadd.f32 %v1048, %v1128
      %v1145 = vadd.f32 %v1049, %v1129
      %v1146 = vadd.f32 %v1050, %v1130
      %v1147 = vadd.f32 %v1051, %v1131
      %v1148 = vadd.f32 %v1052, %v1132
      %v1149 = vadd.f32 %v1053, %v1133
      %v1150 = vadd.f32 %v1054, %v1134
      %v1151 = vadd.f32 %v1055, %v1135
      %v1152 = vadd.f32 %v1056, %v1136
      %v1153 = vadd.f32 %v1057, %v1137
      %v1154 = vadd.f32 %v1058, %v1138
      %v1155 = vadd.f32 %v1059, %v1139
      %1156 = vset.pattern.permute.xlu0 3
      %1157 = vperm.xlu0 %1156, %v565
      %v1158 = vpop.permute.xlu0 %1157
      %1160 = vset.pattern.permute.xlu0 3
      %1161 = vperm.xlu0 %1160, %v570
      %v1162 = vpop.permute.xlu0 %1161
      %1164 = vset.pattern.permute.xlu0 3
      %1165 = vperm.xlu0 %1164, %v575
      %v1166 = vpop.permute.xlu0 %1165
      %1168 = vset.pattern.permute.xlu0 3
      %1169 = vperm.xlu0 %1168, %v580
      %v1170 = vpop.permute.xlu0 %1169
      %1172 = vset.pattern.permute.xlu0 3
      %1173 = vperm.xlu0 %1172, %v585
      %v1174 = vpop.permute.xlu0 %1173
      %1176 = vset.pattern.permute.xlu0 3
      %1177 = vperm.xlu0 %1176, %v590
      %v1178 = vpop.permute.xlu0 %1177
      %1180 = vset.pattern.permute.xlu0 3
      %1181 = vperm.xlu0 %1180, %v595
      %v1182 = vpop.permute.xlu0 %1181
      %1184 = vset.pattern.permute.xlu0 3
      %1185 = vperm.xlu0 %1184, %v600
      %v1186 = vpop.permute.xlu0 %1185
      %1188 = vset.pattern.permute.xlu0 3
      %1189 = vperm.xlu0 %1188, %v605
      %v1190 = vpop.permute.xlu0 %1189
      %1192 = vset.pattern.permute.xlu0 3
      %1193 = vperm.xlu0 %1192, %v610
      %v1194 = vpop.permute.xlu0 %1193
      %1196 = vset.pattern.permute.xlu0 3
      %1197 = vperm.xlu0 %1196, %v615
      %v1198 = vpop.permute.xlu0 %1197
      %1200 = vset.pattern.permute.xlu0 3
      %1201 = vperm.xlu0 %1200, %v620
      %v1202 = vpop.permute.xlu0 %1201
      %1204 = vset.pattern.permute.xlu0 3
      %1205 = vperm.xlu0 %1204, %v625
      %v1206 = vpop.permute.xlu0 %1205
      %1208 = vset.pattern.permute.xlu0 3
      %1209 = vperm.xlu0 %1208, %v630
      %v1210 = vpop.permute.xlu0 %1209
      %1212 = vset.pattern.permute.xlu0 3
      %1213 = vperm.xlu0 %1212, %v635
      %v1214 = vpop.permute.xlu0 %1213
      %1216 = vset.pattern.permute.xlu0 3
      %1217 = vperm.xlu0 %1216, %v640
      %v1218 = vpop.permute.xlu0 %1217
      %v1220 = vsel %vm297, %v1158, 0.0
      %v1221 = vsel %vm298, %v1162, 0.0
      %v1222 = vsel %vm299, %v1166, 0.0
      %v1223 = vsel %vm300, %v1170, 0.0
      %v1224 = vsel %vm301, %v1174, 0.0
      %v1225 = vsel %vm302, %v1178, 0.0
      %v1226 = vsel %vm303, %v1182, 0.0
      %v1227 = vsel %vm304, %v1186, 0.0
      %v1228 = vsel %vm305, %v1190, 0.0
      %v1229 = vsel %vm306, %v1194, 0.0
      %v1230 = vsel %vm307, %v1198, 0.0
      %v1231 = vsel %vm308, %v1202, 0.0
      %v1232 = vsel %vm309, %v1206, 0.0
      %v1233 = vsel %vm310, %v1210, 0.0
      %v1234 = vsel %vm311, %v1214, 0.0
      %v1235 = vsel %vm312, %v1218, 0.0
      %v1236 = vadd.f32 %v1140, %v1220
      %v1237 = vadd.f32 %v1141, %v1221
      %v1238 = vadd.f32 %v1142, %v1222
      %v1239 = vadd.f32 %v1143, %v1223
      %v1240 = vadd.f32 %v1144, %v1224
      %v1241 = vadd.f32 %v1145, %v1225
      %v1242 = vadd.f32 %v1146, %v1226
      %v1243 = vadd.f32 %v1147, %v1227
      %v1244 = vadd.f32 %v1148, %v1228
      %v1245 = vadd.f32 %v1149, %v1229
      %v1246 = vadd.f32 %v1150, %v1230
      %v1247 = vadd.f32 %v1151, %v1231
      %v1248 = vadd.f32 %v1152, %v1232
      %v1249 = vadd.f32 %v1153, %v1233
      %v1250 = vadd.f32 %v1154, %v1234
      %v1251 = vadd.f32 %v1155, %v1235
      %1252 = vset.pattern.permute.xlu0 4
      %1253 = vperm.xlu0 %1252, %v565
      %v1254 = vpop.permute.xlu0 %1253
      %1256 = vset.pattern.permute.xlu0 4
      %1257 = vperm.xlu0 %1256, %v570
      %v1258 = vpop.permute.xlu0 %1257
      %1260 = vset.pattern.permute.xlu0 4
      %1261 = vperm.xlu0 %1260, %v575
      %v1262 = vpop.permute.xlu0 %1261
      %1264 = vset.pattern.permute.xlu0 4
      %1265 = vperm.xlu0 %1264, %v580
      %v1266 = vpop.permute.xlu0 %1265
      %1268 = vset.pattern.permute.xlu0 4
      %1269 = vperm.xlu0 %1268, %v585
      %v1270 = vpop.permute.xlu0 %1269
      %1272 = vset.pattern.permute.xlu0 4
      %1273 = vperm.xlu0 %1272, %v590
      %v1274 = vpop.permute.xlu0 %1273
      %1276 = vset.pattern.permute.xlu0 4
      %1277 = vperm.xlu0 %1276, %v595
      %v1278 = vpop.permute.xlu0 %1277
      %1280 = vset.pattern.permute.xlu0 4
      %1281 = vperm.xlu0 %1280, %v600
      %v1282 = vpop.permute.xlu0 %1281
      %1284 = vset.pattern.permute.xlu0 4
      %1285 = vperm.xlu0 %1284, %v605
      %v1286 = vpop.permute.xlu0 %1285
      %1288 = vset.pattern.permute.xlu0 4
      %1289 = vperm.xlu0 %1288, %v610
      %v1290 = vpop.permute.xlu0 %1289
      %1292 = vset.pattern.permute.xlu0 4
      %1293 = vperm.xlu0 %1292, %v615
      %v1294 = vpop.permute.xlu0 %1293
      %1296 = vset.pattern.permute.xlu0 4
      %1297 = vperm.xlu0 %1296, %v620
      %v1298 = vpop.permute.xlu0 %1297
      %1300 = vset.pattern.permute.xlu0 4
      %1301 = vperm.xlu0 %1300, %v625
      %v1302 = vpop.permute.xlu0 %1301
      %1304 = vset.pattern.permute.xlu0 4
      %1305 = vperm.xlu0 %1304, %v630
      %v1306 = vpop.permute.xlu0 %1305
      %1308 = vset.pattern.permute.xlu0 4
      %1309 = vperm.xlu0 %1308, %v635
      %v1310 = vpop.permute.xlu0 %1309
      %1312 = vset.pattern.permute.xlu0 4
      %1313 = vperm.xlu0 %1312, %v640
      %v1314 = vpop.permute.xlu0 %1313
      %v1316 = vsel %vm313, %v1254, 0.0
      %v1317 = vsel %vm314, %v1258, 0.0
      %v1318 = vsel %vm315, %v1262, 0.0
      %v1319 = vsel %vm316, %v1266, 0.0
      %v1320 = vsel %vm317, %v1270, 0.0
      %v1321 = vsel %vm318, %v1274, 0.0
      %v1322 = vsel %vm319, %v1278, 0.0
      %v1323 = vsel %vm320, %v1282, 0.0
      %v1324 = vsel %vm321, %v1286, 0.0
      %v1325 = vsel %vm322, %v1290, 0.0
      %v1326 = vsel %vm323, %v1294, 0.0
      %v1327 = vsel %vm324, %v1298, 0.0
      %v1328 = vsel %vm325, %v1302, 0.0
      %v1329 = vsel %vm326, %v1306, 0.0
      %v1330 = vsel %vm327, %v1310, 0.0
      %v1331 = vsel %vm328, %v1314, 0.0
      %v1332 = vadd.f32 %v1236, %v1316
      %v1333 = vadd.f32 %v1237, %v1317
      %v1334 = vadd.f32 %v1238, %v1318
      %v1335 = vadd.f32 %v1239, %v1319
      %v1336 = vadd.f32 %v1240, %v1320
      %v1337 = vadd.f32 %v1241, %v1321
      %v1338 = vadd.f32 %v1242, %v1322
      %v1339 = vadd.f32 %v1243, %v1323
      %v1340 = vadd.f32 %v1244, %v1324
      %v1341 = vadd.f32 %v1245, %v1325
      %v1342 = vadd.f32 %v1246, %v1326
      %v1343 = vadd.f32 %v1247, %v1327
      %v1344 = vadd.f32 %v1248, %v1328
      %v1345 = vadd.f32 %v1249, %v1329
      %v1346 = vadd.f32 %v1250, %v1330
      %v1347 = vadd.f32 %v1251, %v1331
      %1348 = vset.pattern.permute.xlu0 5
      %1349 = vperm.xlu0 %1348, %v565
      %v1350 = vpop.permute.xlu0 %1349
      %1352 = vset.pattern.permute.xlu0 5
      %1353 = vperm.xlu0 %1352, %v570
      %v1354 = vpop.permute.xlu0 %1353
      %1356 = vset.pattern.permute.xlu0 5
      %1357 = vperm.xlu0 %1356, %v575
      %v1358 = vpop.permute.xlu0 %1357
      %1360 = vset.pattern.permute.xlu0 5
      %1361 = vperm.xlu0 %1360, %v580
      %v1362 = vpop.permute.xlu0 %1361
      %1364 = vset.pattern.permute.xlu0 5
      %1365 = vperm.xlu0 %1364, %v585
      %v1366 = vpop.permute.xlu0 %1365
      %1368 = vset.pattern.permute.xlu0 5
      %1369 = vperm.xlu0 %1368, %v590
      %v1370 = vpop.permute.xlu0 %1369
      %1372 = vset.pattern.permute.xlu0 5
      %1373 = vperm.xlu0 %1372, %v595
      %v1374 = vpop.permute.xlu0 %1373
      %1376 = vset.pattern.permute.xlu0 5
      %1377 = vperm.xlu0 %1376, %v600
      %v1378 = vpop.permute.xlu0 %1377
      %1380 = vset.pattern.permute.xlu0 5
      %1381 = vperm.xlu0 %1380, %v605
      %v1382 = vpop.permute.xlu0 %1381
      %1384 = vset.pattern.permute.xlu0 5
      %1385 = vperm.xlu0 %1384, %v610
      %v1386 = vpop.permute.xlu0 %1385
      %1388 = vset.pattern.permute.xlu0 5
      %1389 = vperm.xlu0 %1388, %v615
      %v1390 = vpop.permute.xlu0 %1389
      %1392 = vset.pattern.permute.xlu0 5
      %1393 = vperm.xlu0 %1392, %v620
      %v1394 = vpop.permute.xlu0 %1393
      %1396 = vset.pattern.permute.xlu0 5
      %1397 = vperm.xlu0 %1396, %v625
      %v1398 = vpop.permute.xlu0 %1397
      %1400 = vset.pattern.permute.xlu0 5
      %1401 = vperm.xlu0 %1400, %v630
      %v1402 = vpop.permute.xlu0 %1401
      %1404 = vset.pattern.permute.xlu0 5
      %1405 = vperm.xlu0 %1404, %v635
      %v1406 = vpop.permute.xlu0 %1405
      %1408 = vset.pattern.permute.xlu0 5
      %1409 = vperm.xlu0 %1408, %v640
      %v1410 = vpop.permute.xlu0 %1409
      %v1412 = vsel %vm329, %v1350, 0.0
      %v1413 = vsel %vm330, %v1354, 0.0
      %v1414 = vsel %vm331, %v1358, 0.0
      %v1415 = vsel %vm332, %v1362, 0.0
      %v1416 = vsel %vm333, %v1366, 0.0
      %v1417 = vsel %vm334, %v1370, 0.0
      %v1418 = vsel %vm335, %v1374, 0.0
      %v1419 = vsel %vm336, %v1378, 0.0
      %v1420 = vsel %vm337, %v1382, 0.0
      %v1421 = vsel %vm338, %v1386, 0.0
      %v1422 = vsel %vm339, %v1390, 0.0
      %v1423 = vsel %vm340, %v1394, 0.0
      %v1424 = vsel %vm341, %v1398, 0.0
      %v1425 = vsel %vm342, %v1402, 0.0
      %v1426 = vsel %vm343, %v1406, 0.0
      %v1427 = vsel %vm344, %v1410, 0.0
      %v1428 = vadd.f32 %v1332, %v1412
      %v1429 = vadd.f32 %v1333, %v1413
      %v1430 = vadd.f32 %v1334, %v1414
      %v1431 = vadd.f32 %v1335, %v1415
      %v1432 = vadd.f32 %v1336, %v1416
      %v1433 = vadd.f32 %v1337, %v1417
      %v1434 = vadd.f32 %v1338, %v1418
      %v1435 = vadd.f32 %v1339, %v1419
      %v1436 = vadd.f32 %v1340, %v1420
      %v1437 = vadd.f32 %v1341, %v1421
      %v1438 = vadd.f32 %v1342, %v1422
      %v1439 = vadd.f32 %v1343, %v1423
      %v1440 = vadd.f32 %v1344, %v1424
      %v1441 = vadd.f32 %v1345, %v1425
      %v1442 = vadd.f32 %v1346, %v1426
      %v1443 = vadd.f32 %v1347, %v1427
      %1444 = vset.pattern.permute.xlu0 6
      %1445 = vperm.xlu0 %1444, %v565
      %v1446 = vpop.permute.xlu0 %1445
      %1448 = vset.pattern.permute.xlu0 6
      %1449 = vperm.xlu0 %1448, %v570
      %v1450 = vpop.permute.xlu0 %1449
      %1452 = vset.pattern.permute.xlu0 6
      %1453 = vperm.xlu0 %1452, %v575
      %v1454 = vpop.permute.xlu0 %1453
      %1456 = vset.pattern.permute.xlu0 6
      %1457 = vperm.xlu0 %1456, %v580
      %v1458 = vpop.permute.xlu0 %1457
      %1460 = vset.pattern.permute.xlu0 6
      %1461 = vperm.xlu0 %1460, %v585
      %v1462 = vpop.permute.xlu0 %1461
      %1464 = vset.pattern.permute.xlu0 6
      %1465 = vperm.xlu0 %1464, %v590
      %v1466 = vpop.permute.xlu0 %1465
      %1468 = vset.pattern.permute.xlu0 6
      %1469 = vperm.xlu0 %1468, %v595
      %v1470 = vpop.permute.xlu0 %1469
      %1472 = vset.pattern.permute.xlu0 6
      %1473 = vperm.xlu0 %1472, %v600
      %v1474 = vpop.permute.xlu0 %1473
      %1476 = vset.pattern.permute.xlu0 6
      %1477 = vperm.xlu0 %1476, %v605
      %v1478 = vpop.permute.xlu0 %1477
      %1480 = vset.pattern.permute.xlu0 6
      %1481 = vperm.xlu0 %1480, %v610
      %v1482 = vpop.permute.xlu0 %1481
      %1484 = vset.pattern.permute.xlu0 6
      %1485 = vperm.xlu0 %1484, %v615
      %v1486 = vpop.permute.xlu0 %1485
      %1488 = vset.pattern.permute.xlu0 6
      %1489 = vperm.xlu0 %1488, %v620
      %v1490 = vpop.permute.xlu0 %1489
      %1492 = vset.pattern.permute.xlu0 6
      %1493 = vperm.xlu0 %1492, %v625
      %v1494 = vpop.permute.xlu0 %1493
      %1496 = vset.pattern.permute.xlu0 6
      %1497 = vperm.xlu0 %1496, %v630
      %v1498 = vpop.permute.xlu0 %1497
      %1500 = vset.pattern.permute.xlu0 6
      %1501 = vperm.xlu0 %1500, %v635
      %v1502 = vpop.permute.xlu0 %1501
      %1504 = vset.pattern.permute.xlu0 6
      %1505 = vperm.xlu0 %1504, %v640
      %v1506 = vpop.permute.xlu0 %1505
      %v1508 = vsel %vm345, %v1446, 0.0
      %v1509 = vsel %vm346, %v1450, 0.0
      %v1510 = vsel %vm347, %v1454, 0.0
      %v1511 = vsel %vm348, %v1458, 0.0
      %v1512 = vsel %vm349, %v1462, 0.0
      %v1513 = vsel %vm350, %v1466, 0.0
      %v1514 = vsel %vm351, %v1470, 0.0
      %v1515 = vsel %vm352, %v1474, 0.0
      %v1516 = vsel %vm353, %v1478, 0.0
      %v1517 = vsel %vm354, %v1482, 0.0
      %v1518 = vsel %vm355, %v1486, 0.0
      %v1519 = vsel %vm356, %v1490, 0.0
      %v1520 = vsel %vm357, %v1494, 0.0
      %v1521 = vsel %vm358, %v1498, 0.0
      %v1522 = vsel %vm359, %v1502, 0.0
      %v1523 = vsel %vm360, %v1506, 0.0
      %v1524 = vadd.f32 %v1428, %v1508
      %v1525 = vadd.f32 %v1429, %v1509
      %v1526 = vadd.f32 %v1430, %v1510
      %v1527 = vadd.f32 %v1431, %v1511
      %v1528 = vadd.f32 %v1432, %v1512
      %v1529 = vadd.f32 %v1433, %v1513
      %v1530 = vadd.f32 %v1434, %v1514
      %v1531 = vadd.f32 %v1435, %v1515
      %v1532 = vadd.f32 %v1436, %v1516
      %v1533 = vadd.f32 %v1437, %v1517
      %v1534 = vadd.f32 %v1438, %v1518
      %v1535 = vadd.f32 %v1439, %v1519
      %v1536 = vadd.f32 %v1440, %v1520
      %v1537 = vadd.f32 %v1441, %v1521
      %v1538 = vadd.f32 %v1442, %v1522
      %v1539 = vadd.f32 %v1443, %v1523
      %1540 = vset.pattern.permute.xlu0 7
      %1541 = vperm.xlu0 %1540, %v565
      %v1542 = vpop.permute.xlu0 %1541
      %1544 = vset.pattern.permute.xlu0 7
      %1545 = vperm.xlu0 %1544, %v570
      %v1546 = vpop.permute.xlu0 %1545
      %1548 = vset.pattern.permute.xlu0 7
      %1549 = vperm.xlu0 %1548, %v575
      %v1550 = vpop.permute.xlu0 %1549
      %1552 = vset.pattern.permute.xlu0 7
      %1553 = vperm.xlu0 %1552, %v580
      %v1554 = vpop.permute.xlu0 %1553
      %1556 = vset.pattern.permute.xlu0 7
      %1557 = vperm.xlu0 %1556, %v585
      %v1558 = vpop.permute.xlu0 %1557
      %1560 = vset.pattern.permute.xlu0 7
      %1561 = vperm.xlu0 %1560, %v590
      %v1562 = vpop.permute.xlu0 %1561
      %1564 = vset.pattern.permute.xlu0 7
      %1565 = vperm.xlu0 %1564, %v595
      %v1566 = vpop.permute.xlu0 %1565
      %1568 = vset.pattern.permute.xlu0 7
      %1569 = vperm.xlu0 %1568, %v600
      %v1570 = vpop.permute.xlu0 %1569
      %1572 = vset.pattern.permute.xlu0 7
      %1573 = vperm.xlu0 %1572, %v605
      %v1574 = vpop.permute.xlu0 %1573
      %1576 = vset.pattern.permute.xlu0 7
      %1577 = vperm.xlu0 %1576, %v610
      %v1578 = vpop.permute.xlu0 %1577
      %1580 = vset.pattern.permute.xlu0 7
      %1581 = vperm.xlu0 %1580, %v615
      %v1582 = vpop.permute.xlu0 %1581
      %1584 = vset.pattern.permute.xlu0 7
      %1585 = vperm.xlu0 %1584, %v620
      %v1586 = vpop.permute.xlu0 %1585
      %1588 = vset.pattern.permute.xlu0 7
      %1589 = vperm.xlu0 %1588, %v625
      %v1590 = vpop.permute.xlu0 %1589
      %1592 = vset.pattern.permute.xlu0 7
      %1593 = vperm.xlu0 %1592, %v630
      %v1594 = vpop.permute.xlu0 %1593
      %1596 = vset.pattern.permute.xlu0 7
      %1597 = vperm.xlu0 %1596, %v635
      %v1598 = vpop.permute.xlu0 %1597
      %1600 = vset.pattern.permute.xlu0 7
      %1601 = vperm.xlu0 %1600, %v640
      %v1602 = vpop.permute.xlu0 %1601
      %v1604 = vsel %vm361, %v1542, 0.0
      %v1605 = vsel %vm362, %v1546, 0.0
      %v1606 = vsel %vm363, %v1550, 0.0
      %v1607 = vsel %vm364, %v1554, 0.0
      %v1608 = vsel %vm365, %v1558, 0.0
      %v1609 = vsel %vm366, %v1562, 0.0
      %v1610 = vsel %vm367, %v1566, 0.0
      %v1611 = vsel %vm368, %v1570, 0.0
      %v1612 = vsel %vm369, %v1574, 0.0
      %v1613 = vsel %vm370, %v1578, 0.0
      %v1614 = vsel %vm371, %v1582, 0.0
      %v1615 = vsel %vm372, %v1586, 0.0
      %v1616 = vsel %vm373, %v1590, 0.0
      %v1617 = vsel %vm374, %v1594, 0.0
      %v1618 = vsel %vm375, %v1598, 0.0
      %v1619 = vsel %vm376, %v1602, 0.0
      %v1620 = vadd.f32 %v1524, %v1604
      %v1621 = vadd.f32 %v1525, %v1605
      %v1622 = vadd.f32 %v1526, %v1606
      %v1623 = vadd.f32 %v1527, %v1607
      %v1624 = vadd.f32 %v1528, %v1608
      %v1625 = vadd.f32 %v1529, %v1609
      %v1626 = vadd.f32 %v1530, %v1610
      %v1627 = vadd.f32 %v1531, %v1611
      %v1628 = vadd.f32 %v1532, %v1612
      %v1629 = vadd.f32 %v1533, %v1613
      %v1630 = vadd.f32 %v1534, %v1614
      %v1631 = vadd.f32 %v1535, %v1615
      %v1632 = vadd.f32 %v1536, %v1616
      %v1633 = vadd.f32 %v1537, %v1617
      %v1634 = vadd.f32 %v1538, %v1618
      %v1635 = vadd.f32 %v1539, %v1619
      %1636 = vset.pattern.permute.xlu0 8
      %1637 = vperm.xlu0 %1636, %v565
      %v1638 = vpop.permute.xlu0 %1637
      %1640 = vset.pattern.permute.xlu0 8
      %1641 = vperm.xlu0 %1640, %v570
      %v1642 = vpop.permute.xlu0 %1641
      %1644 = vset.pattern.permute.xlu0 8
      %1645 = vperm.xlu0 %1644, %v575
      %v1646 = vpop.permute.xlu0 %1645
      %1648 = vset.pattern.permute.xlu0 8
      %1649 = vperm.xlu0 %1648, %v580
      %v1650 = vpop.permute.xlu0 %1649
      %1652 = vset.pattern.permute.xlu0 8
      %1653 = vperm.xlu0 %1652, %v585
      %v1654 = vpop.permute.xlu0 %1653
      %1656 = vset.pattern.permute.xlu0 8
      %1657 = vperm.xlu0 %1656, %v590
      %v1658 = vpop.permute.xlu0 %1657
      %1660 = vset.pattern.permute.xlu0 8
      %1661 = vperm.xlu0 %1660, %v595
      %v1662 = vpop.permute.xlu0 %1661
      %1664 = vset.pattern.permute.xlu0 8
      %1665 = vperm.xlu0 %1664, %v600
      %v1666 = vpop.permute.xlu0 %1665
      %1668 = vset.pattern.permute.xlu0 8
      %1669 = vperm.xlu0 %1668, %v605
      %v1670 = vpop.permute.xlu0 %1669
      %1672 = vset.pattern.permute.xlu0 8
      %1673 = vperm.xlu0 %1672, %v610
      %v1674 = vpop.permute.xlu0 %1673
      %1676 = vset.pattern.permute.xlu0 8
      %1677 = vperm.xlu0 %1676, %v615
      %v1678 = vpop.permute.xlu0 %1677
      %1680 = vset.pattern.permute.xlu0 8
      %1681 = vperm.xlu0 %1680, %v620
      %v1682 = vpop.permute.xlu0 %1681
      %1684 = vset.pattern.permute.xlu0 8
      %1685 = vperm.xlu0 %1684, %v625
      %v1686 = vpop.permute.xlu0 %1685
      %1688 = vset.pattern.permute.xlu0 8
      %1689 = vperm.xlu0 %1688, %v630
      %v1690 = vpop.permute.xlu0 %1689
      %1692 = vset.pattern.permute.xlu0 8
      %1693 = vperm.xlu0 %1692, %v635
      %v1694 = vpop.permute.xlu0 %1693
      %1696 = vset.pattern.permute.xlu0 8
      %1697 = vperm.xlu0 %1696, %v640
      %v1698 = vpop.permute.xlu0 %1697
      %v1700 = vsel %vm377, %v1638, 0.0
      %v1701 = vsel %vm378, %v1642, 0.0
      %v1702 = vsel %vm379, %v1646, 0.0
      %v1703 = vsel %vm380, %v1650, 0.0
      %v1704 = vsel %vm381, %v1654, 0.0
      %v1705 = vsel %vm382, %v1658, 0.0
      %v1706 = vsel %vm383, %v1662, 0.0
      %v1707 = vsel %vm384, %v1666, 0.0
      %v1708 = vsel %vm385, %v1670, 0.0
      %v1709 = vsel %vm386, %v1674, 0.0
      %v1710 = vsel %vm387, %v1678, 0.0
      %v1711 = vsel %vm388, %v1682, 0.0
      %v1712 = vsel %vm389, %v1686, 0.0
      %v1713 = vsel %vm390, %v1690, 0.0
      %v1714 = vsel %vm391, %v1694, 0.0
      %v1715 = vsel %vm392, %v1698, 0.0
      %v1716 = vadd.f32 %v1620, %v1700
      %v1717 = vadd.f32 %v1621, %v1701
      %v1718 = vadd.f32 %v1622, %v1702
      %v1719 = vadd.f32 %v1623, %v1703
      %v1720 = vadd.f32 %v1624, %v1704
      %v1721 = vadd.f32 %v1625, %v1705
      %v1722 = vadd.f32 %v1626, %v1706
      %v1723 = vadd.f32 %v1627, %v1707
      %v1724 = vadd.f32 %v1628, %v1708
      %v1725 = vadd.f32 %v1629, %v1709
      %v1726 = vadd.f32 %v1630, %v1710
      %v1727 = vadd.f32 %v1631, %v1711
      %v1728 = vadd.f32 %v1632, %v1712
      %v1729 = vadd.f32 %v1633, %v1713
      %v1730 = vadd.f32 %v1634, %v1714
      %v1731 = vadd.f32 %v1635, %v1715
      %v1732 = vsel %vm213, 1, 0
      %v1733 = vlaneseq
      %v1734 = vshrl.u32 %v1733, 7
      %v1735 = vsub.s32 0, %v1734
      %v1736 = vrot.slane %v1732, %v1735
      %vm1737 = vcmp.eq.s32.totalorder %v1736, 1
      %v1738 = vsel %vm1737, %v1716, -10000.0
      %v1739 = vsel %vm1737, %v1717, -10000.0
      %v1740 = vsel %vm1737, %v1718, -10000.0
      %v1741 = vsel %vm1737, %v1719, -10000.0
      %v1742 = vsel %vm1737, %v1720, -10000.0
      %v1743 = vsel %vm1737, %v1721, -10000.0
      %v1744 = vsel %vm1737, %v1722, -10000.0
      %v1745 = vsel %vm1737, %v1723, -10000.0
      %v1746 = vsel %vm1737, %v1724, -10000.0
      %v1747 = vsel %vm1737, %v1725, -10000.0
      %v1748 = vsel %vm1737, %v1726, -10000.0
      %v1749 = vsel %vm1737, %v1727, -10000.0
      %v1750 = vsel %vm1737, %v1728, -10000.0
      %v1751 = vsel %vm1737, %v1729, -10000.0
      %v1752 = vsel %vm1737, %v1730, -10000.0
      %v1753 = vsel %vm1737, %v1731, -10000.0
      %1754 = vmax.xlane.f32.xlu0 %v1738
      %v1755 = vpop.xlane.xlu0 %1754
      %1756 = vmax.xlane.f32.xlu0 %v1739
      %v1757 = vpop.xlane.xlu0 %1756
      %1758 = vmax.xlane.f32.xlu0 %v1740
      %v1759 = vpop.xlane.xlu0 %1758
      %1760 = vmax.xlane.f32.xlu0 %v1741
      %v1761 = vpop.xlane.xlu0 %1760
      %1762 = vmax.xlane.f32.xlu0 %v1742
      %v1763 = vpop.xlane.xlu0 %1762
      %1764 = vmax.xlane.f32.xlu0 %v1743
      %v1765 = vpop.xlane.xlu0 %1764
      %1766 = vmax.xlane.f32.xlu0 %v1744
      %v1767 = vpop.xlane.xlu0 %1766
      %1768 = vmax.xlane.f32.xlu0 %v1745
      %v1769 = vpop.xlane.xlu0 %1768
      %1770 = vmax.xlane.f32.xlu0 %v1746
      %v1771 = vpop.xlane.xlu0 %1770
      %1772 = vmax.xlane.f32.xlu0 %v1747
      %v1773 = vpop.xlane.xlu0 %1772
      %1774 = vmax.xlane.f32.xlu0 %v1748
      %v1775 = vpop.xlane.xlu0 %1774
      %1776 = vmax.xlane.f32.xlu0 %v1749
      %v1777 = vpop.xlane.xlu0 %1776
      %1778 = vmax.xlane.f32.xlu0 %v1750
      %v1779 = vpop.xlane.xlu0 %1778
      %1780 = vmax.xlane.f32.xlu0 %v1751
      %v1781 = vpop.xlane.xlu0 %1780
      %1782 = vmax.xlane.f32.xlu0 %v1752
      %v1783 = vpop.xlane.xlu0 %1782
      %1784 = vmax.xlane.f32.xlu0 %v1753
      %v1785 = vpop.xlane.xlu0 %1784
      %v1786 = vsub.f32 %v1738, %v1755
      %v1787 = vsub.f32 %v1739, %v1757
      %v1788 = vsub.f32 %v1740, %v1759
      %v1789 = vsub.f32 %v1741, %v1761
      %v1790 = vsub.f32 %v1742, %v1763
      %v1791 = vsub.f32 %v1743, %v1765
      %v1792 = vsub.f32 %v1744, %v1767
      %v1793 = vsub.f32 %v1745, %v1769
      %v1794 = vsub.f32 %v1746, %v1771
      %v1795 = vsub.f32 %v1747, %v1773
      %v1796 = vsub.f32 %v1748, %v1775
      %v1797 = vsub.f32 %v1749, %v1777
      %v1798 = vsub.f32 %v1750, %v1779
      %v1799 = vsub.f32 %v1751, %v1781
      %v1800 = vsub.f32 %v1752, %v1783
      %v1801 = vsub.f32 %v1753, %v1785
      %v1802 = vmul.f32 %v1786, 1.442695
      %v1803 = vpow.pop %v1802
      %v1804 = vmul.f32 %v1787, 1.442695
      %v1805 = vpow.pop %v1804
      %v1806 = vmul.f32 %v1788, 1.442695
      %v1807 = vpow.pop %v1806
      %v1808 = vmul.f32 %v1789, 1.442695
      %v1809 = vpow.pop %v1808
      %v1810 = vmul.f32 %v1790, 1.442695
      %v1811 = vpow.pop %v1810
      %v1812 = vmul.f32 %v1791, 1.442695
      %v1813 = vpow.pop %v1812
      %v1814 = vmul.f32 %v1792, 1.442695
      %v1815 = vpow.pop %v1814
      %v1816 = vmul.f32 %v1793, 1.442695
      %v1817 = vpow.pop %v1816
      %v1818 = vmul.f32 %v1794, 1.442695
      %v1819 = vpow.pop %v1818
      %v1820 = vmul.f32 %v1795, 1.442695
      %v1821 = vpow.pop %v1820
      %v1822 = vmul.f32 %v1796, 1.442695
      %v1823 = vpow.pop %v1822
      %v1824 = vmul.f32 %v1797, 1.442695
      %v1825 = vpow.pop %v1824
      %v1826 = vmul.f32 %v1798, 1.442695
      %v1827 = vpow.pop %v1826
      %v1828 = vmul.f32 %v1799, 1.442695
      %v1829 = vpow.pop %v1828
      %v1830 = vmul.f32 %v1800, 1.442695
      %v1831 = vpow.pop %v1830
      %v1832 = vmul.f32 %v1801, 1.442695
      %v1833 = vpow.pop %v1832
      %1834 = vadd.xlane.f32.xlu0 %v1803
      %v1835 = vpop.xlane.xlu0 %1834
      %1836 = vadd.xlane.f32.xlu0 %v1805
      %v1837 = vpop.xlane.xlu0 %1836
      %1838 = vadd.xlane.f32.xlu0 %v1807
      %v1839 = vpop.xlane.xlu0 %1838
      %1840 = vadd.xlane.f32.xlu0 %v1809
      %v1841 = vpop.xlane.xlu0 %1840
      %1842 = vadd.xlane.f32.xlu0 %v1811
      %v1843 = vpop.xlane.xlu0 %1842
      %1844 = vadd.xlane.f32.xlu0 %v1813
      %v1845 = vpop.xlane.xlu0 %1844
      %1846 = vadd.xlane.f32.xlu0 %v1815
      %v1847 = vpop.xlane.xlu0 %1846
      %1848 = vadd.xlane.f32.xlu0 %v1817
      %v1849 = vpop.xlane.xlu0 %1848
      %1850 = vadd.xlane.f32.xlu0 %v1819
      %v1851 = vpop.xlane.xlu0 %1850
      %1852 = vadd.xlane.f32.xlu0 %v1821
      %v1853 = vpop.xlane.xlu0 %1852
      %1854 = vadd.xlane.f32.xlu0 %v1823
      %v1855 = vpop.xlane.xlu0 %1854
      %1856 = vadd.xlane.f32.xlu0 %v1825
      %v1857 = vpop.xlane.xlu0 %1856
      %1858 = vadd.xlane.f32.xlu0 %v1827
      %v1859 = vpop.xlane.xlu0 %1858
      %1860 = vadd.xlane.f32.xlu0 %v1829
      %v1861 = vpop.xlane.xlu0 %1860
      %1862 = vadd.xlane.f32.xlu0 %v1831
      %v1863 = vpop.xlane.xlu0 %1862
      %1864 = vadd.xlane.f32.xlu0 %v1833
      %v1865 = vpop.xlane.xlu0 %1864
      %v1866 = vrcp.pop %v1835
      %v1867 = vmul.f32 %v1803, %v1866
      %v1868 = vrcp.pop %v1837
      %v1869 = vmul.f32 %v1805, %v1868
      %v1870 = vrcp.pop %v1839
      %v1871 = vmul.f32 %v1807, %v1870
      %v1872 = vrcp.pop %v1841
      %v1873 = vmul.f32 %v1809, %v1872
      %v1874 = vrcp.pop %v1843
      %v1875 = vmul.f32 %v1811, %v1874
      %v1876 = vrcp.pop %v1845
      %v1877 = vmul.f32 %v1813, %v1876
      %v1878 = vrcp.pop %v1847
      %v1879 = vmul.f32 %v1815, %v1878
      %v1880 = vrcp.pop %v1849
      %v1881 = vmul.f32 %v1817, %v1880
      %v1882 = vrcp.pop %v1851
      %v1883 = vmul.f32 %v1819, %v1882
      %v1884 = vrcp.pop %v1853
      %v1885 = vmul.f32 %v1821, %v1884
      %v1886 = vrcp.pop %v1855
      %v1887 = vmul.f32 %v1823, %v1886
      %v1888 = vrcp.pop %v1857
      %v1889 = vmul.f32 %v1825, %v1888
      %v1890 = vrcp.pop %v1859
      %v1891 = vmul.f32 %v1827, %v1890
      %v1892 = vrcp.pop %v1861
      %v1893 = vmul.f32 %v1829, %v1892
      %v1894 = vrcp.pop %v1863
      %v1895 = vmul.f32 %v1831, %v1894
      %v1896 = vrcp.pop %v1865
      %v1897 = vmul.f32 %v1833, %v1896
      %v1898 = vsel %vm249, %v1867, 0.0
      %v1899 = vsel %vm250, %v1869, 0.0
      %v1900 = vsel %vm251, %v1871, 0.0
      %v1901 = vsel %vm252, %v1873, 0.0
      %v1902 = vsel %vm253, %v1875, 0.0
      %v1903 = vsel %vm254, %v1877, 0.0
      %v1904 = vsel %vm255, %v1879, 0.0
      %v1905 = vsel %vm256, %v1881, 0.0
      %v1906 = vsel %vm257, %v1883, 0.0
      %v1907 = vsel %vm258, %v1885, 0.0
      %v1908 = vsel %vm259, %v1887, 0.0
      %v1909 = vsel %vm260, %v1889, 0.0
      %v1910 = vsel %vm261, %v1891, 0.0
      %v1911 = vsel %vm262, %v1893, 0.0
      %v1912 = vsel %vm263, %v1895, 0.0
      %v1913 = vsel %vm264, %v1897, 0.0
      %1914 = vadd.xlane.f32.xlu0 %v1898
      %v1915 = vpop.xlane.xlu0 %1914
      %1916 = vadd.xlane.f32.xlu0 %v1899
      %v1917 = vpop.xlane.xlu0 %1916
      %1918 = vadd.xlane.f32.xlu0 %v1900
      %v1919 = vpop.xlane.xlu0 %1918
      %1920 = vadd.xlane.f32.xlu0 %v1901
      %v1921 = vpop.xlane.xlu0 %1920
      %1922 = vadd.xlane.f32.xlu0 %v1902
      %v1923 = vpop.xlane.xlu0 %1922
      %1924 = vadd.xlane.f32.xlu0 %v1903
      %v1925 = vpop.xlane.xlu0 %1924
      %1926 = vadd.xlane.f32.xlu0 %v1904
      %v1927 = vpop.xlane.xlu0 %1926
      %1928 = vadd.xlane.f32.xlu0 %v1905
      %v1929 = vpop.xlane.xlu0 %1928
      %1930 = vadd.xlane.f32.xlu0 %v1906
      %v1931 = vpop.xlane.xlu0 %1930
      %1932 = vadd.xlane.f32.xlu0 %v1907
      %v1933 = vpop.xlane.xlu0 %1932
      %1934 = vadd.xlane.f32.xlu0 %v1908
      %v1935 = vpop.xlane.xlu0 %1934
      %1936 = vadd.xlane.f32.xlu0 %v1909
      %v1937 = vpop.xlane.xlu0 %1936
      %1938 = vadd.xlane.f32.xlu0 %v1910
      %v1939 = vpop.xlane.xlu0 %1938
      %1940 = vadd.xlane.f32.xlu0 %v1911
      %v1941 = vpop.xlane.xlu0 %1940
      %1942 = vadd.xlane.f32.xlu0 %v1912
      %v1943 = vpop.xlane.xlu0 %1942
      %1944 = vadd.xlane.f32.xlu0 %v1913
      %v1945 = vpop.xlane.xlu0 %1944
      %v1946 = vld [vmem:[%s2] sm:$0x1]
      %v1947 = vlaneseq
      %v1948 = vshrl.u32 %v1947, 7
      %v1949 = vsub.s32 0, %v1948
      %v1950 = vrot.slane %v1946, %v1949
      %v1951 = vmul.f32 %v1915, %v1950
      %v1952 = vmul.f32 %v1917, %v1950
      %v1953 = vmul.f32 %v1919, %v1950
      %v1954 = vmul.f32 %v1921, %v1950
      %v1955 = vmul.f32 %v1923, %v1950
      %v1956 = vmul.f32 %v1925, %v1950
      %v1957 = vmul.f32 %v1927, %v1950
      %v1958 = vmul.f32 %v1929, %v1950
      %v1959 = vmul.f32 %v1931, %v1950
      %v1960 = vmul.f32 %v1933, %v1950
      %v1961 = vmul.f32 %v1935, %v1950
      %v1962 = vmul.f32 %v1937, %v1950
      %v1963 = vmul.f32 %v1939, %v1950
      %v1964 = vmul.f32 %v1941, %v1950
      %v1965 = vmul.f32 %v1943, %v1950
      %v1966 = vmul.f32 %v1945, %v1950
      %1967 = vmatprep.subr.mxu0 0.0
      %1968 = vmatpush1.msra.mxu0 %v442
      %1969 = vmatprep.subr.mxu0 0.0
      %1970 = vmatpush1.msra.mxu0 %v441
      %1971 = vmatprep.subr.mxu0 0.0
      %1972 = vmatpush1.msra.mxu0 %v440
      %1973 = vmatprep.subr.mxu0 0.0
      %1974 = vmatpush1.msra.mxu0 %v439
      %1975 = vmatprep.subr.mxu0 0.0
      %1976 = vmatpush1.msra.mxu0 %v438
      %1977 = vmatprep.subr.mxu0 0.0
      %1978 = vmatpush1.msra.mxu0 %v437
      %1979 = vmatprep.subr.mxu0 0.0
      %1980 = vmatpush1.msra.mxu0 %v436
      %1981 = vmatprep.subr.mxu0 0.0
      %1982 = vmatpush1.msra.mxu0 %v435
      %1983 = vmatprep.subr.mxu0 0.0
      %1984 = vmatpush1.msra.mxu0 %v434
      %1985 = vmatprep.subr.mxu0 0.0
      %1986 = vmatpush1.msra.mxu0 %v433
      %1987 = vmatprep.subr.mxu0 0.0
      %1988 = vmatpush1.msra.mxu0 %v432
      %1989 = vmatprep.subr.mxu0 0.0
      %1990 = vmatpush1.msra.mxu0 %v431
      %1991 = vmatprep.subr.mxu0 0.0
      %1992 = vmatpush1.msra.mxu0 %v430
      %1993 = vmatprep.subr.mxu0 0.0
      %1994 = vmatpush1.msra.mxu0 %v429
      %1995 = vmatprep.subr.mxu0 0.0
      %1996 = vmatpush1.msra.mxu0 %v428
      %1997 = vmatprep.subr.mxu0 0.0
      %1998 = vmatpush1.msra.mxu0 %v427
      %1999 = vmatprep.subr.mxu0 0.0
      %2000 = vmatpush2.msra.mxu0 0.0
      %2001 = vmatprep.subr.mxu0 0.0
      %2002 = vmatpush2.msra.mxu0 0.0
      %2003 = vmatprep.subr.mxu0 0.0
      %2004 = vmatpush2.msra.mxu0 0.0
      %2005 = vmatprep.subr.mxu0 0.0
      %2006 = vmatpush2.msra.mxu0 0.0
      %2007 = vmatprep.subr.mxu0 0.0
      %2008 = vmatpush2.msra.mxu0 0.0
      %2009 = vmatprep.subr.mxu0 0.0
      %2010 = vmatpush2.msra.mxu0 0.0
      %2011 = vmatprep.subr.mxu0 0.0
      %2012 = vmatpush2.msra.mxu0 0.0
      %2013 = vmatprep.subr.mxu0 0.0
      %2014 = vmatpush2.msra.mxu0 0.0
      %2015 = vmatprep.subr.mxu0 0.0
      %2016 = vmatpush2.msra.mxu0 0.0
      %2017 = vmatprep.subr.mxu0 0.0
      %2018 = vmatpush2.msra.mxu0 0.0
      %2019 = vmatprep.subr.mxu0 0.0
      %2020 = vmatpush2.msra.mxu0 0.0
      %2021 = vmatprep.subr.mxu0 0.0
      %2022 = vmatpush2.msra.mxu0 0.0
      %2023 = vmatprep.subr.mxu0 0.0
      %2024 = vmatpush2.msra.mxu0 0.0
      %2025 = vmatprep.subr.mxu0 0.0
      %2026 = vmatpush2.msra.mxu0 0.0
      %2027 = vmatprep.subr.mxu0 0.0
      %2028 = vmatpush2.msra.mxu0 0.0
      %2029 = vmatprep.subr.mxu0 0.0
      %2030 = vmatpush2.msra.mxu0 0.0
      %2031 = vmatprep.mubr.f32.mxu0 0.0
      %2032 = vmatmul.mubr.f32.gmra.mxu0 %v1867
      %v2033 = vpop.f32.mrf.mxu0
      %v2034 = vadd.f32 %v1951, %v2033
      %v2035 = vpop.f32.mrf.mxu0
      %2036 = vmatprep.mubr.f32.mxu0 0.0
      %2037 = vmatmul.mubr.f32.gmra.mxu0 %v1869
      %v2038 = vpop.f32.mrf.mxu0
      %v2039 = vadd.f32 %v1952, %v2038
      %v2040 = vpop.f32.mrf.mxu0
      %2041 = vmatprep.mubr.f32.mxu0 0.0
      %2042 = vmatmul.mubr.f32.gmra.mxu0 %v1871
      %v2043 = vpop.f32.mrf.mxu0
      %v2044 = vadd.f32 %v1953, %v2043
      %v2045 = vpop.f32.mrf.mxu0
      %2046 = vmatprep.mubr.f32.mxu0 0.0
      %2047 = vmatmul.mubr.f32.gmra.mxu0 %v1873
      %v2048 = vpop.f32.mrf.mxu0
      %v2049 = vadd.f32 %v1954, %v2048
      %v2050 = vpop.f32.mrf.mxu0
      %2051 = vmatprep.mubr.f32.mxu0 0.0
      %2052 = vmatmul.mubr.f32.gmra.mxu0 %v1875
      %v2053 = vpop.f32.mrf.mxu0
      %v2054 = vadd.f32 %v1955, %v2053
      %v2055 = vpop.f32.mrf.mxu0
      %2056 = vmatprep.mubr.f32.mxu0 0.0
      %2057 = vmatmul.mubr.f32.gmra.mxu0 %v1877
      %v2058 = vpop.f32.mrf.mxu0
      %v2059 = vadd.f32 %v1956, %v2058
      %v2060 = vpop.f32.mrf.mxu0
      %2061 = vmatprep.mubr.f32.mxu0 0.0
      %2062 = vmatmul.mubr.f32.gmra.mxu0 %v1879
      %v2063 = vpop.f32.mrf.mxu0
      %v2064 = vadd.f32 %v1957, %v2063
      %v2065 = vpop.f32.mrf.mxu0
      %2066 = vmatprep.mubr.f32.mxu0 0.0
      %2067 = vmatmul.mubr.f32.gmra.mxu0 %v1881
      %v2068 = vpop.f32.mrf.mxu0
      %v2069 = vadd.f32 %v1958, %v2068
      %v2070 = vpop.f32.mrf.mxu0
      %2071 = vmatprep.mubr.f32.mxu0 0.0
      %2072 = vmatmul.mubr.f32.gmra.mxu0 %v1883
      %v2073 = vpop.f32.mrf.mxu0
      %v2074 = vadd.f32 %v1959, %v2073
      %v2075 = vpop.f32.mrf.mxu0
      %2076 = vmatprep.mubr.f32.mxu0 0.0
      %2077 = vmatmul.mubr.f32.gmra.mxu0 %v1885
      %v2078 = vpop.f32.mrf.mxu0
      %v2079 = vadd.f32 %v1960, %v2078
      %v2080 = vpop.f32.mrf.mxu0
      %2081 = vmatprep.mubr.f32.mxu0 0.0
      %2082 = vmatmul.mubr.f32.gmra.mxu0 %v1887
      %v2083 = vpop.f32.mrf.mxu0
      %v2084 = vadd.f32 %v1961, %v2083
      %v2085 = vpop.f32.mrf.mxu0
      %2086 = vmatprep.mubr.f32.mxu0 0.0
      %2087 = vmatmul.mubr.f32.gmra.mxu0 %v1889
      %v2088 = vpop.f32.mrf.mxu0
      %v2089 = vadd.f32 %v1962, %v2088
      %v2090 = vpop.f32.mrf.mxu0
      %2091 = vmatprep.mubr.f32.mxu0 0.0
      %2092 = vmatmul.mubr.f32.gmra.mxu0 %v1891
      %v2093 = vpop.f32.mrf.mxu0
      %v2094 = vadd.f32 %v1963, %v2093
      %v2095 = vpop.f32.mrf.mxu0
      %2096 = vmatprep.mubr.f32.mxu0 0.0
      %2097 = vmatmul.mubr.f32.gmra.mxu0 %v1893
      %v2098 = vpop.f32.mrf.mxu0
      %v2099 = vadd.f32 %v1964, %v2098
      %v2100 = vpop.f32.mrf.mxu0
      %2101 = vmatprep.mubr.f32.mxu0 0.0
      %2102 = vmatmul.mubr.f32.gmra.mxu0 %v1895
      %v2103 = vpop.f32.mrf.mxu0
      %v2104 = vadd.f32 %v1965, %v2103
      %v2105 = vpop.f32.mrf.mxu0
      %2106 = vmatprep.mubr.f32.mxu0 0.0
      %2107 = vmatmul.mubr.f32.gmra.mxu0 %v1897
      %v2108 = vpop.f32.mrf.mxu0
      %v2109 = vadd.f32 %v1966, %v2108
      %v2110 = vpop.f32.mrf.mxu0
      %2111 = vdwg.mxu0
      %v2112 = vsel %vm265, %v1867, 0.0
      %v2113 = vsel %vm266, %v1869, 0.0
      %v2114 = vsel %vm267, %v1871, 0.0
      %v2115 = vsel %vm268, %v1873, 0.0
      %v2116 = vsel %vm269, %v1875, 0.0
      %v2117 = vsel %vm270, %v1877, 0.0
      %v2118 = vsel %vm271, %v1879, 0.0
      %v2119 = vsel %vm272, %v1881, 0.0
      %v2120 = vsel %vm273, %v1883, 0.0
      %v2121 = vsel %vm274, %v1885, 0.0
      %v2122 = vsel %vm275, %v1887, 0.0
      %v2123 = vsel %vm276, %v1889, 0.0
      %v2124 = vsel %vm277, %v1891, 0.0
      %v2125 = vsel %vm278, %v1893, 0.0
      %v2126 = vsel %vm279, %v1895, 0.0
      %v2127 = vsel %vm280, %v1897, 0.0
      %2128 = vadd.xlane.f32.xlu0 %v2112
      %v2129 = vpop.xlane.xlu0 %2128
      %2130 = vadd.xlane.f32.xlu0 %v2113
      %v2131 = vpop.xlane.xlu0 %2130
      %2132 = vadd.xlane.f32.xlu0 %v2114
      %v2133 = vpop.xlane.xlu0 %2132
      %2134 = vadd.xlane.f32.xlu0 %v2115
      %v2135 = vpop.xlane.xlu0 %2134
      %2136 = vadd.xlane.f32.xlu0 %v2116
      %v2137 = vpop.xlane.xlu0 %2136
      %2138 = vadd.xlane.f32.xlu0 %v2117
      %v2139 = vpop.xlane.xlu0 %2138
      %2140 = vadd.xlane.f32.xlu0 %v2118
      %v2141 = vpop.xlane.xlu0 %2140
      %2142 = vadd.xlane.f32.xlu0 %v2119
      %v2143 = vpop.xlane.xlu0 %2142
      %2144 = vadd.xlane.f32.xlu0 %v2120
      %v2145 = vpop.xlane.xlu0 %2144
      %2146 = vadd.xlane.f32.xlu0 %v2121
      %v2147 = vpop.xlane.xlu0 %2146
      %2148 = vadd.xlane.f32.xlu0 %v2122
      %v2149 = vpop.xlane.xlu0 %2148
      %2150 = vadd.xlane.f32.xlu0 %v2123
      %v2151 = vpop.xlane.xlu0 %2150
      %2152 = vadd.xlane.f32.xlu0 %v2124
      %v2153 = vpop.xlane.xlu0 %2152
      %2154 = vadd.xlane.f32.xlu0 %v2125
      %v2155 = vpop.xlane.xlu0 %2154
      %2156 = vadd.xlane.f32.xlu0 %v2126
      %v2157 = vpop.xlane.xlu0 %2156
      %2158 = vadd.xlane.f32.xlu0 %v2127
      %v2159 = vpop.xlane.xlu0 %2158
      %v2160 = vld [vmem:[%s2 + $0x1] sm:$0x1]
      %v2161 = vlaneseq
      %v2162 = vshrl.u32 %v2161, 7
      %v2163 = vsub.s32 0, %v2162
      %v2164 = vrot.slane %v2160, %v2163
      %v2165 = vmul.f32 %v2129, %v2164
      %v2166 = vmul.f32 %v2131, %v2164
      %v2167 = vmul.f32 %v2133, %v2164
      %v2168 = vmul.f32 %v2135, %v2164
      %v2169 = vmul.f32 %v2137, %v2164
      %v2170 = vmul.f32 %v2139, %v2164
      %v2171 = vmul.f32 %v2141, %v2164
      %v2172 = vmul.f32 %v2143, %v2164
      %v2173 = vmul.f32 %v2145, %v2164
      %v2174 = vmul.f32 %v2147, %v2164
      %v2175 = vmul.f32 %v2149, %v2164
      %v2176 = vmul.f32 %v2151, %v2164
      %v2177 = vmul.f32 %v2153, %v2164
      %v2178 = vmul.f32 %v2155, %v2164
      %v2179 = vmul.f32 %v2157, %v2164
      %v2180 = vmul.f32 %v2159, %v2164
      %v2181 = vadd.f32 %v2034, %v2165
      %v2182 = vadd.f32 %v2039, %v2166
      %v2183 = vadd.f32 %v2044, %v2167
      %v2184 = vadd.f32 %v2049, %v2168
      %v2185 = vadd.f32 %v2054, %v2169
      %v2186 = vadd.f32 %v2059, %v2170
      %v2187 = vadd.f32 %v2064, %v2171
      %v2188 = vadd.f32 %v2069, %v2172
      %v2189 = vadd.f32 %v2074, %v2173
      %v2190 = vadd.f32 %v2079, %v2174
      %v2191 = vadd.f32 %v2084, %v2175
      %v2192 = vadd.f32 %v2089, %v2176
      %v2193 = vadd.f32 %v2094, %v2177
      %v2194 = vadd.f32 %v2099, %v2178
      %v2195 = vadd.f32 %v2104, %v2179
      %v2196 = vadd.f32 %v2109, %v2180
      %v2197 = vsel %vm281, %v1867, 0.0
      %v2198 = vsel %vm282, %v1869, 0.0
      %v2199 = vsel %vm283, %v1871, 0.0
      %v2200 = vsel %vm284, %v1873, 0.0
      %v2201 = vsel %vm285, %v1875, 0.0
      %v2202 = vsel %vm286, %v1877, 0.0
      %v2203 = vsel %vm287, %v1879, 0.0
      %v2204 = vsel %vm288, %v1881, 0.0
      %v2205 = vsel %vm289, %v1883, 0.0
      %v2206 = vsel %vm290, %v1885, 0.0
      %v2207 = vsel %vm291, %v1887, 0.0
      %v2208 = vsel %vm292, %v1889, 0.0
      %v2209 = vsel %vm293, %v1891, 0.0
      %v2210 = vsel %vm294, %v1893, 0.0
      %v2211 = vsel %vm295, %v1895, 0.0
      %v2212 = vsel %vm296, %v1897, 0.0
      %2213 = vadd.xlane.f32.xlu0 %v2197
      %v2214 = vpop.xlane.xlu0 %2213
      %2215 = vadd.xlane.f32.xlu0 %v2198
      %v2216 = vpop.xlane.xlu0 %2215
      %2217 = vadd.xlane.f32.xlu0 %v2199
      %v2218 = vpop.xlane.xlu0 %2217
      %2219 = vadd.xlane.f32.xlu0 %v2200
      %v2220 = vpop.xlane.xlu0 %2219
      %2221 = vadd.xlane.f32.xlu0 %v2201
      %v2222 = vpop.xlane.xlu0 %2221
      %2223 = vadd.xlane.f32.xlu0 %v2202
      %v2224 = vpop.xlane.xlu0 %2223
      %2225 = vadd.xlane.f32.xlu0 %v2203
      %v2226 = vpop.xlane.xlu0 %2225
      %2227 = vadd.xlane.f32.xlu0 %v2204
      %v2228 = vpop.xlane.xlu0 %2227
      %2229 = vadd.xlane.f32.xlu0 %v2205
      %v2230 = vpop.xlane.xlu0 %2229
      %2231 = vadd.xlane.f32.xlu0 %v2206
      %v2232 = vpop.xlane.xlu0 %2231
      %2233 = vadd.xlane.f32.xlu0 %v2207
      %v2234 = vpop.xlane.xlu0 %2233
      %2235 = vadd.xlane.f32.xlu0 %v2208
      %v2236 = vpop.xlane.xlu0 %2235
      %2237 = vadd.xlane.f32.xlu0 %v2209
      %v2238 = vpop.xlane.xlu0 %2237
      %2239 = vadd.xlane.f32.xlu0 %v2210
      %v2240 = vpop.xlane.xlu0 %2239
      %2241 = vadd.xlane.f32.xlu0 %v2211
      %v2242 = vpop.xlane.xlu0 %2241
      %2243 = vadd.xlane.f32.xlu0 %v2212
      %v2244 = vpop.xlane.xlu0 %2243
      %v2245 = vld [vmem:[%s2 + $0x2] sm:$0x1]
      %v2246 = vlaneseq
      %v2247 = vshrl.u32 %v2246, 7
      %v2248 = vsub.s32 0, %v2247
      %v2249 = vrot.slane %v2245, %v2248
      %v2250 = vmul.f32 %v2214, %v2249
      %v2251 = vmul.f32 %v2216, %v2249
      %v2252 = vmul.f32 %v2218, %v2249
      %v2253 = vmul.f32 %v2220, %v2249
      %v2254 = vmul.f32 %v2222, %v2249
      %v2255 = vmul.f32 %v2224, %v2249
      %v2256 = vmul.f32 %v2226, %v2249
      %v2257 = vmul.f32 %v2228, %v2249
      %v2258 = vmul.f32 %v2230, %v2249
      %v2259 = vmul.f32 %v2232, %v2249
      %v2260 = vmul.f32 %v2234, %v2249
      %v2261 = vmul.f32 %v2236, %v2249
      %v2262 = vmul.f32 %v2238, %v2249
      %v2263 = vmul.f32 %v2240, %v2249
      %v2264 = vmul.f32 %v2242, %v2249
      %v2265 = vmul.f32 %v2244, %v2249
      %v2266 = vadd.f32 %v2181, %v2250
      %v2267 = vadd.f32 %v2182, %v2251
      %v2268 = vadd.f32 %v2183, %v2252
      %v2269 = vadd.f32 %v2184, %v2253
      %v2270 = vadd.f32 %v2185, %v2254
      %v2271 = vadd.f32 %v2186, %v2255
      %v2272 = vadd.f32 %v2187, %v2256
      %v2273 = vadd.f32 %v2188, %v2257
      %v2274 = vadd.f32 %v2189, %v2258
      %v2275 = vadd.f32 %v2190, %v2259
      %v2276 = vadd.f32 %v2191, %v2260
      %v2277 = vadd.f32 %v2192, %v2261
      %v2278 = vadd.f32 %v2193, %v2262
      %v2279 = vadd.f32 %v2194, %v2263
      %v2280 = vadd.f32 %v2195, %v2264
      %v2281 = vadd.f32 %v2196, %v2265
      %v2282 = vsel %vm297, %v1867, 0.0
      %v2283 = vsel %vm298, %v1869, 0.0
      %v2284 = vsel %vm299, %v1871, 0.0
      %v2285 = vsel %vm300, %v1873, 0.0
      %v2286 = vsel %vm301, %v1875, 0.0
      %v2287 = vsel %vm302, %v1877, 0.0
      %v2288 = vsel %vm303, %v1879, 0.0
      %v2289 = vsel %vm304, %v1881, 0.0
      %v2290 = vsel %vm305, %v1883, 0.0
      %v2291 = vsel %vm306, %v1885, 0.0
      %v2292 = vsel %vm307, %v1887, 0.0
      %v2293 = vsel %vm308, %v1889, 0.0
      %v2294 = vsel %vm309, %v1891, 0.0
      %v2295 = vsel %vm310, %v1893, 0.0
      %v2296 = vsel %vm311, %v1895, 0.0
      %v2297 = vsel %vm312, %v1897, 0.0
      %2298 = vadd.xlane.f32.xlu0 %v2282
      %v2299 = vpop.xlane.xlu0 %2298
      %2300 = vadd.xlane.f32.xlu0 %v2283
      %v2301 = vpop.xlane.xlu0 %2300
      %2302 = vadd.xlane.f32.xlu0 %v2284
      %v2303 = vpop.xlane.xlu0 %2302
      %2304 = vadd.xlane.f32.xlu0 %v2285
      %v2305 = vpop.xlane.xlu0 %2304
      %2306 = vadd.xlane.f32.xlu0 %v2286
      %v2307 = vpop.xlane.xlu0 %2306
      %2308 = vadd.xlane.f32.xlu0 %v2287
      %v2309 = vpop.xlane.xlu0 %2308
      %2310 = vadd.xlane.f32.xlu0 %v2288
      %v2311 = vpop.xlane.xlu0 %2310
      %2312 = vadd.xlane.f32.xlu0 %v2289
      %v2313 = vpop.xlane.xlu0 %2312
      %2314 = vadd.xlane.f32.xlu0 %v2290
      %v2315 = vpop.xlane.xlu0 %2314
      %2316 = vadd.xlane.f32.xlu0 %v2291
      %v2317 = vpop.xlane.xlu0 %2316
      %2318 = vadd.xlane.f32.xlu0 %v2292
      %v2319 = vpop.xlane.xlu0 %2318
      %2320 = vadd.xlane.f32.xlu0 %v2293
      %v2321 = vpop.xlane.xlu0 %2320
      %2322 = vadd.xlane.f32.xlu0 %v2294
      %v2323 = vpop.xlane.xlu0 %2322
      %2324 = vadd.xlane.f32.xlu0 %v2295
      %v2325 = vpop.xlane.xlu0 %2324
      %2326 = vadd.xlane.f32.xlu0 %v2296
      %v2327 = vpop.xlane.xlu0 %2326
      %2328 = vadd.xlane.f32.xlu0 %v2297
      %v2329 = vpop.xlane.xlu0 %2328
      %v2330 = vld [vmem:[%s2 + $0x3] sm:$0x1]
      %v2331 = vlaneseq
      %v2332 = vshrl.u32 %v2331, 7
      %v2333 = vsub.s32 0, %v2332
      %v2334 = vrot.slane %v2330, %v2333
      %v2335 = vmul.f32 %v2299, %v2334
      %v2336 = vmul.f32 %v2301, %v2334
      %v2337 = vmul.f32 %v2303, %v2334
      %v2338 = vmul.f32 %v2305, %v2334
      %v2339 = vmul.f32 %v2307, %v2334
      %v2340 = vmul.f32 %v2309, %v2334
      %v2341 = vmul.f32 %v2311, %v2334
      %v2342 = vmul.f32 %v2313, %v2334
      %v2343 = vmul.f32 %v2315, %v2334
      %v2344 = vmul.f32 %v2317, %v2334
      %v2345 = vmul.f32 %v2319, %v2334
      %v2346 = vmul.f32 %v2321, %v2334
      %v2347 = vmul.f32 %v2323, %v2334
      %v2348 = vmul.f32 %v2325, %v2334
      %v2349 = vmul.f32 %v2327, %v2334
      %v2350 = vmul.f32 %v2329, %v2334
      %v2351 = vadd.f32 %v2266, %v2335
      %v2352 = vadd.f32 %v2267, %v2336
      %v2353 = vadd.f32 %v2268, %v2337
      %v2354 = vadd.f32 %v2269, %v2338
      %v2355 = vadd.f32 %v2270, %v2339
      %v2356 = vadd.f32 %v2271, %v2340
      %v2357 = vadd.f32 %v2272, %v2341
      %v2358 = vadd.f32 %v2273, %v2342
      %v2359 = vadd.f32 %v2274, %v2343
      %v2360 = vadd.f32 %v2275, %v2344
      %v2361 = vadd.f32 %v2276, %v2345
      %v2362 = vadd.f32 %v2277, %v2346
      %v2363 = vadd.f32 %v2278, %v2347
      %v2364 = vadd.f32 %v2279, %v2348
      %v2365 = vadd.f32 %v2280, %v2349
      %v2366 = vadd.f32 %v2281, %v2350
      %v2367 = vsel %vm313, %v1867, 0.0
      %v2368 = vsel %vm314, %v1869, 0.0
      %v2369 = vsel %vm315, %v1871, 0.0
      %v2370 = vsel %vm316, %v1873, 0.0
      %v2371 = vsel %vm317, %v1875, 0.0
      %v2372 = vsel %vm318, %v1877, 0.0
      %v2373 = vsel %vm319, %v1879, 0.0
      %v2374 = vsel %vm320, %v1881, 0.0
      %v2375 = vsel %vm321, %v1883, 0.0
      %v2376 = vsel %vm322, %v1885, 0.0
      %v2377 = vsel %vm323, %v1887, 0.0
      %v2378 = vsel %vm324, %v1889, 0.0
      %v2379 = vsel %vm325, %v1891, 0.0
      %v2380 = vsel %vm326, %v1893, 0.0
      %v2381 = vsel %vm327, %v1895, 0.0
      %v2382 = vsel %vm328, %v1897, 0.0
      %2383 = vadd.xlane.f32.xlu0 %v2367
      %v2384 = vpop.xlane.xlu0 %2383
      %2385 = vadd.xlane.f32.xlu0 %v2368
      %v2386 = vpop.xlane.xlu0 %2385
      %2387 = vadd.xlane.f32.xlu0 %v2369
      %v2388 = vpop.xlane.xlu0 %2387
      %2389 = vadd.xlane.f32.xlu0 %v2370
      %v2390 = vpop.xlane.xlu0 %2389
      %2391 = vadd.xlane.f32.xlu0 %v2371
      %v2392 = vpop.xlane.xlu0 %2391
      %2393 = vadd.xlane.f32.xlu0 %v2372
      %v2394 = vpop.xlane.xlu0 %2393
      %2395 = vadd.xlane.f32.xlu0 %v2373
      %v2396 = vpop.xlane.xlu0 %2395
      %2397 = vadd.xlane.f32.xlu0 %v2374
      %v2398 = vpop.xlane.xlu0 %2397
      %2399 = vadd.xlane.f32.xlu0 %v2375
      %v2400 = vpop.xlane.xlu0 %2399
      %2401 = vadd.xlane.f32.xlu0 %v2376
      %v2402 = vpop.xlane.xlu0 %2401
      %2403 = vadd.xlane.f32.xlu0 %v2377
      %v2404 = vpop.xlane.xlu0 %2403
      %2405 = vadd.xlane.f32.xlu0 %v2378
      %v2406 = vpop.xlane.xlu0 %2405
      %2407 = vadd.xlane.f32.xlu0 %v2379
      %v2408 = vpop.xlane.xlu0 %2407
      %2409 = vadd.xlane.f32.xlu0 %v2380
      %v2410 = vpop.xlane.xlu0 %2409
      %2411 = vadd.xlane.f32.xlu0 %v2381
      %v2412 = vpop.xlane.xlu0 %2411
      %2413 = vadd.xlane.f32.xlu0 %v2382
      %v2414 = vpop.xlane.xlu0 %2413
      %v2415 = vld [vmem:[%s2 + $0x4] sm:$0x1]
      %v2416 = vlaneseq
      %v2417 = vshrl.u32 %v2416, 7
      %v2418 = vsub.s32 0, %v2417
      %v2419 = vrot.slane %v2415, %v2418
      %v2420 = vmul.f32 %v2384, %v2419
      %v2421 = vmul.f32 %v2386, %v2419
      %v2422 = vmul.f32 %v2388, %v2419
      %v2423 = vmul.f32 %v2390, %v2419
      %v2424 = vmul.f32 %v2392, %v2419
      %v2425 = vmul.f32 %v2394, %v2419
      %v2426 = vmul.f32 %v2396, %v2419
      %v2427 = vmul.f32 %v2398, %v2419
      %v2428 = vmul.f32 %v2400, %v2419
      %v2429 = vmul.f32 %v2402, %v2419
      %v2430 = vmul.f32 %v2404, %v2419
      %v2431 = vmul.f32 %v2406, %v2419
      %v2432 = vmul.f32 %v2408, %v2419
      %v2433 = vmul.f32 %v2410, %v2419
      %v2434 = vmul.f32 %v2412, %v2419
      %v2435 = vmul.f32 %v2414, %v2419
      %v2436 = vadd.f32 %v2351, %v2420
      %v2437 = vadd.f32 %v2352, %v2421
      %v2438 = vadd.f32 %v2353, %v2422
      %v2439 = vadd.f32 %v2354, %v2423
      %v2440 = vadd.f32 %v2355, %v2424
      %v2441 = vadd.f32 %v2356, %v2425
      %v2442 = vadd.f32 %v2357, %v2426
      %v2443 = vadd.f32 %v2358, %v2427
      %v2444 = vadd.f32 %v2359, %v2428
      %v2445 = vadd.f32 %v2360, %v2429
      %v2446 = vadd.f32 %v2361, %v2430
      %v2447 = vadd.f32 %v2362, %v2431
      %v2448 = vadd.f32 %v2363, %v2432
      %v2449 = vadd.f32 %v2364, %v2433
      %v2450 = vadd.f32 %v2365, %v2434
      %v2451 = vadd.f32 %v2366, %v2435
      %v2452 = vsel %vm329, %v1867, 0.0
      %v2453 = vsel %vm330, %v1869, 0.0
      %v2454 = vsel %vm331, %v1871, 0.0
      %v2455 = vsel %vm332, %v1873, 0.0
      %v2456 = vsel %vm333, %v1875, 0.0
      %v2457 = vsel %vm334, %v1877, 0.0
      %v2458 = vsel %vm335, %v1879, 0.0
      %v2459 = vsel %vm336, %v1881, 0.0
      %v2460 = vsel %vm337, %v1883, 0.0
      %v2461 = vsel %vm338, %v1885, 0.0
      %v2462 = vsel %vm339, %v1887, 0.0
      %v2463 = vsel %vm340, %v1889, 0.0
      %v2464 = vsel %vm341, %v1891, 0.0
      %v2465 = vsel %vm342, %v1893, 0.0
      %v2466 = vsel %vm343, %v1895, 0.0
      %v2467 = vsel %vm344, %v1897, 0.0
      %2468 = vadd.xlane.f32.xlu0 %v2452
      %v2469 = vpop.xlane.xlu0 %2468
      %2470 = vadd.xlane.f32.xlu0 %v2453
      %v2471 = vpop.xlane.xlu0 %2470
      %2472 = vadd.xlane.f32.xlu0 %v2454
      %v2473 = vpop.xlane.xlu0 %2472
      %2474 = vadd.xlane.f32.xlu0 %v2455
      %v2475 = vpop.xlane.xlu0 %2474
      %2476 = vadd.xlane.f32.xlu0 %v2456
      %v2477 = vpop.xlane.xlu0 %2476
      %2478 = vadd.xlane.f32.xlu0 %v2457
      %v2479 = vpop.xlane.xlu0 %2478
      %2480 = vadd.xlane.f32.xlu0 %v2458
      %v2481 = vpop.xlane.xlu0 %2480
      %2482 = vadd.xlane.f32.xlu0 %v2459
      %v2483 = vpop.xlane.xlu0 %2482
      %2484 = vadd.xlane.f32.xlu0 %v2460
      %v2485 = vpop.xlane.xlu0 %2484
      %2486 = vadd.xlane.f32.xlu0 %v2461
      %v2487 = vpop.xlane.xlu0 %2486
      %2488 = vadd.xlane.f32.xlu0 %v2462
      %v2489 = vpop.xlane.xlu0 %2488
      %2490 = vadd.xlane.f32.xlu0 %v2463
      %v2491 = vpop.xlane.xlu0 %2490
      %2492 = vadd.xlane.f32.xlu0 %v2464
      %v2493 = vpop.xlane.xlu0 %2492
      %2494 = vadd.xlane.f32.xlu0 %v2465
      %v2495 = vpop.xlane.xlu0 %2494
      %2496 = vadd.xlane.f32.xlu0 %v2466
      %v2497 = vpop.xlane.xlu0 %2496
      %2498 = vadd.xlane.f32.xlu0 %v2467
      %v2499 = vpop.xlane.xlu0 %2498
      %v2500 = vld [vmem:[%s2 + $0x5] sm:$0x1]
      %v2501 = vlaneseq
      %v2502 = vshrl.u32 %v2501, 7
      %v2503 = vsub.s32 0, %v2502
      %v2504 = vrot.slane %v2500, %v2503
      %v2505 = vmul.f32 %v2469, %v2504
      %v2506 = vmul.f32 %v2471, %v2504
      %v2507 = vmul.f32 %v2473, %v2504
      %v2508 = vmul.f32 %v2475, %v2504
      %v2509 = vmul.f32 %v2477, %v2504
      %v2510 = vmul.f32 %v2479, %v2504
      %v2511 = vmul.f32 %v2481, %v2504
      %v2512 = vmul.f32 %v2483, %v2504
      %v2513 = vmul.f32 %v2485, %v2504
      %v2514 = vmul.f32 %v2487, %v2504
      %v2515 = vmul.f32 %v2489, %v2504
      %v2516 = vmul.f32 %v2491, %v2504
      %v2517 = vmul.f32 %v2493, %v2504
      %v2518 = vmul.f32 %v2495, %v2504
      %v2519 = vmul.f32 %v2497, %v2504
      %v2520 = vmul.f32 %v2499, %v2504
      %v2521 = vadd.f32 %v2436, %v2505
      %v2522 = vadd.f32 %v2437, %v2506
      %v2523 = vadd.f32 %v2438, %v2507
      %v2524 = vadd.f32 %v2439, %v2508
      %v2525 = vadd.f32 %v2440, %v2509
      %v2526 = vadd.f32 %v2441, %v2510
      %v2527 = vadd.f32 %v2442, %v2511
      %v2528 = vadd.f32 %v2443, %v2512
      %v2529 = vadd.f32 %v2444, %v2513
      %v2530 = vadd.f32 %v2445, %v2514
      %v2531 = vadd.f32 %v2446, %v2515
      %v2532 = vadd.f32 %v2447, %v2516
      %v2533 = vadd.f32 %v2448, %v2517
      %v2534 = vadd.f32 %v2449, %v2518
      %v2535 = vadd.f32 %v2450, %v2519
      %v2536 = vadd.f32 %v2451, %v2520
      %v2537 = vsel %vm345, %v1867, 0.0
      %v2538 = vsel %vm346, %v1869, 0.0
      %v2539 = vsel %vm347, %v1871, 0.0
      %v2540 = vsel %vm348, %v1873, 0.0
      %v2541 = vsel %vm349, %v1875, 0.0
      %v2542 = vsel %vm350, %v1877, 0.0
      %v2543 = vsel %vm351, %v1879, 0.0
      %v2544 = vsel %vm352, %v1881, 0.0
      %v2545 = vsel %vm353, %v1883, 0.0
      %v2546 = vsel %vm354, %v1885, 0.0
      %v2547 = vsel %vm355, %v1887, 0.0
      %v2548 = vsel %vm356, %v1889, 0.0
      %v2549 = vsel %vm357, %v1891, 0.0
      %v2550 = vsel %vm358, %v1893, 0.0
      %v2551 = vsel %vm359, %v1895, 0.0
      %v2552 = vsel %vm360, %v1897, 0.0
      %2553 = vadd.xlane.f32.xlu0 %v2537
      %v2554 = vpop.xlane.xlu0 %2553
      %2555 = vadd.xlane.f32.xlu0 %v2538
      %v2556 = vpop.xlane.xlu0 %2555
      %2557 = vadd.xlane.f32.xlu0 %v2539
      %v2558 = vpop.xlane.xlu0 %2557
      %2559 = vadd.xlane.f32.xlu0 %v2540
      %v2560 = vpop.xlane.xlu0 %2559
      %2561 = vadd.xlane.f32.xlu0 %v2541
      %v2562 = vpop.xlane.xlu0 %2561
      %2563 = vadd.xlane.f32.xlu0 %v2542
      %v2564 = vpop.xlane.xlu0 %2563
      %2565 = vadd.xlane.f32.xlu0 %v2543
      %v2566 = vpop.xlane.xlu0 %2565
      %2567 = vadd.xlane.f32.xlu0 %v2544
      %v2568 = vpop.xlane.xlu0 %2567
      %2569 = vadd.xlane.f32.xlu0 %v2545
      %v2570 = vpop.xlane.xlu0 %2569
      %2571 = vadd.xlane.f32.xlu0 %v2546
      %v2572 = vpop.xlane.xlu0 %2571
      %2573 = vadd.xlane.f32.xlu0 %v2547
      %v2574 = vpop.xlane.xlu0 %2573
      %2575 = vadd.xlane.f32.xlu0 %v2548
      %v2576 = vpop.xlane.xlu0 %2575
      %2577 = vadd.xlane.f32.xlu0 %v2549
      %v2578 = vpop.xlane.xlu0 %2577
      %2579 = vadd.xlane.f32.xlu0 %v2550
      %v2580 = vpop.xlane.xlu0 %2579
      %2581 = vadd.xlane.f32.xlu0 %v2551
      %v2582 = vpop.xlane.xlu0 %2581
      %2583 = vadd.xlane.f32.xlu0 %v2552
      %v2584 = vpop.xlane.xlu0 %2583
      %v2585 = vld [vmem:[%s2 + $0x6] sm:$0x1]
      %v2586 = vlaneseq
      %v2587 = vshrl.u32 %v2586, 7
      %v2588 = vsub.s32 0, %v2587
      %v2589 = vrot.slane %v2585, %v2588
      %v2590 = vmul.f32 %v2554, %v2589
      %v2591 = vmul.f32 %v2556, %v2589
      %v2592 = vmul.f32 %v2558, %v2589
      %v2593 = vmul.f32 %v2560, %v2589
      %v2594 = vmul.f32 %v2562, %v2589
      %v2595 = vmul.f32 %v2564, %v2589
      %v2596 = vmul.f32 %v2566, %v2589
      %v2597 = vmul.f32 %v2568, %v2589
      %v2598 = vmul.f32 %v2570, %v2589
      %v2599 = vmul.f32 %v2572, %v2589
      %v2600 = vmul.f32 %v2574, %v2589
      %v2601 = vmul.f32 %v2576, %v2589
      %v2602 = vmul.f32 %v2578, %v2589
      %v2603 = vmul.f32 %v2580, %v2589
      %v2604 = vmul.f32 %v2582, %v2589
      %v2605 = vmul.f32 %v2584, %v2589
      %v2606 = vadd.f32 %v2521, %v2590
      %v2607 = vadd.f32 %v2522, %v2591
      %v2608 = vadd.f32 %v2523, %v2592
      %v2609 = vadd.f32 %v2524, %v2593
      %v2610 = vadd.f32 %v2525, %v2594
      %v2611 = vadd.f32 %v2526, %v2595
      %v2612 = vadd.f32 %v2527, %v2596
      %v2613 = vadd.f32 %v2528, %v2597
      %v2614 = vadd.f32 %v2529, %v2598
      %v2615 = vadd.f32 %v2530, %v2599
      %v2616 = vadd.f32 %v2531, %v2600
      %v2617 = vadd.f32 %v2532, %v2601
      %v2618 = vadd.f32 %v2533, %v2602
      %v2619 = vadd.f32 %v2534, %v2603
      %v2620 = vadd.f32 %v2535, %v2604
      %v2621 = vadd.f32 %v2536, %v2605
      %v2622 = vsel %vm361, %v1867, 0.0
      %v2623 = vsel %vm362, %v1869, 0.0
      %v2624 = vsel %vm363, %v1871, 0.0
      %v2625 = vsel %vm364, %v1873, 0.0
      %v2626 = vsel %vm365, %v1875, 0.0
      %v2627 = vsel %vm366, %v1877, 0.0
      %v2628 = vsel %vm367, %v1879, 0.0
      %v2629 = vsel %vm368, %v1881, 0.0
      %v2630 = vsel %vm369, %v1883, 0.0
      %v2631 = vsel %vm370, %v1885, 0.0
      %v2632 = vsel %vm371, %v1887, 0.0
      %v2633 = vsel %vm372, %v1889, 0.0
      %v2634 = vsel %vm373, %v1891, 0.0
      %v2635 = vsel %vm374, %v1893, 0.0
      %v2636 = vsel %vm375, %v1895, 0.0
      %v2637 = vsel %vm376, %v1897, 0.0
      %2638 = vadd.xlane.f32.xlu0 %v2622
      %v2639 = vpop.xlane.xlu0 %2638
      %2640 = vadd.xlane.f32.xlu0 %v2623
      %v2641 = vpop.xlane.xlu0 %2640
      %2642 = vadd.xlane.f32.xlu0 %v2624
      %v2643 = vpop.xlane.xlu0 %2642
      %2644 = vadd.xlane.f32.xlu0 %v2625
      %v2645 = vpop.xlane.xlu0 %2644
      %2646 = vadd.xlane.f32.xlu0 %v2626
      %v2647 = vpop.xlane.xlu0 %2646
      %2648 = vadd.xlane.f32.xlu0 %v2627
      %v2649 = vpop.xlane.xlu0 %2648
      %2650 = vadd.xlane.f32.xlu0 %v2628
      %v2651 = vpop.xlane.xlu0 %2650
      %2652 = vadd.xlane.f32.xlu0 %v2629
      %v2653 = vpop.xlane.xlu0 %2652
      %2654 = vadd.xlane.f32.xlu0 %v2630
      %v2655 = vpop.xlane.xlu0 %2654
      %2656 = vadd.xlane.f32.xlu0 %v2631
      %v2657 = vpop.xlane.xlu0 %2656
      %2658 = vadd.xlane.f32.xlu0 %v2632
      %v2659 = vpop.xlane.xlu0 %2658
      %2660 = vadd.xlane.f32.xlu0 %v2633
      %v2661 = vpop.xlane.xlu0 %2660
      %2662 = vadd.xlane.f32.xlu0 %v2634
      %v2663 = vpop.xlane.xlu0 %2662
      %2664 = vadd.xlane.f32.xlu0 %v2635
      %v2665 = vpop.xlane.xlu0 %2664
      %2666 = vadd.xlane.f32.xlu0 %v2636
      %v2667 = vpop.xlane.xlu0 %2666
      %2668 = vadd.xlane.f32.xlu0 %v2637
      %v2669 = vpop.xlane.xlu0 %2668
      %v2670 = vld [vmem:[%s2 + $0x7] sm:$0x1]
      %v2671 = vlaneseq
      %v2672 = vshrl.u32 %v2671, 7
      %v2673 = vsub.s32 0, %v2672
      %v2674 = vrot.slane %v2670, %v2673
      %v2675 = vmul.f32 %v2639, %v2674
      %v2676 = vmul.f32 %v2641, %v2674
      %v2677 = vmul.f32 %v2643, %v2674
      %v2678 = vmul.f32 %v2645, %v2674
      %v2679 = vmul.f32 %v2647, %v2674
      %v2680 = vmul.f32 %v2649, %v2674
      %v2681 = vmul.f32 %v2651, %v2674
      %v2682 = vmul.f32 %v2653, %v2674
      %v2683 = vmul.f32 %v2655, %v2674
      %v2684 = vmul.f32 %v2657, %v2674
      %v2685 = vmul.f32 %v2659, %v2674
      %v2686 = vmul.f32 %v2661, %v2674
      %v2687 = vmul.f32 %v2663, %v2674
      %v2688 = vmul.f32 %v2665, %v2674
      %v2689 = vmul.f32 %v2667, %v2674
      %v2690 = vmul.f32 %v2669, %v2674
      %v2691 = vadd.f32 %v2606, %v2675
      %v2692 = vadd.f32 %v2607, %v2676
      %v2693 = vadd.f32 %v2608, %v2677
      %v2694 = vadd.f32 %v2609, %v2678
      %v2695 = vadd.f32 %v2610, %v2679
      %v2696 = vadd.f32 %v2611, %v2680
      %v2697 = vadd.f32 %v2612, %v2681
      %v2698 = vadd.f32 %v2613, %v2682
      %v2699 = vadd.f32 %v2614, %v2683
      %v2700 = vadd.f32 %v2615, %v2684
      %v2701 = vadd.f32 %v2616, %v2685
      %v2702 = vadd.f32 %v2617, %v2686
      %v2703 = vadd.f32 %v2618, %v2687
      %v2704 = vadd.f32 %v2619, %v2688
      %v2705 = vadd.f32 %v2620, %v2689
      %v2706 = vadd.f32 %v2621, %v2690
      %v2707 = vsel %vm377, %v1867, 0.0
      %v2708 = vsel %vm378, %v1869, 0.0
      %v2709 = vsel %vm379, %v1871, 0.0
      %v2710 = vsel %vm380, %v1873, 0.0
      %v2711 = vsel %vm381, %v1875, 0.0
      %v2712 = vsel %vm382, %v1877, 0.0
      %v2713 = vsel %vm383, %v1879, 0.0
      %v2714 = vsel %vm384, %v1881, 0.0
      %v2715 = vsel %vm385, %v1883, 0.0
      %v2716 = vsel %vm386, %v1885, 0.0
      %v2717 = vsel %vm387, %v1887, 0.0
      %v2718 = vsel %vm388, %v1889, 0.0
      %v2719 = vsel %vm389, %v1891, 0.0
      %v2720 = vsel %vm390, %v1893, 0.0
      %v2721 = vsel %vm391, %v1895, 0.0
      %v2722 = vsel %vm392, %v1897, 0.0
      %2723 = vadd.xlane.f32.xlu0 %v2707
      %v2724 = vpop.xlane.xlu0 %2723
      %2725 = vadd.xlane.f32.xlu0 %v2708
      %v2726 = vpop.xlane.xlu0 %2725
      %2727 = vadd.xlane.f32.xlu0 %v2709
      %v2728 = vpop.xlane.xlu0 %2727
      %2729 = vadd.xlane.f32.xlu0 %v2710
      %v2730 = vpop.xlane.xlu0 %2729
      %2731 = vadd.xlane.f32.xlu0 %v2711
      %v2732 = vpop.xlane.xlu0 %2731
      %2733 = vadd.xlane.f32.xlu0 %v2712
      %v2734 = vpop.xlane.xlu0 %2733
      %2735 = vadd.xlane.f32.xlu0 %v2713
      %v2736 = vpop.xlane.xlu0 %2735
      %2737 = vadd.xlane.f32.xlu0 %v2714
      %v2738 = vpop.xlane.xlu0 %2737
      %2739 = vadd.xlane.f32.xlu0 %v2715
      %v2740 = vpop.xlane.xlu0 %2739
      %2741 = vadd.xlane.f32.xlu0 %v2716
      %v2742 = vpop.xlane.xlu0 %2741
      %2743 = vadd.xlane.f32.xlu0 %v2717
      %v2744 = vpop.xlane.xlu0 %2743
      %2745 = vadd.xlane.f32.xlu0 %v2718
      %v2746 = vpop.xlane.xlu0 %2745
      %2747 = vadd.xlane.f32.xlu0 %v2719
      %v2748 = vpop.xlane.xlu0 %2747
      %2749 = vadd.xlane.f32.xlu0 %v2720
      %v2750 = vpop.xlane.xlu0 %2749
      %2751 = vadd.xlane.f32.xlu0 %v2721
      %v2752 = vpop.xlane.xlu0 %2751
      %2753 = vadd.xlane.f32.xlu0 %v2722
      %v2754 = vpop.xlane.xlu0 %2753
      %v2755 = vld [vmem:[%s2 + $0x8] sm:$0x1]
      %v2756 = vlaneseq
      %v2757 = vshrl.u32 %v2756, 7
      %v2758 = vsub.s32 0, %v2757
      %v2759 = vrot.slane %v2755, %v2758
      %v2760 = vmul.f32 %v2724, %v2759
      %v2761 = vmul.f32 %v2726, %v2759
      %v2762 = vmul.f32 %v2728, %v2759
      %v2763 = vmul.f32 %v2730, %v2759
      %v2764 = vmul.f32 %v2732, %v2759
      %v2765 = vmul.f32 %v2734, %v2759
      %v2766 = vmul.f32 %v2736, %v2759
      %v2767 = vmul.f32 %v2738, %v2759
      %v2768 = vmul.f32 %v2740, %v2759
      %v2769 = vmul.f32 %v2742, %v2759
      %v2770 = vmul.f32 %v2744, %v2759
      %v2771 = vmul.f32 %v2746, %v2759
      %v2772 = vmul.f32 %v2748, %v2759
      %v2773 = vmul.f32 %v2750, %v2759
      %v2774 = vmul.f32 %v2752, %v2759
      %v2775 = vmul.f32 %v2754, %v2759
      %v2776 = vadd.f32 %v2691, %v2760
      %v2777 = vadd.f32 %v2692, %v2761
      %v2778 = vadd.f32 %v2693, %v2762
      %v2779 = vadd.f32 %v2694, %v2763
      %v2780 = vadd.f32 %v2695, %v2764
      %v2781 = vadd.f32 %v2696, %v2765
      %v2782 = vadd.f32 %v2697, %v2766
      %v2783 = vadd.f32 %v2698, %v2767
      %v2784 = vadd.f32 %v2699, %v2768
      %v2785 = vadd.f32 %v2700, %v2769
      %v2786 = vadd.f32 %v2701, %v2770
      %v2787 = vadd.f32 %v2702, %v2771
      %v2788 = vadd.f32 %v2703, %v2772
      %v2789 = vadd.f32 %v2704, %v2773
      %v2790 = vadd.f32 %v2705, %v2774
      %v2791 = vadd.f32 %v2706, %v2775
      %2792 = vrot.lane.b32.xlu0 %v411, 96
      %v2793 = vpop.permute.xlu0 %2792
      %2794 = vrot.lane.b32.xlu0 %v412, 96
      %v2795 = vpop.permute.xlu0 %2794
      %2796 = vrot.lane.b32.xlu0 %v413, 96
      %v2797 = vpop.permute.xlu0 %2796
      %2798 = vrot.lane.b32.xlu0 %v414, 96
      %v2799 = vpop.permute.xlu0 %2798
      %2800 = vrot.lane.b32.xlu0 %v415, 96
      %v2801 = vpop.permute.xlu0 %2800
      %2802 = vrot.lane.b32.xlu0 %v416, 96
      %v2803 = vpop.permute.xlu0 %2802
      %2804 = vrot.lane.b32.xlu0 %v417, 96
      %v2805 = vpop.permute.xlu0 %2804
      %2806 = vrot.lane.b32.xlu0 %v418, 96
      %v2807 = vpop.permute.xlu0 %2806
      %2808 = vrot.lane.b32.xlu0 %v419, 96
      %v2809 = vpop.permute.xlu0 %2808
      %2810 = vrot.lane.b32.xlu0 %v420, 96
      %v2811 = vpop.permute.xlu0 %2810
      %2812 = vrot.lane.b32.xlu0 %v421, 96
      %v2813 = vpop.permute.xlu0 %2812
      %2814 = vrot.lane.b32.xlu0 %v422, 96
      %v2815 = vpop.permute.xlu0 %2814
      %2816 = vrot.lane.b32.xlu0 %v423, 96
      %v2817 = vpop.permute.xlu0 %2816
      %2818 = vrot.lane.b32.xlu0 %v424, 96
      %v2819 = vpop.permute.xlu0 %2818
      %2820 = vrot.lane.b32.xlu0 %v425, 96
      %v2821 = vpop.permute.xlu0 %2820
      %2822 = vrot.lane.b32.xlu0 %v426, 96
      %v2823 = vpop.permute.xlu0 %2822
      %v2824 = vsel %vm443, %v2793, 0
      %v2826 = vsel %vm443, %v2795, 0
      %v2828 = vsel %vm443, %v2797, 0
      %v2830 = vsel %vm443, %v2799, 0
      %v2832 = vsel %vm443, %v2801, 0
      %v2834 = vsel %vm443, %v2803, 0
      %v2836 = vsel %vm443, %v2805, 0
      %v2838 = vsel %vm443, %v2807, 0
      %v2840 = vsel %vm443, %v2809, 0
      %v2842 = vsel %vm443, %v2811, 0
      %v2844 = vsel %vm443, %v2813, 0
      %v2846 = vsel %vm443, %v2815, 0
      %v2848 = vsel %vm443, %v2817, 0
      %v2850 = vsel %vm443, %v2819, 0
      %v2852 = vsel %vm443, %v2821, 0
      %v2854 = vsel %vm443, %v2823, 0
      %2856 = vmatprep.subr.mxu0 0.0
      %2857 = vmatpush1.xpose.msra.mxu0 0.0
      %2858 = vmatprep.subr.mxu0 0.0
      %2859 = vmatpush1.xpose.msra.mxu0 0.0
      %2860 = vmatprep.subr.mxu0 0.0
      %2861 = vmatpush1.xpose.msra.mxu0 0.0
      %2862 = vmatprep.subr.mxu0 0.0
      %2863 = vmatpush1.xpose.msra.mxu0 0.0
      %2864 = vmatprep.subr.mxu0 0.0
      %2865 = vmatpush1.xpose.msra.mxu0 0.0
      %2866 = vmatprep.subr.mxu0 0.0
      %2867 = vmatpush1.xpose.msra.mxu0 0.0
      %2868 = vmatprep.subr.mxu0 0.0
      %2869 = vmatpush1.xpose.msra.mxu0 0.0
      %2870 = vmatprep.subr.mxu0 0.0
      %2871 = vmatpush1.xpose.msra.mxu0 0.0
      %2872 = vmatprep.subr.mxu0 0.0
      %2873 = vmatpush1.xpose.msra.mxu0 0.0
      %2874 = vmatprep.subr.mxu0 0.0
      %2875 = vmatpush1.xpose.msra.mxu0 0.0
      %2876 = vmatprep.subr.mxu0 0.0
      %2877 = vmatpush1.xpose.msra.mxu0 0.0
      %2878 = vmatprep.subr.mxu0 0.0
      %2879 = vmatpush1.xpose.msra.mxu0 0.0
      %2880 = vmatprep.subr.mxu0 0.0
      %2881 = vmatpush1.xpose.msra.mxu0 0.0
      %2882 = vmatprep.subr.mxu0 0.0
      %2883 = vmatpush1.xpose.msra.mxu0 0.0
      %2884 = vmatprep.subr.mxu0 0.0
      %2885 = vmatpush1.xpose.msra.mxu0 %v496
      %2886 = vmatprep.subr.mxu0 0.0
      %2887 = vmatpush1.xpose.msra.mxu0 %v493
      %2888 = vmatprep.subr.mxu0 0.0
      %2889 = vmatpush2.xpose.msra.mxu0 0.0
      %2890 = vmatprep.subr.mxu0 0.0
      %2891 = vmatpush2.xpose.msra.mxu0 0.0
      %2892 = vmatprep.subr.mxu0 0.0
      %2893 = vmatpush2.xpose.msra.mxu0 0.0
      %2894 = vmatprep.subr.mxu0 0.0
      %2895 = vmatpush2.xpose.msra.mxu0 0.0
      %2896 = vmatprep.subr.mxu0 0.0
      %2897 = vmatpush2.xpose.msra.mxu0 0.0
      %2898 = vmatprep.subr.mxu0 0.0
      %2899 = vmatpush2.xpose.msra.mxu0 0.0
      %2900 = vmatprep.subr.mxu0 0.0
      %2901 = vmatpush2.xpose.msra.mxu0 0.0
      %2902 = vmatprep.subr.mxu0 0.0
      %2903 = vmatpush2.xpose.msra.mxu0 0.0
      %2904 = vmatprep.subr.mxu0 0.0
      %2905 = vmatpush2.xpose.msra.mxu0 0.0
      %2906 = vmatprep.subr.mxu0 0.0
      %2907 = vmatpush2.xpose.msra.mxu0 0.0
      %2908 = vmatprep.subr.mxu0 0.0
      %2909 = vmatpush2.xpose.msra.mxu0 0.0
      %2910 = vmatprep.subr.mxu0 0.0
      %2911 = vmatpush2.xpose.msra.mxu0 0.0
      %2912 = vmatprep.subr.mxu0 0.0
      %2913 = vmatpush2.xpose.msra.mxu0 0.0
      %2914 = vmatprep.subr.mxu0 0.0
      %2915 = vmatpush2.xpose.msra.mxu0 0.0
      %2916 = vmatprep.subr.mxu0 0.0
      %2917 = vmatpush2.xpose.msra.mxu0 0.0
      %2918 = vmatprep.subr.mxu0 0.0
      %2919 = vmatpush2.xpose.msra.mxu0 0.0
      %2920 = vmatprep.mubr.f32.mxu0 0.0
      %2921 = vmatmul.mubr.f32.gmra.mxu0 %v2824
      %v2922 = vpop.f32.mrf.mxu0
      %v2923 = vadd.f32 0.0, %v2922
      %v2924 = vpop.f32.mrf.mxu0
      %2925 = vmatprep.mubr.f32.mxu0 0.0
      %2926 = vmatmul.mubr.f32.gmra.mxu0 %v2826
      %v2927 = vpop.f32.mrf.mxu0
      %v2928 = vadd.f32 0.0, %v2927
      %v2929 = vpop.f32.mrf.mxu0
      %2930 = vmatprep.mubr.f32.mxu0 0.0
      %2931 = vmatmul.mubr.f32.gmra.mxu0 %v2828
      %v2932 = vpop.f32.mrf.mxu0
      %v2933 = vadd.f32 0.0, %v2932
      %v2934 = vpop.f32.mrf.mxu0
      %2935 = vmatprep.mubr.f32.mxu0 0.0
      %2936 = vmatmul.mubr.f32.gmra.mxu0 %v2830
      %v2937 = vpop.f32.mrf.mxu0
      %v2938 = vadd.f32 0.0, %v2937
      %v2939 = vpop.f32.mrf.mxu0
      %2940 = vmatprep.mubr.f32.mxu0 0.0
      %2941 = vmatmul.mubr.f32.gmra.mxu0 %v2832
      %v2942 = vpop.f32.mrf.mxu0
      %v2943 = vadd.f32 0.0, %v2942
      %v2944 = vpop.f32.mrf.mxu0
      %2945 = vmatprep.mubr.f32.mxu0 0.0
      %2946 = vmatmul.mubr.f32.gmra.mxu0 %v2834
      %v2947 = vpop.f32.mrf.mxu0
      %v2948 = vadd.f32 0.0, %v2947
      %v2949 = vpop.f32.mrf.mxu0
      %2950 = vmatprep.mubr.f32.mxu0 0.0
      %2951 = vmatmul.mubr.f32.gmra.mxu0 %v2836
      %v2952 = vpop.f32.mrf.mxu0
      %v2953 = vadd.f32 0.0, %v2952
      %v2954 = vpop.f32.mrf.mxu0
      %2955 = vmatprep.mubr.f32.mxu0 0.0
      %2956 = vmatmul.mubr.f32.gmra.mxu0 %v2838
      %v2957 = vpop.f32.mrf.mxu0
      %v2958 = vadd.f32 0.0, %v2957
      %v2959 = vpop.f32.mrf.mxu0
      %2960 = vmatprep.mubr.f32.mxu0 0.0
      %2961 = vmatmul.mubr.f32.gmra.mxu0 %v2840
      %v2962 = vpop.f32.mrf.mxu0
      %v2963 = vadd.f32 0.0, %v2962
      %v2964 = vpop.f32.mrf.mxu0
      %2965 = vmatprep.mubr.f32.mxu0 0.0
      %2966 = vmatmul.mubr.f32.gmra.mxu0 %v2842
      %v2967 = vpop.f32.mrf.mxu0
      %v2968 = vadd.f32 0.0, %v2967
      %v2969 = vpop.f32.mrf.mxu0
      %2970 = vmatprep.mubr.f32.mxu0 0.0
      %2971 = vmatmul.mubr.f32.gmra.mxu0 %v2844
      %v2972 = vpop.f32.mrf.mxu0
      %v2973 = vadd.f32 0.0, %v2972
      %v2974 = vpop.f32.mrf.mxu0
      %2975 = vmatprep.mubr.f32.mxu0 0.0
      %2976 = vmatmul.mubr.f32.gmra.mxu0 %v2846
      %v2977 = vpop.f32.mrf.mxu0
      %v2978 = vadd.f32 0.0, %v2977
      %v2979 = vpop.f32.mrf.mxu0
      %2980 = vmatprep.mubr.f32.mxu0 0.0
      %2981 = vmatmul.mubr.f32.gmra.mxu0 %v2848
      %v2982 = vpop.f32.mrf.mxu0
      %v2983 = vadd.f32 0.0, %v2982
      %v2984 = vpop.f32.mrf.mxu0
      %2985 = vmatprep.mubr.f32.mxu0 0.0
      %2986 = vmatmul.mubr.f32.gmra.mxu0 %v2850
      %v2987 = vpop.f32.mrf.mxu0
      %v2988 = vadd.f32 0.0, %v2987
      %v2989 = vpop.f32.mrf.mxu0
      %2990 = vmatprep.mubr.f32.mxu0 0.0
      %2991 = vmatmul.mubr.f32.gmra.mxu0 %v2852
      %v2992 = vpop.f32.mrf.mxu0
      %v2993 = vadd.f32 0.0, %v2992
      %v2994 = vpop.f32.mrf.mxu0
      %2995 = vmatprep.mubr.f32.mxu0 0.0
      %2996 = vmatmul.mubr.f32.gmra.mxu0 %v2854
      %v2997 = vpop.f32.mrf.mxu0
      %v2998 = vadd.f32 0.0, %v2997
      %v2999 = vpop.f32.mrf.mxu0
      %3000 = vdwg.mxu0
      %3002 = vset.pattern.permute.xlu0 0
      %3003 = vperm.xlu0 %3002, %v2923
      %v3004 = vpop.permute.xlu0 %3003
      %3007 = vset.pattern.permute.xlu0 0
      %3008 = vperm.xlu0 %3007, %v2928
      %v3009 = vpop.permute.xlu0 %3008
      %3012 = vset.pattern.permute.xlu0 0
      %3013 = vperm.xlu0 %3012, %v2933
      %v3014 = vpop.permute.xlu0 %3013
      %3017 = vset.pattern.permute.xlu0 0
      %3018 = vperm.xlu0 %3017, %v2938
      %v3019 = vpop.permute.xlu0 %3018
      %3022 = vset.pattern.permute.xlu0 0
      %3023 = vperm.xlu0 %3022, %v2943
      %v3024 = vpop.permute.xlu0 %3023
      %3027 = vset.pattern.permute.xlu0 0
      %3028 = vperm.xlu0 %3027, %v2948
      %v3029 = vpop.permute.xlu0 %3028
      %3032 = vset.pattern.permute.xlu0 0
      %3033 = vperm.xlu0 %3032, %v2953
      %v3034 = vpop.permute.xlu0 %3033
      %3037 = vset.pattern.permute.xlu0 0
      %3038 = vperm.xlu0 %3037, %v2958
      %v3039 = vpop.permute.xlu0 %3038
      %3042 = vset.pattern.permute.xlu0 0
      %3043 = vperm.xlu0 %3042, %v2963
      %v3044 = vpop.permute.xlu0 %3043
      %3047 = vset.pattern.permute.xlu0 0
      %3048 = vperm.xlu0 %3047, %v2968
      %v3049 = vpop.permute.xlu0 %3048
      %3052 = vset.pattern.permute.xlu0 0
      %3053 = vperm.xlu0 %3052, %v2973
      %v3054 = vpop.permute.xlu0 %3053
      %3057 = vset.pattern.permute.xlu0 0
      %3058 = vperm.xlu0 %3057, %v2978
      %v3059 = vpop.permute.xlu0 %3058
      %3062 = vset.pattern.permute.xlu0 0
      %3063 = vperm.xlu0 %3062, %v2983
      %v3064 = vpop.permute.xlu0 %3063
      %3067 = vset.pattern.permute.xlu0 0
      %3068 = vperm.xlu0 %3067, %v2988
      %v3069 = vpop.permute.xlu0 %3068
      %3072 = vset.pattern.permute.xlu0 0
      %3073 = vperm.xlu0 %3072, %v2993
      %v3074 = vpop.permute.xlu0 %3073
      %3077 = vset.pattern.permute.xlu0 0
      %3078 = vperm.xlu0 %3077, %v2998
      %v3079 = vpop.permute.xlu0 %3078
      %v3081 = vsel %vm249, %v3004, 0.0
      %v3082 = vsel %vm250, %v3009, 0.0
      %v3083 = vsel %vm251, %v3014, 0.0
      %v3084 = vsel %vm252, %v3019, 0.0
      %v3085 = vsel %vm253, %v3024, 0.0
      %v3086 = vsel %vm254, %v3029, 0.0
      %v3087 = vsel %vm255, %v3034, 0.0
      %v3088 = vsel %vm256, %v3039, 0.0
      %v3089 = vsel %vm257, %v3044, 0.0
      %v3090 = vsel %vm258, %v3049, 0.0
      %v3091 = vsel %vm259, %v3054, 0.0
      %v3092 = vsel %vm260, %v3059, 0.0
      %v3093 = vsel %vm261, %v3064, 0.0
      %v3094 = vsel %vm262, %v3069, 0.0
      %v3095 = vsel %vm263, %v3074, 0.0
      %v3096 = vsel %vm264, %v3079, 0.0
      %3097 = vrot.lane.b32.xlu0 %v395, 32
      %v3098 = vpop.permute.xlu0 %3097
      %3099 = vrot.lane.b32.xlu0 %v396, 32
      %v3100 = vpop.permute.xlu0 %3099
      %3101 = vrot.lane.b32.xlu0 %v397, 32
      %v3102 = vpop.permute.xlu0 %3101
      %3103 = vrot.lane.b32.xlu0 %v398, 32
      %v3104 = vpop.permute.xlu0 %3103
      %3105 = vrot.lane.b32.xlu0 %v399, 32
      %v3106 = vpop.permute.xlu0 %3105
      %3107 = vrot.lane.b32.xlu0 %v400, 32
      %v3108 = vpop.permute.xlu0 %3107
      %3109 = vrot.lane.b32.xlu0 %v401, 32
      %v3110 = vpop.permute.xlu0 %3109
      %3111 = vrot.lane.b32.xlu0 %v402, 32
      %v3112 = vpop.permute.xlu0 %3111
      %3113 = vrot.lane.b32.xlu0 %v403, 32
      %v3114 = vpop.permute.xlu0 %3113
      %3115 = vrot.lane.b32.xlu0 %v404, 32
      %v3116 = vpop.permute.xlu0 %3115
      %3117 = vrot.lane.b32.xlu0 %v405, 32
      %v3118 = vpop.permute.xlu0 %3117
      %3119 = vrot.lane.b32.xlu0 %v406, 32
      %v3120 = vpop.permute.xlu0 %3119
      %3121 = vrot.lane.b32.xlu0 %v407, 32
      %v3122 = vpop.permute.xlu0 %3121
      %3123 = vrot.lane.b32.xlu0 %v408, 32
      %v3124 = vpop.permute.xlu0 %3123
      %3125 = vrot.lane.b32.xlu0 %v409, 32
      %v3126 = vpop.permute.xlu0 %3125
      %3127 = vrot.lane.b32.xlu0 %v410, 32
      %v3128 = vpop.permute.xlu0 %3127
      %v3129 = vsel %vm443, %v3098, 0
      %v3131 = vsel %vm443, %v3100, 0
      %v3133 = vsel %vm443, %v3102, 0
      %v3135 = vsel %vm443, %v3104, 0
      %v3137 = vsel %vm443, %v3106, 0
      %v3139 = vsel %vm443, %v3108, 0
      %v3141 = vsel %vm443, %v3110, 0
      %v3143 = vsel %vm443, %v3112, 0
      %v3145 = vsel %vm443, %v3114, 0
      %v3147 = vsel %vm443, %v3116, 0
      %v3149 = vsel %vm443, %v3118, 0
      %v3151 = vsel %vm443, %v3120, 0
      %v3153 = vsel %vm443, %v3122, 0
      %v3155 = vsel %vm443, %v3124, 0
      %v3157 = vsel %vm443, %v3126, 0
      %v3159 = vsel %vm443, %v3128, 0
      %3161 = vmatprep.subr.mxu0 0.0
      %3162 = vmatpush1.xpose.msra.mxu0 %v3159
      %3163 = vmatprep.subr.mxu0 0.0
      %3164 = vmatpush1.xpose.msra.mxu0 %v3157
      %3165 = vmatprep.subr.mxu0 0.0
      %3166 = vmatpush1.xpose.msra.mxu0 %v3155
      %3167 = vmatprep.subr.mxu0 0.0
      %3168 = vmatpush1.xpose.msra.mxu0 %v3153
      %3169 = vmatprep.subr.mxu0 0.0
      %3170 = vmatpush1.xpose.msra.mxu0 %v3151
      %3171 = vmatprep.subr.mxu0 0.0
      %3172 = vmatpush1.xpose.msra.mxu0 %v3149
      %3173 = vmatprep.subr.mxu0 0.0
      %3174 = vmatpush1.xpose.msra.mxu0 %v3147
      %3175 = vmatprep.subr.mxu0 0.0
      %3176 = vmatpush1.xpose.msra.mxu0 %v3145
      %3177 = vmatprep.subr.mxu0 0.0
      %3178 = vmatpush1.xpose.msra.mxu0 %v3143
      %3179 = vmatprep.subr.mxu0 0.0
      %3180 = vmatpush1.xpose.msra.mxu0 %v3141
      %3181 = vmatprep.subr.mxu0 0.0
      %3182 = vmatpush1.xpose.msra.mxu0 %v3139
      %3183 = vmatprep.subr.mxu0 0.0
      %3184 = vmatpush1.xpose.msra.mxu0 %v3137
      %3185 = vmatprep.subr.mxu0 0.0
      %3186 = vmatpush1.xpose.msra.mxu0 %v3135
      %3187 = vmatprep.subr.mxu0 0.0
      %3188 = vmatpush1.xpose.msra.mxu0 %v3133
      %3189 = vmatprep.subr.mxu0 0.0
      %3190 = vmatpush1.xpose.msra.mxu0 %v3131
      %3191 = vmatprep.subr.mxu0 0.0
      %3192 = vmatpush1.xpose.msra.mxu0 %v3129
      %3193 = vmatprep.subr.mxu0 0.0
      %3194 = vmatpush2.xpose.msra.mxu0 0.0
      %3195 = vmatprep.subr.mxu0 0.0
      %3196 = vmatpush2.xpose.msra.mxu0 0.0
      %3197 = vmatprep.subr.mxu0 0.0
      %3198 = vmatpush2.xpose.msra.mxu0 0.0
      %3199 = vmatprep.subr.mxu0 0.0
      %3200 = vmatpush2.xpose.msra.mxu0 0.0
      %3201 = vmatprep.subr.mxu0 0.0
      %3202 = vmatpush2.xpose.msra.mxu0 0.0
      %3203 = vmatprep.subr.mxu0 0.0
      %3204 = vmatpush2.xpose.msra.mxu0 0.0
      %3205 = vmatprep.subr.mxu0 0.0
      %3206 = vmatpush2.xpose.msra.mxu0 0.0
      %3207 = vmatprep.subr.mxu0 0.0
      %3208 = vmatpush2.xpose.msra.mxu0 0.0
      %3209 = vmatprep.subr.mxu0 0.0
      %3210 = vmatpush2.xpose.msra.mxu0 0.0
      %3211 = vmatprep.subr.mxu0 0.0
      %3212 = vmatpush2.xpose.msra.mxu0 0.0
      %3213 = vmatprep.subr.mxu0 0.0
      %3214 = vmatpush2.xpose.msra.mxu0 0.0
      %3215 = vmatprep.subr.mxu0 0.0
      %3216 = vmatpush2.xpose.msra.mxu0 0.0
      %3217 = vmatprep.subr.mxu0 0.0
      %3218 = vmatpush2.xpose.msra.mxu0 0.0
      %3219 = vmatprep.subr.mxu0 0.0
      %3220 = vmatpush2.xpose.msra.mxu0 0.0
      %3221 = vmatprep.subr.mxu0 0.0
      %3222 = vmatpush2.xpose.msra.mxu0 0.0
      %3223 = vmatprep.subr.mxu0 0.0
      %3224 = vmatpush2.xpose.msra.mxu0 0.0
      %3225 = vmatprep.mubr.f32.mxu0 0.0
      %3226 = vmatmul.mubr.f32.gmra.mxu0 %v2824
      %v3227 = vpop.f32.mrf.mxu0
      %v3228 = vadd.f32 %v3081, %v3227
      %v3229 = vpop.f32.mrf.mxu0
      %3230 = vmatprep.mubr.f32.mxu0 0.0
      %3231 = vmatmul.mubr.f32.gmra.mxu0 %v2826
      %v3232 = vpop.f32.mrf.mxu0
      %v3233 = vadd.f32 %v3082, %v3232
      %v3234 = vpop.f32.mrf.mxu0
      %3235 = vmatprep.mubr.f32.mxu0 0.0
      %3236 = vmatmul.mubr.f32.gmra.mxu0 %v2828
      %v3237 = vpop.f32.mrf.mxu0
      %v3238 = vadd.f32 %v3083, %v3237
      %v3239 = vpop.f32.mrf.mxu0
      %3240 = vmatprep.mubr.f32.mxu0 0.0
      %3241 = vmatmul.mubr.f32.gmra.mxu0 %v2830
      %v3242 = vpop.f32.mrf.mxu0
      %v3243 = vadd.f32 %v3084, %v3242
      %v3244 = vpop.f32.mrf.mxu0
      %3245 = vmatprep.mubr.f32.mxu0 0.0
      %3246 = vmatmul.mubr.f32.gmra.mxu0 %v2832
      %v3247 = vpop.f32.mrf.mxu0
      %v3248 = vadd.f32 %v3085, %v3247
      %v3249 = vpop.f32.mrf.mxu0
      %3250 = vmatprep.mubr.f32.mxu0 0.0
      %3251 = vmatmul.mubr.f32.gmra.mxu0 %v2834
      %v3252 = vpop.f32.mrf.mxu0
      %v3253 = vadd.f32 %v3086, %v3252
      %v3254 = vpop.f32.mrf.mxu0
      %3255 = vmatprep.mubr.f32.mxu0 0.0
      %3256 = vmatmul.mubr.f32.gmra.mxu0 %v2836
      %v3257 = vpop.f32.mrf.mxu0
      %v3258 = vadd.f32 %v3087, %v3257
      %v3259 = vpop.f32.mrf.mxu0
      %3260 = vmatprep.mubr.f32.mxu0 0.0
      %3261 = vmatmul.mubr.f32.gmra.mxu0 %v2838
      %v3262 = vpop.f32.mrf.mxu0
      %v3263 = vadd.f32 %v3088, %v3262
      %v3264 = vpop.f32.mrf.mxu0
      %3265 = vmatprep.mubr.f32.mxu0 0.0
      %3266 = vmatmul.mubr.f32.gmra.mxu0 %v2840
      %v3267 = vpop.f32.mrf.mxu0
      %v3268 = vadd.f32 %v3089, %v3267
      %v3269 = vpop.f32.mrf.mxu0
      %3270 = vmatprep.mubr.f32.mxu0 0.0
      %3271 = vmatmul.mubr.f32.gmra.mxu0 %v2842
      %v3272 = vpop.f32.mrf.mxu0
      %v3273 = vadd.f32 %v3090, %v3272
      %v3274 = vpop.f32.mrf.mxu0
      %3275 = vmatprep.mubr.f32.mxu0 0.0
      %3276 = vmatmul.mubr.f32.gmra.mxu0 %v2844
      %v3277 = vpop.f32.mrf.mxu0
      %v3278 = vadd.f32 %v3091, %v3277
      %v3279 = vpop.f32.mrf.mxu0
      %3280 = vmatprep.mubr.f32.mxu0 0.0
      %3281 = vmatmul.mubr.f32.gmra.mxu0 %v2846
      %v3282 = vpop.f32.mrf.mxu0
      %v3283 = vadd.f32 %v3092, %v3282
      %v3284 = vpop.f32.mrf.mxu0
      %3285 = vmatprep.mubr.f32.mxu0 0.0
      %3286 = vmatmul.mubr.f32.gmra.mxu0 %v2848
      %v3287 = vpop.f32.mrf.mxu0
      %v3288 = vadd.f32 %v3093, %v3287
      %v3289 = vpop.f32.mrf.mxu0
      %3290 = vmatprep.mubr.f32.mxu0 0.0
      %3291 = vmatmul.mubr.f32.gmra.mxu0 %v2850
      %v3292 = vpop.f32.mrf.mxu0
      %v3293 = vadd.f32 %v3094, %v3292
      %v3294 = vpop.f32.mrf.mxu0
      %3295 = vmatprep.mubr.f32.mxu0 0.0
      %3296 = vmatmul.mubr.f32.gmra.mxu0 %v2852
      %v3297 = vpop.f32.mrf.mxu0
      %v3298 = vadd.f32 %v3095, %v3297
      %v3299 = vpop.f32.mrf.mxu0
      %3300 = vmatprep.mubr.f32.mxu0 0.0
      %3301 = vmatmul.mubr.f32.gmra.mxu0 %v2854
      %v3302 = vpop.f32.mrf.mxu0
      %v3303 = vadd.f32 %v3096, %v3302
      %v3304 = vpop.f32.mrf.mxu0
      %3305 = vdwg.mxu0
      %3306 = vset.pattern.permute.xlu0 1
      %3307 = vperm.xlu0 %3306, %v2923
      %v3308 = vpop.permute.xlu0 %3307
      %3310 = vset.pattern.permute.xlu0 1
      %3311 = vperm.xlu0 %3310, %v2928
      %v3312 = vpop.permute.xlu0 %3311
      %3314 = vset.pattern.permute.xlu0 1
      %3315 = vperm.xlu0 %3314, %v2933
      %v3316 = vpop.permute.xlu0 %3315
      %3318 = vset.pattern.permute.xlu0 1
      %3319 = vperm.xlu0 %3318, %v2938
      %v3320 = vpop.permute.xlu0 %3319
      %3322 = vset.pattern.permute.xlu0 1
      %3323 = vperm.xlu0 %3322, %v2943
      %v3324 = vpop.permute.xlu0 %3323
      %3326 = vset.pattern.permute.xlu0 1
      %3327 = vperm.xlu0 %3326, %v2948
      %v3328 = vpop.permute.xlu0 %3327
      %3330 = vset.pattern.permute.xlu0 1
      %3331 = vperm.xlu0 %3330, %v2953
      %v3332 = vpop.permute.xlu0 %3331
      %3334 = vset.pattern.permute.xlu0 1
      %3335 = vperm.xlu0 %3334, %v2958
      %v3336 = vpop.permute.xlu0 %3335
      %3338 = vset.pattern.permute.xlu0 1
      %3339 = vperm.xlu0 %3338, %v2963
      %v3340 = vpop.permute.xlu0 %3339
      %3342 = vset.pattern.permute.xlu0 1
      %3343 = vperm.xlu0 %3342, %v2968
      %v3344 = vpop.permute.xlu0 %3343
      %3346 = vset.pattern.permute.xlu0 1
      %3347 = vperm.xlu0 %3346, %v2973
      %v3348 = vpop.permute.xlu0 %3347
      %3350 = vset.pattern.permute.xlu0 1
      %3351 = vperm.xlu0 %3350, %v2978
      %v3352 = vpop.permute.xlu0 %3351
      %3354 = vset.pattern.permute.xlu0 1
      %3355 = vperm.xlu0 %3354, %v2983
      %v3356 = vpop.permute.xlu0 %3355
      %3358 = vset.pattern.permute.xlu0 1
      %3359 = vperm.xlu0 %3358, %v2988
      %v3360 = vpop.permute.xlu0 %3359
      %3362 = vset.pattern.permute.xlu0 1
      %3363 = vperm.xlu0 %3362, %v2993
      %v3364 = vpop.permute.xlu0 %3363
      %3366 = vset.pattern.permute.xlu0 1
      %3367 = vperm.xlu0 %3366, %v2998
      %v3368 = vpop.permute.xlu0 %3367
      %v3370 = vsel %vm265, %v3308, 0.0
      %v3371 = vsel %vm266, %v3312, 0.0
      %v3372 = vsel %vm267, %v3316, 0.0
      %v3373 = vsel %vm268, %v3320, 0.0
      %v3374 = vsel %vm269, %v3324, 0.0
      %v3375 = vsel %vm270, %v3328, 0.0
      %v3376 = vsel %vm271, %v3332, 0.0
      %v3377 = vsel %vm272, %v3336, 0.0
      %v3378 = vsel %vm273, %v3340, 0.0
      %v3379 = vsel %vm274, %v3344, 0.0
      %v3380 = vsel %vm275, %v3348, 0.0
      %v3381 = vsel %vm276, %v3352, 0.0
      %v3382 = vsel %vm277, %v3356, 0.0
      %v3383 = vsel %vm278, %v3360, 0.0
      %v3384 = vsel %vm279, %v3364, 0.0
      %v3385 = vsel %vm280, %v3368, 0.0
      %v3386 = vadd.f32 %v3228, %v3370
      %v3387 = vadd.f32 %v3233, %v3371
      %v3388 = vadd.f32 %v3238, %v3372
      %v3389 = vadd.f32 %v3243, %v3373
      %v3390 = vadd.f32 %v3248, %v3374
      %v3391 = vadd.f32 %v3253, %v3375
      %v3392 = vadd.f32 %v3258, %v3376
      %v3393 = vadd.f32 %v3263, %v3377
      %v3394 = vadd.f32 %v3268, %v3378
      %v3395 = vadd.f32 %v3273, %v3379
      %v3396 = vadd.f32 %v3278, %v3380
      %v3397 = vadd.f32 %v3283, %v3381
      %v3398 = vadd.f32 %v3288, %v3382
      %v3399 = vadd.f32 %v3293, %v3383
      %v3400 = vadd.f32 %v3298, %v3384
      %v3401 = vadd.f32 %v3303, %v3385
      %3402 = vset.pattern.permute.xlu0 2
      %3403 = vperm.xlu0 %3402, %v2923
      %v3404 = vpop.permute.xlu0 %3403
      %3406 = vset.pattern.permute.xlu0 2
      %3407 = vperm.xlu0 %3406, %v2928
      %v3408 = vpop.permute.xlu0 %3407
      %3410 = vset.pattern.permute.xlu0 2
      %3411 = vperm.xlu0 %3410, %v2933
      %v3412 = vpop.permute.xlu0 %3411
      %3414 = vset.pattern.permute.xlu0 2
      %3415 = vperm.xlu0 %3414, %v2938
      %v3416 = vpop.permute.xlu0 %3415
      %3418 = vset.pattern.permute.xlu0 2
      %3419 = vperm.xlu0 %3418, %v2943
      %v3420 = vpop.permute.xlu0 %3419
      %3422 = vset.pattern.permute.xlu0 2
      %3423 = vperm.xlu0 %3422, %v2948
      %v3424 = vpop.permute.xlu0 %3423
      %3426 = vset.pattern.permute.xlu0 2
      %3427 = vperm.xlu0 %3426, %v2953
      %v3428 = vpop.permute.xlu0 %3427
      %3430 = vset.pattern.permute.xlu0 2
      %3431 = vperm.xlu0 %3430, %v2958
      %v3432 = vpop.permute.xlu0 %3431
      %3434 = vset.pattern.permute.xlu0 2
      %3435 = vperm.xlu0 %3434, %v2963
      %v3436 = vpop.permute.xlu0 %3435
      %3438 = vset.pattern.permute.xlu0 2
      %3439 = vperm.xlu0 %3438, %v2968
      %v3440 = vpop.permute.xlu0 %3439
      %3442 = vset.pattern.permute.xlu0 2
      %3443 = vperm.xlu0 %3442, %v2973
      %v3444 = vpop.permute.xlu0 %3443
      %3446 = vset.pattern.permute.xlu0 2
      %3447 = vperm.xlu0 %3446, %v2978
      %v3448 = vpop.permute.xlu0 %3447
      %3450 = vset.pattern.permute.xlu0 2
      %3451 = vperm.xlu0 %3450, %v2983
      %v3452 = vpop.permute.xlu0 %3451
      %3454 = vset.pattern.permute.xlu0 2
      %3455 = vperm.xlu0 %3454, %v2988
      %v3456 = vpop.permute.xlu0 %3455
      %3458 = vset.pattern.permute.xlu0 2
      %3459 = vperm.xlu0 %3458, %v2993
      %v3460 = vpop.permute.xlu0 %3459
      %3462 = vset.pattern.permute.xlu0 2
      %3463 = vperm.xlu0 %3462, %v2998
      %v3464 = vpop.permute.xlu0 %3463
      %v3466 = vsel %vm281, %v3404, 0.0
      %v3467 = vsel %vm282, %v3408, 0.0
      %v3468 = vsel %vm283, %v3412, 0.0
      %v3469 = vsel %vm284, %v3416, 0.0
      %v3470 = vsel %vm285, %v3420, 0.0
      %v3471 = vsel %vm286, %v3424, 0.0
      %v3472 = vsel %vm287, %v3428, 0.0
      %v3473 = vsel %vm288, %v3432, 0.0
      %v3474 = vsel %vm289, %v3436, 0.0
      %v3475 = vsel %vm290, %v3440, 0.0
      %v3476 = vsel %vm291, %v3444, 0.0
      %v3477 = vsel %vm292, %v3448, 0.0
      %v3478 = vsel %vm293, %v3452, 0.0
      %v3479 = vsel %vm294, %v3456, 0.0
      %v3480 = vsel %vm295, %v3460, 0.0
      %v3481 = vsel %vm296, %v3464, 0.0
      %v3482 = vadd.f32 %v3386, %v3466
      %v3483 = vadd.f32 %v3387, %v3467
      %v3484 = vadd.f32 %v3388, %v3468
      %v3485 = vadd.f32 %v3389, %v3469
      %v3486 = vadd.f32 %v3390, %v3470
      %v3487 = vadd.f32 %v3391, %v3471
      %v3488 = vadd.f32 %v3392, %v3472
      %v3489 = vadd.f32 %v3393, %v3473
      %v3490 = vadd.f32 %v3394, %v3474
      %v3491 = vadd.f32 %v3395, %v3475
      %v3492 = vadd.f32 %v3396, %v3476
      %v3493 = vadd.f32 %v3397, %v3477
      %v3494 = vadd.f32 %v3398, %v3478
      %v3495 = vadd.f32 %v3399, %v3479
      %v3496 = vadd.f32 %v3400, %v3480
      %v3497 = vadd.f32 %v3401, %v3481
      %3498 = vset.pattern.permute.xlu0 3
      %3499 = vperm.xlu0 %3498, %v2923
      %v3500 = vpop.permute.xlu0 %3499
      %3502 = vset.pattern.permute.xlu0 3
      %3503 = vperm.xlu0 %3502, %v2928
      %v3504 = vpop.permute.xlu0 %3503
      %3506 = vset.pattern.permute.xlu0 3
      %3507 = vperm.xlu0 %3506, %v2933
      %v3508 = vpop.permute.xlu0 %3507
      %3510 = vset.pattern.permute.xlu0 3
      %3511 = vperm.xlu0 %3510, %v2938
      %v3512 = vpop.permute.xlu0 %3511
      %3514 = vset.pattern.permute.xlu0 3
      %3515 = vperm.xlu0 %3514, %v2943
      %v3516 = vpop.permute.xlu0 %3515
      %3518 = vset.pattern.permute.xlu0 3
      %3519 = vperm.xlu0 %3518, %v2948
      %v3520 = vpop.permute.xlu0 %3519
      %3522 = vset.pattern.permute.xlu0 3
      %3523 = vperm.xlu0 %3522, %v2953
      %v3524 = vpop.permute.xlu0 %3523
      %3526 = vset.pattern.permute.xlu0 3
      %3527 = vperm.xlu0 %3526, %v2958
      %v3528 = vpop.permute.xlu0 %3527
      %3530 = vset.pattern.permute.xlu0 3
      %3531 = vperm.xlu0 %3530, %v2963
      %v3532 = vpop.permute.xlu0 %3531
      %3534 = vset.pattern.permute.xlu0 3
      %3535 = vperm.xlu0 %3534, %v2968
      %v3536 = vpop.permute.xlu0 %3535
      %3538 = vset.pattern.permute.xlu0 3
      %3539 = vperm.xlu0 %3538, %v2973
      %v3540 = vpop.permute.xlu0 %3539
      %3542 = vset.pattern.permute.xlu0 3
      %3543 = vperm.xlu0 %3542, %v2978
      %v3544 = vpop.permute.xlu0 %3543
      %3546 = vset.pattern.permute.xlu0 3
      %3547 = vperm.xlu0 %3546, %v2983
      %v3548 = vpop.permute.xlu0 %3547
      %3550 = vset.pattern.permute.xlu0 3
      %3551 = vperm.xlu0 %3550, %v2988
      %v3552 = vpop.permute.xlu0 %3551
      %3554 = vset.pattern.permute.xlu0 3
      %3555 = vperm.xlu0 %3554, %v2993
      %v3556 = vpop.permute.xlu0 %3555
      %3558 = vset.pattern.permute.xlu0 3
      %3559 = vperm.xlu0 %3558, %v2998
      %v3560 = vpop.permute.xlu0 %3559
      %v3562 = vsel %vm297, %v3500, 0.0
      %v3563 = vsel %vm298, %v3504, 0.0
      %v3564 = vsel %vm299, %v3508, 0.0
      %v3565 = vsel %vm300, %v3512, 0.0
      %v3566 = vsel %vm301, %v3516, 0.0
      %v3567 = vsel %vm302, %v3520, 0.0
      %v3568 = vsel %vm303, %v3524, 0.0
      %v3569 = vsel %vm304, %v3528, 0.0
      %v3570 = vsel %vm305, %v3532, 0.0
      %v3571 = vsel %vm306, %v3536, 0.0
      %v3572 = vsel %vm307, %v3540, 0.0
      %v3573 = vsel %vm308, %v3544, 0.0
      %v3574 = vsel %vm309, %v3548, 0.0
      %v3575 = vsel %vm310, %v3552, 0.0
      %v3576 = vsel %vm311, %v3556, 0.0
      %v3577 = vsel %vm312, %v3560, 0.0
      %v3578 = vadd.f32 %v3482, %v3562
      %v3579 = vadd.f32 %v3483, %v3563
      %v3580 = vadd.f32 %v3484, %v3564
      %v3581 = vadd.f32 %v3485, %v3565
      %v3582 = vadd.f32 %v3486, %v3566
      %v3583 = vadd.f32 %v3487, %v3567
      %v3584 = vadd.f32 %v3488, %v3568
      %v3585 = vadd.f32 %v3489, %v3569
      %v3586 = vadd.f32 %v3490, %v3570
      %v3587 = vadd.f32 %v3491, %v3571
      %v3588 = vadd.f32 %v3492, %v3572
      %v3589 = vadd.f32 %v3493, %v3573
      %v3590 = vadd.f32 %v3494, %v3574
      %v3591 = vadd.f32 %v3495, %v3575
      %v3592 = vadd.f32 %v3496, %v3576
      %v3593 = vadd.f32 %v3497, %v3577
      %3594 = vset.pattern.permute.xlu0 4
      %3595 = vperm.xlu0 %3594, %v2923
      %v3596 = vpop.permute.xlu0 %3595
      %3598 = vset.pattern.permute.xlu0 4
      %3599 = vperm.xlu0 %3598, %v2928
      %v3600 = vpop.permute.xlu0 %3599
      %3602 = vset.pattern.permute.xlu0 4
      %3603 = vperm.xlu0 %3602, %v2933
      %v3604 = vpop.permute.xlu0 %3603
      %3606 = vset.pattern.permute.xlu0 4
      %3607 = vperm.xlu0 %3606, %v2938
      %v3608 = vpop.permute.xlu0 %3607
      %3610 = vset.pattern.permute.xlu0 4
      %3611 = vperm.xlu0 %3610, %v2943
      %v3612 = vpop.permute.xlu0 %3611
      %3614 = vset.pattern.permute.xlu0 4
      %3615 = vperm.xlu0 %3614, %v2948
      %v3616 = vpop.permute.xlu0 %3615
      %3618 = vset.pattern.permute.xlu0 4
      %3619 = vperm.xlu0 %3618, %v2953
      %v3620 = vpop.permute.xlu0 %3619
      %3622 = vset.pattern.permute.xlu0 4
      %3623 = vperm.xlu0 %3622, %v2958
      %v3624 = vpop.permute.xlu0 %3623
      %3626 = vset.pattern.permute.xlu0 4
      %3627 = vperm.xlu0 %3626, %v2963
      %v3628 = vpop.permute.xlu0 %3627
      %3630 = vset.pattern.permute.xlu0 4
      %3631 = vperm.xlu0 %3630, %v2968
      %v3632 = vpop.permute.xlu0 %3631
      %3634 = vset.pattern.permute.xlu0 4
      %3635 = vperm.xlu0 %3634, %v2973
      %v3636 = vpop.permute.xlu0 %3635
      %3638 = vset.pattern.permute.xlu0 4
      %3639 = vperm.xlu0 %3638, %v2978
      %v3640 = vpop.permute.xlu0 %3639
      %3642 = vset.pattern.permute.xlu0 4
      %3643 = vperm.xlu0 %3642, %v2983
      %v3644 = vpop.permute.xlu0 %3643
      %3646 = vset.pattern.permute.xlu0 4
      %3647 = vperm.xlu0 %3646, %v2988
      %v3648 = vpop.permute.xlu0 %3647
      %3650 = vset.pattern.permute.xlu0 4
      %3651 = vperm.xlu0 %3650, %v2993
      %v3652 = vpop.permute.xlu0 %3651
      %3654 = vset.pattern.permute.xlu0 4
      %3655 = vperm.xlu0 %3654, %v2998
      %v3656 = vpop.permute.xlu0 %3655
      %v3658 = vsel %vm313, %v3596, 0.0
      %v3659 = vsel %vm314, %v3600, 0.0
      %v3660 = vsel %vm315, %v3604, 0.0
      %v3661 = vsel %vm316, %v3608, 0.0
      %v3662 = vsel %vm317, %v3612, 0.0
      %v3663 = vsel %vm318, %v3616, 0.0
      %v3664 = vsel %vm319, %v3620, 0.0
      %v3665 = vsel %vm320, %v3624, 0.0
      %v3666 = vsel %vm321, %v3628, 0.0
      %v3667 = vsel %vm322, %v3632, 0.0
      %v3668 = vsel %vm323, %v3636, 0.0
      %v3669 = vsel %vm324, %v3640, 0.0
      %v3670 = vsel %vm325, %v3644, 0.0
      %v3671 = vsel %vm326, %v3648, 0.0
      %v3672 = vsel %vm327, %v3652, 0.0
      %v3673 = vsel %vm328, %v3656, 0.0
      %v3674 = vadd.f32 %v3578, %v3658
      %v3675 = vadd.f32 %v3579, %v3659
      %v3676 = vadd.f32 %v3580, %v3660
      %v3677 = vadd.f32 %v3581, %v3661
      %v3678 = vadd.f32 %v3582, %v3662
      %v3679 = vadd.f32 %v3583, %v3663
      %v3680 = vadd.f32 %v3584, %v3664
      %v3681 = vadd.f32 %v3585, %v3665
      %v3682 = vadd.f32 %v3586, %v3666
      %v3683 = vadd.f32 %v3587, %v3667
      %v3684 = vadd.f32 %v3588, %v3668
      %v3685 = vadd.f32 %v3589, %v3669
      %v3686 = vadd.f32 %v3590, %v3670
      %v3687 = vadd.f32 %v3591, %v3671
      %v3688 = vadd.f32 %v3592, %v3672
      %v3689 = vadd.f32 %v3593, %v3673
      %3690 = vset.pattern.permute.xlu0 5
      %3691 = vperm.xlu0 %3690, %v2923
      %v3692 = vpop.permute.xlu0 %3691
      %3694 = vset.pattern.permute.xlu0 5
      %3695 = vperm.xlu0 %3694, %v2928
      %v3696 = vpop.permute.xlu0 %3695
      %3698 = vset.pattern.permute.xlu0 5
      %3699 = vperm.xlu0 %3698, %v2933
      %v3700 = vpop.permute.xlu0 %3699
      %3702 = vset.pattern.permute.xlu0 5
      %3703 = vperm.xlu0 %3702, %v2938
      %v3704 = vpop.permute.xlu0 %3703
      %3706 = vset.pattern.permute.xlu0 5
      %3707 = vperm.xlu0 %3706, %v2943
      %v3708 = vpop.permute.xlu0 %3707
      %3710 = vset.pattern.permute.xlu0 5
      %3711 = vperm.xlu0 %3710, %v2948
      %v3712 = vpop.permute.xlu0 %3711
      %3714 = vset.pattern.permute.xlu0 5
      %3715 = vperm.xlu0 %3714, %v2953
      %v3716 = vpop.permute.xlu0 %3715
      %3718 = vset.pattern.permute.xlu0 5
      %3719 = vperm.xlu0 %3718, %v2958
      %v3720 = vpop.permute.xlu0 %3719
      %3722 = vset.pattern.permute.xlu0 5
      %3723 = vperm.xlu0 %3722, %v2963
      %v3724 = vpop.permute.xlu0 %3723
      %3726 = vset.pattern.permute.xlu0 5
      %3727 = vperm.xlu0 %3726, %v2968
      %v3728 = vpop.permute.xlu0 %3727
      %3730 = vset.pattern.permute.xlu0 5
      %3731 = vperm.xlu0 %3730, %v2973
      %v3732 = vpop.permute.xlu0 %3731
      %3734 = vset.pattern.permute.xlu0 5
      %3735 = vperm.xlu0 %3734, %v2978
      %v3736 = vpop.permute.xlu0 %3735
      %3738 = vset.pattern.permute.xlu0 5
      %3739 = vperm.xlu0 %3738, %v2983
      %v3740 = vpop.permute.xlu0 %3739
      %3742 = vset.pattern.permute.xlu0 5
      %3743 = vperm.xlu0 %3742, %v2988
      %v3744 = vpop.permute.xlu0 %3743
      %3746 = vset.pattern.permute.xlu0 5
      %3747 = vperm.xlu0 %3746, %v2993
      %v3748 = vpop.permute.xlu0 %3747
      %3750 = vset.pattern.permute.xlu0 5
      %3751 = vperm.xlu0 %3750, %v2998
      %v3752 = vpop.permute.xlu0 %3751
      %v3754 = vsel %vm329, %v3692, 0.0
      %v3755 = vsel %vm330, %v3696, 0.0
      %v3756 = vsel %vm331, %v3700, 0.0
      %v3757 = vsel %vm332, %v3704, 0.0
      %v3758 = vsel %vm333, %v3708, 0.0
      %v3759 = vsel %vm334, %v3712, 0.0
      %v3760 = vsel %vm335, %v3716, 0.0
      %v3761 = vsel %vm336, %v3720, 0.0
      %v3762 = vsel %vm337, %v3724, 0.0
      %v3763 = vsel %vm338, %v3728, 0.0
      %v3764 = vsel %vm339, %v3732, 0.0
      %v3765 = vsel %vm340, %v3736, 0.0
      %v3766 = vsel %vm341, %v3740, 0.0
      %v3767 = vsel %vm342, %v3744, 0.0
      %v3768 = vsel %vm343, %v3748, 0.0
      %v3769 = vsel %vm344, %v3752, 0.0
      %v3770 = vadd.f32 %v3674, %v3754
      %v3771 = vadd.f32 %v3675, %v3755
      %v3772 = vadd.f32 %v3676, %v3756
      %v3773 = vadd.f32 %v3677, %v3757
      %v3774 = vadd.f32 %v3678, %v3758
      %v3775 = vadd.f32 %v3679, %v3759
      %v3776 = vadd.f32 %v3680, %v3760
      %v3777 = vadd.f32 %v3681, %v3761
      %v3778 = vadd.f32 %v3682, %v3762
      %v3779 = vadd.f32 %v3683, %v3763
      %v3780 = vadd.f32 %v3684, %v3764
      %v3781 = vadd.f32 %v3685, %v3765
      %v3782 = vadd.f32 %v3686, %v3766
      %v3783 = vadd.f32 %v3687, %v3767
      %v3784 = vadd.f32 %v3688, %v3768
      %v3785 = vadd.f32 %v3689, %v3769
      %3786 = vset.pattern.permute.xlu0 6
      %3787 = vperm.xlu0 %3786, %v2923
      %v3788 = vpop.permute.xlu0 %3787
      %3790 = vset.pattern.permute.xlu0 6
      %3791 = vperm.xlu0 %3790, %v2928
      %v3792 = vpop.permute.xlu0 %3791
      %3794 = vset.pattern.permute.xlu0 6
      %3795 = vperm.xlu0 %3794, %v2933
      %v3796 = vpop.permute.xlu0 %3795
      %3798 = vset.pattern.permute.xlu0 6
      %3799 = vperm.xlu0 %3798, %v2938
      %v3800 = vpop.permute.xlu0 %3799
      %3802 = vset.pattern.permute.xlu0 6
      %3803 = vperm.xlu0 %3802, %v2943
      %v3804 = vpop.permute.xlu0 %3803
      %3806 = vset.pattern.permute.xlu0 6
      %3807 = vperm.xlu0 %3806, %v2948
      %v3808 = vpop.permute.xlu0 %3807
      %3810 = vset.pattern.permute.xlu0 6
      %3811 = vperm.xlu0 %3810, %v2953
      %v3812 = vpop.permute.xlu0 %3811
      %3814 = vset.pattern.permute.xlu0 6
      %3815 = vperm.xlu0 %3814, %v2958
      %v3816 = vpop.permute.xlu0 %3815
      %3818 = vset.pattern.permute.xlu0 6
      %3819 = vperm.xlu0 %3818, %v2963
      %v3820 = vpop.permute.xlu0 %3819
      %3822 = vset.pattern.permute.xlu0 6
      %3823 = vperm.xlu0 %3822, %v2968
      %v3824 = vpop.permute.xlu0 %3823
      %3826 = vset.pattern.permute.xlu0 6
      %3827 = vperm.xlu0 %3826, %v2973
      %v3828 = vpop.permute.xlu0 %3827
      %3830 = vset.pattern.permute.xlu0 6
      %3831 = vperm.xlu0 %3830, %v2978
      %v3832 = vpop.permute.xlu0 %3831
      %3834 = vset.pattern.permute.xlu0 6
      %3835 = vperm.xlu0 %3834, %v2983
      %v3836 = vpop.permute.xlu0 %3835
      %3838 = vset.pattern.permute.xlu0 6
      %3839 = vperm.xlu0 %3838, %v2988
      %v3840 = vpop.permute.xlu0 %3839
      %3842 = vset.pattern.permute.xlu0 6
      %3843 = vperm.xlu0 %3842, %v2993
      %v3844 = vpop.permute.xlu0 %3843
      %3846 = vset.pattern.permute.xlu0 6
      %3847 = vperm.xlu0 %3846, %v2998
      %v3848 = vpop.permute.xlu0 %3847
      %v3850 = vsel %vm345, %v3788, 0.0
      %v3851 = vsel %vm346, %v3792, 0.0
      %v3852 = vsel %vm347, %v3796, 0.0
      %v3853 = vsel %vm348, %v3800, 0.0
      %v3854 = vsel %vm349, %v3804, 0.0
      %v3855 = vsel %vm350, %v3808, 0.0
      %v3856 = vsel %vm351, %v3812, 0.0
      %v3857 = vsel %vm352, %v3816, 0.0
      %v3858 = vsel %vm353, %v3820, 0.0
      %v3859 = vsel %vm354, %v3824, 0.0
      %v3860 = vsel %vm355, %v3828, 0.0
      %v3861 = vsel %vm356, %v3832, 0.0
      %v3862 = vsel %vm357, %v3836, 0.0
      %v3863 = vsel %vm358, %v3840, 0.0
      %v3864 = vsel %vm359, %v3844, 0.0
      %v3865 = vsel %vm360, %v3848, 0.0
      %v3866 = vadd.f32 %v3770, %v3850
      %v3867 = vadd.f32 %v3771, %v3851
      %v3868 = vadd.f32 %v3772, %v3852
      %v3869 = vadd.f32 %v3773, %v3853
      %v3870 = vadd.f32 %v3774, %v3854
      %v3871 = vadd.f32 %v3775, %v3855
      %v3872 = vadd.f32 %v3776, %v3856
      %v3873 = vadd.f32 %v3777, %v3857
      %v3874 = vadd.f32 %v3778, %v3858
      %v3875 = vadd.f32 %v3779, %v3859
      %v3876 = vadd.f32 %v3780, %v3860
      %v3877 = vadd.f32 %v3781, %v3861
      %v3878 = vadd.f32 %v3782, %v3862
      %v3879 = vadd.f32 %v3783, %v3863
      %v3880 = vadd.f32 %v3784, %v3864
      %v3881 = vadd.f32 %v3785, %v3865
      %3882 = vset.pattern.permute.xlu0 7
      %3883 = vperm.xlu0 %3882, %v2923
      %v3884 = vpop.permute.xlu0 %3883
      %3886 = vset.pattern.permute.xlu0 7
      %3887 = vperm.xlu0 %3886, %v2928
      %v3888 = vpop.permute.xlu0 %3887
      %3890 = vset.pattern.permute.xlu0 7
      %3891 = vperm.xlu0 %3890, %v2933
      %v3892 = vpop.permute.xlu0 %3891
      %3894 = vset.pattern.permute.xlu0 7
      %3895 = vperm.xlu0 %3894, %v2938
      %v3896 = vpop.permute.xlu0 %3895
      %3898 = vset.pattern.permute.xlu0 7
      %3899 = vperm.xlu0 %3898, %v2943
      %v3900 = vpop.permute.xlu0 %3899
      %3902 = vset.pattern.permute.xlu0 7
      %3903 = vperm.xlu0 %3902, %v2948
      %v3904 = vpop.permute.xlu0 %3903
      %3906 = vset.pattern.permute.xlu0 7
      %3907 = vperm.xlu0 %3906, %v2953
      %v3908 = vpop.permute.xlu0 %3907
      %3910 = vset.pattern.permute.xlu0 7
      %3911 = vperm.xlu0 %3910, %v2958
      %v3912 = vpop.permute.xlu0 %3911
      %3914 = vset.pattern.permute.xlu0 7
      %3915 = vperm.xlu0 %3914, %v2963
      %v3916 = vpop.permute.xlu0 %3915
      %3918 = vset.pattern.permute.xlu0 7
      %3919 = vperm.xlu0 %3918, %v2968
      %v3920 = vpop.permute.xlu0 %3919
      %3922 = vset.pattern.permute.xlu0 7
      %3923 = vperm.xlu0 %3922, %v2973
      %v3924 = vpop.permute.xlu0 %3923
      %3926 = vset.pattern.permute.xlu0 7
      %3927 = vperm.xlu0 %3926, %v2978
      %v3928 = vpop.permute.xlu0 %3927
      %3930 = vset.pattern.permute.xlu0 7
      %3931 = vperm.xlu0 %3930, %v2983
      %v3932 = vpop.permute.xlu0 %3931
      %3934 = vset.pattern.permute.xlu0 7
      %3935 = vperm.xlu0 %3934, %v2988
      %v3936 = vpop.permute.xlu0 %3935
      %3938 = vset.pattern.permute.xlu0 7
      %3939 = vperm.xlu0 %3938, %v2993
      %v3940 = vpop.permute.xlu0 %3939
      %3942 = vset.pattern.permute.xlu0 7
      %3943 = vperm.xlu0 %3942, %v2998
      %v3944 = vpop.permute.xlu0 %3943
      %v3946 = vsel %vm361, %v3884, 0.0
      %v3947 = vsel %vm362, %v3888, 0.0
      %v3948 = vsel %vm363, %v3892, 0.0
      %v3949 = vsel %vm364, %v3896, 0.0
      %v3950 = vsel %vm365, %v3900, 0.0
      %v3951 = vsel %vm366, %v3904, 0.0
      %v3952 = vsel %vm367, %v3908, 0.0
      %v3953 = vsel %vm368, %v3912, 0.0
      %v3954 = vsel %vm369, %v3916, 0.0
      %v3955 = vsel %vm370, %v3920, 0.0
      %v3956 = vsel %vm371, %v3924, 0.0
      %v3957 = vsel %vm372, %v3928, 0.0
      %v3958 = vsel %vm373, %v3932, 0.0
      %v3959 = vsel %vm374, %v3936, 0.0
      %v3960 = vsel %vm375, %v3940, 0.0
      %v3961 = vsel %vm376, %v3944, 0.0
      %v3962 = vadd.f32 %v3866, %v3946
      %v3963 = vadd.f32 %v3867, %v3947
      %v3964 = vadd.f32 %v3868, %v3948
      %v3965 = vadd.f32 %v3869, %v3949
      %v3966 = vadd.f32 %v3870, %v3950
      %v3967 = vadd.f32 %v3871, %v3951
      %v3968 = vadd.f32 %v3872, %v3952
      %v3969 = vadd.f32 %v3873, %v3953
      %v3970 = vadd.f32 %v3874, %v3954
      %v3971 = vadd.f32 %v3875, %v3955
      %v3972 = vadd.f32 %v3876, %v3956
      %v3973 = vadd.f32 %v3877, %v3957
      %v3974 = vadd.f32 %v3878, %v3958
      %v3975 = vadd.f32 %v3879, %v3959
      %v3976 = vadd.f32 %v3880, %v3960
      %v3977 = vadd.f32 %v3881, %v3961
      %3978 = vset.pattern.permute.xlu0 8
      %3979 = vperm.xlu0 %3978, %v2923
      %v3980 = vpop.permute.xlu0 %3979
      %3982 = vset.pattern.permute.xlu0 8
      %3983 = vperm.xlu0 %3982, %v2928
      %v3984 = vpop.permute.xlu0 %3983
      %3986 = vset.pattern.permute.xlu0 8
      %3987 = vperm.xlu0 %3986, %v2933
      %v3988 = vpop.permute.xlu0 %3987
      %3990 = vset.pattern.permute.xlu0 8
      %3991 = vperm.xlu0 %3990, %v2938
      %v3992 = vpop.permute.xlu0 %3991
      %3994 = vset.pattern.permute.xlu0 8
      %3995 = vperm.xlu0 %3994, %v2943
      %v3996 = vpop.permute.xlu0 %3995
      %3998 = vset.pattern.permute.xlu0 8
      %3999 = vperm.xlu0 %3998, %v2948
      %v4000 = vpop.permute.xlu0 %3999
      %4002 = vset.pattern.permute.xlu0 8
      %4003 = vperm.xlu0 %4002, %v2953
      %v4004 = vpop.permute.xlu0 %4003
      %4006 = vset.pattern.permute.xlu0 8
      %4007 = vperm.xlu0 %4006, %v2958
      %v4008 = vpop.permute.xlu0 %4007
      %4010 = vset.pattern.permute.xlu0 8
      %4011 = vperm.xlu0 %4010, %v2963
      %v4012 = vpop.permute.xlu0 %4011
      %4014 = vset.pattern.permute.xlu0 8
      %4015 = vperm.xlu0 %4014, %v2968
      %v4016 = vpop.permute.xlu0 %4015
      %4018 = vset.pattern.permute.xlu0 8
      %4019 = vperm.xlu0 %4018, %v2973
      %v4020 = vpop.permute.xlu0 %4019
      %4022 = vset.pattern.permute.xlu0 8
      %4023 = vperm.xlu0 %4022, %v2978
      %v4024 = vpop.permute.xlu0 %4023
      %4026 = vset.pattern.permute.xlu0 8
      %4027 = vperm.xlu0 %4026, %v2983
      %v4028 = vpop.permute.xlu0 %4027
      %4030 = vset.pattern.permute.xlu0 8
      %4031 = vperm.xlu0 %4030, %v2988
      %v4032 = vpop.permute.xlu0 %4031
      %4034 = vset.pattern.permute.xlu0 8
      %4035 = vperm.xlu0 %4034, %v2993
      %v4036 = vpop.permute.xlu0 %4035
      %4038 = vset.pattern.permute.xlu0 8
      %4039 = vperm.xlu0 %4038, %v2998
      %v4040 = vpop.permute.xlu0 %4039
      %v4042 = vsel %vm377, %v3980, 0.0
      %v4043 = vsel %vm378, %v3984, 0.0
      %v4044 = vsel %vm379, %v3988, 0.0
      %v4045 = vsel %vm380, %v3992, 0.0
      %v4046 = vsel %vm381, %v3996, 0.0
      %v4047 = vsel %vm382, %v4000, 0.0
      %v4048 = vsel %vm383, %v4004, 0.0
      %v4049 = vsel %vm384, %v4008, 0.0
      %v4050 = vsel %vm385, %v4012, 0.0
      %v4051 = vsel %vm386, %v4016, 0.0
      %v4052 = vsel %vm387, %v4020, 0.0
      %v4053 = vsel %vm388, %v4024, 0.0
      %v4054 = vsel %vm389, %v4028, 0.0
      %v4055 = vsel %vm390, %v4032, 0.0
      %v4056 = vsel %vm391, %v4036, 0.0
      %v4057 = vsel %vm392, %v4040, 0.0
      %v4058 = vadd.f32 %v3962, %v4042
      %v4059 = vadd.f32 %v3963, %v4043
      %v4060 = vadd.f32 %v3964, %v4044
      %v4061 = vadd.f32 %v3965, %v4045
      %v4062 = vadd.f32 %v3966, %v4046
      %v4063 = vadd.f32 %v3967, %v4047
      %v4064 = vadd.f32 %v3968, %v4048
      %v4065 = vadd.f32 %v3969, %v4049
      %v4066 = vadd.f32 %v3970, %v4050
      %v4067 = vadd.f32 %v3971, %v4051
      %v4068 = vadd.f32 %v3972, %v4052
      %v4069 = vadd.f32 %v3973, %v4053
      %v4070 = vadd.f32 %v3974, %v4054
      %v4071 = vadd.f32 %v3975, %v4055
      %v4072 = vadd.f32 %v3976, %v4056
      %v4073 = vadd.f32 %v3977, %v4057
      %v4074 = vsel %vm1737, %v4058, -10000.0
      %v4075 = vsel %vm1737, %v4059, -10000.0
      %v4076 = vsel %vm1737, %v4060, -10000.0
      %v4077 = vsel %vm1737, %v4061, -10000.0
      %v4078 = vsel %vm1737, %v4062, -10000.0
      %v4079 = vsel %vm1737, %v4063, -10000.0
      %v4080 = vsel %vm1737, %v4064, -10000.0
      %v4081 = vsel %vm1737, %v4065, -10000.0
      %v4082 = vsel %vm1737, %v4066, -10000.0
      %v4083 = vsel %vm1737, %v4067, -10000.0
      %v4084 = vsel %vm1737, %v4068, -10000.0
      %v4085 = vsel %vm1737, %v4069, -10000.0
      %v4086 = vsel %vm1737, %v4070, -10000.0
      %v4087 = vsel %vm1737, %v4071, -10000.0
      %v4088 = vsel %vm1737, %v4072, -10000.0
      %v4089 = vsel %vm1737, %v4073, -10000.0
      %4090 = vmax.xlane.f32.xlu0 %v4074
      %v4091 = vpop.xlane.xlu0 %4090
      %4092 = vmax.xlane.f32.xlu0 %v4075
      %v4093 = vpop.xlane.xlu0 %4092
      %4094 = vmax.xlane.f32.xlu0 %v4076
      %v4095 = vpop.xlane.xlu0 %4094
      %4096 = vmax.xlane.f32.xlu0 %v4077
      %v4097 = vpop.xlane.xlu0 %4096
      %4098 = vmax.xlane.f32.xlu0 %v4078
      %v4099 = vpop.xlane.xlu0 %4098
      %4100 = vmax.xlane.f32.xlu0 %v4079
      %v4101 = vpop.xlane.xlu0 %4100
      %4102 = vmax.xlane.f32.xlu0 %v4080
      %v4103 = vpop.xlane.xlu0 %4102
      %4104 = vmax.xlane.f32.xlu0 %v4081
      %v4105 = vpop.xlane.xlu0 %4104
      %4106 = vmax.xlane.f32.xlu0 %v4082
      %v4107 = vpop.xlane.xlu0 %4106
      %4108 = vmax.xlane.f32.xlu0 %v4083
      %v4109 = vpop.xlane.xlu0 %4108
      %4110 = vmax.xlane.f32.xlu0 %v4084
      %v4111 = vpop.xlane.xlu0 %4110
      %4112 = vmax.xlane.f32.xlu0 %v4085
      %v4113 = vpop.xlane.xlu0 %4112
      %4114 = vmax.xlane.f32.xlu0 %v4086
      %v4115 = vpop.xlane.xlu0 %4114
      %4116 = vmax.xlane.f32.xlu0 %v4087
      %v4117 = vpop.xlane.xlu0 %4116
      %4118 = vmax.xlane.f32.xlu0 %v4088
      %v4119 = vpop.xlane.xlu0 %4118
      %4120 = vmax.xlane.f32.xlu0 %v4089
      %v4121 = vpop.xlane.xlu0 %4120
      %v4122 = vsub.f32 %v4074, %v4091
      %v4123 = vsub.f32 %v4075, %v4093
      %v4124 = vsub.f32 %v4076, %v4095
      %v4125 = vsub.f32 %v4077, %v4097
      %v4126 = vsub.f32 %v4078, %v4099
      %v4127 = vsub.f32 %v4079, %v4101
      %v4128 = vsub.f32 %v4080, %v4103
      %v4129 = vsub.f32 %v4081, %v4105
      %v4130 = vsub.f32 %v4082, %v4107
      %v4131 = vsub.f32 %v4083, %v4109
      %v4132 = vsub.f32 %v4084, %v4111
      %v4133 = vsub.f32 %v4085, %v4113
      %v4134 = vsub.f32 %v4086, %v4115
      %v4135 = vsub.f32 %v4087, %v4117
      %v4136 = vsub.f32 %v4088, %v4119
      %v4137 = vsub.f32 %v4089, %v4121
      %v4138 = vmul.f32 %v4122, 1.442695
      %v4139 = vpow.pop %v4138
      %v4140 = vmul.f32 %v4123, 1.442695
      %v4141 = vpow.pop %v4140
      %v4142 = vmul.f32 %v4124, 1.442695
      %v4143 = vpow.pop %v4142
      %v4144 = vmul.f32 %v4125, 1.442695
      %v4145 = vpow.pop %v4144
      %v4146 = vmul.f32 %v4126, 1.442695
      %v4147 = vpow.pop %v4146
      %v4148 = vmul.f32 %v4127, 1.442695
      %v4149 = vpow.pop %v4148
      %v4150 = vmul.f32 %v4128, 1.442695
      %v4151 = vpow.pop %v4150
      %v4152 = vmul.f32 %v4129, 1.442695
      %v4153 = vpow.pop %v4152
      %v4154 = vmul.f32 %v4130, 1.442695
      %v4155 = vpow.pop %v4154
      %v4156 = vmul.f32 %v4131, 1.442695
      %v4157 = vpow.pop %v4156
      %v4158 = vmul.f32 %v4132, 1.442695
      %v4159 = vpow.pop %v4158
      %v4160 = vmul.f32 %v4133, 1.442695
      %v4161 = vpow.pop %v4160
      %v4162 = vmul.f32 %v4134, 1.442695
      %v4163 = vpow.pop %v4162
      %v4164 = vmul.f32 %v4135, 1.442695
      %v4165 = vpow.pop %v4164
      %v4166 = vmul.f32 %v4136, 1.442695
      %v4167 = vpow.pop %v4166
      %v4168 = vmul.f32 %v4137, 1.442695
      %v4169 = vpow.pop %v4168
      %4170 = vadd.xlane.f32.xlu0 %v4139
      %v4171 = vpop.xlane.xlu0 %4170
      %4172 = vadd.xlane.f32.xlu0 %v4141
      %v4173 = vpop.xlane.xlu0 %4172
      %4174 = vadd.xlane.f32.xlu0 %v4143
      %v4175 = vpop.xlane.xlu0 %4174
      %4176 = vadd.xlane.f32.xlu0 %v4145
      %v4177 = vpop.xlane.xlu0 %4176
      %4178 = vadd.xlane.f32.xlu0 %v4147
      %v4179 = vpop.xlane.xlu0 %4178
      %4180 = vadd.xlane.f32.xlu0 %v4149
      %v4181 = vpop.xlane.xlu0 %4180
      %4182 = vadd.xlane.f32.xlu0 %v4151
      %v4183 = vpop.xlane.xlu0 %4182
      %4184 = vadd.xlane.f32.xlu0 %v4153
      %v4185 = vpop.xlane.xlu0 %4184
      %4186 = vadd.xlane.f32.xlu0 %v4155
      %v4187 = vpop.xlane.xlu0 %4186
      %4188 = vadd.xlane.f32.xlu0 %v4157
      %v4189 = vpop.xlane.xlu0 %4188
      %4190 = vadd.xlane.f32.xlu0 %v4159
      %v4191 = vpop.xlane.xlu0 %4190
      %4192 = vadd.xlane.f32.xlu0 %v4161
      %v4193 = vpop.xlane.xlu0 %4192
      %4194 = vadd.xlane.f32.xlu0 %v4163
      %v4195 = vpop.xlane.xlu0 %4194
      %4196 = vadd.xlane.f32.xlu0 %v4165
      %v4197 = vpop.xlane.xlu0 %4196
      %4198 = vadd.xlane.f32.xlu0 %v4167
      %v4199 = vpop.xlane.xlu0 %4198
      %4200 = vadd.xlane.f32.xlu0 %v4169
      %v4201 = vpop.xlane.xlu0 %4200
      %v4202 = vrcp.pop %v4171
      %v4203 = vmul.f32 %v4139, %v4202
      %v4204 = vrcp.pop %v4173
      %v4205 = vmul.f32 %v4141, %v4204
      %v4206 = vrcp.pop %v4175
      %v4207 = vmul.f32 %v4143, %v4206
      %v4208 = vrcp.pop %v4177
      %v4209 = vmul.f32 %v4145, %v4208
      %v4210 = vrcp.pop %v4179
      %v4211 = vmul.f32 %v4147, %v4210
      %v4212 = vrcp.pop %v4181
      %v4213 = vmul.f32 %v4149, %v4212
      %v4214 = vrcp.pop %v4183
      %v4215 = vmul.f32 %v4151, %v4214
      %v4216 = vrcp.pop %v4185
      %v4217 = vmul.f32 %v4153, %v4216
      %v4218 = vrcp.pop %v4187
      %v4219 = vmul.f32 %v4155, %v4218
      %v4220 = vrcp.pop %v4189
      %v4221 = vmul.f32 %v4157, %v4220
      %v4222 = vrcp.pop %v4191
      %v4223 = vmul.f32 %v4159, %v4222
      %v4224 = vrcp.pop %v4193
      %v4225 = vmul.f32 %v4161, %v4224
      %v4226 = vrcp.pop %v4195
      %v4227 = vmul.f32 %v4163, %v4226
      %v4228 = vrcp.pop %v4197
      %v4229 = vmul.f32 %v4165, %v4228
      %v4230 = vrcp.pop %v4199
      %v4231 = vmul.f32 %v4167, %v4230
      %v4232 = vrcp.pop %v4201
      %v4233 = vmul.f32 %v4169, %v4232
      %v4234 = vsel %vm249, %v4203, 0.0
      %v4235 = vsel %vm250, %v4205, 0.0
      %v4236 = vsel %vm251, %v4207, 0.0
      %v4237 = vsel %vm252, %v4209, 0.0
      %v4238 = vsel %vm253, %v4211, 0.0
      %v4239 = vsel %vm254, %v4213, 0.0
      %v4240 = vsel %vm255, %v4215, 0.0
      %v4241 = vsel %vm256, %v4217, 0.0
      %v4242 = vsel %vm257, %v4219, 0.0
      %v4243 = vsel %vm258, %v4221, 0.0
      %v4244 = vsel %vm259, %v4223, 0.0
      %v4245 = vsel %vm260, %v4225, 0.0
      %v4246 = vsel %vm261, %v4227, 0.0
      %v4247 = vsel %vm262, %v4229, 0.0
      %v4248 = vsel %vm263, %v4231, 0.0
      %v4249 = vsel %vm264, %v4233, 0.0
      %4250 = vadd.xlane.f32.xlu0 %v4234
      %v4251 = vpop.xlane.xlu0 %4250
      %4252 = vadd.xlane.f32.xlu0 %v4235
      %v4253 = vpop.xlane.xlu0 %4252
      %4254 = vadd.xlane.f32.xlu0 %v4236
      %v4255 = vpop.xlane.xlu0 %4254
      %4256 = vadd.xlane.f32.xlu0 %v4237
      %v4257 = vpop.xlane.xlu0 %4256
      %4258 = vadd.xlane.f32.xlu0 %v4238
      %v4259 = vpop.xlane.xlu0 %4258
      %4260 = vadd.xlane.f32.xlu0 %v4239
      %v4261 = vpop.xlane.xlu0 %4260
      %4262 = vadd.xlane.f32.xlu0 %v4240
      %v4263 = vpop.xlane.xlu0 %4262
      %4264 = vadd.xlane.f32.xlu0 %v4241
      %v4265 = vpop.xlane.xlu0 %4264
      %4266 = vadd.xlane.f32.xlu0 %v4242
      %v4267 = vpop.xlane.xlu0 %4266
      %4268 = vadd.xlane.f32.xlu0 %v4243
      %v4269 = vpop.xlane.xlu0 %4268
      %4270 = vadd.xlane.f32.xlu0 %v4244
      %v4271 = vpop.xlane.xlu0 %4270
      %4272 = vadd.xlane.f32.xlu0 %v4245
      %v4273 = vpop.xlane.xlu0 %4272
      %4274 = vadd.xlane.f32.xlu0 %v4246
      %v4275 = vpop.xlane.xlu0 %4274
      %4276 = vadd.xlane.f32.xlu0 %v4247
      %v4277 = vpop.xlane.xlu0 %4276
      %4278 = vadd.xlane.f32.xlu0 %v4248
      %v4279 = vpop.xlane.xlu0 %4278
      %4280 = vadd.xlane.f32.xlu0 %v4249
      %v4281 = vpop.xlane.xlu0 %4280
      %v4282 = vmul.f32 %v4251, %v1950
      %v4283 = vmul.f32 %v4253, %v1950
      %v4284 = vmul.f32 %v4255, %v1950
      %v4285 = vmul.f32 %v4257, %v1950
      %v4286 = vmul.f32 %v4259, %v1950
      %v4287 = vmul.f32 %v4261, %v1950
      %v4288 = vmul.f32 %v4263, %v1950
      %v4289 = vmul.f32 %v4265, %v1950
      %v4290 = vmul.f32 %v4267, %v1950
      %v4291 = vmul.f32 %v4269, %v1950
      %v4292 = vmul.f32 %v4271, %v1950
      %v4293 = vmul.f32 %v4273, %v1950
      %v4294 = vmul.f32 %v4275, %v1950
      %v4295 = vmul.f32 %v4277, %v1950
      %v4296 = vmul.f32 %v4279, %v1950
      %v4297 = vmul.f32 %v4281, %v1950
      %4314 = vrot.lane.b32.xlu0 %v427, 96
      %v4315 = vpop.permute.xlu0 %4314
      %4316 = vrot.lane.b32.xlu0 %v428, 96
      %v4317 = vpop.permute.xlu0 %4316
      %4318 = vrot.lane.b32.xlu0 %v429, 96
      %v4319 = vpop.permute.xlu0 %4318
      %4320 = vrot.lane.b32.xlu0 %v430, 96
      %v4321 = vpop.permute.xlu0 %4320
      %4322 = vrot.lane.b32.xlu0 %v431, 96
      %v4323 = vpop.permute.xlu0 %4322
      %4324 = vrot.lane.b32.xlu0 %v432, 96
      %v4325 = vpop.permute.xlu0 %4324
      %4326 = vrot.lane.b32.xlu0 %v433, 96
      %v4327 = vpop.permute.xlu0 %4326
      %4328 = vrot.lane.b32.xlu0 %v434, 96
      %v4329 = vpop.permute.xlu0 %4328
      %4330 = vrot.lane.b32.xlu0 %v435, 96
      %v4331 = vpop.permute.xlu0 %4330
      %4332 = vrot.lane.b32.xlu0 %v436, 96
      %v4333 = vpop.permute.xlu0 %4332
      %4334 = vrot.lane.b32.xlu0 %v437, 96
      %v4335 = vpop.permute.xlu0 %4334
      %4336 = vrot.lane.b32.xlu0 %v438, 96
      %v4337 = vpop.permute.xlu0 %4336
      %4338 = vrot.lane.b32.xlu0 %v439, 96
      %v4339 = vpop.permute.xlu0 %4338
      %4340 = vrot.lane.b32.xlu0 %v440, 96
      %v4341 = vpop.permute.xlu0 %4340
      %4342 = vrot.lane.b32.xlu0 %v441, 96
      %v4343 = vpop.permute.xlu0 %4342
      %4344 = vrot.lane.b32.xlu0 %v442, 96
      %v4345 = vpop.permute.xlu0 %4344
      %4362 = vmatprep.subr.mxu0 0.0
      %4363 = vmatpush1.msra.mxu0 %v4345
      %4364 = vmatprep.subr.mxu0 0.0
      %4365 = vmatpush1.msra.mxu0 %v4343
      %4366 = vmatprep.subr.mxu0 0.0
      %4367 = vmatpush1.msra.mxu0 %v4341
      %4368 = vmatprep.subr.mxu0 0.0
      %4369 = vmatpush1.msra.mxu0 %v4339
      %4370 = vmatprep.subr.mxu0 0.0
      %4371 = vmatpush1.msra.mxu0 %v4337
      %4372 = vmatprep.subr.mxu0 0.0
      %4373 = vmatpush1.msra.mxu0 %v4335
      %4374 = vmatprep.subr.mxu0 0.0
      %4375 = vmatpush1.msra.mxu0 %v4333
      %4376 = vmatprep.subr.mxu0 0.0
      %4377 = vmatpush1.msra.mxu0 %v4331
      %4378 = vmatprep.subr.mxu0 0.0
      %4379 = vmatpush1.msra.mxu0 %v4329
      %4380 = vmatprep.subr.mxu0 0.0
      %4381 = vmatpush1.msra.mxu0 %v4327
      %4382 = vmatprep.subr.mxu0 0.0
      %4383 = vmatpush1.msra.mxu0 %v4325
      %4384 = vmatprep.subr.mxu0 0.0
      %4385 = vmatpush1.msra.mxu0 %v4323
      %4386 = vmatprep.subr.mxu0 0.0
      %4387 = vmatpush1.msra.mxu0 %v4321
      %4388 = vmatprep.subr.mxu0 0.0
      %4389 = vmatpush1.msra.mxu0 %v4319
      %4390 = vmatprep.subr.mxu0 0.0
      %4391 = vmatpush1.msra.mxu0 %v4317
      %4392 = vmatprep.subr.mxu0 0.0
      %4393 = vmatpush1.msra.mxu0 %v4315
      %4394 = vmatprep.subr.mxu0 0.0
      %4395 = vmatpush2.msra.mxu0 0.0
      %4396 = vmatprep.subr.mxu0 0.0
      %4397 = vmatpush2.msra.mxu0 0.0
      %4398 = vmatprep.subr.mxu0 0.0
      %4399 = vmatpush2.msra.mxu0 0.0
      %4400 = vmatprep.subr.mxu0 0.0
      %4401 = vmatpush2.msra.mxu0 0.0
      %4402 = vmatprep.subr.mxu0 0.0
      %4403 = vmatpush2.msra.mxu0 0.0
      %4404 = vmatprep.subr.mxu0 0.0
      %4405 = vmatpush2.msra.mxu0 0.0
      %4406 = vmatprep.subr.mxu0 0.0
      %4407 = vmatpush2.msra.mxu0 0.0
      %4408 = vmatprep.subr.mxu0 0.0
      %4409 = vmatpush2.msra.mxu0 0.0
      %4410 = vmatprep.subr.mxu0 0.0
      %4411 = vmatpush2.msra.mxu0 0.0
      %4412 = vmatprep.subr.mxu0 0.0
      %4413 = vmatpush2.msra.mxu0 0.0
      %4414 = vmatprep.subr.mxu0 0.0
      %4415 = vmatpush2.msra.mxu0 0.0
      %4416 = vmatprep.subr.mxu0 0.0
      %4417 = vmatpush2.msra.mxu0 0.0
      %4418 = vmatprep.subr.mxu0 0.0
      %4419 = vmatpush2.msra.mxu0 0.0
      %4420 = vmatprep.subr.mxu0 0.0
      %4421 = vmatpush2.msra.mxu0 0.0
      %4422 = vmatprep.subr.mxu0 0.0
      %4423 = vmatpush2.msra.mxu0 0.0
      %4424 = vmatprep.subr.mxu0 0.0
      %4425 = vmatpush2.msra.mxu0 0.0
      %4426 = vmatprep.mubr.f32.mxu0 0.0
      %4427 = vmatmul.mubr.f32.gmra.mxu0 %v4203
      %v4428 = vpop.f32.mrf.mxu0
      %v4429 = vadd.f32 %v4282, %v4428
      %v4430 = vpop.f32.mrf.mxu0
      %4431 = vmatprep.mubr.f32.mxu0 0.0
      %4432 = vmatmul.mubr.f32.gmra.mxu0 %v4205
      %v4433 = vpop.f32.mrf.mxu0
      %v4434 = vadd.f32 %v4283, %v4433
      %v4435 = vpop.f32.mrf.mxu0
      %4436 = vmatprep.mubr.f32.mxu0 0.0
      %4437 = vmatmul.mubr.f32.gmra.mxu0 %v4207
      %v4438 = vpop.f32.mrf.mxu0
      %v4439 = vadd.f32 %v4284, %v4438
      %v4440 = vpop.f32.mrf.mxu0
      %4441 = vmatprep.mubr.f32.mxu0 0.0
      %4442 = vmatmul.mubr.f32.gmra.mxu0 %v4209
      %v4443 = vpop.f32.mrf.mxu0
      %v4444 = vadd.f32 %v4285, %v4443
      %v4445 = vpop.f32.mrf.mxu0
      %4446 = vmatprep.mubr.f32.mxu0 0.0
      %4447 = vmatmul.mubr.f32.gmra.mxu0 %v4211
      %v4448 = vpop.f32.mrf.mxu0
      %v4449 = vadd.f32 %v4286, %v4448
      %v4450 = vpop.f32.mrf.mxu0
      %4451 = vmatprep.mubr.f32.mxu0 0.0
      %4452 = vmatmul.mubr.f32.gmra.mxu0 %v4213
      %v4453 = vpop.f32.mrf.mxu0
      %v4454 = vadd.f32 %v4287, %v4453
      %v4455 = vpop.f32.mrf.mxu0
      %4456 = vmatprep.mubr.f32.mxu0 0.0
      %4457 = vmatmul.mubr.f32.gmra.mxu0 %v4215
      %v4458 = vpop.f32.mrf.mxu0
      %v4459 = vadd.f32 %v4288, %v4458
      %v4460 = vpop.f32.mrf.mxu0
      %4461 = vmatprep.mubr.f32.mxu0 0.0
      %4462 = vmatmul.mubr.f32.gmra.mxu0 %v4217
      %v4463 = vpop.f32.mrf.mxu0
      %v4464 = vadd.f32 %v4289, %v4463
      %v4465 = vpop.f32.mrf.mxu0
      %4466 = vmatprep.mubr.f32.mxu0 0.0
      %4467 = vmatmul.mubr.f32.gmra.mxu0 %v4219
      %v4468 = vpop.f32.mrf.mxu0
      %v4469 = vadd.f32 %v4290, %v4468
      %v4470 = vpop.f32.mrf.mxu0
      %4471 = vmatprep.mubr.f32.mxu0 0.0
      %4472 = vmatmul.mubr.f32.gmra.mxu0 %v4221
      %v4473 = vpop.f32.mrf.mxu0
      %v4474 = vadd.f32 %v4291, %v4473
      %v4475 = vpop.f32.mrf.mxu0
      %4476 = vmatprep.mubr.f32.mxu0 0.0
      %4477 = vmatmul.mubr.f32.gmra.mxu0 %v4223
      %v4478 = vpop.f32.mrf.mxu0
      %v4479 = vadd.f32 %v4292, %v4478
      %v4480 = vpop.f32.mrf.mxu0
      %4481 = vmatprep.mubr.f32.mxu0 0.0
      %4482 = vmatmul.mubr.f32.gmra.mxu0 %v4225
      %v4483 = vpop.f32.mrf.mxu0
      %v4484 = vadd.f32 %v4293, %v4483
      %v4485 = vpop.f32.mrf.mxu0
      %4486 = vmatprep.mubr.f32.mxu0 0.0
      %4487 = vmatmul.mubr.f32.gmra.mxu0 %v4227
      %v4488 = vpop.f32.mrf.mxu0
      %v4489 = vadd.f32 %v4294, %v4488
      %v4490 = vpop.f32.mrf.mxu0
      %4491 = vmatprep.mubr.f32.mxu0 0.0
      %4492 = vmatmul.mubr.f32.gmra.mxu0 %v4229
      %v4493 = vpop.f32.mrf.mxu0
      %v4494 = vadd.f32 %v4295, %v4493
      %v4495 = vpop.f32.mrf.mxu0
      %4496 = vmatprep.mubr.f32.mxu0 0.0
      %4497 = vmatmul.mubr.f32.gmra.mxu0 %v4231
      %v4498 = vpop.f32.mrf.mxu0
      %v4499 = vadd.f32 %v4296, %v4498
      %v4500 = vpop.f32.mrf.mxu0
      %4501 = vmatprep.mubr.f32.mxu0 0.0
      %4502 = vmatmul.mubr.f32.gmra.mxu0 %v4233
      %v4503 = vpop.f32.mrf.mxu0
      %v4504 = vadd.f32 %v4297, %v4503
      %v4505 = vpop.f32.mrf.mxu0
      %4506 = vdwg.mxu0
      %v4507 = vsel %vm265, %v4203, 0.0
      %v4508 = vsel %vm266, %v4205, 0.0
      %v4509 = vsel %vm267, %v4207, 0.0
      %v4510 = vsel %vm268, %v4209, 0.0
      %v4511 = vsel %vm269, %v4211, 0.0
      %v4512 = vsel %vm270, %v4213, 0.0
      %v4513 = vsel %vm271, %v4215, 0.0
      %v4514 = vsel %vm272, %v4217, 0.0
      %v4515 = vsel %vm273, %v4219, 0.0
      %v4516 = vsel %vm274, %v4221, 0.0
      %v4517 = vsel %vm275, %v4223, 0.0
      %v4518 = vsel %vm276, %v4225, 0.0
      %v4519 = vsel %vm277, %v4227, 0.0
      %v4520 = vsel %vm278, %v4229, 0.0
      %v4521 = vsel %vm279, %v4231, 0.0
      %v4522 = vsel %vm280, %v4233, 0.0
      %4523 = vadd.xlane.f32.xlu0 %v4507
      %v4524 = vpop.xlane.xlu0 %4523
      %4525 = vadd.xlane.f32.xlu0 %v4508
      %v4526 = vpop.xlane.xlu0 %4525
      %4527 = vadd.xlane.f32.xlu0 %v4509
      %v4528 = vpop.xlane.xlu0 %4527
      %4529 = vadd.xlane.f32.xlu0 %v4510
      %v4530 = vpop.xlane.xlu0 %4529
      %4531 = vadd.xlane.f32.xlu0 %v4511
      %v4532 = vpop.xlane.xlu0 %4531
      %4533 = vadd.xlane.f32.xlu0 %v4512
      %v4534 = vpop.xlane.xlu0 %4533
      %4535 = vadd.xlane.f32.xlu0 %v4513
      %v4536 = vpop.xlane.xlu0 %4535
      %4537 = vadd.xlane.f32.xlu0 %v4514
      %v4538 = vpop.xlane.xlu0 %4537
      %4539 = vadd.xlane.f32.xlu0 %v4515
      %v4540 = vpop.xlane.xlu0 %4539
      %4541 = vadd.xlane.f32.xlu0 %v4516
      %v4542 = vpop.xlane.xlu0 %4541
      %4543 = vadd.xlane.f32.xlu0 %v4517
      %v4544 = vpop.xlane.xlu0 %4543
      %4545 = vadd.xlane.f32.xlu0 %v4518
      %v4546 = vpop.xlane.xlu0 %4545
      %4547 = vadd.xlane.f32.xlu0 %v4519
      %v4548 = vpop.xlane.xlu0 %4547
      %4549 = vadd.xlane.f32.xlu0 %v4520
      %v4550 = vpop.xlane.xlu0 %4549
      %4551 = vadd.xlane.f32.xlu0 %v4521
      %v4552 = vpop.xlane.xlu0 %4551
      %4553 = vadd.xlane.f32.xlu0 %v4522
      %v4554 = vpop.xlane.xlu0 %4553
      %v4555 = vmul.f32 %v4524, %v2164
      %v4556 = vmul.f32 %v4526, %v2164
      %v4557 = vmul.f32 %v4528, %v2164
      %v4558 = vmul.f32 %v4530, %v2164
      %v4559 = vmul.f32 %v4532, %v2164
      %v4560 = vmul.f32 %v4534, %v2164
      %v4561 = vmul.f32 %v4536, %v2164
      %v4562 = vmul.f32 %v4538, %v2164
      %v4563 = vmul.f32 %v4540, %v2164
      %v4564 = vmul.f32 %v4542, %v2164
      %v4565 = vmul.f32 %v4544, %v2164
      %v4566 = vmul.f32 %v4546, %v2164
      %v4567 = vmul.f32 %v4548, %v2164
      %v4568 = vmul.f32 %v4550, %v2164
      %v4569 = vmul.f32 %v4552, %v2164
      %v4570 = vmul.f32 %v4554, %v2164
      %v4571 = vadd.f32 %v4429, %v4555
      %v4572 = vadd.f32 %v4434, %v4556
      %v4573 = vadd.f32 %v4439, %v4557
      %v4574 = vadd.f32 %v4444, %v4558
      %v4575 = vadd.f32 %v4449, %v4559
      %v4576 = vadd.f32 %v4454, %v4560
      %v4577 = vadd.f32 %v4459, %v4561
      %v4578 = vadd.f32 %v4464, %v4562
      %v4579 = vadd.f32 %v4469, %v4563
      %v4580 = vadd.f32 %v4474, %v4564
      %v4581 = vadd.f32 %v4479, %v4565
      %v4582 = vadd.f32 %v4484, %v4566
      %v4583 = vadd.f32 %v4489, %v4567
      %v4584 = vadd.f32 %v4494, %v4568
      %v4585 = vadd.f32 %v4499, %v4569
      %v4586 = vadd.f32 %v4504, %v4570
      %v4587 = vsel %vm281, %v4203, 0.0
      %v4588 = vsel %vm282, %v4205, 0.0
      %v4589 = vsel %vm283, %v4207, 0.0
      %v4590 = vsel %vm284, %v4209, 0.0
      %v4591 = vsel %vm285, %v4211, 0.0
      %v4592 = vsel %vm286, %v4213, 0.0
      %v4593 = vsel %vm287, %v4215, 0.0
      %v4594 = vsel %vm288, %v4217, 0.0
      %v4595 = vsel %vm289, %v4219, 0.0
      %v4596 = vsel %vm290, %v4221, 0.0
      %v4597 = vsel %vm291, %v4223, 0.0
      %v4598 = vsel %vm292, %v4225, 0.0
      %v4599 = vsel %vm293, %v4227, 0.0
      %v4600 = vsel %vm294, %v4229, 0.0
      %v4601 = vsel %vm295, %v4231, 0.0
      %v4602 = vsel %vm296, %v4233, 0.0
      %4603 = vadd.xlane.f32.xlu0 %v4587
      %v4604 = vpop.xlane.xlu0 %4603
      %4605 = vadd.xlane.f32.xlu0 %v4588
      %v4606 = vpop.xlane.xlu0 %4605
      %4607 = vadd.xlane.f32.xlu0 %v4589
      %v4608 = vpop.xlane.xlu0 %4607
      %4609 = vadd.xlane.f32.xlu0 %v4590
      %v4610 = vpop.xlane.xlu0 %4609
      %4611 = vadd.xlane.f32.xlu0 %v4591
      %v4612 = vpop.xlane.xlu0 %4611
      %4613 = vadd.xlane.f32.xlu0 %v4592
      %v4614 = vpop.xlane.xlu0 %4613
      %4615 = vadd.xlane.f32.xlu0 %v4593
      %v4616 = vpop.xlane.xlu0 %4615
      %4617 = vadd.xlane.f32.xlu0 %v4594
      %v4618 = vpop.xlane.xlu0 %4617
      %4619 = vadd.xlane.f32.xlu0 %v4595
      %v4620 = vpop.xlane.xlu0 %4619
      %4621 = vadd.xlane.f32.xlu0 %v4596
      %v4622 = vpop.xlane.xlu0 %4621
      %4623 = vadd.xlane.f32.xlu0 %v4597
      %v4624 = vpop.xlane.xlu0 %4623
      %4625 = vadd.xlane.f32.xlu0 %v4598
      %v4626 = vpop.xlane.xlu0 %4625
      %4627 = vadd.xlane.f32.xlu0 %v4599
      %v4628 = vpop.xlane.xlu0 %4627
      %4629 = vadd.xlane.f32.xlu0 %v4600
      %v4630 = vpop.xlane.xlu0 %4629
      %4631 = vadd.xlane.f32.xlu0 %v4601
      %v4632 = vpop.xlane.xlu0 %4631
      %4633 = vadd.xlane.f32.xlu0 %v4602
      %v4634 = vpop.xlane.xlu0 %4633
      %v4635 = vmul.f32 %v4604, %v2249
      %v4636 = vmul.f32 %v4606, %v2249
      %v4637 = vmul.f32 %v4608, %v2249
      %v4638 = vmul.f32 %v4610, %v2249
      %v4639 = vmul.f32 %v4612, %v2249
      %v4640 = vmul.f32 %v4614, %v2249
      %v4641 = vmul.f32 %v4616, %v2249
      %v4642 = vmul.f32 %v4618, %v2249
      %v4643 = vmul.f32 %v4620, %v2249
      %v4644 = vmul.f32 %v4622, %v2249
      %v4645 = vmul.f32 %v4624, %v2249
      %v4646 = vmul.f32 %v4626, %v2249
      %v4647 = vmul.f32 %v4628, %v2249
      %v4648 = vmul.f32 %v4630, %v2249
      %v4649 = vmul.f32 %v4632, %v2249
      %v4650 = vmul.f32 %v4634, %v2249
      %v4651 = vadd.f32 %v4571, %v4635
      %v4652 = vadd.f32 %v4572, %v4636
      %v4653 = vadd.f32 %v4573, %v4637
      %v4654 = vadd.f32 %v4574, %v4638
      %v4655 = vadd.f32 %v4575, %v4639
      %v4656 = vadd.f32 %v4576, %v4640
      %v4657 = vadd.f32 %v4577, %v4641
      %v4658 = vadd.f32 %v4578, %v4642
      %v4659 = vadd.f32 %v4579, %v4643
      %v4660 = vadd.f32 %v4580, %v4644
      %v4661 = vadd.f32 %v4581, %v4645
      %v4662 = vadd.f32 %v4582, %v4646
      %v4663 = vadd.f32 %v4583, %v4647
      %v4664 = vadd.f32 %v4584, %v4648
      %v4665 = vadd.f32 %v4585, %v4649
      %v4666 = vadd.f32 %v4586, %v4650
      %v4667 = vsel %vm297, %v4203, 0.0
      %v4668 = vsel %vm298, %v4205, 0.0
      %v4669 = vsel %vm299, %v4207, 0.0
      %v4670 = vsel %vm300, %v4209, 0.0
      %v4671 = vsel %vm301, %v4211, 0.0
      %v4672 = vsel %vm302, %v4213, 0.0
      %v4673 = vsel %vm303, %v4215, 0.0
      %v4674 = vsel %vm304, %v4217, 0.0
      %v4675 = vsel %vm305, %v4219, 0.0
      %v4676 = vsel %vm306, %v4221, 0.0
      %v4677 = vsel %vm307, %v4223, 0.0
      %v4678 = vsel %vm308, %v4225, 0.0
      %v4679 = vsel %vm309, %v4227, 0.0
      %v4680 = vsel %vm310, %v4229, 0.0
      %v4681 = vsel %vm311, %v4231, 0.0
      %v4682 = vsel %vm312, %v4233, 0.0
      %4683 = vadd.xlane.f32.xlu0 %v4667
      %v4684 = vpop.xlane.xlu0 %4683
      %4685 = vadd.xlane.f32.xlu0 %v4668
      %v4686 = vpop.xlane.xlu0 %4685
      %4687 = vadd.xlane.f32.xlu0 %v4669
      %v4688 = vpop.xlane.xlu0 %4687
      %4689 = vadd.xlane.f32.xlu0 %v4670
      %v4690 = vpop.xlane.xlu0 %4689
      %4691 = vadd.xlane.f32.xlu0 %v4671
      %v4692 = vpop.xlane.xlu0 %4691
      %4693 = vadd.xlane.f32.xlu0 %v4672
      %v4694 = vpop.xlane.xlu0 %4693
      %4695 = vadd.xlane.f32.xlu0 %v4673
      %v4696 = vpop.xlane.xlu0 %4695
      %4697 = vadd.xlane.f32.xlu0 %v4674
      %v4698 = vpop.xlane.xlu0 %4697
      %4699 = vadd.xlane.f32.xlu0 %v4675
      %v4700 = vpop.xlane.xlu0 %4699
      %4701 = vadd.xlane.f32.xlu0 %v4676
      %v4702 = vpop.xlane.xlu0 %4701
      %4703 = vadd.xlane.f32.xlu0 %v4677
      %v4704 = vpop.xlane.xlu0 %4703
      %4705 = vadd.xlane.f32.xlu0 %v4678
      %v4706 = vpop.xlane.xlu0 %4705
      %4707 = vadd.xlane.f32.xlu0 %v4679
      %v4708 = vpop.xlane.xlu0 %4707
      %4709 = vadd.xlane.f32.xlu0 %v4680
      %v4710 = vpop.xlane.xlu0 %4709
      %4711 = vadd.xlane.f32.xlu0 %v4681
      %v4712 = vpop.xlane.xlu0 %4711
      %4713 = vadd.xlane.f32.xlu0 %v4682
      %v4714 = vpop.xlane.xlu0 %4713
      %v4715 = vmul.f32 %v4684, %v2334
      %v4716 = vmul.f32 %v4686, %v2334
      %v4717 = vmul.f32 %v4688, %v2334
      %v4718 = vmul.f32 %v4690, %v2334
      %v4719 = vmul.f32 %v4692, %v2334
      %v4720 = vmul.f32 %v4694, %v2334
      %v4721 = vmul.f32 %v4696, %v2334
      %v4722 = vmul.f32 %v4698, %v2334
      %v4723 = vmul.f32 %v4700, %v2334
      %v4724 = vmul.f32 %v4702, %v2334
      %v4725 = vmul.f32 %v4704, %v2334
      %v4726 = vmul.f32 %v4706, %v2334
      %v4727 = vmul.f32 %v4708, %v2334
      %v4728 = vmul.f32 %v4710, %v2334
      %v4729 = vmul.f32 %v4712, %v2334
      %v4730 = vmul.f32 %v4714, %v2334
      %v4731 = vadd.f32 %v4651, %v4715
      %v4732 = vadd.f32 %v4652, %v4716
      %v4733 = vadd.f32 %v4653, %v4717
      %v4734 = vadd.f32 %v4654, %v4718
      %v4735 = vadd.f32 %v4655, %v4719
      %v4736 = vadd.f32 %v4656, %v4720
      %v4737 = vadd.f32 %v4657, %v4721
      %v4738 = vadd.f32 %v4658, %v4722
      %v4739 = vadd.f32 %v4659, %v4723
      %v4740 = vadd.f32 %v4660, %v4724
      %v4741 = vadd.f32 %v4661, %v4725
      %v4742 = vadd.f32 %v4662, %v4726
      %v4743 = vadd.f32 %v4663, %v4727
      %v4744 = vadd.f32 %v4664, %v4728
      %v4745 = vadd.f32 %v4665, %v4729
      %v4746 = vadd.f32 %v4666, %v4730
      %v4747 = vsel %vm313, %v4203, 0.0
      %v4748 = vsel %vm314, %v4205, 0.0
      %v4749 = vsel %vm315, %v4207, 0.0
      %v4750 = vsel %vm316, %v4209, 0.0
      %v4751 = vsel %vm317, %v4211, 0.0
      %v4752 = vsel %vm318, %v4213, 0.0
      %v4753 = vsel %vm319, %v4215, 0.0
      %v4754 = vsel %vm320, %v4217, 0.0
      %v4755 = vsel %vm321, %v4219, 0.0
      %v4756 = vsel %vm322, %v4221, 0.0
      %v4757 = vsel %vm323, %v4223, 0.0
      %v4758 = vsel %vm324, %v4225, 0.0
      %v4759 = vsel %vm325, %v4227, 0.0
      %v4760 = vsel %vm326, %v4229, 0.0
      %v4761 = vsel %vm327, %v4231, 0.0
      %v4762 = vsel %vm328, %v4233, 0.0
      %4763 = vadd.xlane.f32.xlu0 %v4747
      %v4764 = vpop.xlane.xlu0 %4763
      %4765 = vadd.xlane.f32.xlu0 %v4748
      %v4766 = vpop.xlane.xlu0 %4765
      %4767 = vadd.xlane.f32.xlu0 %v4749
      %v4768 = vpop.xlane.xlu0 %4767
      %4769 = vadd.xlane.f32.xlu0 %v4750
      %v4770 = vpop.xlane.xlu0 %4769
      %4771 = vadd.xlane.f32.xlu0 %v4751
      %v4772 = vpop.xlane.xlu0 %4771
      %4773 = vadd.xlane.f32.xlu0 %v4752
      %v4774 = vpop.xlane.xlu0 %4773
      %4775 = vadd.xlane.f32.xlu0 %v4753
      %v4776 = vpop.xlane.xlu0 %4775
      %4777 = vadd.xlane.f32.xlu0 %v4754
      %v4778 = vpop.xlane.xlu0 %4777
      %4779 = vadd.xlane.f32.xlu0 %v4755
      %v4780 = vpop.xlane.xlu0 %4779
      %4781 = vadd.xlane.f32.xlu0 %v4756
      %v4782 = vpop.xlane.xlu0 %4781
      %4783 = vadd.xlane.f32.xlu0 %v4757
      %v4784 = vpop.xlane.xlu0 %4783
      %4785 = vadd.xlane.f32.xlu0 %v4758
      %v4786 = vpop.xlane.xlu0 %4785
      %4787 = vadd.xlane.f32.xlu0 %v4759
      %v4788 = vpop.xlane.xlu0 %4787
      %4789 = vadd.xlane.f32.xlu0 %v4760
      %v4790 = vpop.xlane.xlu0 %4789
      %4791 = vadd.xlane.f32.xlu0 %v4761
      %v4792 = vpop.xlane.xlu0 %4791
      %4793 = vadd.xlane.f32.xlu0 %v4762
      %v4794 = vpop.xlane.xlu0 %4793
      %v4795 = vmul.f32 %v4764, %v2419
      %v4796 = vmul.f32 %v4766, %v2419
      %v4797 = vmul.f32 %v4768, %v2419
      %v4798 = vmul.f32 %v4770, %v2419
      %v4799 = vmul.f32 %v4772, %v2419
      %v4800 = vmul.f32 %v4774, %v2419
      %v4801 = vmul.f32 %v4776, %v2419
      %v4802 = vmul.f32 %v4778, %v2419
      %v4803 = vmul.f32 %v4780, %v2419
      %v4804 = vmul.f32 %v4782, %v2419
      %v4805 = vmul.f32 %v4784, %v2419
      %v4806 = vmul.f32 %v4786, %v2419
      %v4807 = vmul.f32 %v4788, %v2419
      %v4808 = vmul.f32 %v4790, %v2419
      %v4809 = vmul.f32 %v4792, %v2419
      %v4810 = vmul.f32 %v4794, %v2419
      %v4811 = vadd.f32 %v4731, %v4795
      %v4812 = vadd.f32 %v4732, %v4796
      %v4813 = vadd.f32 %v4733, %v4797
      %v4814 = vadd.f32 %v4734, %v4798
      %v4815 = vadd.f32 %v4735, %v4799
      %v4816 = vadd.f32 %v4736, %v4800
      %v4817 = vadd.f32 %v4737, %v4801
      %v4818 = vadd.f32 %v4738, %v4802
      %v4819 = vadd.f32 %v4739, %v4803
      %v4820 = vadd.f32 %v4740, %v4804
      %v4821 = vadd.f32 %v4741, %v4805
      %v4822 = vadd.f32 %v4742, %v4806
      %v4823 = vadd.f32 %v4743, %v4807
      %v4824 = vadd.f32 %v4744, %v4808
      %v4825 = vadd.f32 %v4745, %v4809
      %v4826 = vadd.f32 %v4746, %v4810
      %v4827 = vsel %vm329, %v4203, 0.0
      %v4828 = vsel %vm330, %v4205, 0.0
      %v4829 = vsel %vm331, %v4207, 0.0
      %v4830 = vsel %vm332, %v4209, 0.0
      %v4831 = vsel %vm333, %v4211, 0.0
      %v4832 = vsel %vm334, %v4213, 0.0
      %v4833 = vsel %vm335, %v4215, 0.0
      %v4834 = vsel %vm336, %v4217, 0.0
      %v4835 = vsel %vm337, %v4219, 0.0
      %v4836 = vsel %vm338, %v4221, 0.0
      %v4837 = vsel %vm339, %v4223, 0.0
      %v4838 = vsel %vm340, %v4225, 0.0
      %v4839 = vsel %vm341, %v4227, 0.0
      %v4840 = vsel %vm342, %v4229, 0.0
      %v4841 = vsel %vm343, %v4231, 0.0
      %v4842 = vsel %vm344, %v4233, 0.0
      %4843 = vadd.xlane.f32.xlu0 %v4827
      %v4844 = vpop.xlane.xlu0 %4843
      %4845 = vadd.xlane.f32.xlu0 %v4828
      %v4846 = vpop.xlane.xlu0 %4845
      %4847 = vadd.xlane.f32.xlu0 %v4829
      %v4848 = vpop.xlane.xlu0 %4847
      %4849 = vadd.xlane.f32.xlu0 %v4830
      %v4850 = vpop.xlane.xlu0 %4849
      %4851 = vadd.xlane.f32.xlu0 %v4831
      %v4852 = vpop.xlane.xlu0 %4851
      %4853 = vadd.xlane.f32.xlu0 %v4832
      %v4854 = vpop.xlane.xlu0 %4853
      %4855 = vadd.xlane.f32.xlu0 %v4833
      %v4856 = vpop.xlane.xlu0 %4855
      %4857 = vadd.xlane.f32.xlu0 %v4834
      %v4858 = vpop.xlane.xlu0 %4857
      %4859 = vadd.xlane.f32.xlu0 %v4835
      %v4860 = vpop.xlane.xlu0 %4859
      %4861 = vadd.xlane.f32.xlu0 %v4836
      %v4862 = vpop.xlane.xlu0 %4861
      %4863 = vadd.xlane.f32.xlu0 %v4837
      %v4864 = vpop.xlane.xlu0 %4863
      %4865 = vadd.xlane.f32.xlu0 %v4838
      %v4866 = vpop.xlane.xlu0 %4865
      %4867 = vadd.xlane.f32.xlu0 %v4839
      %v4868 = vpop.xlane.xlu0 %4867
      %4869 = vadd.xlane.f32.xlu0 %v4840
      %v4870 = vpop.xlane.xlu0 %4869
      %4871 = vadd.xlane.f32.xlu0 %v4841
      %v4872 = vpop.xlane.xlu0 %4871
      %4873 = vadd.xlane.f32.xlu0 %v4842
      %v4874 = vpop.xlane.xlu0 %4873
      %v4875 = vmul.f32 %v4844, %v2504
      %v4876 = vmul.f32 %v4846, %v2504
      %v4877 = vmul.f32 %v4848, %v2504
      %v4878 = vmul.f32 %v4850, %v2504
      %v4879 = vmul.f32 %v4852, %v2504
      %v4880 = vmul.f32 %v4854, %v2504
      %v4881 = vmul.f32 %v4856, %v2504
      %v4882 = vmul.f32 %v4858, %v2504
      %v4883 = vmul.f32 %v4860, %v2504
      %v4884 = vmul.f32 %v4862, %v2504
      %v4885 = vmul.f32 %v4864, %v2504
      %v4886 = vmul.f32 %v4866, %v2504
      %v4887 = vmul.f32 %v4868, %v2504
      %v4888 = vmul.f32 %v4870, %v2504
      %v4889 = vmul.f32 %v4872, %v2504
      %v4890 = vmul.f32 %v4874, %v2504
      %v4891 = vadd.f32 %v4811, %v4875
      %v4892 = vadd.f32 %v4812, %v4876
      %v4893 = vadd.f32 %v4813, %v4877
      %v4894 = vadd.f32 %v4814, %v4878
      %v4895 = vadd.f32 %v4815, %v4879
      %v4896 = vadd.f32 %v4816, %v4880
      %v4897 = vadd.f32 %v4817, %v4881
      %v4898 = vadd.f32 %v4818, %v4882
      %v4899 = vadd.f32 %v4819, %v4883
      %v4900 = vadd.f32 %v4820, %v4884
      %v4901 = vadd.f32 %v4821, %v4885
      %v4902 = vadd.f32 %v4822, %v4886
      %v4903 = vadd.f32 %v4823, %v4887
      %v4904 = vadd.f32 %v4824, %v4888
      %v4905 = vadd.f32 %v4825, %v4889
      %v4906 = vadd.f32 %v4826, %v4890
      %v4907 = vsel %vm345, %v4203, 0.0
      %v4908 = vsel %vm346, %v4205, 0.0
      %v4909 = vsel %vm347, %v4207, 0.0
      %v4910 = vsel %vm348, %v4209, 0.0
      %v4911 = vsel %vm349, %v4211, 0.0
      %v4912 = vsel %vm350, %v4213, 0.0
      %v4913 = vsel %vm351, %v4215, 0.0
      %v4914 = vsel %vm352, %v4217, 0.0
      %v4915 = vsel %vm353, %v4219, 0.0
      %v4916 = vsel %vm354, %v4221, 0.0
      %v4917 = vsel %vm355, %v4223, 0.0
      %v4918 = vsel %vm356, %v4225, 0.0
      %v4919 = vsel %vm357, %v4227, 0.0
      %v4920 = vsel %vm358, %v4229, 0.0
      %v4921 = vsel %vm359, %v4231, 0.0
      %v4922 = vsel %vm360, %v4233, 0.0
      %4923 = vadd.xlane.f32.xlu0 %v4907
      %v4924 = vpop.xlane.xlu0 %4923
      %4925 = vadd.xlane.f32.xlu0 %v4908
      %v4926 = vpop.xlane.xlu0 %4925
      %4927 = vadd.xlane.f32.xlu0 %v4909
      %v4928 = vpop.xlane.xlu0 %4927
      %4929 = vadd.xlane.f32.xlu0 %v4910
      %v4930 = vpop.xlane.xlu0 %4929
      %4931 = vadd.xlane.f32.xlu0 %v4911
      %v4932 = vpop.xlane.xlu0 %4931
      %4933 = vadd.xlane.f32.xlu0 %v4912
      %v4934 = vpop.xlane.xlu0 %4933
      %4935 = vadd.xlane.f32.xlu0 %v4913
      %v4936 = vpop.xlane.xlu0 %4935
      %4937 = vadd.xlane.f32.xlu0 %v4914
      %v4938 = vpop.xlane.xlu0 %4937
      %4939 = vadd.xlane.f32.xlu0 %v4915
      %v4940 = vpop.xlane.xlu0 %4939
      %4941 = vadd.xlane.f32.xlu0 %v4916
      %v4942 = vpop.xlane.xlu0 %4941
      %4943 = vadd.xlane.f32.xlu0 %v4917
      %v4944 = vpop.xlane.xlu0 %4943
      %4945 = vadd.xlane.f32.xlu0 %v4918
      %v4946 = vpop.xlane.xlu0 %4945
      %4947 = vadd.xlane.f32.xlu0 %v4919
      %v4948 = vpop.xlane.xlu0 %4947
      %4949 = vadd.xlane.f32.xlu0 %v4920
      %v4950 = vpop.xlane.xlu0 %4949
      %4951 = vadd.xlane.f32.xlu0 %v4921
      %v4952 = vpop.xlane.xlu0 %4951
      %4953 = vadd.xlane.f32.xlu0 %v4922
      %v4954 = vpop.xlane.xlu0 %4953
      %v4955 = vmul.f32 %v4924, %v2589
      %v4956 = vmul.f32 %v4926, %v2589
      %v4957 = vmul.f32 %v4928, %v2589
      %v4958 = vmul.f32 %v4930, %v2589
      %v4959 = vmul.f32 %v4932, %v2589
      %v4960 = vmul.f32 %v4934, %v2589
      %v4961 = vmul.f32 %v4936, %v2589
      %v4962 = vmul.f32 %v4938, %v2589
      %v4963 = vmul.f32 %v4940, %v2589
      %v4964 = vmul.f32 %v4942, %v2589
      %v4965 = vmul.f32 %v4944, %v2589
      %v4966 = vmul.f32 %v4946, %v2589
      %v4967 = vmul.f32 %v4948, %v2589
      %v4968 = vmul.f32 %v4950, %v2589
      %v4969 = vmul.f32 %v4952, %v2589
      %v4970 = vmul.f32 %v4954, %v2589
      %v4971 = vadd.f32 %v4891, %v4955
      %v4972 = vadd.f32 %v4892, %v4956
      %v4973 = vadd.f32 %v4893, %v4957
      %v4974 = vadd.f32 %v4894, %v4958
      %v4975 = vadd.f32 %v4895, %v4959
      %v4976 = vadd.f32 %v4896, %v4960
      %v4977 = vadd.f32 %v4897, %v4961
      %v4978 = vadd.f32 %v4898, %v4962
      %v4979 = vadd.f32 %v4899, %v4963
      %v4980 = vadd.f32 %v4900, %v4964
      %v4981 = vadd.f32 %v4901, %v4965
      %v4982 = vadd.f32 %v4902, %v4966
      %v4983 = vadd.f32 %v4903, %v4967
      %v4984 = vadd.f32 %v4904, %v4968
      %v4985 = vadd.f32 %v4905, %v4969
      %v4986 = vadd.f32 %v4906, %v4970
      %v4987 = vsel %vm361, %v4203, 0.0
      %v4988 = vsel %vm362, %v4205, 0.0
      %v4989 = vsel %vm363, %v4207, 0.0
      %v4990 = vsel %vm364, %v4209, 0.0
      %v4991 = vsel %vm365, %v4211, 0.0
      %v4992 = vsel %vm366, %v4213, 0.0
      %v4993 = vsel %vm367, %v4215, 0.0
      %v4994 = vsel %vm368, %v4217, 0.0
      %v4995 = vsel %vm369, %v4219, 0.0
      %v4996 = vsel %vm370, %v4221, 0.0
      %v4997 = vsel %vm371, %v4223, 0.0
      %v4998 = vsel %vm372, %v4225, 0.0
      %v4999 = vsel %vm373, %v4227, 0.0
      %v5000 = vsel %vm374, %v4229, 0.0
      %v5001 = vsel %vm375, %v4231, 0.0
      %v5002 = vsel %vm376, %v4233, 0.0
      %5003 = vadd.xlane.f32.xlu0 %v4987
      %v5004 = vpop.xlane.xlu0 %5003
      %5005 = vadd.xlane.f32.xlu0 %v4988
      %v5006 = vpop.xlane.xlu0 %5005
      %5007 = vadd.xlane.f32.xlu0 %v4989
      %v5008 = vpop.xlane.xlu0 %5007
      %5009 = vadd.xlane.f32.xlu0 %v4990
      %v5010 = vpop.xlane.xlu0 %5009
      %5011 = vadd.xlane.f32.xlu0 %v4991
      %v5012 = vpop.xlane.xlu0 %5011
      %5013 = vadd.xlane.f32.xlu0 %v4992
      %v5014 = vpop.xlane.xlu0 %5013
      %5015 = vadd.xlane.f32.xlu0 %v4993
      %v5016 = vpop.xlane.xlu0 %5015
      %5017 = vadd.xlane.f32.xlu0 %v4994
      %v5018 = vpop.xlane.xlu0 %5017
      %5019 = vadd.xlane.f32.xlu0 %v4995
      %v5020 = vpop.xlane.xlu0 %5019
      %5021 = vadd.xlane.f32.xlu0 %v4996
      %v5022 = vpop.xlane.xlu0 %5021
      %5023 = vadd.xlane.f32.xlu0 %v4997
      %v5024 = vpop.xlane.xlu0 %5023
      %5025 = vadd.xlane.f32.xlu0 %v4998
      %v5026 = vpop.xlane.xlu0 %5025
      %5027 = vadd.xlane.f32.xlu0 %v4999
      %v5028 = vpop.xlane.xlu0 %5027
      %5029 = vadd.xlane.f32.xlu0 %v5000
      %v5030 = vpop.xlane.xlu0 %5029
      %5031 = vadd.xlane.f32.xlu0 %v5001
      %v5032 = vpop.xlane.xlu0 %5031
      %5033 = vadd.xlane.f32.xlu0 %v5002
      %v5034 = vpop.xlane.xlu0 %5033
      %v5035 = vmul.f32 %v5004, %v2674
      %v5036 = vmul.f32 %v5006, %v2674
      %v5037 = vmul.f32 %v5008, %v2674
      %v5038 = vmul.f32 %v5010, %v2674
      %v5039 = vmul.f32 %v5012, %v2674
      %v5040 = vmul.f32 %v5014, %v2674
      %v5041 = vmul.f32 %v5016, %v2674
      %v5042 = vmul.f32 %v5018, %v2674
      %v5043 = vmul.f32 %v5020, %v2674
      %v5044 = vmul.f32 %v5022, %v2674
      %v5045 = vmul.f32 %v5024, %v2674
      %v5046 = vmul.f32 %v5026, %v2674
      %v5047 = vmul.f32 %v5028, %v2674
      %v5048 = vmul.f32 %v5030, %v2674
      %v5049 = vmul.f32 %v5032, %v2674
      %v5050 = vmul.f32 %v5034, %v2674
      %v5051 = vadd.f32 %v4971, %v5035
      %v5052 = vadd.f32 %v4972, %v5036
      %v5053 = vadd.f32 %v4973, %v5037
      %v5054 = vadd.f32 %v4974, %v5038
      %v5055 = vadd.f32 %v4975, %v5039
      %v5056 = vadd.f32 %v4976, %v5040
      %v5057 = vadd.f32 %v4977, %v5041
      %v5058 = vadd.f32 %v4978, %v5042
      %v5059 = vadd.f32 %v4979, %v5043
      %v5060 = vadd.f32 %v4980, %v5044
      %v5061 = vadd.f32 %v4981, %v5045
      %v5062 = vadd.f32 %v4982, %v5046
      %v5063 = vadd.f32 %v4983, %v5047
      %v5064 = vadd.f32 %v4984, %v5048
      %v5065 = vadd.f32 %v4985, %v5049
      %v5066 = vadd.f32 %v4986, %v5050
      %v5067 = vsel %vm377, %v4203, 0.0
      %v5068 = vsel %vm378, %v4205, 0.0
      %v5069 = vsel %vm379, %v4207, 0.0
      %v5070 = vsel %vm380, %v4209, 0.0
      %v5071 = vsel %vm381, %v4211, 0.0
      %v5072 = vsel %vm382, %v4213, 0.0
      %v5073 = vsel %vm383, %v4215, 0.0
      %v5074 = vsel %vm384, %v4217, 0.0
      %v5075 = vsel %vm385, %v4219, 0.0
      %v5076 = vsel %vm386, %v4221, 0.0
      %v5077 = vsel %vm387, %v4223, 0.0
      %v5078 = vsel %vm388, %v4225, 0.0
      %v5079 = vsel %vm389, %v4227, 0.0
      %v5080 = vsel %vm390, %v4229, 0.0
      %v5081 = vsel %vm391, %v4231, 0.0
      %v5082 = vsel %vm392, %v4233, 0.0
      %5083 = vadd.xlane.f32.xlu0 %v5067
      %v5084 = vpop.xlane.xlu0 %5083
      %5085 = vadd.xlane.f32.xlu0 %v5068
      %v5086 = vpop.xlane.xlu0 %5085
      %5087 = vadd.xlane.f32.xlu0 %v5069
      %v5088 = vpop.xlane.xlu0 %5087
      %5089 = vadd.xlane.f32.xlu0 %v5070
      %v5090 = vpop.xlane.xlu0 %5089
      %5091 = vadd.xlane.f32.xlu0 %v5071
      %v5092 = vpop.xlane.xlu0 %5091
      %5093 = vadd.xlane.f32.xlu0 %v5072
      %v5094 = vpop.xlane.xlu0 %5093
      %5095 = vadd.xlane.f32.xlu0 %v5073
      %v5096 = vpop.xlane.xlu0 %5095
      %5097 = vadd.xlane.f32.xlu0 %v5074
      %v5098 = vpop.xlane.xlu0 %5097
      %5099 = vadd.xlane.f32.xlu0 %v5075
      %v5100 = vpop.xlane.xlu0 %5099
      %5101 = vadd.xlane.f32.xlu0 %v5076
      %v5102 = vpop.xlane.xlu0 %5101
      %5103 = vadd.xlane.f32.xlu0 %v5077
      %v5104 = vpop.xlane.xlu0 %5103
      %5105 = vadd.xlane.f32.xlu0 %v5078
      %v5106 = vpop.xlane.xlu0 %5105
      %5107 = vadd.xlane.f32.xlu0 %v5079
      %v5108 = vpop.xlane.xlu0 %5107
      %5109 = vadd.xlane.f32.xlu0 %v5080
      %v5110 = vpop.xlane.xlu0 %5109
      %5111 = vadd.xlane.f32.xlu0 %v5081
      %v5112 = vpop.xlane.xlu0 %5111
      %5113 = vadd.xlane.f32.xlu0 %v5082
      %v5114 = vpop.xlane.xlu0 %5113
      %v5115 = vmul.f32 %v5084, %v2759
      %v5116 = vmul.f32 %v5086, %v2759
      %v5117 = vmul.f32 %v5088, %v2759
      %v5118 = vmul.f32 %v5090, %v2759
      %v5119 = vmul.f32 %v5092, %v2759
      %v5120 = vmul.f32 %v5094, %v2759
      %v5121 = vmul.f32 %v5096, %v2759
      %v5122 = vmul.f32 %v5098, %v2759
      %v5123 = vmul.f32 %v5100, %v2759
      %v5124 = vmul.f32 %v5102, %v2759
      %v5125 = vmul.f32 %v5104, %v2759
      %v5126 = vmul.f32 %v5106, %v2759
      %v5127 = vmul.f32 %v5108, %v2759
      %v5128 = vmul.f32 %v5110, %v2759
      %v5129 = vmul.f32 %v5112, %v2759
      %v5130 = vmul.f32 %v5114, %v2759
      %v5131 = vadd.f32 %v5051, %v5115
      %v5132 = vadd.f32 %v5052, %v5116
      %v5133 = vadd.f32 %v5053, %v5117
      %v5134 = vadd.f32 %v5054, %v5118
      %v5135 = vadd.f32 %v5055, %v5119
      %v5136 = vadd.f32 %v5056, %v5120
      %v5137 = vadd.f32 %v5057, %v5121
      %v5138 = vadd.f32 %v5058, %v5122
      %v5139 = vadd.f32 %v5059, %v5123
      %v5140 = vadd.f32 %v5060, %v5124
      %v5141 = vadd.f32 %v5061, %v5125
      %v5142 = vadd.f32 %v5062, %v5126
      %v5143 = vadd.f32 %v5063, %v5127
      %v5144 = vadd.f32 %v5064, %v5128
      %v5145 = vadd.f32 %v5065, %v5129
      %v5146 = vadd.f32 %v5066, %v5130
      %5163 = vrot.lane.b32.xlu0 %v5131, 32
      %v5164 = vpop.permute.xlu0 %5163
      %5165 = vrot.lane.b32.xlu0 %v5132, 32
      %v5166 = vpop.permute.xlu0 %5165
      %5167 = vrot.lane.b32.xlu0 %v5133, 32
      %v5168 = vpop.permute.xlu0 %5167
      %5169 = vrot.lane.b32.xlu0 %v5134, 32
      %v5170 = vpop.permute.xlu0 %5169
      %5171 = vrot.lane.b32.xlu0 %v5135, 32
      %v5172 = vpop.permute.xlu0 %5171
      %5173 = vrot.lane.b32.xlu0 %v5136, 32
      %v5174 = vpop.permute.xlu0 %5173
      %5175 = vrot.lane.b32.xlu0 %v5137, 32
      %v5176 = vpop.permute.xlu0 %5175
      %5177 = vrot.lane.b32.xlu0 %v5138, 32
      %v5178 = vpop.permute.xlu0 %5177
      %5179 = vrot.lane.b32.xlu0 %v5139, 32
      %v5180 = vpop.permute.xlu0 %5179
      %5181 = vrot.lane.b32.xlu0 %v5140, 32
      %v5182 = vpop.permute.xlu0 %5181
      %5183 = vrot.lane.b32.xlu0 %v5141, 32
      %v5184 = vpop.permute.xlu0 %5183
      %5185 = vrot.lane.b32.xlu0 %v5142, 32
      %v5186 = vpop.permute.xlu0 %5185
      %5187 = vrot.lane.b32.xlu0 %v5143, 32
      %v5188 = vpop.permute.xlu0 %5187
      %5189 = vrot.lane.b32.xlu0 %v5144, 32
      %v5190 = vpop.permute.xlu0 %5189
      %5191 = vrot.lane.b32.xlu0 %v5145, 32
      %v5192 = vpop.permute.xlu0 %5191
      %5193 = vrot.lane.b32.xlu0 %v5146, 32
      %v5194 = vpop.permute.xlu0 %5193
      %v5211 = vsel %vm443, %v2776, %v5164
      %v5212 = vsel %vm443, %v2777, %v5166
      %v5213 = vsel %vm443, %v2778, %v5168
      %v5214 = vsel %vm443, %v2779, %v5170
      %v5215 = vsel %vm443, %v2780, %v5172
      %v5216 = vsel %vm443, %v2781, %v5174
      %v5217 = vsel %vm443, %v2782, %v5176
      %v5218 = vsel %vm443, %v2783, %v5178
      %v5219 = vsel %vm443, %v2784, %v5180
      %v5220 = vsel %vm443, %v2785, %v5182
      %v5221 = vsel %vm443, %v2786, %v5184
      %v5222 = vsel %vm443, %v2787, %v5186
      %v5223 = vsel %vm443, %v2788, %v5188
      %v5224 = vsel %vm443, %v2789, %v5190
      %v5225 = vsel %vm443, %v2790, %v5192
      %v5226 = vsel %vm443, %v2791, %v5194
      %vm5227 = vcmask 523264
      %5228 = vst.msk [vmem:[%s211] sm:$0xff] %vm5227, %v5211
      %5229 = vst.msk [vmem:[%s211 + $0x8] sm:$0xff] %vm5227, %v5212
      %5230 = vst.msk [vmem:[%s211 + $0x10] sm:$0xff] %vm5227, %v5213
      %5231 = vst.msk [vmem:[%s211 + $0x18] sm:$0xff] %vm5227, %v5214
      %5232 = vst.msk [vmem:[%s211 + $0x20] sm:$0xff] %vm5227, %v5215
      %5233 = vst.msk [vmem:[%s211 + $0x28] sm:$0xff] %vm5227, %v5216
      %5234 = vst.msk [vmem:[%s211 + $0x30] sm:$0xff] %vm5227, %v5217
      %5235 = vst.msk [vmem:[%s211 + $0x38] sm:$0xff] %vm5227, %v5218
      %5236 = vst.msk [vmem:[%s211 + $0x40] sm:$0xff] %vm5227, %v5219
      %5237 = vst.msk [vmem:[%s211 + $0x48] sm:$0xff] %vm5227, %v5220
      %5238 = vst.msk [vmem:[%s211 + $0x50] sm:$0xff] %vm5227, %v5221
      %5239 = vst.msk [vmem:[%s211 + $0x58] sm:$0xff] %vm5227, %v5222
      %5240 = vst.msk [vmem:[%s211 + $0x60] sm:$0xff] %vm5227, %v5223
      %5241 = vst.msk [vmem:[%s211 + $0x68] sm:$0xff] %vm5227, %v5224
      %5242 = vst.msk [vmem:[%s211 + $0x70] sm:$0xff] %vm5227, %v5225
      %5243 = vst.msk [vmem:[%s211 + $0x78] sm:$0xff] %vm5227, %v5226
      %p5244 = scmp.lt.s32.totalorder %s15, 1
      %s5245 = scalar_select %p5244, %s15, 1
      %s5246 = smul.addr %s5245, 16
      %s5247 = smul.addr %s5246, 8
      %s5248 = scalar_lea.vmem %s4, %s5247
      // Predicated region
      $region37: #{vits_text_encoder_forward.16} parent=35 // pred_check
        %p5249 = pneg %p127
      $region38: #{vits_text_encoder_forward.16} parent=35 // pred_check_branch
        %5251 = sbr.rel (%p5249) target = $region40
      $region39: #{vits_text_encoder_forward.16} parent=35 // pred_region
        _
      $region40: #{vits_text_encoder_forward.16} parent=35 // pred_fallthru
        _
    $region36: #{vits_text_encoder_forward.16} parent=5 // pred_fallthru
      _
    %p5252 = scmp.le.s32.totalorder 2, %s10
    // Predicated region
    $region41: #{vits_text_encoder_forward.16} parent=5 // pred_check
      %p5253 = pneg %p5252
    $region42: #{vits_text_encoder_forward.16} parent=5 // pred_check_branch
      %5255 = sbr.rel (%p5253) target = $region44
    $region43: #{vits_text_encoder_forward.16} parent=5 // pred_region
      %s5256 = ssub.s32 %s10, 2
      // Predicated region
      $region45: #{vits_text_encoder_forward.16} parent=43 // pred_check
        %p5257 = pneg %p133
      $region46: #{vits_text_encoder_forward.16} parent=43 // pred_check_branch
        %5259 = sbr.rel (%p5257) target = $region48
      $region47: #{vits_text_encoder_forward.16} parent=43 // pred_region
        %p5260 = scmp.lt.s32.totalorder %s16, 1
        %s5261 = scalar_select %p5260, %s16, 1
        %s5262 = smul.addr %s5261, 16
        %s5263 = smul.addr %s5262, 8
        %s5264 = scalar_lea.vmem %s4, %s5263
      $region48: #{vits_text_encoder_forward.16} parent=43 // pred_fallthru
        _
    $region44: #{vits_text_encoder_forward.16} parent=5 // pred_fallthru
      _
  $region6: #{vits_text_encoder_forward.16} parent=0 // loop_footer
    %s14 = sadd.s32 1, %s10
  $region7: #{vits_text_encoder_forward.16} parent=0 // loop_footer_branch
    %9 = sbr.rel target = $region3
  $region8: #{vits_text_encoder_forward.16} parent=0 // loop_exit
    _

</llo_original>
